<compile_context>
chip_gen: v7x
topology: tpu7x:2x2x1
jax: 0.10.0
libtpu: 0.0.40
codegen_flags: <defaults>
</compile_context>

<pallas_src>
import jax
import jax.numpy as jnp
from jax.experimental import pallas as pl
from jax.experimental.pallas import tpu as pltpu


# ----------------------------------------------------------------------------
# Fused kernel: conv1 + pool1 + conv2 + pool2 + fc1 + relu + fc2 + tanh
# ----------------------------------------------------------------------------
def lenet_kernel(p1_ref, w1_ref, b1_ref, w2_ref, b2_ref,
                 wf1_ref, bf1_ref, wf2_ref, bf2_ref, o_ref, h1_s):
    f32 = jnp.float32
    bf16 = jnp.bfloat16

    # ---- conv1: single slot-stacked im2col matmul, then maxpool1 over the 4
    #      pool-slot row blocks (each 144 rows, sublane aligned), then bias.
    c1 = jnp.dot(p1_ref[...], w1_ref[...], preferred_element_type=f32)      # (576, 20)
    h1 = jnp.maximum(jnp.maximum(c1[0:144], c1[144:288]),
                     jnp.maximum(c1[288:432], c1[432:576])) + b1_ref[...]   # (144, 20)

    # Stash pooled map (rows = py*12 + px) in VMEM scratch, zero-padded rows.
    h1_s[0:144, :] = h1.astype(bf16)
    h1_s[144:160, :] = jnp.zeros((16, 20), bf16)

    # ---- conv2: 25 accumulated tap matmuls on row-shifted views of h1.
    #      acc2 row r = 12*y2 + x2 (only y2,x2 < 8 are real conv outputs; extra
    #      rows are never read downstream).
    acc2 = jnp.zeros((104, 50), f32)
    for t in range(25):
        ky, kx = t // 5, t % 5
        d = 12 * ky + kx
        shifted = h1_s[d:d + 104, :]                                        # (104, 20) bf16
        acc2 = acc2 + jnp.dot(shifted, w2_ref[t], preferred_element_type=f32)
    acc2 = acc2 + b2_ref[...]                                               # bias (constant per channel)

    # ---- maxpool2 (2x2 stride 2) via shifted-row maxima:
    #      pooled(py,px) = max over rows {r, r+1, r+12, r+13}, r = 24*py + 2*px
    m1 = jnp.maximum(acc2[0:96, :], acc2[1:97, :])                          # max over x pairs
    m2 = jnp.maximum(m1[0:80, :], m1[12:92, :])                             # max over y pairs

    # ---- fc1 (800 -> 500), accumulated over the 16 pooled pixels (NCHW flatten
    #      order is baked into the wf1 layout), then ReLU.
    acc_fc = jnp.zeros((1, 500), f32)
    for p in range(16):
        py, px = p // 4, p % 4
        r = 24 * py + 2 * px
        row = m2[r:r + 1, :]                                                # (1, 50)
        acc_fc = acc_fc + jnp.dot(row.astype(bf16), wf1_ref[p],
                                  preferred_element_type=f32)
    hfc = jnp.maximum(acc_fc + bf1_ref[...], 0.0)                           # (1, 500) f32

    # ---- fc2 (500 -> 84, lane-padded to 128) + tanh
    y = jnp.dot(hfc.astype(bf16), wf2_ref[...], preferred_element_type=f32) + bf2_ref[...]
    o_ref[...] = jnp.tanh(y).astype(o_ref.dtype)                            # (1, 128)


# ----------------------------------------------------------------------------
# Wrappers
# ----------------------------------------------------------------------------
def prepare_params(params):
    """One-time weight re-layout (outside the jitted forward path)."""
    w1, b1, w2, b2, wf1, bf1, wf2, bf2 = params
    # conv1: (20,1,5,5) -> (25, 20), feature order t = ky*5 + kx
    w1m = w1.reshape(20, 25).T.astype(jnp.bfloat16)
    # conv2: (50,20,5,5) -> (25, 20, 50), tap-major (ky,kx), then (ci, co)
    w2t = jnp.transpose(w2, (2, 3, 1, 0)).reshape(25, 20, 50).astype(jnp.bfloat16)
    # fc1: (500, 800) with input index c*16 + p  ->  (16, 50, 500) = [p, c, h]
    wf1g = jnp.transpose(wf1.reshape(500, 50, 16), (2, 1, 0)).astype(jnp.bfloat16)
    # fc2: (84, 500) -> (500, 128) lane-padded with zeros
    wf2m = jnp.zeros((500, 128), jnp.bfloat16).at[:, :84].set(wf2.T.astype(jnp.bfloat16))
    bf2p = jnp.zeros((1, 128), jnp.float32).at[:, :84].set(bf2.reshape(1, 84))
    return (w1m, b1.reshape(1, 20), w2t, b2.reshape(1, 50),
            wf1g, bf1.reshape(1, 500), wf2m, bf2p)


def lenet_forward(x, prepared):
    """x: (1, 1, 28, 28) float32 (NCHW). Returns (1, 84) float32."""
    w1m, b1r, w2t, b2r, wf1g, bf1r, wf2m, bf2p = prepared
    img = x[0, 0]                                                            # (28, 28)

    # conv1 im2col, slot-stacked by 2x2 pool position: rows = s*144 + py*12 + px
    patches1 = jnp.stack(
        [img[ky:ky + 24, kx:kx + 24] for ky in range(5) for kx in range(5)],
        axis=-1,
    )                                                                        # (24, 24, 25)
    p1 = (patches1.reshape(12, 2, 12, 2, 25)
          .transpose(1, 3, 0, 2, 4)
          .reshape(576, 25)
          .astype(jnp.bfloat16))

    y = pl.pallas_call(
        lenet_kernel,
        out_shape=jax.ShapeDtypeStruct((1, 128), jnp.float32),
        in_specs=[pl.BlockSpec(memory_space=pltpu.MemorySpace.VMEM)] * 9,
        out_specs=pl.BlockSpec(memory_space=pltpu.MemorySpace.VMEM),
        scratch_shapes=[pltpu.VMEM((160, 20), jnp.bfloat16)],
        compiler_params=pltpu.CompilerParams(vmem_limit_bytes=16 * 1024 * 1024),
    )(p1, w1m, b1r, w2t, b2r, wf1g, bf1r, wf2m, bf2p)

    return y[:, :84]


def init_params(key):
    """Deterministic PyTorch-style uniform(-1/sqrt(fan_in), +1/sqrt(fan_in)) init."""
    ks = jax.random.split(key, 8)

    def u(k, shape, fan_in):
        bound = 1.0 / float(fan_in) ** 0.5
        return jax.random.uniform(k, shape, jnp.float32, -bound, bound)

    w1 = u(ks[0], (20, 1, 5, 5), 1 * 5 * 5)
    b1 = u(ks[1], (20,), 1 * 5 * 5)
    w2 = u(ks[2], (50, 20, 5, 5), 20 * 5 * 5)
    b2 = u(ks[3], (50,), 20 * 5 * 5)
    wf1 = u(ks[4], (500, 800), 800)
    bf1 = u(ks[5], (500,), 800)
    wf2 = u(ks[6], (84, 500), 500)
    bf2 = u(ks[7], (84,), 500)
    return (w1, b1, w2, b2, wf1, bf1, wf2, bf2)


if __name__ == "__main__":
    key = jax.random.PRNGKey(0)
    k_x, k_p = jax.random.split(key)
    x = jax.random.normal(k_x, (1, 1, 28, 28), dtype=jnp.float32)
    params = init_params(k_p)

    prepared = prepare_params(params)          # one-time weight re-layout / bf16 cast
    fwd = jax.jit(lenet_forward)
    y = fwd(x, prepared)
    jax.block_until_ready(y)

    assert y.shape == (1, 84) and y.dtype == jnp.float32
    assert bool(jnp.all(jnp.isfinite(y)))
    print("KERNEL_OK")
</pallas_src>

<mosaic_0001>
module attributes {stable_mosaic.version = 11 : i64} {
  func.func @lenet_kernel(%arg0: memref<576x25xbf16, #tpu.memory_space<vmem>>, %arg1: memref<25x20xbf16, #tpu.memory_space<vmem>>, %arg2: memref<1x20xf32, #tpu.memory_space<vmem>>, %arg3: memref<25x20x50xbf16, #tpu.memory_space<vmem>>, %arg4: memref<1x50xf32, #tpu.memory_space<vmem>>, %arg5: memref<16x50x500xbf16, #tpu.memory_space<vmem>>, %arg6: memref<1x500xf32, #tpu.memory_space<vmem>>, %arg7: memref<500x128xbf16, #tpu.memory_space<vmem>>, %arg8: memref<1x128xf32, #tpu.memory_space<vmem>>, %arg9: memref<1x128xf32, #tpu.memory_space<vmem>>, %arg10: memref<160x20xbf16, #tpu.memory_space<vmem>>) attributes {dimension_semantics = [], scalar_prefetch = 0 : i64, scratch_operands = 1 : i64, tpu.core_type = #tpu.core_type<tc>} {
    %c0 = arith.constant 0 : index
    %c0_0 = arith.constant 0 : index
    %0 = vector.load %arg0[%c0, %c0_0] : memref<576x25xbf16, #tpu.memory_space<vmem>>, vector<576x25xbf16>
    %c0_1 = arith.constant 0 : index
    %c0_2 = arith.constant 0 : index
    %1 = vector.load %arg1[%c0_1, %c0_2] : memref<25x20xbf16, #tpu.memory_space<vmem>>, vector<25x20xbf16>
    %cst = arith.constant dense<0.000000e+00> : vector<576x20xf32>
    %2 = tpu.matmul %0, %1, %cst {dimension_numbers = #tpu.dot_dimension_numbers<[1], [0], [0], [1], [0, 0, 1, 1], [], []>} : vector<576x25xbf16>, vector<25x20xbf16>, vector<576x20xf32> -> vector<576x20xf32>
    %3 = vector.extract_strided_slice %2 {offsets = [0, 0], sizes = [144, 20], strides = [1, 1]} : vector<576x20xf32> to vector<144x20xf32>
    %4 = vector.extract_strided_slice %2 {offsets = [144, 0], sizes = [144, 20], strides = [1, 1]} : vector<576x20xf32> to vector<144x20xf32>
    %5 = arith.maximumf %3, %4 : vector<144x20xf32>
    %6 = vector.extract_strided_slice %2 {offsets = [288, 0], sizes = [144, 20], strides = [1, 1]} : vector<576x20xf32> to vector<144x20xf32>
    %7 = vector.extract_strided_slice %2 {offsets = [432, 0], sizes = [144, 20], strides = [1, 1]} : vector<576x20xf32> to vector<144x20xf32>
    %8 = arith.maximumf %6, %7 : vector<144x20xf32>
    %9 = arith.maximumf %5, %8 : vector<144x20xf32>
    %c0_3 = arith.constant 0 : index
    %c0_4 = arith.constant 0 : index
    %10 = vector.load %arg2[%c0_3, %c0_4] : memref<1x20xf32, #tpu.memory_space<vmem>>, vector<1x20xf32>
    %11 = vector.broadcast %10 : vector<1x20xf32> to vector<144x20xf32>
    %12 = arith.addf %9, %11 : vector<144x20xf32>
    %13 = arith.truncf %12 : vector<144x20xf32> to vector<144x20xbf16>
    %c0_5 = arith.constant 0 : index
    %c0_6 = arith.constant 0 : index
    %14 = vector.load %arg10[%c0_5, %c0_6] : memref<160x20xbf16, #tpu.memory_space<vmem>>, vector<144x20xbf16>
    tpu.vector_store %arg10[%c0_5, %c0_6], %13 {strides = array<i32>} : memref<160x20xbf16, #tpu.memory_space<vmem>>, vector<144x20xbf16>,
    %cst_7 = arith.constant 0.000000e+00 : bf16
    %15 = vector.broadcast %cst_7 : bf16 to vector<16x20xbf16>
    %c144 = arith.constant 144 : index
    %c0_8 = arith.constant 0 : index
    %16 = vector.load %arg10[%c144, %c0_8] : memref<160x20xbf16, #tpu.memory_space<vmem>>, vector<16x20xbf16>
    tpu.vector_store %arg10[%c144, %c0_8], %15 {strides = array<i32>} : memref<160x20xbf16, #tpu.memory_space<vmem>>, vector<16x20xbf16>,
    %cst_9 = arith.constant 0.000000e+00 : f32
    %17 = vector.broadcast %cst_9 : f32 to vector<104x50xf32>
    %c0_10 = arith.constant 0 : index
    %c0_11 = arith.constant 0 : index
    %18 = vector.load %arg10[%c0_10, %c0_11] : memref<160x20xbf16, #tpu.memory_space<vmem>>, vector<104x20xbf16>
    %c0_12 = arith.constant 0 : index
    %c0_13 = arith.constant 0 : index
    %c0_14 = arith.constant 0 : index
    %19 = vector.load %arg3[%c0_12, %c0_13, %c0_14] : memref<25x20x50xbf16, #tpu.memory_space<vmem>>, vector<1x20x50xbf16>
    %20 = vector.shape_cast %19 : vector<1x20x50xbf16> to vector<20x50xbf16>
    %cst_15 = arith.constant dense<0.000000e+00> : vector<104x50xf32>
    %21 = tpu.matmul %18, %20, %cst_15 {dimension_numbers = #tpu.dot_dimension_numbers<[1], [0], [0], [1], [0, 0, 1, 1], [], []>} : vector<104x20xbf16>, vector<20x50xbf16>, vector<104x50xf32> -> vector<104x50xf32>
    %22 = arith.addf %17, %21 : vector<104x50xf32>
    %c1 = arith.constant 1 : index
    %c0_16 = arith.constant 0 : index
    %23 = vector.load %arg10[%c1, %c0_16] : memref<160x20xbf16, #tpu.memory_space<vmem>>, vector<104x20xbf16>
    %c1_17 = arith.constant 1 : index
    %c0_18 = arith.constant 0 : index
    %c0_19 = arith.constant 0 : index
    %24 = vector.load %arg3[%c1_17, %c0_18, %c0_19] : memref<25x20x50xbf16, #tpu.memory_space<vmem>>, vector<1x20x50xbf16>
    %25 = vector.shape_cast %24 : vector<1x20x50xbf16> to vector<20x50xbf16>
    %cst_20 = arith.constant dense<0.000000e+00> : vector<104x50xf32>
    %26 = tpu.matmul %23, %25, %cst_20 {dimension_numbers = #tpu.dot_dimension_numbers<[1], [0], [0], [1], [0, 0, 1, 1], [], []>} : vector<104x20xbf16>, vector<20x50xbf16>, vector<104x50xf32> -> vector<104x50xf32>
    %27 = arith.addf %22, %26 : vector<104x50xf32>
    %c2 = arith.constant 2 : index
    %c0_21 = arith.constant 0 : index
    %28 = vector.load %arg10[%c2, %c0_21] : memref<160x20xbf16, #tpu.memory_space<vmem>>, vector<104x20xbf16>
    %c2_22 = arith.constant 2 : index
    %c0_23 = arith.constant 0 : index
    %c0_24 = arith.constant 0 : index
    %29 = vector.load %arg3[%c2_22, %c0_23, %c0_24] : memref<25x20x50xbf16, #tpu.memory_space<vmem>>, vector<1x20x50xbf16>
    %30 = vector.shape_cast %29 : vector<1x20x50xbf16> to vector<20x50xbf16>
    %cst_25 = arith.constant dense<0.000000e+00> : vector<104x50xf32>
    %31 = tpu.matmul %28, %30, %cst_25 {dimension_numbers = #tpu.dot_dimension_numbers<[1], [0], [0], [1], [0, 0, 1, 1], [], []>} : vector<104x20xbf16>, vector<20x50xbf16>, vector<104x50xf32> -> vector<104x50xf32>
    %32 = arith.addf %27, %31 : vector<104x50xf32>
    %c3 = arith.constant 3 : index
    %c0_26 = arith.constant 0 : index
    %33 = vector.load %arg10[%c3, %c0_26] : memref<160x20xbf16, #tpu.memory_space<vmem>>, vector<104x20xbf16>
    %c3_27 = arith.constant 3 : index
    %c0_28 = arith.constant 0 : index
    %c0_29 = arith.constant 0 : index
    %34 = vector.load %arg3[%c3_27, %c0_28, %c0_29] : memref<25x20x50xbf16, #tpu.memory_space<vmem>>, vector<1x20x50xbf16>
    %35 = vector.shape_cast %34 : vector<1x20x50xbf16> to vector<20x50xbf16>
    %cst_30 = arith.constant dense<0.000000e+00> : vector<104x50xf32>
    %36 = tpu.matmul %33, %35, %cst_30 {dimension_numbers = #tpu.dot_dimension_numbers<[1], [0], [0], [1], [0, 0, 1, 1], [], []>} : vector<104x20xbf16>, vector<20x50xbf16>, vector<104x50xf32> -> vector<104x50xf32>
    %37 = arith.addf %32, %36 : vector<104x50xf32>
    %c4 = arith.constant 4 : index
    %c0_31 = arith.constant 0 : index
    %38 = vector.load %arg10[%c4, %c0_31] : memref<160x20xbf16, #tpu.memory_space<vmem>>, vector<104x20xbf16>
    %c4_32 = arith.constant 4 : index
    %c0_33 = arith.constant 0 : index
    %c0_34 = arith.constant 0 : index
    %39 = vector.load %arg3[%c4_32, %c0_33, %c0_34] : memref<25x20x50xbf16, #tpu.memory_space<vmem>>, vector<1x20x50xbf16>
    %40 = vector.shape_cast %39 : vector<1x20x50xbf16> to vector<20x50xbf16>
    %cst_35 = arith.constant dense<0.000000e+00> : vector<104x50xf32>
    %41 = tpu.matmul %38, %40, %cst_35 {dimension_numbers = #tpu.dot_dimension_numbers<[1], [0], [0], [1], [0, 0, 1, 1], [], []>} : vector<104x20xbf16>, vector<20x50xbf16>, vector<104x50xf32> -> vector<104x50xf32>
    %42 = arith.addf %37, %41 : vector<104x50xf32>
    %c12 = arith.constant 12 : index
    %c0_36 = arith.constant 0 : index
    %43 = vector.load %arg10[%c12, %c0_36] : memref<160x20xbf16, #tpu.memory_space<vmem>>, vector<104x20xbf16>
    %c5 = arith.constant 5 : index
    %c0_37 = arith.constant 0 : index
    %c0_38 = arith.constant 0 : index
    %44 = vector.load %arg3[%c5, %c0_37, %c0_38] : memref<25x20x50xbf16, #tpu.memory_space<vmem>>, vector<1x20x50xbf16>
    %45 = vector.shape_cast %44 : vector<1x20x50xbf16> to vector<20x50xbf16>
    %cst_39 = arith.constant dense<0.000000e+00> : vector<104x50xf32>
    %46 = tpu.matmul %43, %45, %cst_39 {dimension_numbers = #tpu.dot_dimension_numbers<[1], [0], [0], [1], [0, 0, 1, 1], [], []>} : vector<104x20xbf16>, vector<20x50xbf16>, vector<104x50xf32> -> vector<104x50xf32>
    %47 = arith.addf %42, %46 : vector<104x50xf32>
    %c13 = arith.constant 13 : index
    %c0_40 = arith.constant 0 : index
    %48 = vector.load %arg10[%c13, %c0_40] : memref<160x20xbf16, #tpu.memory_space<vmem>>, vector<104x20xbf16>
    %c6 = arith.constant 6 : index
    %c0_41 = arith.constant 0 : index
    %c0_42 = arith.constant 0 : index
    %49 = vector.load %arg3[%c6, %c0_41, %c0_42] : memref<25x20x50xbf16, #tpu.memory_space<vmem>>, vector<1x20x50xbf16>
    %50 = vector.shape_cast %49 : vector<1x20x50xbf16> to vector<20x50xbf16>
    %cst_43 = arith.constant dense<0.000000e+00> : vector<104x50xf32>
    %51 = tpu.matmul %48, %50, %cst_43 {dimension_numbers = #tpu.dot_dimension_numbers<[1], [0], [0], [1], [0, 0, 1, 1], [], []>} : vector<104x20xbf16>, vector<20x50xbf16>, vector<104x50xf32> -> vector<104x50xf32>
    %52 = arith.addf %47, %51 : vector<104x50xf32>
    %c14 = arith.constant 14 : index
    %c0_44 = arith.constant 0 : index
    %53 = vector.load %arg10[%c14, %c0_44] : memref<160x20xbf16, #tpu.memory_space<vmem>>, vector<104x20xbf16>
    %c7 = arith.constant 7 : index
    %c0_45 = arith.constant 0 : index
    %c0_46 = arith.constant 0 : index
    %54 = vector.load %arg3[%c7, %c0_45, %c0_46] : memref<25x20x50xbf16, #tpu.memory_space<vmem>>, vector<1x20x50xbf16>
    %55 = vector.shape_cast %54 : vector<1x20x50xbf16> to vector<20x50xbf16>
    %cst_47 = arith.constant dense<0.000000e+00> : vector<104x50xf32>
    %56 = tpu.matmul %53, %55, %cst_47 {dimension_numbers = #tpu.dot_dimension_numbers<[1], [0], [0], [1], [0, 0, 1, 1], [], []>} : vector<104x20xbf16>, vector<20x50xbf16>, vector<104x50xf32> -> vector<104x50xf32>
    %57 = arith.addf %52, %56 : vector<104x50xf32>
    %c15 = arith.constant 15 : index
    %c0_48 = arith.constant 0 : index
    %58 = vector.load %arg10[%c15, %c0_48] : memref<160x20xbf16, #tpu.memory_space<vmem>>, vector<104x20xbf16>
    %c8 = arith.constant 8 : index
    %c0_49 = arith.constant 0 : index
    %c0_50 = arith.constant 0 : index
    %59 = vector.load %arg3[%c8, %c0_49, %c0_50] : memref<25x20x50xbf16, #tpu.memory_space<vmem>>, vector<1x20x50xbf16>
    %60 = vector.shape_cast %59 : vector<1x20x50xbf16> to vector<20x50xbf16>
    %cst_51 = arith.constant dense<0.000000e+00> : vector<104x50xf32>
    %61 = tpu.matmul %58, %60, %cst_51 {dimension_numbers = #tpu.dot_dimension_numbers<[1], [0], [0], [1], [0, 0, 1, 1], [], []>} : vector<104x20xbf16>, vector<20x50xbf16>, vector<104x50xf32> -> vector<104x50xf32>
    %62 = arith.addf %57, %61 : vector<104x50xf32>
    %c16 = arith.constant 16 : index
    %c0_52 = arith.constant 0 : index
    %63 = vector.load %arg10[%c16, %c0_52] : memref<160x20xbf16, #tpu.memory_space<vmem>>, vector<104x20xbf16>
    %c9 = arith.constant 9 : index
    %c0_53 = arith.constant 0 : index
    %c0_54 = arith.constant 0 : index
    %64 = vector.load %arg3[%c9, %c0_53, %c0_54] : memref<25x20x50xbf16, #tpu.memory_space<vmem>>, vector<1x20x50xbf16>
    %65 = vector.shape_cast %64 : vector<1x20x50xbf16> to vector<20x50xbf16>
    %cst_55 = arith.constant dense<0.000000e+00> : vector<104x50xf32>
    %66 = tpu.matmul %63, %65, %cst_55 {dimension_numbers = #tpu.dot_dimension_numbers<[1], [0], [0], [1], [0, 0, 1, 1], [], []>} : vector<104x20xbf16>, vector<20x50xbf16>, vector<104x50xf32> -> vector<104x50xf32>
    %67 = arith.addf %62, %66 : vector<104x50xf32>
    %c24 = arith.constant 24 : index
    %c0_56 = arith.constant 0 : index
    %68 = vector.load %arg10[%c24, %c0_56] : memref<160x20xbf16, #tpu.memory_space<vmem>>, vector<104x20xbf16>
    %c10 = arith.constant 10 : index
    %c0_57 = arith.constant 0 : index
    %c0_58 = arith.constant 0 : index
    %69 = vector.load %arg3[%c10, %c0_57, %c0_58] : memref<25x20x50xbf16, #tpu.memory_space<vmem>>, vector<1x20x50xbf16>
    %70 = vector.shape_cast %69 : vector<1x20x50xbf16> to vector<20x50xbf16>
    %cst_59 = arith.constant dense<0.000000e+00> : vector<104x50xf32>
    %71 = tpu.matmul %68, %70, %cst_59 {dimension_numbers = #tpu.dot_dimension_numbers<[1], [0], [0], [1], [0, 0, 1, 1], [], []>} : vector<104x20xbf16>, vector<20x50xbf16>, vector<104x50xf32> -> vector<104x50xf32>
    %72 = arith.addf %67, %71 : vector<104x50xf32>
    %c25 = arith.constant 25 : index
    %c0_60 = arith.constant 0 : index
    %73 = vector.load %arg10[%c25, %c0_60] : memref<160x20xbf16, #tpu.memory_space<vmem>>, vector<104x20xbf16>
    %c11 = arith.constant 11 : index
    %c0_61 = arith.constant 0 : index
    %c0_62 = arith.constant 0 : index
    %74 = vector.load %arg3[%c11, %c0_61, %c0_62] : memref<25x20x50xbf16, #tpu.memory_space<vmem>>, vector<1x20x50xbf16>
    %75 = vector.shape_cast %74 : vector<1x20x50xbf16> to vector<20x50xbf16>
    %cst_63 = arith.constant dense<0.000000e+00> : vector<104x50xf32>
    %76 = tpu.matmul %73, %75, %cst_63 {dimension_numbers = #tpu.dot_dimension_numbers<[1], [0], [0], [1], [0, 0, 1, 1], [], []>} : vector<104x20xbf16>, vector<20x50xbf16>, vector<104x50xf32> -> vector<104x50xf32>
    %77 = arith.addf %72, %76 : vector<104x50xf32>
    %c26 = arith.constant 26 : index
    %c0_64 = arith.constant 0 : index
    %78 = vector.load %arg10[%c26, %c0_64] : memref<160x20xbf16, #tpu.memory_space<vmem>>, vector<104x20xbf16>
    %c12_65 = arith.constant 12 : index
    %c0_66 = arith.constant 0 : index
    %c0_67 = arith.constant 0 : index
    %79 = vector.load %arg3[%c12_65, %c0_66, %c0_67] : memref<25x20x50xbf16, #tpu.memory_space<vmem>>, vector<1x20x50xbf16>
    %80 = vector.shape_cast %79 : vector<1x20x50xbf16> to vector<20x50xbf16>
    %cst_68 = arith.constant dense<0.000000e+00> : vector<104x50xf32>
    %81 = tpu.matmul %78, %80, %cst_68 {dimension_numbers = #tpu.dot_dimension_numbers<[1], [0], [0], [1], [0, 0, 1, 1], [], []>} : vector<104x20xbf16>, vector<20x50xbf16>, vector<104x50xf32> -> vector<104x50xf32>
    %82 = arith.addf %77, %81 : vector<104x50xf32>
    %c27 = arith.constant 27 : index
    %c0_69 = arith.constant 0 : index
    %83 = vector.load %arg10[%c27, %c0_69] : memref<160x20xbf16, #tpu.memory_space<vmem>>, vector<104x20xbf16>
    %c13_70 = arith.constant 13 : index
    %c0_71 = arith.constant 0 : index
    %c0_72 = arith.constant 0 : index
    %84 = vector.load %arg3[%c13_70, %c0_71, %c0_72] : memref<25x20x50xbf16, #tpu.memory_space<vmem>>, vector<1x20x50xbf16>
    %85 = vector.shape_cast %84 : vector<1x20x50xbf16> to vector<20x50xbf16>
    %cst_73 = arith.constant dense<0.000000e+00> : vector<104x50xf32>
    %86 = tpu.matmul %83, %85, %cst_73 {dimension_numbers = #tpu.dot_dimension_numbers<[1], [0], [0], [1], [0, 0, 1, 1], [], []>} : vector<104x20xbf16>, vector<20x50xbf16>, vector<104x50xf32> -> vector<104x50xf32>
    %87 = arith.addf %82, %86 : vector<104x50xf32>
    %c28 = arith.constant 28 : index
    %c0_74 = arith.constant 0 : index
    %88 = vector.load %arg10[%c28, %c0_74] : memref<160x20xbf16, #tpu.memory_space<vmem>>, vector<104x20xbf16>
    %c14_75 = arith.constant 14 : index
    %c0_76 = arith.constant 0 : index
    %c0_77 = arith.constant 0 : index
    %89 = vector.load %arg3[%c14_75, %c0_76, %c0_77] : memref<25x20x50xbf16, #tpu.memory_space<vmem>>, vector<1x20x50xbf16>
    %90 = vector.shape_cast %89 : vector<1x20x50xbf16> to vector<20x50xbf16>
    %cst_78 = arith.constant dense<0.000000e+00> : vector<104x50xf32>
    %91 = tpu.matmul %88, %90, %cst_78 {dimension_numbers = #tpu.dot_dimension_numbers<[1], [0], [0], [1], [0, 0, 1, 1], [], []>} : vector<104x20xbf16>, vector<20x50xbf16>, vector<104x50xf32> -> vector<104x50xf32>
    %92 = arith.addf %87, %91 : vector<104x50xf32>
    %c36 = arith.constant 36 : index
    %c0_79 = arith.constant 0 : index
    %93 = vector.load %arg10[%c36, %c0_79] : memref<160x20xbf16, #tpu.memory_space<vmem>>, vector<104x20xbf16>
    %c15_80 = arith.constant 15 : index
    %c0_81 = arith.constant 0 : index
    %c0_82 = arith.constant 0 : index
    %94 = vector.load %arg3[%c15_80, %c0_81, %c0_82] : memref<25x20x50xbf16, #tpu.memory_space<vmem>>, vector<1x20x50xbf16>
    %95 = vector.shape_cast %94 : vector<1x20x50xbf16> to vector<20x50xbf16>
    %cst_83 = arith.constant dense<0.000000e+00> : vector<104x50xf32>
    %96 = tpu.matmul %93, %95, %cst_83 {dimension_numbers = #tpu.dot_dimension_numbers<[1], [0], [0], [1], [0, 0, 1, 1], [], []>} : vector<104x20xbf16>, vector<20x50xbf16>, vector<104x50xf32> -> vector<104x50xf32>
    %97 = arith.addf %92, %96 : vector<104x50xf32>
    %c37 = arith.constant 37 : index
    %c0_84 = arith.constant 0 : index
    %98 = vector.load %arg10[%c37, %c0_84] : memref<160x20xbf16, #tpu.memory_space<vmem>>, vector<104x20xbf16>
    %c16_85 = arith.constant 16 : index
    %c0_86 = arith.constant 0 : index
    %c0_87 = arith.constant 0 : index
    %99 = vector.load %arg3[%c16_85, %c0_86, %c0_87] : memref<25x20x50xbf16, #tpu.memory_space<vmem>>, vector<1x20x50xbf16>
    %100 = vector.shape_cast %99 : vector<1x20x50xbf16> to vector<20x50xbf16>
    %cst_88 = arith.constant dense<0.000000e+00> : vector<104x50xf32>
    %101 = tpu.matmul %98, %100, %cst_88 {dimension_numbers = #tpu.dot_dimension_numbers<[1], [0], [0], [1], [0, 0, 1, 1], [], []>} : vector<104x20xbf16>, vector<20x50xbf16>, vector<104x50xf32> -> vector<104x50xf32>
    %102 = arith.addf %97, %101 : vector<104x50xf32>
    %c38 = arith.constant 38 : index
    %c0_89 = arith.constant 0 : index
    %103 = vector.load %arg10[%c38, %c0_89] : memref<160x20xbf16, #tpu.memory_space<vmem>>, vector<104x20xbf16>
    %c17 = arith.constant 17 : index
    %c0_90 = arith.constant 0 : index
    %c0_91 = arith.constant 0 : index
    %104 = vector.load %arg3[%c17, %c0_90, %c0_91] : memref<25x20x50xbf16, #tpu.memory_space<vmem>>, vector<1x20x50xbf16>
    %105 = vector.shape_cast %104 : vector<1x20x50xbf16> to vector<20x50xbf16>
    %cst_92 = arith.constant dense<0.000000e+00> : vector<104x50xf32>
    %106 = tpu.matmul %103, %105, %cst_92 {dimension_numbers = #tpu.dot_dimension_numbers<[1], [0], [0], [1], [0, 0, 1, 1], [], []>} : vector<104x20xbf16>, vector<20x50xbf16>, vector<104x50xf32> -> vector<104x50xf32>
    %107 = arith.addf %102, %106 : vector<104x50xf32>
    %c39 = arith.constant 39 : index
    %c0_93 = arith.constant 0 : index
    %108 = vector.load %arg10[%c39, %c0_93] : memref<160x20xbf16, #tpu.memory_space<vmem>>, vector<104x20xbf16>
    %c18 = arith.constant 18 : index
    %c0_94 = arith.constant 0 : index
    %c0_95 = arith.constant 0 : index
    %109 = vector.load %arg3[%c18, %c0_94, %c0_95] : memref<25x20x50xbf16, #tpu.memory_space<vmem>>, vector<1x20x50xbf16>
    %110 = vector.shape_cast %109 : vector<1x20x50xbf16> to vector<20x50xbf16>
    %cst_96 = arith.constant dense<0.000000e+00> : vector<104x50xf32>
    %111 = tpu.matmul %108, %110, %cst_96 {dimension_numbers = #tpu.dot_dimension_numbers<[1], [0], [0], [1], [0, 0, 1, 1], [], []>} : vector<104x20xbf16>, vector<20x50xbf16>, vector<104x50xf32> -> vector<104x50xf32>
    %112 = arith.addf %107, %111 : vector<104x50xf32>
    %c40 = arith.constant 40 : index
    %c0_97 = arith.constant 0 : index
    %113 = vector.load %arg10[%c40, %c0_97] : memref<160x20xbf16, #tpu.memory_space<vmem>>, vector<104x20xbf16>
    %c19 = arith.constant 19 : index
    %c0_98 = arith.constant 0 : index
    %c0_99 = arith.constant 0 : index
    %114 = vector.load %arg3[%c19, %c0_98, %c0_99] : memref<25x20x50xbf16, #tpu.memory_space<vmem>>, vector<1x20x50xbf16>
    %115 = vector.shape_cast %114 : vector<1x20x50xbf16> to vector<20x50xbf16>
    %cst_100 = arith.constant dense<0.000000e+00> : vector<104x50xf32>
    %116 = tpu.matmul %113, %115, %cst_100 {dimension_numbers = #tpu.dot_dimension_numbers<[1], [0], [0], [1], [0, 0, 1, 1], [], []>} : vector<104x20xbf16>, vector<20x50xbf16>, vector<104x50xf32> -> vector<104x50xf32>
    %117 = arith.addf %112, %116 : vector<104x50xf32>
    %c48 = arith.constant 48 : index
    %c0_101 = arith.constant 0 : index
    %118 = vector.load %arg10[%c48, %c0_101] : memref<160x20xbf16, #tpu.memory_space<vmem>>, vector<104x20xbf16>
    %c20 = arith.constant 20 : index
    %c0_102 = arith.constant 0 : index
    %c0_103 = arith.constant 0 : index
    %119 = vector.load %arg3[%c20, %c0_102, %c0_103] : memref<25x20x50xbf16, #tpu.memory_space<vmem>>, vector<1x20x50xbf16>
    %120 = vector.shape_cast %119 : vector<1x20x50xbf16> to vector<20x50xbf16>
    %cst_104 = arith.constant dense<0.000000e+00> : vector<104x50xf32>
    %121 = tpu.matmul %118, %120, %cst_104 {dimension_numbers = #tpu.dot_dimension_numbers<[1], [0], [0], [1], [0, 0, 1, 1], [], []>} : vector<104x20xbf16>, vector<20x50xbf16>, vector<104x50xf32> -> vector<104x50xf32>
    %122 = arith.addf %117, %121 : vector<104x50xf32>
    %c49 = arith.constant 49 : index
    %c0_105 = arith.constant 0 : index
    %123 = vector.load %arg10[%c49, %c0_105] : memref<160x20xbf16, #tpu.memory_space<vmem>>, vector<104x20xbf16>
    %c21 = arith.constant 21 : index
    %c0_106 = arith.constant 0 : index
    %c0_107 = arith.constant 0 : index
    %124 = vector.load %arg3[%c21, %c0_106, %c0_107] : memref<25x20x50xbf16, #tpu.memory_space<vmem>>, vector<1x20x50xbf16>
    %125 = vector.shape_cast %124 : vector<1x20x50xbf16> to vector<20x50xbf16>
    %cst_108 = arith.constant dense<0.000000e+00> : vector<104x50xf32>
    %126 = tpu.matmul %123, %125, %cst_108 {dimension_numbers = #tpu.dot_dimension_numbers<[1], [0], [0], [1], [0, 0, 1, 1], [], []>} : vector<104x20xbf16>, vector<20x50xbf16>, vector<104x50xf32> -> vector<104x50xf32>
    %127 = arith.addf %122, %126 : vector<104x50xf32>
    %c50 = arith.constant 50 : index
    %c0_109 = arith.constant 0 : index
    %128 = vector.load %arg10[%c50, %c0_109] : memref<160x20xbf16, #tpu.memory_space<vmem>>, vector<104x20xbf16>
    %c22 = arith.constant 22 : index
    %c0_110 = arith.constant 0 : index
    %c0_111 = arith.constant 0 : index
    %129 = vector.load %arg3[%c22, %c0_110, %c0_111] : memref<25x20x50xbf16, #tpu.memory_space<vmem>>, vector<1x20x50xbf16>
    %130 = vector.shape_cast %129 : vector<1x20x50xbf16> to vector<20x50xbf16>
    %cst_112 = arith.constant dense<0.000000e+00> : vector<104x50xf32>
    %131 = tpu.matmul %128, %130, %cst_112 {dimension_numbers = #tpu.dot_dimension_numbers<[1], [0], [0], [1], [0, 0, 1, 1], [], []>} : vector<104x20xbf16>, vector<20x50xbf16>, vector<104x50xf32> -> vector<104x50xf32>
    %132 = arith.addf %127, %131 : vector<104x50xf32>
    %c51 = arith.constant 51 : index
    %c0_113 = arith.constant 0 : index
    %133 = vector.load %arg10[%c51, %c0_113] : memref<160x20xbf16, #tpu.memory_space<vmem>>, vector<104x20xbf16>
    %c23 = arith.constant 23 : index
    %c0_114 = arith.constant 0 : index
    %c0_115 = arith.constant 0 : index
    %134 = vector.load %arg3[%c23, %c0_114, %c0_115] : memref<25x20x50xbf16, #tpu.memory_space<vmem>>, vector<1x20x50xbf16>
    %135 = vector.shape_cast %134 : vector<1x20x50xbf16> to vector<20x50xbf16>
    %cst_116 = arith.constant dense<0.000000e+00> : vector<104x50xf32>
    %136 = tpu.matmul %133, %135, %cst_116 {dimension_numbers = #tpu.dot_dimension_numbers<[1], [0], [0], [1], [0, 0, 1, 1], [], []>} : vector<104x20xbf16>, vector<20x50xbf16>, vector<104x50xf32> -> vector<104x50xf32>
    %137 = arith.addf %132, %136 : vector<104x50xf32>
    %c52 = arith.constant 52 : index
    %c0_117 = arith.constant 0 : index
    %138 = vector.load %arg10[%c52, %c0_117] : memref<160x20xbf16, #tpu.memory_space<vmem>>, vector<104x20xbf16>
    %c24_118 = arith.constant 24 : index
    %c0_119 = arith.constant 0 : index
    %c0_120 = arith.constant 0 : index
    %139 = vector.load %arg3[%c24_118, %c0_119, %c0_120] : memref<25x20x50xbf16, #tpu.memory_space<vmem>>, vector<1x20x50xbf16>
    %140 = vector.shape_cast %139 : vector<1x20x50xbf16> to vector<20x50xbf16>
    %cst_121 = arith.constant dense<0.000000e+00> : vector<104x50xf32>
    %141 = tpu.matmul %138, %140, %cst_121 {dimension_numbers = #tpu.dot_dimension_numbers<[1], [0], [0], [1], [0, 0, 1, 1], [], []>} : vector<104x20xbf16>, vector<20x50xbf16>, vector<104x50xf32> -> vector<104x50xf32>
    %142 = arith.addf %137, %141 : vector<104x50xf32>
    %c0_122 = arith.constant 0 : index
    %c0_123 = arith.constant 0 : index
    %143 = vector.load %arg4[%c0_122, %c0_123] : memref<1x50xf32, #tpu.memory_space<vmem>>, vector<1x50xf32>
    %144 = vector.broadcast %143 : vector<1x50xf32> to vector<104x50xf32>
    %145 = arith.addf %142, %144 : vector<104x50xf32>
    %146 = vector.extract_strided_slice %145 {offsets = [0, 0], sizes = [96, 50], strides = [1, 1]} : vector<104x50xf32> to vector<96x50xf32>
    %147 = vector.extract_strided_slice %145 {offsets = [1, 0], sizes = [96, 50], strides = [1, 1]} : vector<104x50xf32> to vector<96x50xf32>
    %148 = arith.maximumf %146, %147 : vector<96x50xf32>
    %149 = vector.extract_strided_slice %148 {offsets = [0, 0], sizes = [80, 50], strides = [1, 1]} : vector<96x50xf32> to vector<80x50xf32>
    %150 = vector.extract_strided_slice %148 {offsets = [12, 0], sizes = [80, 50], strides = [1, 1]} : vector<96x50xf32> to vector<80x50xf32>
    %151 = arith.maximumf %149, %150 : vector<80x50xf32>
    %cst_124 = arith.constant 0.000000e+00 : f32
    %152 = vector.broadcast %cst_124 : f32 to vector<1x500xf32>
    %153 = vector.extract_strided_slice %151 {offsets = [0, 0], sizes = [1, 50], strides = [1, 1]} : vector<80x50xf32> to vector<1x50xf32>
    %154 = arith.truncf %153 : vector<1x50xf32> to vector<1x50xbf16>
    %c0_125 = arith.constant 0 : index
    %c0_126 = arith.constant 0 : index
    %c0_127 = arith.constant 0 : index
    %155 = vector.load %arg5[%c0_125, %c0_126, %c0_127] : memref<16x50x500xbf16, #tpu.memory_space<vmem>>, vector<1x50x500xbf16>
    %156 = vector.shape_cast %155 : vector<1x50x500xbf16> to vector<50x500xbf16>
    %cst_128 = arith.constant dense<0.000000e+00> : vector<1x500xf32>
    %157 = tpu.matmul %154, %156, %cst_128 {dimension_numbers = #tpu.dot_dimension_numbers<[1], [0], [0], [1], [0, 0, 1, 1], [], []>} : vector<1x50xbf16>, vector<50x500xbf16>, vector<1x500xf32> -> vector<1x500xf32>
    %158 = arith.addf %152, %157 : vector<1x500xf32>
    %159 = vector.extract_strided_slice %151 {offsets = [2, 0], sizes = [1, 50], strides = [1, 1]} : vector<80x50xf32> to vector<1x50xf32>
    %160 = arith.truncf %159 : vector<1x50xf32> to vector<1x50xbf16>
    %c1_129 = arith.constant 1 : index
    %c0_130 = arith.constant 0 : index
    %c0_131 = arith.constant 0 : index
    %161 = vector.load %arg5[%c1_129, %c0_130, %c0_131] : memref<16x50x500xbf16, #tpu.memory_space<vmem>>, vector<1x50x500xbf16>
    %162 = vector.shape_cast %161 : vector<1x50x500xbf16> to vector<50x500xbf16>
    %cst_132 = arith.constant dense<0.000000e+00> : vector<1x500xf32>
    %163 = tpu.matmul %160, %162, %cst_132 {dimension_numbers = #tpu.dot_dimension_numbers<[1], [0], [0], [1], [0, 0, 1, 1], [], []>} : vector<1x50xbf16>, vector<50x500xbf16>, vector<1x500xf32> -> vector<1x500xf32>
    %164 = arith.addf %158, %163 : vector<1x500xf32>
    %165 = vector.extract_strided_slice %151 {offsets = [4, 0], sizes = [1, 50], strides = [1, 1]} : vector<80x50xf32> to vector<1x50xf32>
    %166 = arith.truncf %165 : vector<1x50xf32> to vector<1x50xbf16>
    %c2_133 = arith.constant 2 : index
    %c0_134 = arith.constant 0 : index
    %c0_135 = arith.constant 0 : index
    %167 = vector.load %arg5[%c2_133, %c0_134, %c0_135] : memref<16x50x500xbf16, #tpu.memory_space<vmem>>, vector<1x50x500xbf16>
    %168 = vector.shape_cast %167 : vector<1x50x500xbf16> to vector<50x500xbf16>
    %cst_136 = arith.constant dense<0.000000e+00> : vector<1x500xf32>
    %169 = tpu.matmul %166, %168, %cst_136 {dimension_numbers = #tpu.dot_dimension_numbers<[1], [0], [0], [1], [0, 0, 1, 1], [], []>} : vector<1x50xbf16>, vector<50x500xbf16>, vector<1x500xf32> -> vector<1x500xf32>
    %170 = arith.addf %164, %169 : vector<1x500xf32>
    %171 = vector.extract_strided_slice %151 {offsets = [6, 0], sizes = [1, 50], strides = [1, 1]} : vector<80x50xf32> to vector<1x50xf32>
    %172 = arith.truncf %171 : vector<1x50xf32> to vector<1x50xbf16>
    %c3_137 = arith.constant 3 : index
    %c0_138 = arith.constant 0 : index
    %c0_139 = arith.constant 0 : index
    %173 = vector.load %arg5[%c3_137, %c0_138, %c0_139] : memref<16x50x500xbf16, #tpu.memory_space<vmem>>, vector<1x50x500xbf16>
    %174 = vector.shape_cast %173 : vector<1x50x500xbf16> to vector<50x500xbf16>
    %cst_140 = arith.constant dense<0.000000e+00> : vector<1x500xf32>
    %175 = tpu.matmul %172, %174, %cst_140 {dimension_numbers = #tpu.dot_dimension_numbers<[1], [0], [0], [1], [0, 0, 1, 1], [], []>} : vector<1x50xbf16>, vector<50x500xbf16>, vector<1x500xf32> -> vector<1x500xf32>
    %176 = arith.addf %170, %175 : vector<1x500xf32>
    %177 = vector.extract_strided_slice %151 {offsets = [24, 0], sizes = [1, 50], strides = [1, 1]} : vector<80x50xf32> to vector<1x50xf32>
    %178 = arith.truncf %177 : vector<1x50xf32> to vector<1x50xbf16>
    %c4_141 = arith.constant 4 : index
    %c0_142 = arith.constant 0 : index
    %c0_143 = arith.constant 0 : index
    %179 = vector.load %arg5[%c4_141, %c0_142, %c0_143] : memref<16x50x500xbf16, #tpu.memory_space<vmem>>, vector<1x50x500xbf16>
    %180 = vector.shape_cast %179 : vector<1x50x500xbf16> to vector<50x500xbf16>
    %cst_144 = arith.constant dense<0.000000e+00> : vector<1x500xf32>
    %181 = tpu.matmul %178, %180, %cst_144 {dimension_numbers = #tpu.dot_dimension_numbers<[1], [0], [0], [1], [0, 0, 1, 1], [], []>} : vector<1x50xbf16>, vector<50x500xbf16>, vector<1x500xf32> -> vector<1x500xf32>
    %182 = arith.addf %176, %181 : vector<1x500xf32>
    %183 = vector.extract_strided_slice %151 {offsets = [26, 0], sizes = [1, 50], strides = [1, 1]} : vector<80x50xf32> to vector<1x50xf32>
    %184 = arith.truncf %183 : vector<1x50xf32> to vector<1x50xbf16>
    %c5_145 = arith.constant 5 : index
    %c0_146 = arith.constant 0 : index
    %c0_147 = arith.constant 0 : index
    %185 = vector.load %arg5[%c5_145, %c0_146, %c0_147] : memref<16x50x500xbf16, #tpu.memory_space<vmem>>, vector<1x50x500xbf16>
    %186 = vector.shape_cast %185 : vector<1x50x500xbf16> to vector<50x500xbf16>
    %cst_148 = arith.constant dense<0.000000e+00> : vector<1x500xf32>
    %187 = tpu.matmul %184, %186, %cst_148 {dimension_numbers = #tpu.dot_dimension_numbers<[1], [0], [0], [1], [0, 0, 1, 1], [], []>} : vector<1x50xbf16>, vector<50x500xbf16>, vector<1x500xf32> -> vector<1x500xf32>
    %188 = arith.addf %182, %187 : vector<1x500xf32>
    %189 = vector.extract_strided_slice %151 {offsets = [28, 0], sizes = [1, 50], strides = [1, 1]} : vector<80x50xf32> to vector<1x50xf32>
    %190 = arith.truncf %189 : vector<1x50xf32> to vector<1x50xbf16>
    %c6_149 = arith.constant 6 : index
    %c0_150 = arith.constant 0 : index
    %c0_151 = arith.constant 0 : index
    %191 = vector.load %arg5[%c6_149, %c0_150, %c0_151] : memref<16x50x500xbf16, #tpu.memory_space<vmem>>, vector<1x50x500xbf16>
    %192 = vector.shape_cast %191 : vector<1x50x500xbf16> to vector<50x500xbf16>
    %cst_152 = arith.constant dense<0.000000e+00> : vector<1x500xf32>
    %193 = tpu.matmul %190, %192, %cst_152 {dimension_numbers = #tpu.dot_dimension_numbers<[1], [0], [0], [1], [0, 0, 1, 1], [], []>} : vector<1x50xbf16>, vector<50x500xbf16>, vector<1x500xf32> -> vector<1x500xf32>
    %194 = arith.addf %188, %193 : vector<1x500xf32>
    %195 = vector.extract_strided_slice %151 {offsets = [30, 0], sizes = [1, 50], strides = [1, 1]} : vector<80x50xf32> to vector<1x50xf32>
    %196 = arith.truncf %195 : vector<1x50xf32> to vector<1x50xbf16>
    %c7_153 = arith.constant 7 : index
    %c0_154 = arith.constant 0 : index
    %c0_155 = arith.constant 0 : index
    %197 = vector.load %arg5[%c7_153, %c0_154, %c0_155] : memref<16x50x500xbf16, #tpu.memory_space<vmem>>, vector<1x50x500xbf16>
    %198 = vector.shape_cast %197 : vector<1x50x500xbf16> to vector<50x500xbf16>
    %cst_156 = arith.constant dense<0.000000e+00> : vector<1x500xf32>
    %199 = tpu.matmul %196, %198, %cst_156 {dimension_numbers = #tpu.dot_dimension_numbers<[1], [0], [0], [1], [0, 0, 1, 1], [], []>} : vector<1x50xbf16>, vector<50x500xbf16>, vector<1x500xf32> -> vector<1x500xf32>
    %200 = arith.addf %194, %199 : vector<1x500xf32>
    %201 = vector.extract_strided_slice %151 {offsets = [48, 0], sizes = [1, 50], strides = [1, 1]} : vector<80x50xf32> to vector<1x50xf32>
    %202 = arith.truncf %201 : vector<1x50xf32> to vector<1x50xbf16>
    %c8_157 = arith.constant 8 : index
    %c0_158 = arith.constant 0 : index
    %c0_159 = arith.constant 0 : index
    %203 = vector.load %arg5[%c8_157, %c0_158, %c0_159] : memref<16x50x500xbf16, #tpu.memory_space<vmem>>, vector<1x50x500xbf16>
    %204 = vector.shape_cast %203 : vector<1x50x500xbf16> to vector<50x500xbf16>
    %cst_160 = arith.constant dense<0.000000e+00> : vector<1x500xf32>
    %205 = tpu.matmul %202, %204, %cst_160 {dimension_numbers = #tpu.dot_dimension_numbers<[1], [0], [0], [1], [0, 0, 1, 1], [], []>} : vector<1x50xbf16>, vector<50x500xbf16>, vector<1x500xf32> -> vector<1x500xf32>
    %206 = arith.addf %200, %205 : vector<1x500xf32>
    %207 = vector.extract_strided_slice %151 {offsets = [50, 0], sizes = [1, 50], strides = [1, 1]} : vector<80x50xf32> to vector<1x50xf32>
    %208 = arith.truncf %207 : vector<1x50xf32> to vector<1x50xbf16>
    %c9_161 = arith.constant 9 : index
    %c0_162 = arith.constant 0 : index
    %c0_163 = arith.constant 0 : index
    %209 = vector.load %arg5[%c9_161, %c0_162, %c0_163] : memref<16x50x500xbf16, #tpu.memory_space<vmem>>, vector<1x50x500xbf16>
    %210 = vector.shape_cast %209 : vector<1x50x500xbf16> to vector<50x500xbf16>
    %cst_164 = arith.constant dense<0.000000e+00> : vector<1x500xf32>
    %211 = tpu.matmul %208, %210, %cst_164 {dimension_numbers = #tpu.dot_dimension_numbers<[1], [0], [0], [1], [0, 0, 1, 1], [], []>} : vector<1x50xbf16>, vector<50x500xbf16>, vector<1x500xf32> -> vector<1x500xf32>
    %212 = arith.addf %206, %211 : vector<1x500xf32>
    %213 = vector.extract_strided_slice %151 {offsets = [52, 0], sizes = [1, 50], strides = [1, 1]} : vector<80x50xf32> to vector<1x50xf32>
    %214 = arith.truncf %213 : vector<1x50xf32> to vector<1x50xbf16>
    %c10_165 = arith.constant 10 : index
    %c0_166 = arith.constant 0 : index
    %c0_167 = arith.constant 0 : index
    %215 = vector.load %arg5[%c10_165, %c0_166, %c0_167] : memref<16x50x500xbf16, #tpu.memory_space<vmem>>, vector<1x50x500xbf16>
    %216 = vector.shape_cast %215 : vector<1x50x500xbf16> to vector<50x500xbf16>
    %cst_168 = arith.constant dense<0.000000e+00> : vector<1x500xf32>
    %217 = tpu.matmul %214, %216, %cst_168 {dimension_numbers = #tpu.dot_dimension_numbers<[1], [0], [0], [1], [0, 0, 1, 1], [], []>} : vector<1x50xbf16>, vector<50x500xbf16>, vector<1x500xf32> -> vector<1x500xf32>
    %218 = arith.addf %212, %217 : vector<1x500xf32>
    %219 = vector.extract_strided_slice %151 {offsets = [54, 0], sizes = [1, 50], strides = [1, 1]} : vector<80x50xf32> to vector<1x50xf32>
    %220 = arith.truncf %219 : vector<1x50xf32> to vector<1x50xbf16>
    %c11_169 = arith.constant 11 : index
    %c0_170 = arith.constant 0 : index
    %c0_171 = arith.constant 0 : index
    %221 = vector.load %arg5[%c11_169, %c0_170, %c0_171] : memref<16x50x500xbf16, #tpu.memory_space<vmem>>, vector<1x50x500xbf16>
    %222 = vector.shape_cast %221 : vector<1x50x500xbf16> to vector<50x500xbf16>
    %cst_172 = arith.constant dense<0.000000e+00> : vector<1x500xf32>
    %223 = tpu.matmul %220, %222, %cst_172 {dimension_numbers = #tpu.dot_dimension_numbers<[1], [0], [0], [1], [0, 0, 1, 1], [], []>} : vector<1x50xbf16>, vector<50x500xbf16>, vector<1x500xf32> -> vector<1x500xf32>
    %224 = arith.addf %218, %223 : vector<1x500xf32>
    %225 = vector.extract_strided_slice %151 {offsets = [72, 0], sizes = [1, 50], strides = [1, 1]} : vector<80x50xf32> to vector<1x50xf32>
    %226 = arith.truncf %225 : vector<1x50xf32> to vector<1x50xbf16>
    %c12_173 = arith.constant 12 : index
    %c0_174 = arith.constant 0 : index
    %c0_175 = arith.constant 0 : index
    %227 = vector.load %arg5[%c12_173, %c0_174, %c0_175] : memref<16x50x500xbf16, #tpu.memory_space<vmem>>, vector<1x50x500xbf16>
    %228 = vector.shape_cast %227 : vector<1x50x500xbf16> to vector<50x500xbf16>
    %cst_176 = arith.constant dense<0.000000e+00> : vector<1x500xf32>
    %229 = tpu.matmul %226, %228, %cst_176 {dimension_numbers = #tpu.dot_dimension_numbers<[1], [0], [0], [1], [0, 0, 1, 1], [], []>} : vector<1x50xbf16>, vector<50x500xbf16>, vector<1x500xf32> -> vector<1x500xf32>
    %230 = arith.addf %224, %229 : vector<1x500xf32>
    %231 = vector.extract_strided_slice %151 {offsets = [74, 0], sizes = [1, 50], strides = [1, 1]} : vector<80x50xf32> to vector<1x50xf32>
    %232 = arith.truncf %231 : vector<1x50xf32> to vector<1x50xbf16>
    %c13_177 = arith.constant 13 : index
    %c0_178 = arith.constant 0 : index
    %c0_179 = arith.constant 0 : index
    %233 = vector.load %arg5[%c13_177, %c0_178, %c0_179] : memref<16x50x500xbf16, #tpu.memory_space<vmem>>, vector<1x50x500xbf16>
    %234 = vector.shape_cast %233 : vector<1x50x500xbf16> to vector<50x500xbf16>
    %cst_180 = arith.constant dense<0.000000e+00> : vector<1x500xf32>
    %235 = tpu.matmul %232, %234, %cst_180 {dimension_numbers = #tpu.dot_dimension_numbers<[1], [0], [0], [1], [0, 0, 1, 1], [], []>} : vector<1x50xbf16>, vector<50x500xbf16>, vector<1x500xf32> -> vector<1x500xf32>
    %236 = arith.addf %230, %235 : vector<1x500xf32>
    %237 = vector.extract_strided_slice %151 {offsets = [76, 0], sizes = [1, 50], strides = [1, 1]} : vector<80x50xf32> to vector<1x50xf32>
    %238 = arith.truncf %237 : vector<1x50xf32> to vector<1x50xbf16>
    %c14_181 = arith.constant 14 : index
    %c0_182 = arith.constant 0 : index
    %c0_183 = arith.constant 0 : index
    %239 = vector.load %arg5[%c14_181, %c0_182, %c0_183] : memref<16x50x500xbf16, #tpu.memory_space<vmem>>, vector<1x50x500xbf16>
    %240 = vector.shape_cast %239 : vector<1x50x500xbf16> to vector<50x500xbf16>
    %cst_184 = arith.constant dense<0.000000e+00> : vector<1x500xf32>
    %241 = tpu.matmul %238, %240, %cst_184 {dimension_numbers = #tpu.dot_dimension_numbers<[1], [0], [0], [1], [0, 0, 1, 1], [], []>} : vector<1x50xbf16>, vector<50x500xbf16>, vector<1x500xf32> -> vector<1x500xf32>
    %242 = arith.addf %236, %241 : vector<1x500xf32>
    %243 = vector.extract_strided_slice %151 {offsets = [78, 0], sizes = [1, 50], strides = [1, 1]} : vector<80x50xf32> to vector<1x50xf32>
    %244 = arith.truncf %243 : vector<1x50xf32> to vector<1x50xbf16>
    %c15_185 = arith.constant 15 : index
    %c0_186 = arith.constant 0 : index
    %c0_187 = arith.constant 0 : index
    %245 = vector.load %arg5[%c15_185, %c0_186, %c0_187] : memref<16x50x500xbf16, #tpu.memory_space<vmem>>, vector<1x50x500xbf16>
    %246 = vector.shape_cast %245 : vector<1x50x500xbf16> to vector<50x500xbf16>
    %cst_188 = arith.constant dense<0.000000e+00> : vector<1x500xf32>
    %247 = tpu.matmul %244, %246, %cst_188 {dimension_numbers = #tpu.dot_dimension_numbers<[1], [0], [0], [1], [0, 0, 1, 1], [], []>} : vector<1x50xbf16>, vector<50x500xbf16>, vector<1x500xf32> -> vector<1x500xf32>
    %248 = arith.addf %242, %247 : vector<1x500xf32>
    %c0_189 = arith.constant 0 : index
    %c0_190 = arith.constant 0 : index
    %249 = vector.load %arg6[%c0_189, %c0_190] : memref<1x500xf32, #tpu.memory_space<vmem>>, vector<1x500xf32>
    %250 = arith.addf %248, %249 : vector<1x500xf32>
    %cst_191 = arith.constant 0.000000e+00 : f32
    %251 = vector.broadcast %cst_191 : f32 to vector<1x500xf32>
    %252 = arith.maximumf %250, %251 : vector<1x500xf32>
    %253 = arith.truncf %252 : vector<1x500xf32> to vector<1x500xbf16>
    %c0_192 = arith.constant 0 : index
    %c0_193 = arith.constant 0 : index
    %254 = vector.load %arg7[%c0_192, %c0_193] : memref<500x128xbf16, #tpu.memory_space<vmem>>, vector<500x128xbf16>
    %cst_194 = arith.constant dense<0.000000e+00> : vector<1x128xf32>
    %255 = tpu.matmul %253, %254, %cst_194 {dimension_numbers = #tpu.dot_dimension_numbers<[1], [0], [0], [1], [0, 0, 1, 1], [], []>} : vector<1x500xbf16>, vector<500x128xbf16>, vector<1x128xf32> -> vector<1x128xf32>
    %c0_195 = arith.constant 0 : index
    %c0_196 = arith.constant 0 : index
    %256 = vector.load %arg8[%c0_195, %c0_196] : memref<1x128xf32, #tpu.memory_space<vmem>>, vector<1x128xf32>
    %257 = arith.addf %255, %256 : vector<1x128xf32>
    %258 = math.tanh %257 : vector<1x128xf32>
    %c0_197 = arith.constant 0 : index
    %c0_198 = arith.constant 0 : index
    %259 = vector.load %arg9[%c0_197, %c0_198] : memref<1x128xf32, #tpu.memory_space<vmem>>, vector<1x128xf32>
    tpu.vector_store %arg9[%c0_197, %c0_198], %258 {strides = array<i32>} : memref<1x128xf32, #tpu.memory_space<vmem>>, vector<1x128xf32>,
    return
  }
}

</mosaic_0001>

<llo_original>
// kernel: lenet_forward.1
$region0: #{lenet_forward.1}
  #allocation0 [shape = 'u32[]', space=smem, size = 0x4, offset = 0x4, fixed_abs, tag = 'smem constant byte address 0x4 - core index']
  #allocation1 [shape = 'u32[144,128]{1,0:T(1,128)}', space=vmem, size = 0x12000, scoped, tag = 'internal scratch']
  #allocation2 [shape = 'bf16[160,20]{1,0:T(16,128)(2,1)}', space=vmem, size = 0xa000, scoped, tag = 'scratch operand']
  %s0 = inlined_call_operand.vmem [shape: bf16[576,25], index: 0, kind: input, shape index: {}]
  %s1 = inlined_call_operand.vmem [shape: bf16[25,20], index: 1, kind: input, shape index: {}]
  %s2 = inlined_call_operand.vmem [shape: f32[1,20], index: 2, kind: input, shape index: {}]
  %s3 = inlined_call_operand.vmem [shape: bf16[25,20,50], index: 3, kind: input, shape index: {}]
  %s4 = inlined_call_operand.vmem [shape: f32[1,50], index: 4, kind: input, shape index: {}]
  %s5 = inlined_call_operand.vmem [shape: bf16[16,50,500], index: 5, kind: input, shape index: {}]
  %s6 = inlined_call_operand.vmem [shape: f32[1,500], index: 6, kind: input, shape index: {}]
  %s7 = inlined_call_operand.vmem [shape: bf16[500,128], index: 7, kind: input, shape index: {}]
  %s8 = inlined_call_operand.vmem [shape: f32[1,128], index: 8, kind: input, shape index: {}]
  %s9 = inlined_call_operand.hbm [shape: f32[1,128], index: 9, kind: output, shape index: {}]
  %s10 = sld [smem:[#allocation0]]
  $region46: #{lenet_forward.1} parent=0
    _
  %s12 = ssub.s32 1, %s10
  %s13 = scalar_select 0, %s12, %s10
  $region1: #{lenet_forward.1} parent=0
    #allocation3 [shape = 'u8[512]{0}', space=vmem, size = 0x400, scoped, tag = 'output window, operand 0, single buffered']
    #allocation4 [shape = 's32[1]{0}', space=sflag, size = 0x4, scoped, tag = 'scoped memory for lenet_forward.1']
    %14 = vsyncpa [#allocation4], 0
    // Predicated region
    $region2: #{lenet_forward.1} parent=1 // pred_check
      _
    $region3: #{lenet_forward.1} parent=1 // pred_check_branch
      %16 = sbr.rel (0) target = $region5
    $region4: #{lenet_forward.1} parent=1 // pred_region
      _
    $region5: #{lenet_forward.1} parent=1 // pred_fallthru
      _
    // Predicated region
    $region6: #{lenet_forward.1} parent=1 // pred_check
      _
    $region7: #{lenet_forward.1} parent=1 // pred_check_branch
      %18 = sbr.rel (0) target = $region9
    $region8: #{lenet_forward.1} parent=1 // pred_region
      _
    $region9: #{lenet_forward.1} parent=1 // pred_fallthru
      _
    // Predicated region
    $region10: #{lenet_forward.1} parent=1 // pred_check
      _
    $region11: #{lenet_forward.1} parent=1 // pred_check_branch
      %20 = sbr.rel (0) target = $region13
    $region12: #{lenet_forward.1} parent=1 // pred_region
      _
    $region13: #{lenet_forward.1} parent=1 // pred_fallthru
      _
    // Predicated region
    $region14: #{lenet_forward.1} parent=1 // pred_check
      _
    $region15: #{lenet_forward.1} parent=1 // pred_check_branch
      %22 = sbr.rel (0) target = $region17
    $region16: #{lenet_forward.1} parent=1 // pred_region
      _
    $region17: #{lenet_forward.1} parent=1 // pred_fallthru
      _
    // Predicated region
    $region18: #{lenet_forward.1} parent=1 // pred_check
      _
    $region19: #{lenet_forward.1} parent=1 // pred_check_branch
      %24 = sbr.rel (0) target = $region21
    $region20: #{lenet_forward.1} parent=1 // pred_region
      _
    $region21: #{lenet_forward.1} parent=1 // pred_fallthru
      _
    // Predicated region
    $region22: #{lenet_forward.1} parent=1 // pred_check
      _
    $region23: #{lenet_forward.1} parent=1 // pred_check_branch
      %26 = sbr.rel (0) target = $region25
    $region24: #{lenet_forward.1} parent=1 // pred_region
      _
    $region25: #{lenet_forward.1} parent=1 // pred_fallthru
      _
    // Predicated region
    $region26: #{lenet_forward.1} parent=1 // pred_check
      _
    $region27: #{lenet_forward.1} parent=1 // pred_check_branch
      %28 = sbr.rel (0) target = $region29
    $region28: #{lenet_forward.1} parent=1 // pred_region
      _
    $region29: #{lenet_forward.1} parent=1 // pred_fallthru
      _
    // Predicated region
    $region30: #{lenet_forward.1} parent=1 // pred_check
      _
    $region31: #{lenet_forward.1} parent=1 // pred_check_branch
      %30 = sbr.rel (0) target = $region33
    $region32: #{lenet_forward.1} parent=1 // pred_region
      _
    $region33: #{lenet_forward.1} parent=1 // pred_fallthru
      _
    // Predicated region
    $region34: #{lenet_forward.1} parent=1 // pred_check
      _
    $region35: #{lenet_forward.1} parent=1 // pred_check_branch
      %32 = sbr.rel (0) target = $region37
    $region36: #{lenet_forward.1} parent=1 // pred_region
      _
    $region37: #{lenet_forward.1} parent=1 // pred_fallthru
      _
    %v34 = vld [vmem:[%s0] sm:$0xf]
    %v35 = vld [vmem:[%s0 + $0x4] sm:$0xf]
    %v36 = vld [vmem:[%s0 + $0x8] sm:$0xf]
    %v37 = vld [vmem:[%s0 + $0xc] sm:$0xf]
    %v38 = vld [vmem:[%s0 + $0x10] sm:$0xf]
    %v39 = vld [vmem:[%s0 + $0x14] sm:$0xf]
    %v40 = vld [vmem:[%s0 + $0x18] sm:$0xf]
    %v41 = vld [vmem:[%s0 + $0x1c] sm:$0xf]
    %v42 = vld [vmem:[%s0 + $0x20] sm:$0xf]
    %v43 = vld [vmem:[%s0 + $0x24] sm:$0xf]
    %v44 = vld [vmem:[%s0 + $0x28] sm:$0xf]
    %v45 = vld [vmem:[%s0 + $0x2c] sm:$0xf]
    %v46 = vld [vmem:[%s0 + $0x30] sm:$0xf]
    %v47 = vld [vmem:[%s0 + $0x34] sm:$0xf]
    %v48 = vld [vmem:[%s0 + $0x38] sm:$0xf]
    %v49 = vld [vmem:[%s0 + $0x3c] sm:$0xf]
    %v50 = vld [vmem:[%s0 + $0x40] sm:$0xf]
    %v51 = vld [vmem:[%s0 + $0x44] sm:$0xf]
    %v52 = vld [vmem:[%s0 + $0x48] sm:$0xf]
    %v53 = vld [vmem:[%s0 + $0x4c] sm:$0xf]
    %v54 = vld [vmem:[%s0 + $0x50] sm:$0xf]
    %v55 = vld [vmem:[%s0 + $0x54] sm:$0xf]
    %v56 = vld [vmem:[%s0 + $0x58] sm:$0xf]
    %v57 = vld [vmem:[%s0 + $0x5c] sm:$0xf]
    %v58 = vld [vmem:[%s0 + $0x60] sm:$0xf]
    %v59 = vld [vmem:[%s0 + $0x64] sm:$0xf]
    %v60 = vld [vmem:[%s0 + $0x68] sm:$0xf]
    %v61 = vld [vmem:[%s0 + $0x6c] sm:$0xf]
    %v62 = vld [vmem:[%s0 + $0x70] sm:$0xf]
    %v63 = vld [vmem:[%s0 + $0x74] sm:$0xf]
    %v64 = vld [vmem:[%s0 + $0x78] sm:$0xf]
    %v65 = vld [vmem:[%s0 + $0x7c] sm:$0xf]
    %v66 = vld [vmem:[%s0 + $0x80] sm:$0xf]
    %v67 = vld [vmem:[%s0 + $0x84] sm:$0xf]
    %v68 = vld [vmem:[%s0 + $0x88] sm:$0xf]
    %v69 = vld [vmem:[%s0 + $0x8c] sm:$0xf]
    %v70 = vld [vmem:[%s0 + $0x90] sm:$0xf]
    %v71 = vld [vmem:[%s0 + $0x94] sm:$0xf]
    %v72 = vld [vmem:[%s0 + $0x98] sm:$0xf]
    %v73 = vld [vmem:[%s0 + $0x9c] sm:$0xf]
    %v74 = vld [vmem:[%s0 + $0xa0] sm:$0xf]
    %v75 = vld [vmem:[%s0 + $0xa4] sm:$0xf]
    %v76 = vld [vmem:[%s0 + $0xa8] sm:$0xf]
    %v77 = vld [vmem:[%s0 + $0xac] sm:$0xf]
    %v78 = vld [vmem:[%s0 + $0xb0] sm:$0xf]
    %v79 = vld [vmem:[%s0 + $0xb4] sm:$0xf]
    %v80 = vld [vmem:[%s0 + $0xb8] sm:$0xf]
    %v81 = vld [vmem:[%s0 + $0xbc] sm:$0xf]
    %v82 = vld [vmem:[%s0 + $0xc0] sm:$0xf]
    %v83 = vld [vmem:[%s0 + $0xc4] sm:$0xf]
    %v84 = vld [vmem:[%s0 + $0xc8] sm:$0xf]
    %v85 = vld [vmem:[%s0 + $0xcc] sm:$0xf]
    %v86 = vld [vmem:[%s0 + $0xd0] sm:$0xf]
    %v87 = vld [vmem:[%s0 + $0xd4] sm:$0xf]
    %v88 = vld [vmem:[%s0 + $0xd8] sm:$0xf]
    %v89 = vld [vmem:[%s0 + $0xdc] sm:$0xf]
    %v90 = vld [vmem:[%s0 + $0xe0] sm:$0xf]
    %v91 = vld [vmem:[%s0 + $0xe4] sm:$0xf]
    %v92 = vld [vmem:[%s0 + $0xe8] sm:$0xf]
    %v93 = vld [vmem:[%s0 + $0xec] sm:$0xf]
    %v94 = vld [vmem:[%s0 + $0xf0] sm:$0xf]
    %v95 = vld [vmem:[%s0 + $0xf4] sm:$0xf]
    %v96 = vld [vmem:[%s0 + $0xf8] sm:$0xf]
    %v97 = vld [vmem:[%s0 + $0xfc] sm:$0xf]
    %v98 = vld [vmem:[%s0 + $0x100] sm:$0xf]
    %v99 = vld [vmem:[%s0 + $0x104] sm:$0xf]
    %v100 = vld [vmem:[%s0 + $0x108] sm:$0xf]
    %v101 = vld [vmem:[%s0 + $0x10c] sm:$0xf]
    %v102 = vld [vmem:[%s0 + $0x110] sm:$0xf]
    %v103 = vld [vmem:[%s0 + $0x114] sm:$0xf]
    %v104 = vld [vmem:[%s0 + $0x118] sm:$0xf]
    %v105 = vld [vmem:[%s0 + $0x11c] sm:$0xf]
    %v106 = vld [vmem:[%s1] sm:$0xf]
    %v107 = vld [vmem:[%s1 + $0x4] sm:$0xf]
    %v108 = vld [vmem:[%s1 + $0x8] sm:$0xf]
    %v109 = vld [vmem:[%s1 + $0xc] sm:$0x1]
    %v182 = vunpack.c.l.b16 %v34
    %v183 = vunpack.c.l.b16 %v35
    %v184 = vunpack.c.l.b16 %v36
    %v185 = vunpack.c.l.b16 %v37
    %v186 = vunpack.c.l.b16 %v38
    %v187 = vunpack.c.l.b16 %v39
    %v188 = vunpack.c.l.b16 %v40
    %v189 = vunpack.c.l.b16 %v41
    %v190 = vunpack.c.l.b16 %v42
    %v191 = vunpack.c.l.b16 %v43
    %v192 = vunpack.c.l.b16 %v44
    %v193 = vunpack.c.l.b16 %v45
    %v194 = vunpack.c.l.b16 %v46
    %v195 = vunpack.c.l.b16 %v47
    %v196 = vunpack.c.l.b16 %v48
    %v197 = vunpack.c.l.b16 %v49
    %v198 = vunpack.c.l.b16 %v50
    %v199 = vunpack.c.l.b16 %v51
    %v200 = vunpack.c.l.b16 %v52
    %v201 = vunpack.c.l.b16 %v53
    %v202 = vunpack.c.l.b16 %v54
    %v203 = vunpack.c.l.b16 %v55
    %v204 = vunpack.c.l.b16 %v56
    %v205 = vunpack.c.l.b16 %v57
    %v206 = vunpack.c.l.b16 %v58
    %v207 = vunpack.c.l.b16 %v59
    %v208 = vunpack.c.l.b16 %v60
    %v209 = vunpack.c.l.b16 %v61
    %v210 = vunpack.c.l.b16 %v62
    %v211 = vunpack.c.l.b16 %v63
    %v212 = vunpack.c.l.b16 %v64
    %v213 = vunpack.c.l.b16 %v65
    %v214 = vunpack.c.l.b16 %v66
    %v215 = vunpack.c.l.b16 %v67
    %v216 = vunpack.c.l.b16 %v68
    %v217 = vunpack.c.l.b16 %v69
    %v218 = vunpack.c.l.b16 %v70
    %v219 = vunpack.c.l.b16 %v71
    %v220 = vunpack.c.l.b16 %v72
    %v221 = vunpack.c.l.b16 %v73
    %v222 = vunpack.c.l.b16 %v74
    %v223 = vunpack.c.l.b16 %v75
    %v224 = vunpack.c.l.b16 %v76
    %v225 = vunpack.c.l.b16 %v77
    %v226 = vunpack.c.l.b16 %v78
    %v227 = vunpack.c.l.b16 %v79
    %v228 = vunpack.c.l.b16 %v80
    %v229 = vunpack.c.l.b16 %v81
    %v230 = vunpack.c.l.b16 %v82
    %v231 = vunpack.c.l.b16 %v83
    %v232 = vunpack.c.l.b16 %v84
    %v233 = vunpack.c.l.b16 %v85
    %v234 = vunpack.c.l.b16 %v86
    %v235 = vunpack.c.l.b16 %v87
    %v236 = vunpack.c.l.b16 %v88
    %v237 = vunpack.c.l.b16 %v89
    %v238 = vunpack.c.l.b16 %v90
    %v239 = vunpack.c.l.b16 %v91
    %v240 = vunpack.c.l.b16 %v92
    %v241 = vunpack.c.l.b16 %v93
    %v242 = vunpack.c.l.b16 %v94
    %v243 = vunpack.c.l.b16 %v95
    %v244 = vunpack.c.l.b16 %v96
    %v245 = vunpack.c.l.b16 %v97
    %v246 = vunpack.c.l.b16 %v98
    %v247 = vunpack.c.l.b16 %v99
    %v248 = vunpack.c.l.b16 %v100
    %v249 = vunpack.c.l.b16 %v101
    %v250 = vunpack.c.l.b16 %v102
    %v251 = vunpack.c.l.b16 %v103
    %v252 = vunpack.c.l.b16 %v104
    %v253 = vunpack.c.l.b16 %v105
    %v254 = vpack.c.b16 %v183, %v182
    %v255 = vpack.c.b16 %v185, %v184
    %v256 = vpack.c.b16 %v187, %v186
    %v257 = vpack.c.b16 %v189, %v188
    %v258 = vpack.c.b16 %v191, %v190
    %v259 = vpack.c.b16 %v193, %v192
    %v260 = vpack.c.b16 %v195, %v194
    %v261 = vpack.c.b16 %v197, %v196
    %v262 = vpack.c.b16 %v199, %v198
    %v263 = vpack.c.b16 %v201, %v200
    %v264 = vpack.c.b16 %v203, %v202
    %v265 = vpack.c.b16 %v205, %v204
    %v266 = vpack.c.b16 %v207, %v206
    %v267 = vpack.c.b16 %v209, %v208
    %v268 = vpack.c.b16 %v211, %v210
    %v269 = vpack.c.b16 %v213, %v212
    %v270 = vpack.c.b16 %v215, %v214
    %v271 = vpack.c.b16 %v217, %v216
    %v272 = vpack.c.b16 %v219, %v218
    %v273 = vpack.c.b16 %v221, %v220
    %v274 = vpack.c.b16 %v223, %v222
    %v275 = vpack.c.b16 %v225, %v224
    %v276 = vpack.c.b16 %v227, %v226
    %v277 = vpack.c.b16 %v229, %v228
    %v278 = vpack.c.b16 %v231, %v230
    %v279 = vpack.c.b16 %v233, %v232
    %v280 = vpack.c.b16 %v235, %v234
    %v281 = vpack.c.b16 %v237, %v236
    %v282 = vpack.c.b16 %v239, %v238
    %v283 = vpack.c.b16 %v241, %v240
    %v284 = vpack.c.b16 %v243, %v242
    %v285 = vpack.c.b16 %v245, %v244
    %v286 = vpack.c.b16 %v247, %v246
    %v287 = vpack.c.b16 %v249, %v248
    %v288 = vpack.c.b16 %v251, %v250
    %v289 = vpack.c.b16 %v253, %v252
    %v294 = vunpack.c.l.b16 %v106
    %v295 = vunpack.c.l.b16 %v107
    %v296 = vunpack.c.l.b16 %v108
    %v297 = vunpack.c.l.b16 %v109
    %v298 = vpack.c.b16 %v295, %v294
    %v299 = vpack.c.b16 %v297, %v296
    %vm301 = vcmask 203776
    %v303 = vsel %vm301, %v254, 0
    %v306 = vsel %vm301, %v255, 0
    %v309 = vsel %vm301, %v256, 0
    %v312 = vsel %vm301, %v257, 0
    %v315 = vsel %vm301, %v258, 0
    %v318 = vsel %vm301, %v259, 0
    %v321 = vsel %vm301, %v260, 0
    %v324 = vsel %vm301, %v261, 0
    %v327 = vsel %vm301, %v262, 0
    %v330 = vsel %vm301, %v263, 0
    %v333 = vsel %vm301, %v264, 0
    %v336 = vsel %vm301, %v265, 0
    %v339 = vsel %vm301, %v266, 0
    %v342 = vsel %vm301, %v267, 0
    %v345 = vsel %vm301, %v268, 0
    %v348 = vsel %vm301, %v269, 0
    %v351 = vsel %vm301, %v270, 0
    %v354 = vsel %vm301, %v271, 0
    %v357 = vsel %vm301, %v272, 0
    %v360 = vsel %vm301, %v273, 0
    %v363 = vsel %vm301, %v274, 0
    %v366 = vsel %vm301, %v275, 0
    %v369 = vsel %vm301, %v276, 0
    %v372 = vsel %vm301, %v277, 0
    %v375 = vsel %vm301, %v278, 0
    %v378 = vsel %vm301, %v279, 0
    %v381 = vsel %vm301, %v280, 0
    %v384 = vsel %vm301, %v281, 0
    %v387 = vsel %vm301, %v282, 0
    %v390 = vsel %vm301, %v283, 0
    %v393 = vsel %vm301, %v284, 0
    %v396 = vsel %vm301, %v285, 0
    %v399 = vsel %vm301, %v286, 0
    %v402 = vsel %vm301, %v287, 0
    %v405 = vsel %vm301, %v288, 0
    %v408 = vsel %vm301, %v289, 0
    %vm410 = vcmask 1043456
    %vm411 = vcmask 1044480
    %v412 = vsel %vm410, 4294967295, 65535
    %v413 = vsel %vm411, %v412, 0
    %v415 = vand.u32 %v299, %v413
    %417 = vmatprep.subr.bf16.mxu0 0
    %418 = vmatpush1.bf16.msra.mxu0 %v298
    %419 = vmatprep.subr.bf16.mxu0 0
    %420 = vmatpush1.bf16.msra.mxu0 %v415
    %421 = vmatprep.subr.bf16.mxu0 0
    %422 = vmatpush1.bf16.msra.mxu0 0
    %423 = vmatprep.subr.bf16.mxu0 0
    %424 = vmatpush1.bf16.msra.mxu0 0
    %425 = vmatprep.subr.bf16.mxu0 0
    %426 = vmatpush1.bf16.msra.mxu0 0
    %427 = vmatprep.subr.bf16.mxu0 0
    %428 = vmatpush1.bf16.msra.mxu0 0
    %429 = vmatprep.subr.bf16.mxu0 0
    %430 = vmatpush1.bf16.msra.mxu0 0
    %431 = vmatprep.subr.bf16.mxu0 0
    %432 = vmatpush1.bf16.msra.mxu0 0
    %433 = vmatprep.subr.bf16.mxu0 0
    %434 = vmatpush1.bf16.msra.mxu0 0
    %435 = vmatprep.subr.bf16.mxu0 0
    %436 = vmatpush1.bf16.msra.mxu0 0
    %437 = vmatprep.subr.bf16.mxu0 0
    %438 = vmatpush1.bf16.msra.mxu0 0
    %439 = vmatprep.subr.bf16.mxu0 0
    %440 = vmatpush1.bf16.msra.mxu0 0
    %441 = vmatprep.subr.bf16.mxu0 0
    %442 = vmatpush1.bf16.msra.mxu0 0
    %443 = vmatprep.subr.bf16.mxu0 0
    %444 = vmatpush1.bf16.msra.mxu0 0
    %445 = vmatprep.subr.bf16.mxu0 0
    %446 = vmatpush1.bf16.msra.mxu0 0
    %447 = vmatprep.subr.bf16.mxu0 0
    %448 = vmatpush1.bf16.msra.mxu0 0
    %449 = vmatprep.mubr.bf16.mxu0 0
    %450 = vmatmul.mubr.bf16.gmra.mrb[0].mxu0 %v303
    %v451 = vpop.f32.mrb[0].mxu0
    %v452 = vadd.f32 0.0, %v451
    %v453 = vpop.f32.mrb[0].mxu0
    %v454 = vpop.f32.mrb[0].mxu0
    %v455 = vadd.f32 0.0, %v454
    %v456 = vpop.f32.mrb[0].mxu0
    %457 = vmatprep.mubr.bf16.mxu0 0
    %458 = vmatmul.mubr.bf16.gmra.mrb[0].mxu0 %v306
    %v459 = vpop.f32.mrb[0].mxu0
    %v460 = vadd.f32 0.0, %v459
    %v461 = vpop.f32.mrb[0].mxu0
    %v462 = vpop.f32.mrb[0].mxu0
    %v463 = vadd.f32 0.0, %v462
    %v464 = vpop.f32.mrb[0].mxu0
    %465 = vmatprep.mubr.bf16.mxu0 0
    %466 = vmatmul.mubr.bf16.gmra.mrb[0].mxu0 %v309
    %v467 = vpop.f32.mrb[0].mxu0
    %v468 = vadd.f32 0.0, %v467
    %v469 = vpop.f32.mrb[0].mxu0
    %v470 = vpop.f32.mrb[0].mxu0
    %v471 = vadd.f32 0.0, %v470
    %v472 = vpop.f32.mrb[0].mxu0
    %473 = vmatprep.mubr.bf16.mxu0 0
    %474 = vmatmul.mubr.bf16.gmra.mrb[0].mxu0 %v312
    %v475 = vpop.f32.mrb[0].mxu0
    %v476 = vadd.f32 0.0, %v475
    %v477 = vpop.f32.mrb[0].mxu0
    %v478 = vpop.f32.mrb[0].mxu0
    %v479 = vadd.f32 0.0, %v478
    %v480 = vpop.f32.mrb[0].mxu0
    %481 = vmatprep.mubr.bf16.mxu0 0
    %482 = vmatmul.mubr.bf16.gmra.mrb[0].mxu0 %v315
    %v483 = vpop.f32.mrb[0].mxu0
    %v484 = vadd.f32 0.0, %v483
    %v485 = vpop.f32.mrb[0].mxu0
    %v486 = vpop.f32.mrb[0].mxu0
    %v487 = vadd.f32 0.0, %v486
    %v488 = vpop.f32.mrb[0].mxu0
    %489 = vmatprep.mubr.bf16.mxu0 0
    %490 = vmatmul.mubr.bf16.gmra.mrb[0].mxu0 %v318
    %v491 = vpop.f32.mrb[0].mxu0
    %v492 = vadd.f32 0.0, %v491
    %v493 = vpop.f32.mrb[0].mxu0
    %v494 = vpop.f32.mrb[0].mxu0
    %v495 = vadd.f32 0.0, %v494
    %v496 = vpop.f32.mrb[0].mxu0
    %497 = vmatprep.mubr.bf16.mxu0 0
    %498 = vmatmul.mubr.bf16.gmra.mrb[0].mxu0 %v321
    %v499 = vpop.f32.mrb[0].mxu0
    %v500 = vadd.f32 0.0, %v499
    %v501 = vpop.f32.mrb[0].mxu0
    %v502 = vpop.f32.mrb[0].mxu0
    %v503 = vadd.f32 0.0, %v502
    %v504 = vpop.f32.mrb[0].mxu0
    %505 = vmatprep.mubr.bf16.mxu0 0
    %506 = vmatmul.mubr.bf16.gmra.mrb[0].mxu0 %v324
    %v507 = vpop.f32.mrb[0].mxu0
    %v508 = vadd.f32 0.0, %v507
    %v509 = vpop.f32.mrb[0].mxu0
    %v510 = vpop.f32.mrb[0].mxu0
    %v511 = vadd.f32 0.0, %v510
    %v512 = vpop.f32.mrb[0].mxu0
    %513 = vmatprep.mubr.bf16.mxu0 0
    %514 = vmatmul.mubr.bf16.gmra.mrb[0].mxu0 %v327
    %v515 = vpop.f32.mrb[0].mxu0
    %v516 = vadd.f32 0.0, %v515
    %v517 = vpop.f32.mrb[0].mxu0
    %v518 = vpop.f32.mrb[0].mxu0
    %v519 = vadd.f32 0.0, %v518
    %v520 = vpop.f32.mrb[0].mxu0
    %521 = vmatprep.mubr.bf16.mxu0 0
    %522 = vmatmul.mubr.bf16.gmra.mrb[0].mxu0 %v330
    %v523 = vpop.f32.mrb[0].mxu0
    %v524 = vadd.f32 0.0, %v523
    %v525 = vpop.f32.mrb[0].mxu0
    %v526 = vpop.f32.mrb[0].mxu0
    %v527 = vadd.f32 0.0, %v526
    %v528 = vpop.f32.mrb[0].mxu0
    %529 = vmatprep.mubr.bf16.mxu0 0
    %530 = vmatmul.mubr.bf16.gmra.mrb[0].mxu0 %v333
    %v531 = vpop.f32.mrb[0].mxu0
    %v532 = vadd.f32 0.0, %v531
    %v533 = vpop.f32.mrb[0].mxu0
    %v534 = vpop.f32.mrb[0].mxu0
    %v535 = vadd.f32 0.0, %v534
    %v536 = vpop.f32.mrb[0].mxu0
    %537 = vmatprep.mubr.bf16.mxu0 0
    %538 = vmatmul.mubr.bf16.gmra.mrb[0].mxu0 %v336
    %v539 = vpop.f32.mrb[0].mxu0
    %v540 = vadd.f32 0.0, %v539
    %v541 = vpop.f32.mrb[0].mxu0
    %v542 = vpop.f32.mrb[0].mxu0
    %v543 = vadd.f32 0.0, %v542
    %v544 = vpop.f32.mrb[0].mxu0
    %545 = vmatprep.mubr.bf16.mxu0 0
    %546 = vmatmul.mubr.bf16.gmra.mrb[0].mxu0 %v339
    %v547 = vpop.f32.mrb[0].mxu0
    %v548 = vadd.f32 0.0, %v547
    %v549 = vpop.f32.mrb[0].mxu0
    %v550 = vpop.f32.mrb[0].mxu0
    %v551 = vadd.f32 0.0, %v550
    %v552 = vpop.f32.mrb[0].mxu0
    %553 = vmatprep.mubr.bf16.mxu0 0
    %554 = vmatmul.mubr.bf16.gmra.mrb[0].mxu0 %v342
    %v555 = vpop.f32.mrb[0].mxu0
    %v556 = vadd.f32 0.0, %v555
    %v557 = vpop.f32.mrb[0].mxu0
    %v558 = vpop.f32.mrb[0].mxu0
    %v559 = vadd.f32 0.0, %v558
    %v560 = vpop.f32.mrb[0].mxu0
    %561 = vmatprep.mubr.bf16.mxu0 0
    %562 = vmatmul.mubr.bf16.gmra.mrb[0].mxu0 %v345
    %v563 = vpop.f32.mrb[0].mxu0
    %v564 = vadd.f32 0.0, %v563
    %v565 = vpop.f32.mrb[0].mxu0
    %v566 = vpop.f32.mrb[0].mxu0
    %v567 = vadd.f32 0.0, %v566
    %v568 = vpop.f32.mrb[0].mxu0
    %569 = vmatprep.mubr.bf16.mxu0 0
    %570 = vmatmul.mubr.bf16.gmra.mrb[0].mxu0 %v348
    %v571 = vpop.f32.mrb[0].mxu0
    %v572 = vadd.f32 0.0, %v571
    %v573 = vpop.f32.mrb[0].mxu0
    %v574 = vpop.f32.mrb[0].mxu0
    %v575 = vadd.f32 0.0, %v574
    %v576 = vpop.f32.mrb[0].mxu0
    %577 = vmatprep.mubr.bf16.mxu0 0
    %578 = vmatmul.mubr.bf16.gmra.mrb[0].mxu0 %v351
    %v579 = vpop.f32.mrb[0].mxu0
    %v580 = vadd.f32 0.0, %v579
    %v581 = vpop.f32.mrb[0].mxu0
    %v582 = vpop.f32.mrb[0].mxu0
    %v583 = vadd.f32 0.0, %v582
    %v584 = vpop.f32.mrb[0].mxu0
    %585 = vmatprep.mubr.bf16.mxu0 0
    %586 = vmatmul.mubr.bf16.gmra.mrb[0].mxu0 %v354
    %v587 = vpop.f32.mrb[0].mxu0
    %v588 = vadd.f32 0.0, %v587
    %v589 = vpop.f32.mrb[0].mxu0
    %v590 = vpop.f32.mrb[0].mxu0
    %v591 = vadd.f32 0.0, %v590
    %v592 = vpop.f32.mrb[0].mxu0
    %593 = vmatprep.mubr.bf16.mxu0 0
    %594 = vmatmul.mubr.bf16.gmra.mrb[0].mxu0 %v357
    %v595 = vpop.f32.mrb[0].mxu0
    %v596 = vadd.f32 0.0, %v595
    %v597 = vpop.f32.mrb[0].mxu0
    %v598 = vpop.f32.mrb[0].mxu0
    %v599 = vadd.f32 0.0, %v598
    %v600 = vpop.f32.mrb[0].mxu0
    %601 = vmatprep.mubr.bf16.mxu0 0
    %602 = vmatmul.mubr.bf16.gmra.mrb[0].mxu0 %v360
    %v603 = vpop.f32.mrb[0].mxu0
    %v604 = vadd.f32 0.0, %v603
    %v605 = vpop.f32.mrb[0].mxu0
    %v606 = vpop.f32.mrb[0].mxu0
    %v607 = vadd.f32 0.0, %v606
    %v608 = vpop.f32.mrb[0].mxu0
    %609 = vmatprep.mubr.bf16.mxu0 0
    %610 = vmatmul.mubr.bf16.gmra.mrb[0].mxu0 %v363
    %v611 = vpop.f32.mrb[0].mxu0
    %v612 = vadd.f32 0.0, %v611
    %v613 = vpop.f32.mrb[0].mxu0
    %v614 = vpop.f32.mrb[0].mxu0
    %v615 = vadd.f32 0.0, %v614
    %v616 = vpop.f32.mrb[0].mxu0
    %617 = vmatprep.mubr.bf16.mxu0 0
    %618 = vmatmul.mubr.bf16.gmra.mrb[0].mxu0 %v366
    %v619 = vpop.f32.mrb[0].mxu0
    %v620 = vadd.f32 0.0, %v619
    %v621 = vpop.f32.mrb[0].mxu0
    %v622 = vpop.f32.mrb[0].mxu0
    %v623 = vadd.f32 0.0, %v622
    %v624 = vpop.f32.mrb[0].mxu0
    %625 = vmatprep.mubr.bf16.mxu0 0
    %626 = vmatmul.mubr.bf16.gmra.mrb[0].mxu0 %v369
    %v627 = vpop.f32.mrb[0].mxu0
    %v628 = vadd.f32 0.0, %v627
    %v629 = vpop.f32.mrb[0].mxu0
    %v630 = vpop.f32.mrb[0].mxu0
    %v631 = vadd.f32 0.0, %v630
    %v632 = vpop.f32.mrb[0].mxu0
    %633 = vmatprep.mubr.bf16.mxu0 0
    %634 = vmatmul.mubr.bf16.gmra.mrb[0].mxu0 %v372
    %v635 = vpop.f32.mrb[0].mxu0
    %v636 = vadd.f32 0.0, %v635
    %v637 = vpop.f32.mrb[0].mxu0
    %v638 = vpop.f32.mrb[0].mxu0
    %v639 = vadd.f32 0.0, %v638
    %v640 = vpop.f32.mrb[0].mxu0
    %641 = vmatprep.mubr.bf16.mxu0 0
    %642 = vmatmul.mubr.bf16.gmra.mrb[0].mxu0 %v375
    %v643 = vpop.f32.mrb[0].mxu0
    %v644 = vadd.f32 0.0, %v643
    %v645 = vpop.f32.mrb[0].mxu0
    %v646 = vpop.f32.mrb[0].mxu0
    %v647 = vadd.f32 0.0, %v646
    %v648 = vpop.f32.mrb[0].mxu0
    %649 = vmatprep.mubr.bf16.mxu0 0
    %650 = vmatmul.mubr.bf16.gmra.mrb[0].mxu0 %v378
    %v651 = vpop.f32.mrb[0].mxu0
    %v652 = vadd.f32 0.0, %v651
    %v653 = vpop.f32.mrb[0].mxu0
    %v654 = vpop.f32.mrb[0].mxu0
    %v655 = vadd.f32 0.0, %v654
    %v656 = vpop.f32.mrb[0].mxu0
    %657 = vmatprep.mubr.bf16.mxu0 0
    %658 = vmatmul.mubr.bf16.gmra.mrb[0].mxu0 %v381
    %v659 = vpop.f32.mrb[0].mxu0
    %v660 = vadd.f32 0.0, %v659
    %v661 = vpop.f32.mrb[0].mxu0
    %v662 = vpop.f32.mrb[0].mxu0
    %v663 = vadd.f32 0.0, %v662
    %v664 = vpop.f32.mrb[0].mxu0
    %665 = vmatprep.mubr.bf16.mxu0 0
    %666 = vmatmul.mubr.bf16.gmra.mrb[0].mxu0 %v384
    %v667 = vpop.f32.mrb[0].mxu0
    %v668 = vadd.f32 0.0, %v667
    %v669 = vpop.f32.mrb[0].mxu0
    %v670 = vpop.f32.mrb[0].mxu0
    %v671 = vadd.f32 0.0, %v670
    %v672 = vpop.f32.mrb[0].mxu0
    %673 = vmatprep.mubr.bf16.mxu0 0
    %674 = vmatmul.mubr.bf16.gmra.mrb[0].mxu0 %v387
    %v675 = vpop.f32.mrb[0].mxu0
    %v676 = vadd.f32 0.0, %v675
    %v677 = vpop.f32.mrb[0].mxu0
    %v678 = vpop.f32.mrb[0].mxu0
    %v679 = vadd.f32 0.0, %v678
    %v680 = vpop.f32.mrb[0].mxu0
    %681 = vmatprep.mubr.bf16.mxu0 0
    %682 = vmatmul.mubr.bf16.gmra.mrb[0].mxu0 %v390
    %v683 = vpop.f32.mrb[0].mxu0
    %v684 = vadd.f32 0.0, %v683
    %v685 = vpop.f32.mrb[0].mxu0
    %v686 = vpop.f32.mrb[0].mxu0
    %v687 = vadd.f32 0.0, %v686
    %v688 = vpop.f32.mrb[0].mxu0
    %689 = vmatprep.mubr.bf16.mxu0 0
    %690 = vmatmul.mubr.bf16.gmra.mrb[0].mxu0 %v393
    %v691 = vpop.f32.mrb[0].mxu0
    %v692 = vadd.f32 0.0, %v691
    %v693 = vpop.f32.mrb[0].mxu0
    %v694 = vpop.f32.mrb[0].mxu0
    %v695 = vadd.f32 0.0, %v694
    %v696 = vpop.f32.mrb[0].mxu0
    %697 = vmatprep.mubr.bf16.mxu0 0
    %698 = vmatmul.mubr.bf16.gmra.mrb[0].mxu0 %v396
    %v699 = vpop.f32.mrb[0].mxu0
    %v700 = vadd.f32 0.0, %v699
    %v701 = vpop.f32.mrb[0].mxu0
    %v702 = vpop.f32.mrb[0].mxu0
    %v703 = vadd.f32 0.0, %v702
    %v704 = vpop.f32.mrb[0].mxu0
    %705 = vmatprep.mubr.bf16.mxu0 0
    %706 = vmatmul.mubr.bf16.gmra.mrb[0].mxu0 %v399
    %v707 = vpop.f32.mrb[0].mxu0
    %v708 = vadd.f32 0.0, %v707
    %v709 = vpop.f32.mrb[0].mxu0
    %v710 = vpop.f32.mrb[0].mxu0
    %v711 = vadd.f32 0.0, %v710
    %v712 = vpop.f32.mrb[0].mxu0
    %713 = vmatprep.mubr.bf16.mxu0 0
    %714 = vmatmul.mubr.bf16.gmra.mrb[0].mxu0 %v402
    %v715 = vpop.f32.mrb[0].mxu0
    %v716 = vadd.f32 0.0, %v715
    %v717 = vpop.f32.mrb[0].mxu0
    %v718 = vpop.f32.mrb[0].mxu0
    %v719 = vadd.f32 0.0, %v718
    %v720 = vpop.f32.mrb[0].mxu0
    %721 = vmatprep.mubr.bf16.mxu0 0
    %722 = vmatmul.mubr.bf16.gmra.mrb[0].mxu0 %v405
    %v723 = vpop.f32.mrb[0].mxu0
    %v724 = vadd.f32 0.0, %v723
    %v725 = vpop.f32.mrb[0].mxu0
    %v726 = vpop.f32.mrb[0].mxu0
    %v727 = vadd.f32 0.0, %v726
    %v728 = vpop.f32.mrb[0].mxu0
    %729 = vmatprep.mubr.bf16.mxu0 0
    %730 = vmatmul.mubr.bf16.gmra.mrb[0].mxu0 %v408
    %v731 = vpop.f32.mrb[0].mxu0
    %v732 = vadd.f32 0.0, %v731
    %v733 = vpop.f32.mrb[0].mxu0
    %v734 = vpop.f32.mrb[0].mxu0
    %v735 = vadd.f32 0.0, %v734
    %v736 = vpop.f32.mrb[0].mxu0
    %737 = vdwg.mxu0
    %v738 = vmax.f32 %v452, %v524
    %v739 = vmax.f32 %v455, %v527
    %v740 = vmax.f32 %v460, %v532
    %v741 = vmax.f32 %v463, %v535
    %v742 = vmax.f32 %v468, %v540
    %v743 = vmax.f32 %v471, %v543
    %v744 = vmax.f32 %v476, %v548
    %v745 = vmax.f32 %v479, %v551
    %v746 = vmax.f32 %v484, %v556
    %v747 = vmax.f32 %v487, %v559
    %v748 = vmax.f32 %v492, %v564
    %v749 = vmax.f32 %v495, %v567
    %v750 = vmax.f32 %v500, %v572
    %v751 = vmax.f32 %v503, %v575
    %v752 = vmax.f32 %v508, %v580
    %v753 = vmax.f32 %v511, %v583
    %v754 = vmax.f32 %v516, %v588
    %v755 = vmax.f32 %v519, %v591
    %v756 = vmax.f32 %v596, %v668
    %v757 = vmax.f32 %v599, %v671
    %v758 = vmax.f32 %v604, %v676
    %v759 = vmax.f32 %v607, %v679
    %v760 = vmax.f32 %v612, %v684
    %v761 = vmax.f32 %v615, %v687
    %v762 = vmax.f32 %v620, %v692
    %v763 = vmax.f32 %v623, %v695
    %v764 = vmax.f32 %v628, %v700
    %v765 = vmax.f32 %v631, %v703
    %v766 = vmax.f32 %v636, %v708
    %v767 = vmax.f32 %v639, %v711
    %v768 = vmax.f32 %v644, %v716
    %v769 = vmax.f32 %v647, %v719
    %v770 = vmax.f32 %v652, %v724
    %v771 = vmax.f32 %v655, %v727
    %v772 = vmax.f32 %v660, %v732
    %v773 = vmax.f32 %v663, %v735
    %v774 = vmax.f32 %v738, %v756
    %v775 = vmax.f32 %v739, %v757
    %v776 = vmax.f32 %v740, %v758
    %v777 = vmax.f32 %v741, %v759
    %v778 = vmax.f32 %v742, %v760
    %v779 = vmax.f32 %v743, %v761
    %v780 = vmax.f32 %v744, %v762
    %v781 = vmax.f32 %v745, %v763
    %v782 = vmax.f32 %v746, %v764
    %v783 = vmax.f32 %v747, %v765
    %v784 = vmax.f32 %v748, %v766
    %v785 = vmax.f32 %v749, %v767
    %v786 = vmax.f32 %v750, %v768
    %v787 = vmax.f32 %v751, %v769
    %v788 = vmax.f32 %v752, %v770
    %v789 = vmax.f32 %v753, %v771
    %v790 = vmax.f32 %v754, %v772
    %v791 = vmax.f32 %v755, %v773
    %v792 = vld [vmem:[%s2] sm:$0x1]
    %v794 = vlaneseq
    %v795 = vshrl.u32 %v794, 7
    %v796 = vsub.s32 0, %v795
    %v797 = vrot.slane %v792, %v796
    %v799 = vadd.f32 %v774, %v797
    %v800 = vadd.f32 %v775, %v797
    %v801 = vadd.f32 %v776, %v797
    %v802 = vadd.f32 %v777, %v797
    %v803 = vadd.f32 %v778, %v797
    %v804 = vadd.f32 %v779, %v797
    %v805 = vadd.f32 %v780, %v797
    %v806 = vadd.f32 %v781, %v797
    %v807 = vadd.f32 %v782, %v797
    %v808 = vadd.f32 %v783, %v797
    %v809 = vadd.f32 %v784, %v797
    %v810 = vadd.f32 %v785, %v797
    %v811 = vadd.f32 %v786, %v797
    %v812 = vadd.f32 %v787, %v797
    %v813 = vadd.f32 %v788, %v797
    %v814 = vadd.f32 %v789, %v797
    %v815 = vadd.f32 %v790, %v797
    %v816 = vadd.f32 %v791, %v797
    %v817 = vpack.c.bf16 %v800, %v799
    %v818 = vpack.c.bf16 %v802, %v801
    %v819 = vpack.c.bf16 %v804, %v803
    %v820 = vpack.c.bf16 %v806, %v805
    %v821 = vpack.c.bf16 %v808, %v807
    %v822 = vpack.c.bf16 %v810, %v809
    %v823 = vpack.c.bf16 %v812, %v811
    %v824 = vpack.c.bf16 %v814, %v813
    %v825 = vpack.c.bf16 %v816, %v815
    %vm826 = vcmask 162816
    %827 = vst.msk [vmem:[#allocation2] sm:$0xff] %vm826, %v817
    %828 = vst.msk [vmem:[#allocation2 + $0x8] sm:$0xff] %vm826, %v818
    %829 = vst.msk [vmem:[#allocation2 + $0x10] sm:$0xff] %vm826, %v819
    %830 = vst.msk [vmem:[#allocation2 + $0x18] sm:$0xff] %vm826, %v820
    %831 = vst.msk [vmem:[#allocation2 + $0x20] sm:$0xff] %vm826, %v821
    %832 = vst.msk [vmem:[#allocation2 + $0x28] sm:$0xff] %vm826, %v822
    %833 = vst.msk [vmem:[#allocation2 + $0x30] sm:$0xff] %vm826, %v823
    %834 = vst.msk [vmem:[#allocation2 + $0x38] sm:$0xff] %vm826, %v824
    %835 = vst.msk [vmem:[#allocation2 + $0x40] sm:$0xff] %vm826, %v825
    %836 = vst.msk [vmem:[#allocation2 + $0x48] sm:$0xff] %vm826, 0
    %v837 = vld [vmem:[#allocation2] sm:$0xff]
    %v838 = vld [vmem:[#allocation2 + $0x8] sm:$0xff]
    %v839 = vld [vmem:[#allocation2 + $0x10] sm:$0xff]
    %v840 = vld [vmem:[#allocation2 + $0x18] sm:$0xff]
    %v841 = vld [vmem:[#allocation2 + $0x20] sm:$0xff]
    %v842 = vld [vmem:[#allocation2 + $0x28] sm:$0xff]
    %v843 = vld [vmem:[#allocation2 + $0x30] sm:$0xf]
    %v844 = vld [vmem:[%s3] sm:$0xf]
    %v845 = vld [vmem:[%s3 + $0x4] sm:$0xf]
    %v846 = vld [vmem:[%s3 + $0x8] sm:$0x3]
    %v847 = vld [vmem:[#allocation2 + $0x30] sm:$0x1f]
    %s848 = scalar_lea.vmem %s3, 12
    %v849 = vld [vmem:[%s848] sm:$0xf]
    %v850 = vld [vmem:[%s848 + $0x4] sm:$0xf]
    %v851 = vld [vmem:[%s848 + $0x8] sm:$0x3]
    %vm852 = vsmask.f32 7424
    %v854 = vshrl.u32 %v837, 16
    %v856 = vshll.u32 %v837, 16
    %v858 = vrot.slane %v856, 1
    %v859 = vor.u32 %v854, %v858
    %v861 = vshll.u32 %v838, 16
    %v863 = vrot.slane %v861, 1
    %v864 = vsel %vm852, %v859, %v863
    %v865 = vshrl.u32 %v838, 16
    %v867 = vor.u32 %v865, %v863
    %v869 = vshll.u32 %v839, 16
    %v871 = vrot.slane %v869, 1
    %v872 = vsel %vm852, %v867, %v871
    %v873 = vshrl.u32 %v839, 16
    %v875 = vor.u32 %v873, %v871
    %v877 = vshll.u32 %v840, 16
    %v879 = vrot.slane %v877, 1
    %v880 = vsel %vm852, %v875, %v879
    %v881 = vshrl.u32 %v840, 16
    %v883 = vor.u32 %v881, %v879
    %v885 = vshll.u32 %v841, 16
    %v887 = vrot.slane %v885, 1
    %v888 = vsel %vm852, %v883, %v887
    %v889 = vshrl.u32 %v841, 16
    %v891 = vor.u32 %v889, %v887
    %v893 = vshll.u32 %v842, 16
    %v895 = vrot.slane %v893, 1
    %v896 = vsel %vm852, %v891, %v895
    %v897 = vshrl.u32 %v842, 16
    %v899 = vor.u32 %v897, %v895
    %v901 = vshll.u32 %v847, 16
    %v903 = vrot.slane %v901, 1
    %v904 = vsel %vm852, %v899, %v903
    %v905 = vshrl.u32 %v847, 16
    %v907 = vor.u32 %v905, %v903
    %v911 = vunpack.c.l.b16 %v849
    %v912 = vunpack.c.l.b16 %v850
    %v913 = vunpack.c.l.b16 %v851
    %v914 = vpack.c.b16 %v912, %v911
    %v915 = vpack.c.b16 %v913, %v913
    %v918 = vsel %vm826, %v864, 0
    %v921 = vsel %vm826, %v872, 0
    %v924 = vsel %vm826, %v880, 0
    %v927 = vsel %vm826, %v888, 0
    %v930 = vsel %vm826, %v896, 0
    %v933 = vsel %vm826, %v904, 0
    %v936 = vsel %vm826, %v907, 0
    %vm938 = vcmask 1041408
    %v940 = vsel %vm938, %v915, 0
    %942 = vmatprep.subr.bf16.mxu0 0
    %943 = vmatpush1.bf16.msra.mxu0 %v914
    %944 = vmatprep.subr.bf16.mxu0 0
    %945 = vmatpush1.bf16.msra.mxu0 %v940
    %946 = vmatprep.subr.bf16.mxu0 0
    %947 = vmatpush1.bf16.msra.mxu0 0
    %948 = vmatprep.subr.bf16.mxu0 0
    %949 = vmatpush1.bf16.msra.mxu0 0
    %950 = vmatprep.subr.bf16.mxu0 0
    %951 = vmatpush1.bf16.msra.mxu0 0
    %952 = vmatprep.subr.bf16.mxu0 0
    %953 = vmatpush1.bf16.msra.mxu0 0
    %954 = vmatprep.subr.bf16.mxu0 0
    %955 = vmatpush1.bf16.msra.mxu0 0
    %956 = vmatprep.subr.bf16.mxu0 0
    %957 = vmatpush1.bf16.msra.mxu0 0
    %958 = vmatprep.subr.bf16.mxu0 0
    %959 = vmatpush1.bf16.msra.mxu0 0
    %960 = vmatprep.subr.bf16.mxu0 0
    %961 = vmatpush1.bf16.msra.mxu0 0
    %962 = vmatprep.subr.bf16.mxu0 0
    %963 = vmatpush1.bf16.msra.mxu0 0
    %964 = vmatprep.subr.bf16.mxu0 0
    %965 = vmatpush1.bf16.msra.mxu0 0
    %966 = vmatprep.subr.bf16.mxu0 0
    %967 = vmatpush1.bf16.msra.mxu0 0
    %968 = vmatprep.subr.bf16.mxu0 0
    %969 = vmatpush1.bf16.msra.mxu0 0
    %970 = vmatprep.subr.bf16.mxu0 0
    %971 = vmatpush1.bf16.msra.mxu0 0
    %972 = vmatprep.subr.bf16.mxu0 0
    %973 = vmatpush1.bf16.msra.mxu0 0
    %974 = vmatprep.mubr.bf16.mxu0 0
    %975 = vmatmul.mubr.bf16.gmra.mrb[0].mxu0 %v918
    %v976 = vpop.f32.mrb[0].mxu0
    %v977 = vadd.f32 0.0, %v976
    %v978 = vpop.f32.mrb[0].mxu0
    %v979 = vpop.f32.mrb[0].mxu0
    %v980 = vadd.f32 0.0, %v979
    %v981 = vpop.f32.mrb[0].mxu0
    %982 = vmatprep.mubr.bf16.mxu0 0
    %983 = vmatmul.mubr.bf16.gmra.mrb[0].mxu0 %v921
    %v984 = vpop.f32.mrb[0].mxu0
    %v985 = vadd.f32 0.0, %v984
    %v986 = vpop.f32.mrb[0].mxu0
    %v987 = vpop.f32.mrb[0].mxu0
    %v988 = vadd.f32 0.0, %v987
    %v989 = vpop.f32.mrb[0].mxu0
    %990 = vmatprep.mubr.bf16.mxu0 0
    %991 = vmatmul.mubr.bf16.gmra.mrb[0].mxu0 %v924
    %v992 = vpop.f32.mrb[0].mxu0
    %v993 = vadd.f32 0.0, %v992
    %v994 = vpop.f32.mrb[0].mxu0
    %v995 = vpop.f32.mrb[0].mxu0
    %v996 = vadd.f32 0.0, %v995
    %v997 = vpop.f32.mrb[0].mxu0
    %998 = vmatprep.mubr.bf16.mxu0 0
    %999 = vmatmul.mubr.bf16.gmra.mrb[0].mxu0 %v927
    %v1000 = vpop.f32.mrb[0].mxu0
    %v1001 = vadd.f32 0.0, %v1000
    %v1002 = vpop.f32.mrb[0].mxu0
    %v1003 = vpop.f32.mrb[0].mxu0
    %v1004 = vadd.f32 0.0, %v1003
    %v1005 = vpop.f32.mrb[0].mxu0
    %1006 = vmatprep.mubr.bf16.mxu0 0
    %1007 = vmatmul.mubr.bf16.gmra.mrb[0].mxu0 %v930
    %v1008 = vpop.f32.mrb[0].mxu0
    %v1009 = vadd.f32 0.0, %v1008
    %v1010 = vpop.f32.mrb[0].mxu0
    %v1011 = vpop.f32.mrb[0].mxu0
    %v1012 = vadd.f32 0.0, %v1011
    %v1013 = vpop.f32.mrb[0].mxu0
    %1014 = vmatprep.mubr.bf16.mxu0 0
    %1015 = vmatmul.mubr.bf16.gmra.mrb[0].mxu0 %v933
    %v1016 = vpop.f32.mrb[0].mxu0
    %v1017 = vadd.f32 0.0, %v1016
    %v1018 = vpop.f32.mrb[0].mxu0
    %v1019 = vpop.f32.mrb[0].mxu0
    %v1020 = vadd.f32 0.0, %v1019
    %v1021 = vpop.f32.mrb[0].mxu0
    %1022 = vmatprep.mubr.bf16.mxu0 0
    %1023 = vmatmul.mubr.bf16.gmra.mrb[0].mxu0 %v936
    %v1024 = vpop.f32.mrb[0].mxu0
    %v1025 = vadd.f32 0.0, %v1024
    %v1026 = vpop.f32.mrb[0].mxu0
    %v1027 = vpop.f32.mrb[0].mxu0
    %v1028 = vpop.f32.mrb[0].mxu0
    %1029 = vdwg.mxu0
    %v1033 = vunpack.c.l.b16 %v844
    %v1034 = vunpack.c.l.b16 %v845
    %v1035 = vunpack.c.l.b16 %v846
    %v1036 = vpack.c.b16 %v1034, %v1033
    %v1037 = vpack.c.b16 %v1035, %v1035
    %v1039 = vsel %vm826, %v837, 0
    %v1041 = vsel %vm826, %v838, 0
    %v1043 = vsel %vm826, %v839, 0
    %v1045 = vsel %vm826, %v840, 0
    %v1047 = vsel %vm826, %v841, 0
    %v1049 = vsel %vm826, %v842, 0
    %v1052 = vsel %vm826, %v843, 0
    %v1055 = vsel %vm938, %v1037, 0
    %1057 = vmatprep.subr.bf16.mxu0 0
    %1058 = vmatpush1.bf16.msra.mxu0 %v1036
    %1059 = vmatprep.subr.bf16.mxu0 0
    %1060 = vmatpush1.bf16.msra.mxu0 %v1055
    %1061 = vmatprep.subr.bf16.mxu0 0
    %1062 = vmatpush1.bf16.msra.mxu0 0
    %1063 = vmatprep.subr.bf16.mxu0 0
    %1064 = vmatpush1.bf16.msra.mxu0 0
    %1065 = vmatprep.subr.bf16.mxu0 0
    %1066 = vmatpush1.bf16.msra.mxu0 0
    %1067 = vmatprep.subr.bf16.mxu0 0
    %1068 = vmatpush1.bf16.msra.mxu0 0
    %1069 = vmatprep.subr.bf16.mxu0 0
    %1070 = vmatpush1.bf16.msra.mxu0 0
    %1071 = vmatprep.subr.bf16.mxu0 0
    %1072 = vmatpush1.bf16.msra.mxu0 0
    %1073 = vmatprep.subr.bf16.mxu0 0
    %1074 = vmatpush1.bf16.msra.mxu0 0
    %1075 = vmatprep.subr.bf16.mxu0 0
    %1076 = vmatpush1.bf16.msra.mxu0 0
    %1077 = vmatprep.subr.bf16.mxu0 0
    %1078 = vmatpush1.bf16.msra.mxu0 0
    %1079 = vmatprep.subr.bf16.mxu0 0
    %1080 = vmatpush1.bf16.msra.mxu0 0
    %1081 = vmatprep.subr.bf16.mxu0 0
    %1082 = vmatpush1.bf16.msra.mxu0 0
    %1083 = vmatprep.subr.bf16.mxu0 0
    %1084 = vmatpush1.bf16.msra.mxu0 0
    %1085 = vmatprep.subr.bf16.mxu0 0
    %1086 = vmatpush1.bf16.msra.mxu0 0
    %1087 = vmatprep.subr.bf16.mxu0 0
    %1088 = vmatpush1.bf16.msra.mxu0 0
    %1089 = vmatprep.mubr.bf16.mxu0 0
    %1090 = vmatmul.mubr.bf16.gmra.mrb[0].mxu0 %v1039
    %v1091 = vpop.f32.mrb[0].mxu0
    %v1092 = vadd.f32 %v977, %v1091
    %v1093 = vpop.f32.mrb[0].mxu0
    %v1094 = vpop.f32.mrb[0].mxu0
    %v1095 = vadd.f32 %v980, %v1094
    %v1096 = vpop.f32.mrb[0].mxu0
    %1097 = vmatprep.mubr.bf16.mxu0 0
    %1098 = vmatmul.mubr.bf16.gmra.mrb[0].mxu0 %v1041
    %v1099 = vpop.f32.mrb[0].mxu0
    %v1100 = vadd.f32 %v985, %v1099
    %v1101 = vpop.f32.mrb[0].mxu0
    %v1102 = vpop.f32.mrb[0].mxu0
    %v1103 = vadd.f32 %v988, %v1102
    %v1104 = vpop.f32.mrb[0].mxu0
    %1105 = vmatprep.mubr.bf16.mxu0 0
    %1106 = vmatmul.mubr.bf16.gmra.mrb[0].mxu0 %v1043
    %v1107 = vpop.f32.mrb[0].mxu0
    %v1108 = vadd.f32 %v993, %v1107
    %v1109 = vpop.f32.mrb[0].mxu0
    %v1110 = vpop.f32.mrb[0].mxu0
    %v1111 = vadd.f32 %v996, %v1110
    %v1112 = vpop.f32.mrb[0].mxu0
    %1113 = vmatprep.mubr.bf16.mxu0 0
    %1114 = vmatmul.mubr.bf16.gmra.mrb[0].mxu0 %v1045
    %v1115 = vpop.f32.mrb[0].mxu0
    %v1116 = vadd.f32 %v1001, %v1115
    %v1117 = vpop.f32.mrb[0].mxu0
    %v1118 = vpop.f32.mrb[0].mxu0
    %v1119 = vadd.f32 %v1004, %v1118
    %v1120 = vpop.f32.mrb[0].mxu0
    %1121 = vmatprep.mubr.bf16.mxu0 0
    %1122 = vmatmul.mubr.bf16.gmra.mrb[0].mxu0 %v1047
    %v1123 = vpop.f32.mrb[0].mxu0
    %v1124 = vadd.f32 %v1009, %v1123
    %v1125 = vpop.f32.mrb[0].mxu0
    %v1126 = vpop.f32.mrb[0].mxu0
    %v1127 = vadd.f32 %v1012, %v1126
    %v1128 = vpop.f32.mrb[0].mxu0
    %1129 = vmatprep.mubr.bf16.mxu0 0
    %1130 = vmatmul.mubr.bf16.gmra.mrb[0].mxu0 %v1049
    %v1131 = vpop.f32.mrb[0].mxu0
    %v1132 = vadd.f32 %v1017, %v1131
    %v1133 = vpop.f32.mrb[0].mxu0
    %v1134 = vpop.f32.mrb[0].mxu0
    %v1135 = vadd.f32 %v1020, %v1134
    %v1136 = vpop.f32.mrb[0].mxu0
    %1137 = vmatprep.mubr.bf16.mxu0 0
    %1138 = vmatmul.mubr.bf16.gmra.mrb[0].mxu0 %v1052
    %v1139 = vpop.f32.mrb[0].mxu0
    %v1140 = vadd.f32 %v1025, %v1139
    %v1141 = vpop.f32.mrb[0].mxu0
    %v1142 = vpop.f32.mrb[0].mxu0
    %v1143 = vpop.f32.mrb[0].mxu0
    %1144 = vdwg.mxu0
    %v1145 = vld [vmem:[#allocation2] sm:$0xfe]
    %s1146 = scalar_lea.vmem %s3, 24
    %v1147 = vld [vmem:[%s1146] sm:$0xf]
    %v1148 = vld [vmem:[%s1146 + $0x4] sm:$0xf]
    %v1149 = vld [vmem:[%s1146 + $0x8] sm:$0x3]
    %vm1157 = vcmask 1046528
    %v1158 = vrot.slane %v1145, 1
    %v1159 = vrot.slane %v838, 1
    %v1160 = vsel %vm1157, %v1158, %v1159
    %v1161 = vrot.slane %v839, 1
    %v1162 = vsel %vm1157, %v1159, %v1161
    %v1163 = vrot.slane %v840, 1
    %v1164 = vsel %vm1157, %v1161, %v1163
    %v1165 = vrot.slane %v841, 1
    %v1166 = vsel %vm1157, %v1163, %v1165
    %v1167 = vrot.slane %v842, 1
    %v1168 = vsel %vm1157, %v1165, %v1167
    %v1169 = vrot.slane %v847, 1
    %v1170 = vsel %vm1157, %v1167, %v1169
    %v1174 = vunpack.c.l.b16 %v1147
    %v1175 = vunpack.c.l.b16 %v1148
    %v1176 = vunpack.c.l.b16 %v1149
    %v1177 = vpack.c.b16 %v1175, %v1174
    %v1178 = vpack.c.b16 %v1176, %v1176
    %v1181 = vsel %vm826, %v1160, 0
    %v1184 = vsel %vm826, %v1162, 0
    %v1187 = vsel %vm826, %v1164, 0
    %v1190 = vsel %vm826, %v1166, 0
    %v1193 = vsel %vm826, %v1168, 0
    %v1196 = vsel %vm826, %v1170, 0
    %v1199 = vsel %vm826, %v1169, 0
    %v1202 = vsel %vm938, %v1178, 0
    %1204 = vmatprep.subr.bf16.mxu0 0
    %1205 = vmatpush1.bf16.msra.mxu0 %v1177
    %1206 = vmatprep.subr.bf16.mxu0 0
    %1207 = vmatpush1.bf16.msra.mxu0 %v1202
    %1208 = vmatprep.subr.bf16.mxu0 0
    %1209 = vmatpush1.bf16.msra.mxu0 0
    %1210 = vmatprep.subr.bf16.mxu0 0
    %1211 = vmatpush1.bf16.msra.mxu0 0
    %1212 = vmatprep.subr.bf16.mxu0 0
    %1213 = vmatpush1.bf16.msra.mxu0 0
    %1214 = vmatprep.subr.bf16.mxu0 0
    %1215 = vmatpush1.bf16.msra.mxu0 0
    %1216 = vmatprep.subr.bf16.mxu0 0
    %1217 = vmatpush1.bf16.msra.mxu0 0
    %1218 = vmatprep.subr.bf16.mxu0 0
    %1219 = vmatpush1.bf16.msra.mxu0 0
    %1220 = vmatprep.subr.bf16.mxu0 0
    %1221 = vmatpush1.bf16.msra.mxu0 0
    %1222 = vmatprep.subr.bf16.mxu0 0
    %1223 = vmatpush1.bf16.msra.mxu0 0
    %1224 = vmatprep.subr.bf16.mxu0 0
    %1225 = vmatpush1.bf16.msra.mxu0 0
    %1226 = vmatprep.subr.bf16.mxu0 0
    %1227 = vmatpush1.bf16.msra.mxu0 0
    %1228 = vmatprep.subr.bf16.mxu0 0
    %1229 = vmatpush1.bf16.msra.mxu0 0
    %1230 = vmatprep.subr.bf16.mxu0 0
    %1231 = vmatpush1.bf16.msra.mxu0 0
    %1232 = vmatprep.subr.bf16.mxu0 0
    %1233 = vmatpush1.bf16.msra.mxu0 0
    %1234 = vmatprep.subr.bf16.mxu0 0
    %1235 = vmatpush1.bf16.msra.mxu0 0
    %1236 = vmatprep.mubr.bf16.mxu0 0
    %1237 = vmatmul.mubr.bf16.gmra.mrb[0].mxu0 %v1181
    %v1238 = vpop.f32.mrb[0].mxu0
    %v1239 = vadd.f32 0.0, %v1238
    %v1240 = vpop.f32.mrb[0].mxu0
    %v1241 = vpop.f32.mrb[0].mxu0
    %v1242 = vadd.f32 0.0, %v1241
    %v1243 = vpop.f32.mrb[0].mxu0
    %1244 = vmatprep.mubr.bf16.mxu0 0
    %1245 = vmatmul.mubr.bf16.gmra.mrb[0].mxu0 %v1184
    %v1246 = vpop.f32.mrb[0].mxu0
    %v1247 = vadd.f32 0.0, %v1246
    %v1248 = vpop.f32.mrb[0].mxu0
    %v1249 = vpop.f32.mrb[0].mxu0
    %v1250 = vadd.f32 0.0, %v1249
    %v1251 = vpop.f32.mrb[0].mxu0
    %1252 = vmatprep.mubr.bf16.mxu0 0
    %1253 = vmatmul.mubr.bf16.gmra.mrb[0].mxu0 %v1187
    %v1254 = vpop.f32.mrb[0].mxu0
    %v1255 = vadd.f32 0.0, %v1254
    %v1256 = vpop.f32.mrb[0].mxu0
    %v1257 = vpop.f32.mrb[0].mxu0
    %v1258 = vadd.f32 0.0, %v1257
    %v1259 = vpop.f32.mrb[0].mxu0
    %1260 = vmatprep.mubr.bf16.mxu0 0
    %1261 = vmatmul.mubr.bf16.gmra.mrb[0].mxu0 %v1190
    %v1262 = vpop.f32.mrb[0].mxu0
    %v1263 = vadd.f32 0.0, %v1262
    %v1264 = vpop.f32.mrb[0].mxu0
    %v1265 = vpop.f32.mrb[0].mxu0
    %v1266 = vadd.f32 0.0, %v1265
    %v1267 = vpop.f32.mrb[0].mxu0
    %1268 = vmatprep.mubr.bf16.mxu0 0
    %1269 = vmatmul.mubr.bf16.gmra.mrb[0].mxu0 %v1193
    %v1270 = vpop.f32.mrb[0].mxu0
    %v1271 = vadd.f32 0.0, %v1270
    %v1272 = vpop.f32.mrb[0].mxu0
    %v1273 = vpop.f32.mrb[0].mxu0
    %v1274 = vadd.f32 0.0, %v1273
    %v1275 = vpop.f32.mrb[0].mxu0
    %1276 = vmatprep.mubr.bf16.mxu0 0
    %1277 = vmatmul.mubr.bf16.gmra.mrb[0].mxu0 %v1196
    %v1278 = vpop.f32.mrb[0].mxu0
    %v1279 = vadd.f32 0.0, %v1278
    %v1280 = vpop.f32.mrb[0].mxu0
    %v1281 = vpop.f32.mrb[0].mxu0
    %v1282 = vadd.f32 0.0, %v1281
    %v1283 = vpop.f32.mrb[0].mxu0
    %1284 = vmatprep.mubr.bf16.mxu0 0
    %1285 = vmatmul.mubr.bf16.gmra.mrb[0].mxu0 %v1199
    %v1286 = vpop.f32.mrb[0].mxu0
    %v1287 = vadd.f32 0.0, %v1286
    %v1288 = vpop.f32.mrb[0].mxu0
    %v1289 = vpop.f32.mrb[0].mxu0
    %v1290 = vpop.f32.mrb[0].mxu0
    %1291 = vdwg.mxu0
    %v1292 = vadd.f32 %v1092, %v1239
    %v1293 = vadd.f32 %v1095, %v1242
    %v1294 = vadd.f32 %v1100, %v1247
    %v1295 = vadd.f32 %v1103, %v1250
    %v1296 = vadd.f32 %v1108, %v1255
    %v1297 = vadd.f32 %v1111, %v1258
    %v1298 = vadd.f32 %v1116, %v1263
    %v1299 = vadd.f32 %v1119, %v1266
    %v1300 = vadd.f32 %v1124, %v1271
    %v1301 = vadd.f32 %v1127, %v1274
    %v1302 = vadd.f32 %v1132, %v1279
    %v1303 = vadd.f32 %v1135, %v1282
    %v1304 = vadd.f32 %v1140, %v1287
    %v1305 = vld [vmem:[#allocation2 + $0x30] sm:$0x3f]
    %s1306 = scalar_lea.vmem %s3, 36
    %v1307 = vld [vmem:[%s1306] sm:$0xf]
    %v1308 = vld [vmem:[%s1306 + $0x4] sm:$0xf]
    %v1309 = vld [vmem:[%s1306 + $0x8] sm:$0x3]
    %vm1310 = vsmask.f32 6400
    %v1312 = vshrl.u32 %v1145, 16
    %v1314 = vrot.slane %v1312, 1
    %v1315 = vshll.u32 %v1145, 16
    %v1317 = vrot.slane %v1315, 2
    %v1318 = vor.u32 %v1314, %v1317
    %v1319 = vrot.slane %v865, 1
    %v1320 = vrot.slane %v861, 2
    %v1321 = vor.u32 %v1319, %v1320
    %v1322 = vsel %vm1310, %v1318, %v1321
    %v1323 = vrot.slane %v873, 1
    %v1324 = vrot.slane %v869, 2
    %v1325 = vor.u32 %v1323, %v1324
    %v1326 = vsel %vm1310, %v1321, %v1325
    %v1327 = vrot.slane %v881, 1
    %v1328 = vrot.slane %v877, 2
    %v1329 = vor.u32 %v1327, %v1328
    %v1330 = vsel %vm1310, %v1325, %v1329
    %v1331 = vrot.slane %v889, 1
    %v1332 = vrot.slane %v885, 2
    %v1333 = vor.u32 %v1331, %v1332
    %v1334 = vsel %vm1310, %v1329, %v1333
    %v1335 = vrot.slane %v897, 1
    %v1336 = vrot.slane %v893, 2
    %v1337 = vor.u32 %v1335, %v1336
    %v1338 = vsel %vm1310, %v1333, %v1337
    %v1340 = vshrl.u32 %v1305, 16
    %v1342 = vrot.slane %v1340, 1
    %v1343 = vshll.u32 %v1305, 16
    %v1345 = vrot.slane %v1343, 2
    %v1346 = vor.u32 %v1342, %v1345
    %v1347 = vsel %vm1310, %v1337, %v1346
    %v1351 = vunpack.c.l.b16 %v1307
    %v1352 = vunpack.c.l.b16 %v1308
    %v1353 = vunpack.c.l.b16 %v1309
    %v1354 = vpack.c.b16 %v1352, %v1351
    %v1355 = vpack.c.b16 %v1353, %v1353
    %v1358 = vsel %vm826, %v1322, 0
    %v1361 = vsel %vm826, %v1326, 0
    %v1364 = vsel %vm826, %v1330, 0
    %v1367 = vsel %vm826, %v1334, 0
    %v1370 = vsel %vm826, %v1338, 0
    %v1373 = vsel %vm826, %v1347, 0
    %v1376 = vsel %vm826, %v1346, 0
    %v1379 = vsel %vm938, %v1355, 0
    %1381 = vmatprep.subr.bf16.mxu0 0
    %1382 = vmatpush1.bf16.msra.mxu0 %v1354
    %1383 = vmatprep.subr.bf16.mxu0 0
    %1384 = vmatpush1.bf16.msra.mxu0 %v1379
    %1385 = vmatprep.subr.bf16.mxu0 0
    %1386 = vmatpush1.bf16.msra.mxu0 0
    %1387 = vmatprep.subr.bf16.mxu0 0
    %1388 = vmatpush1.bf16.msra.mxu0 0
    %1389 = vmatprep.subr.bf16.mxu0 0
    %1390 = vmatpush1.bf16.msra.mxu0 0
    %1391 = vmatprep.subr.bf16.mxu0 0
    %1392 = vmatpush1.bf16.msra.mxu0 0
    %1393 = vmatprep.subr.bf16.mxu0 0
    %1394 = vmatpush1.bf16.msra.mxu0 0
    %1395 = vmatprep.subr.bf16.mxu0 0
    %1396 = vmatpush1.bf16.msra.mxu0 0
    %1397 = vmatprep.subr.bf16.mxu0 0
    %1398 = vmatpush1.bf16.msra.mxu0 0
    %1399 = vmatprep.subr.bf16.mxu0 0
    %1400 = vmatpush1.bf16.msra.mxu0 0
    %1401 = vmatprep.subr.bf16.mxu0 0
    %1402 = vmatpush1.bf16.msra.mxu0 0
    %1403 = vmatprep.subr.bf16.mxu0 0
    %1404 = vmatpush1.bf16.msra.mxu0 0
    %1405 = vmatprep.subr.bf16.mxu0 0
    %1406 = vmatpush1.bf16.msra.mxu0 0
    %1407 = vmatprep.subr.bf16.mxu0 0
    %1408 = vmatpush1.bf16.msra.mxu0 0
    %1409 = vmatprep.subr.bf16.mxu0 0
    %1410 = vmatpush1.bf16.msra.mxu0 0
    %1411 = vmatprep.subr.bf16.mxu0 0
    %1412 = vmatpush1.bf16.msra.mxu0 0
    %1413 = vmatprep.mubr.bf16.mxu0 0
    %1414 = vmatmul.mubr.bf16.gmra.mrb[0].mxu0 %v1358
    %v1415 = vpop.f32.mrb[0].mxu0
    %v1416 = vadd.f32 0.0, %v1415
    %v1417 = vpop.f32.mrb[0].mxu0
    %v1418 = vpop.f32.mrb[0].mxu0
    %v1419 = vadd.f32 0.0, %v1418
    %v1420 = vpop.f32.mrb[0].mxu0
    %1421 = vmatprep.mubr.bf16.mxu0 0
    %1422 = vmatmul.mubr.bf16.gmra.mrb[0].mxu0 %v1361
    %v1423 = vpop.f32.mrb[0].mxu0
    %v1424 = vadd.f32 0.0, %v1423
    %v1425 = vpop.f32.mrb[0].mxu0
    %v1426 = vpop.f32.mrb[0].mxu0
    %v1427 = vadd.f32 0.0, %v1426
    %v1428 = vpop.f32.mrb[0].mxu0
    %1429 = vmatprep.mubr.bf16.mxu0 0
    %1430 = vmatmul.mubr.bf16.gmra.mrb[0].mxu0 %v1364
    %v1431 = vpop.f32.mrb[0].mxu0
    %v1432 = vadd.f32 0.0, %v1431
    %v1433 = vpop.f32.mrb[0].mxu0
    %v1434 = vpop.f32.mrb[0].mxu0
    %v1435 = vadd.f32 0.0, %v1434
    %v1436 = vpop.f32.mrb[0].mxu0
    %1437 = vmatprep.mubr.bf16.mxu0 0
    %1438 = vmatmul.mubr.bf16.gmra.mrb[0].mxu0 %v1367
    %v1439 = vpop.f32.mrb[0].mxu0
    %v1440 = vadd.f32 0.0, %v1439
    %v1441 = vpop.f32.mrb[0].mxu0
    %v1442 = vpop.f32.mrb[0].mxu0
    %v1443 = vadd.f32 0.0, %v1442
    %v1444 = vpop.f32.mrb[0].mxu0
    %1445 = vmatprep.mubr.bf16.mxu0 0
    %1446 = vmatmul.mubr.bf16.gmra.mrb[0].mxu0 %v1370
    %v1447 = vpop.f32.mrb[0].mxu0
    %v1448 = vadd.f32 0.0, %v1447
    %v1449 = vpop.f32.mrb[0].mxu0
    %v1450 = vpop.f32.mrb[0].mxu0
    %v1451 = vadd.f32 0.0, %v1450
    %v1452 = vpop.f32.mrb[0].mxu0
    %1453 = vmatprep.mubr.bf16.mxu0 0
    %1454 = vmatmul.mubr.bf16.gmra.mrb[0].mxu0 %v1373
    %v1455 = vpop.f32.mrb[0].mxu0
    %v1456 = vadd.f32 0.0, %v1455
    %v1457 = vpop.f32.mrb[0].mxu0
    %v1458 = vpop.f32.mrb[0].mxu0
    %v1459 = vadd.f32 0.0, %v1458
    %v1460 = vpop.f32.mrb[0].mxu0
    %1461 = vmatprep.mubr.bf16.mxu0 0
    %1462 = vmatmul.mubr.bf16.gmra.mrb[0].mxu0 %v1376
    %v1463 = vpop.f32.mrb[0].mxu0
    %v1464 = vadd.f32 0.0, %v1463
    %v1465 = vpop.f32.mrb[0].mxu0
    %v1466 = vpop.f32.mrb[0].mxu0
    %v1467 = vpop.f32.mrb[0].mxu0
    %1468 = vdwg.mxu0
    %v1469 = vadd.f32 %v1292, %v1416
    %v1470 = vadd.f32 %v1293, %v1419
    %v1471 = vadd.f32 %v1294, %v1424
    %v1472 = vadd.f32 %v1295, %v1427
    %v1473 = vadd.f32 %v1296, %v1432
    %v1474 = vadd.f32 %v1297, %v1435
    %v1475 = vadd.f32 %v1298, %v1440
    %v1476 = vadd.f32 %v1299, %v1443
    %v1477 = vadd.f32 %v1300, %v1448
    %v1478 = vadd.f32 %v1301, %v1451
    %v1479 = vadd.f32 %v1302, %v1456
    %v1480 = vadd.f32 %v1303, %v1459
    %v1481 = vadd.f32 %v1304, %v1464
    %v1482 = vld [vmem:[#allocation2] sm:$0xfc]
    %s1483 = scalar_lea.vmem %s3, 48
    %v1484 = vld [vmem:[%s1483] sm:$0xf]
    %v1485 = vld [vmem:[%s1483 + $0x4] sm:$0xf]
    %v1486 = vld [vmem:[%s1483 + $0x8] sm:$0x3]
    %vm1489 = vcmask 1045504
    %v1490 = vrot.slane %v1482, 2
    %v1491 = vrot.slane %v838, 2
    %v1492 = vsel %vm1489, %v1490, %v1491
    %v1493 = vrot.slane %v839, 2
    %v1494 = vsel %vm1489, %v1491, %v1493
    %v1495 = vrot.slane %v840, 2
    %v1496 = vsel %vm1489, %v1493, %v1495
    %v1497 = vrot.slane %v841, 2
    %v1498 = vsel %vm1489, %v1495, %v1497
    %v1499 = vrot.slane %v842, 2
    %v1500 = vsel %vm1489, %v1497, %v1499
    %v1501 = vrot.slane %v1305, 2
    %v1502 = vsel %vm1489, %v1499, %v1501
    %v1506 = vunpack.c.l.b16 %v1484
    %v1507 = vunpack.c.l.b16 %v1485
    %v1508 = vunpack.c.l.b16 %v1486
    %v1509 = vpack.c.b16 %v1507, %v1506
    %v1510 = vpack.c.b16 %v1508, %v1508
    %v1513 = vsel %vm826, %v1492, 0
    %v1516 = vsel %vm826, %v1494, 0
    %v1519 = vsel %vm826, %v1496, 0
    %v1522 = vsel %vm826, %v1498, 0
    %v1525 = vsel %vm826, %v1500, 0
    %v1528 = vsel %vm826, %v1502, 0
    %v1531 = vsel %vm826, %v1501, 0
    %v1534 = vsel %vm938, %v1510, 0
    %1536 = vmatprep.subr.bf16.mxu0 0
    %1537 = vmatpush1.bf16.msra.mxu0 %v1509
    %1538 = vmatprep.subr.bf16.mxu0 0
    %1539 = vmatpush1.bf16.msra.mxu0 %v1534
    %1540 = vmatprep.subr.bf16.mxu0 0
    %1541 = vmatpush1.bf16.msra.mxu0 0
    %1542 = vmatprep.subr.bf16.mxu0 0
    %1543 = vmatpush1.bf16.msra.mxu0 0
    %1544 = vmatprep.subr.bf16.mxu0 0
    %1545 = vmatpush1.bf16.msra.mxu0 0
    %1546 = vmatprep.subr.bf16.mxu0 0
    %1547 = vmatpush1.bf16.msra.mxu0 0
    %1548 = vmatprep.subr.bf16.mxu0 0
    %1549 = vmatpush1.bf16.msra.mxu0 0
    %1550 = vmatprep.subr.bf16.mxu0 0
    %1551 = vmatpush1.bf16.msra.mxu0 0
    %1552 = vmatprep.subr.bf16.mxu0 0
    %1553 = vmatpush1.bf16.msra.mxu0 0
    %1554 = vmatprep.subr.bf16.mxu0 0
    %1555 = vmatpush1.bf16.msra.mxu0 0
    %1556 = vmatprep.subr.bf16.mxu0 0
    %1557 = vmatpush1.bf16.msra.mxu0 0
    %1558 = vmatprep.subr.bf16.mxu0 0
    %1559 = vmatpush1.bf16.msra.mxu0 0
    %1560 = vmatprep.subr.bf16.mxu0 0
    %1561 = vmatpush1.bf16.msra.mxu0 0
    %1562 = vmatprep.subr.bf16.mxu0 0
    %1563 = vmatpush1.bf16.msra.mxu0 0
    %1564 = vmatprep.subr.bf16.mxu0 0
    %1565 = vmatpush1.bf16.msra.mxu0 0
    %1566 = vmatprep.subr.bf16.mxu0 0
    %1567 = vmatpush1.bf16.msra.mxu0 0
    %1568 = vmatprep.mubr.bf16.mxu0 0
    %1569 = vmatmul.mubr.bf16.gmra.mrb[0].mxu0 %v1513
    %v1570 = vpop.f32.mrb[0].mxu0
    %v1571 = vadd.f32 0.0, %v1570
    %v1572 = vpop.f32.mrb[0].mxu0
    %v1573 = vpop.f32.mrb[0].mxu0
    %v1574 = vadd.f32 0.0, %v1573
    %v1575 = vpop.f32.mrb[0].mxu0
    %1576 = vmatprep.mubr.bf16.mxu0 0
    %1577 = vmatmul.mubr.bf16.gmra.mrb[0].mxu0 %v1516
    %v1578 = vpop.f32.mrb[0].mxu0
    %v1579 = vadd.f32 0.0, %v1578
    %v1580 = vpop.f32.mrb[0].mxu0
    %v1581 = vpop.f32.mrb[0].mxu0
    %v1582 = vadd.f32 0.0, %v1581
    %v1583 = vpop.f32.mrb[0].mxu0
    %1584 = vmatprep.mubr.bf16.mxu0 0
    %1585 = vmatmul.mubr.bf16.gmra.mrb[0].mxu0 %v1519
    %v1586 = vpop.f32.mrb[0].mxu0
    %v1587 = vadd.f32 0.0, %v1586
    %v1588 = vpop.f32.mrb[0].mxu0
    %v1589 = vpop.f32.mrb[0].mxu0
    %v1590 = vadd.f32 0.0, %v1589
    %v1591 = vpop.f32.mrb[0].mxu0
    %1592 = vmatprep.mubr.bf16.mxu0 0
    %1593 = vmatmul.mubr.bf16.gmra.mrb[0].mxu0 %v1522
    %v1594 = vpop.f32.mrb[0].mxu0
    %v1595 = vadd.f32 0.0, %v1594
    %v1596 = vpop.f32.mrb[0].mxu0
    %v1597 = vpop.f32.mrb[0].mxu0
    %v1598 = vadd.f32 0.0, %v1597
    %v1599 = vpop.f32.mrb[0].mxu0
    %1600 = vmatprep.mubr.bf16.mxu0 0
    %1601 = vmatmul.mubr.bf16.gmra.mrb[0].mxu0 %v1525
    %v1602 = vpop.f32.mrb[0].mxu0
    %v1603 = vadd.f32 0.0, %v1602
    %v1604 = vpop.f32.mrb[0].mxu0
    %v1605 = vpop.f32.mrb[0].mxu0
    %v1606 = vadd.f32 0.0, %v1605
    %v1607 = vpop.f32.mrb[0].mxu0
    %1608 = vmatprep.mubr.bf16.mxu0 0
    %1609 = vmatmul.mubr.bf16.gmra.mrb[0].mxu0 %v1528
    %v1610 = vpop.f32.mrb[0].mxu0
    %v1611 = vadd.f32 0.0, %v1610
    %v1612 = vpop.f32.mrb[0].mxu0
    %v1613 = vpop.f32.mrb[0].mxu0
    %v1614 = vadd.f32 0.0, %v1613
    %v1615 = vpop.f32.mrb[0].mxu0
    %1616 = vmatprep.mubr.bf16.mxu0 0
    %1617 = vmatmul.mubr.bf16.gmra.mrb[0].mxu0 %v1531
    %v1618 = vpop.f32.mrb[0].mxu0
    %v1619 = vadd.f32 0.0, %v1618
    %v1620 = vpop.f32.mrb[0].mxu0
    %v1621 = vpop.f32.mrb[0].mxu0
    %v1622 = vpop.f32.mrb[0].mxu0
    %1623 = vdwg.mxu0
    %v1624 = vadd.f32 %v1469, %v1571
    %v1625 = vadd.f32 %v1470, %v1574
    %v1626 = vadd.f32 %v1471, %v1579
    %v1627 = vadd.f32 %v1472, %v1582
    %v1628 = vadd.f32 %v1473, %v1587
    %v1629 = vadd.f32 %v1474, %v1590
    %v1630 = vadd.f32 %v1475, %v1595
    %v1631 = vadd.f32 %v1476, %v1598
    %v1632 = vadd.f32 %v1477, %v1603
    %v1633 = vadd.f32 %v1478, %v1606
    %v1634 = vadd.f32 %v1479, %v1611
    %v1635 = vadd.f32 %v1480, %v1614
    %v1636 = vadd.f32 %v1481, %v1619
    %v1637 = vld [vmem:[#allocation2] sm:$0xc0]
    %v1638 = vld [vmem:[#allocation2 + $0x8] sm:$0xff]
    %v1639 = vld [vmem:[#allocation2 + $0x10] sm:$0xff]
    %v1640 = vld [vmem:[#allocation2 + $0x18] sm:$0xff]
    %v1641 = vld [vmem:[#allocation2 + $0x20] sm:$0xff]
    %v1642 = vld [vmem:[#allocation2 + $0x28] sm:$0xff]
    %v1643 = vld [vmem:[#allocation2 + $0x30] sm:$0xff]
    %v1644 = vld [vmem:[#allocation2 + $0x38] sm:$0x3]
    %s1645 = scalar_lea.vmem %s3, 60
    %v1646 = vld [vmem:[%s1645] sm:$0xf]
    %v1647 = vld [vmem:[%s1645 + $0x4] sm:$0xf]
    %v1648 = vld [vmem:[%s1645 + $0x8] sm:$0x3]
    %vm1657 = vcmask 1041408
    %v1658 = vrot.slane %v1637, 6
    %v1659 = vrot.slane %v1638, 6
    %v1660 = vsel %vm1657, %v1658, %v1659
    %v1661 = vrot.slane %v1639, 6
    %v1662 = vsel %vm1657, %v1659, %v1661
    %v1663 = vrot.slane %v1640, 6
    %v1664 = vsel %vm1657, %v1661, %v1663
    %v1665 = vrot.slane %v1641, 6
    %v1666 = vsel %vm1657, %v1663, %v1665
    %v1667 = vrot.slane %v1642, 6
    %v1668 = vsel %vm1657, %v1665, %v1667
    %v1669 = vrot.slane %v1643, 6
    %v1670 = vsel %vm1657, %v1667, %v1669
    %v1671 = vrot.slane %v1644, 6
    %v1672 = vsel %vm1657, %v1669, %v1671
    %v1676 = vunpack.c.l.b16 %v1646
    %v1677 = vunpack.c.l.b16 %v1647
    %v1678 = vunpack.c.l.b16 %v1648
    %v1679 = vpack.c.b16 %v1677, %v1676
    %v1680 = vpack.c.b16 %v1678, %v1678
    %v1683 = vsel %vm826, %v1660, 0
    %v1686 = vsel %vm826, %v1662, 0
    %v1689 = vsel %vm826, %v1664, 0
    %v1692 = vsel %vm826, %v1666, 0
    %v1695 = vsel %vm826, %v1668, 0
    %v1698 = vsel %vm826, %v1670, 0
    %v1701 = vsel %vm826, %v1672, 0
    %v1704 = vsel %vm938, %v1680, 0
    %1706 = vmatprep.subr.bf16.mxu0 0
    %1707 = vmatpush1.bf16.msra.mxu0 %v1679
    %1708 = vmatprep.subr.bf16.mxu0 0
    %1709 = vmatpush1.bf16.msra.mxu0 %v1704
    %1710 = vmatprep.subr.bf16.mxu0 0
    %1711 = vmatpush1.bf16.msra.mxu0 0
    %1712 = vmatprep.subr.bf16.mxu0 0
    %1713 = vmatpush1.bf16.msra.mxu0 0
    %1714 = vmatprep.subr.bf16.mxu0 0
    %1715 = vmatpush1.bf16.msra.mxu0 0
    %1716 = vmatprep.subr.bf16.mxu0 0
    %1717 = vmatpush1.bf16.msra.mxu0 0
    %1718 = vmatprep.subr.bf16.mxu0 0
    %1719 = vmatpush1.bf16.msra.mxu0 0
    %1720 = vmatprep.subr.bf16.mxu0 0
    %1721 = vmatpush1.bf16.msra.mxu0 0
    %1722 = vmatprep.subr.bf16.mxu0 0
    %1723 = vmatpush1.bf16.msra.mxu0 0
    %1724 = vmatprep.subr.bf16.mxu0 0
    %1725 = vmatpush1.bf16.msra.mxu0 0
    %1726 = vmatprep.subr.bf16.mxu0 0
    %1727 = vmatpush1.bf16.msra.mxu0 0
    %1728 = vmatprep.subr.bf16.mxu0 0
    %1729 = vmatpush1.bf16.msra.mxu0 0
    %1730 = vmatprep.subr.bf16.mxu0 0
    %1731 = vmatpush1.bf16.msra.mxu0 0
    %1732 = vmatprep.subr.bf16.mxu0 0
    %1733 = vmatpush1.bf16.msra.mxu0 0
    %1734 = vmatprep.subr.bf16.mxu0 0
    %1735 = vmatpush1.bf16.msra.mxu0 0
    %1736 = vmatprep.subr.bf16.mxu0 0
    %1737 = vmatpush1.bf16.msra.mxu0 0
    %1738 = vmatprep.mubr.bf16.mxu0 0
    %1739 = vmatmul.mubr.bf16.gmra.mrb[0].mxu0 %v1683
    %v1740 = vpop.f32.mrb[0].mxu0
    %v1741 = vadd.f32 0.0, %v1740
    %v1742 = vpop.f32.mrb[0].mxu0
    %v1743 = vpop.f32.mrb[0].mxu0
    %v1744 = vadd.f32 0.0, %v1743
    %v1745 = vpop.f32.mrb[0].mxu0
    %1746 = vmatprep.mubr.bf16.mxu0 0
    %1747 = vmatmul.mubr.bf16.gmra.mrb[0].mxu0 %v1686
    %v1748 = vpop.f32.mrb[0].mxu0
    %v1749 = vadd.f32 0.0, %v1748
    %v1750 = vpop.f32.mrb[0].mxu0
    %v1751 = vpop.f32.mrb[0].mxu0
    %v1752 = vadd.f32 0.0, %v1751
    %v1753 = vpop.f32.mrb[0].mxu0
    %1754 = vmatprep.mubr.bf16.mxu0 0
    %1755 = vmatmul.mubr.bf16.gmra.mrb[0].mxu0 %v1689
    %v1756 = vpop.f32.mrb[0].mxu0
    %v1757 = vadd.f32 0.0, %v1756
    %v1758 = vpop.f32.mrb[0].mxu0
    %v1759 = vpop.f32.mrb[0].mxu0
    %v1760 = vadd.f32 0.0, %v1759
    %v1761 = vpop.f32.mrb[0].mxu0
    %1762 = vmatprep.mubr.bf16.mxu0 0
    %1763 = vmatmul.mubr.bf16.gmra.mrb[0].mxu0 %v1692
    %v1764 = vpop.f32.mrb[0].mxu0
    %v1765 = vadd.f32 0.0, %v1764
    %v1766 = vpop.f32.mrb[0].mxu0
    %v1767 = vpop.f32.mrb[0].mxu0
    %v1768 = vadd.f32 0.0, %v1767
    %v1769 = vpop.f32.mrb[0].mxu0
    %1770 = vmatprep.mubr.bf16.mxu0 0
    %1771 = vmatmul.mubr.bf16.gmra.mrb[0].mxu0 %v1695
    %v1772 = vpop.f32.mrb[0].mxu0
    %v1773 = vadd.f32 0.0, %v1772
    %v1774 = vpop.f32.mrb[0].mxu0
    %v1775 = vpop.f32.mrb[0].mxu0
    %v1776 = vadd.f32 0.0, %v1775
    %v1777 = vpop.f32.mrb[0].mxu0
    %1778 = vmatprep.mubr.bf16.mxu0 0
    %1779 = vmatmul.mubr.bf16.gmra.mrb[0].mxu0 %v1698
    %v1780 = vpop.f32.mrb[0].mxu0
    %v1781 = vadd.f32 0.0, %v1780
    %v1782 = vpop.f32.mrb[0].mxu0
    %v1783 = vpop.f32.mrb[0].mxu0
    %v1784 = vadd.f32 0.0, %v1783
    %v1785 = vpop.f32.mrb[0].mxu0
    %1786 = vmatprep.mubr.bf16.mxu0 0
    %1787 = vmatmul.mubr.bf16.gmra.mrb[0].mxu0 %v1701
    %v1788 = vpop.f32.mrb[0].mxu0
    %v1789 = vadd.f32 0.0, %v1788
    %v1790 = vpop.f32.mrb[0].mxu0
    %v1791 = vpop.f32.mrb[0].mxu0
    %v1792 = vpop.f32.mrb[0].mxu0
    %1793 = vdwg.mxu0
    %v1794 = vadd.f32 %v1624, %v1741
    %v1795 = vadd.f32 %v1625, %v1744
    %v1796 = vadd.f32 %v1626, %v1749
    %v1797 = vadd.f32 %v1627, %v1752
    %v1798 = vadd.f32 %v1628, %v1757
    %v1799 = vadd.f32 %v1629, %v1760
    %v1800 = vadd.f32 %v1630, %v1765
    %v1801 = vadd.f32 %v1631, %v1768
    %v1802 = vadd.f32 %v1632, %v1773
    %v1803 = vadd.f32 %v1633, %v1776
    %v1804 = vadd.f32 %v1634, %v1781
    %v1805 = vadd.f32 %v1635, %v1784
    %v1806 = vadd.f32 %v1636, %v1789
    %v1807 = vld [vmem:[#allocation2 + $0x38] sm:$0x7]
    %s1808 = scalar_lea.vmem %s3, 72
    %v1809 = vld [vmem:[%s1808] sm:$0xf]
    %v1810 = vld [vmem:[%s1808 + $0x4] sm:$0xf]
    %v1811 = vld [vmem:[%s1808 + $0x8] sm:$0x3]
    %vm1812 = vsmask.f32 1280
    %v1814 = vshrl.u32 %v1637, 16
    %v1816 = vrot.slane %v1814, 6
    %v1817 = vshll.u32 %v1637, 16
    %v1819 = vrot.slane %v1817, 7
    %v1820 = vor.u32 %v1816, %v1819
    %v1822 = vshrl.u32 %v1638, 16
    %v1824 = vrot.slane %v1822, 6
    %v1825 = vshll.u32 %v1638, 16
    %v1827 = vrot.slane %v1825, 7
    %v1828 = vor.u32 %v1824, %v1827
    %v1829 = vsel %vm1812, %v1820, %v1828
    %v1831 = vshrl.u32 %v1639, 16
    %v1833 = vrot.slane %v1831, 6
    %v1834 = vshll.u32 %v1639, 16
    %v1836 = vrot.slane %v1834, 7
    %v1837 = vor.u32 %v1833, %v1836
    %v1838 = vsel %vm1812, %v1828, %v1837
    %v1840 = vshrl.u32 %v1640, 16
    %v1842 = vrot.slane %v1840, 6
    %v1843 = vshll.u32 %v1640, 16
    %v1845 = vrot.slane %v1843, 7
    %v1846 = vor.u32 %v1842, %v1845
    %v1847 = vsel %vm1812, %v1837, %v1846
    %v1849 = vshrl.u32 %v1641, 16
    %v1851 = vrot.slane %v1849, 6
    %v1852 = vshll.u32 %v1641, 16
    %v1854 = vrot.slane %v1852, 7
    %v1855 = vor.u32 %v1851, %v1854
    %v1856 = vsel %vm1812, %v1846, %v1855
    %v1858 = vshrl.u32 %v1642, 16
    %v1860 = vrot.slane %v1858, 6
    %v1861 = vshll.u32 %v1642, 16
    %v1863 = vrot.slane %v1861, 7
    %v1864 = vor.u32 %v1860, %v1863
    %v1865 = vsel %vm1812, %v1855, %v1864
    %v1867 = vshrl.u32 %v1643, 16
    %v1869 = vrot.slane %v1867, 6
    %v1870 = vshll.u32 %v1643, 16
    %v1872 = vrot.slane %v1870, 7
    %v1873 = vor.u32 %v1869, %v1872
    %v1874 = vsel %vm1812, %v1864, %v1873
    %v1876 = vshrl.u32 %v1807, 16
    %v1878 = vrot.slane %v1876, 6
    %v1879 = vshll.u32 %v1807, 16
    %v1881 = vrot.slane %v1879, 7
    %v1882 = vor.u32 %v1878, %v1881
    %v1883 = vsel %vm1812, %v1873, %v1882
    %v1887 = vunpack.c.l.b16 %v1809
    %v1888 = vunpack.c.l.b16 %v1810
    %v1889 = vunpack.c.l.b16 %v1811
    %v1890 = vpack.c.b16 %v1888, %v1887
    %v1891 = vpack.c.b16 %v1889, %v1889
    %v1894 = vsel %vm826, %v1829, 0
    %v1897 = vsel %vm826, %v1838, 0
    %v1900 = vsel %vm826, %v1847, 0
    %v1903 = vsel %vm826, %v1856, 0
    %v1906 = vsel %vm826, %v1865, 0
    %v1909 = vsel %vm826, %v1874, 0
    %v1912 = vsel %vm826, %v1883, 0
    %v1915 = vsel %vm938, %v1891, 0
    %1917 = vmatprep.subr.bf16.mxu0 0
    %1918 = vmatpush1.bf16.msra.mxu0 %v1890
    %1919 = vmatprep.subr.bf16.mxu0 0
    %1920 = vmatpush1.bf16.msra.mxu0 %v1915
    %1921 = vmatprep.subr.bf16.mxu0 0
    %1922 = vmatpush1.bf16.msra.mxu0 0
    %1923 = vmatprep.subr.bf16.mxu0 0
    %1924 = vmatpush1.bf16.msra.mxu0 0
    %1925 = vmatprep.subr.bf16.mxu0 0
    %1926 = vmatpush1.bf16.msra.mxu0 0
    %1927 = vmatprep.subr.bf16.mxu0 0
    %1928 = vmatpush1.bf16.msra.mxu0 0
    %1929 = vmatprep.subr.bf16.mxu0 0
    %1930 = vmatpush1.bf16.msra.mxu0 0
    %1931 = vmatprep.subr.bf16.mxu0 0
    %1932 = vmatpush1.bf16.msra.mxu0 0
    %1933 = vmatprep.subr.bf16.mxu0 0
    %1934 = vmatpush1.bf16.msra.mxu0 0
    %1935 = vmatprep.subr.bf16.mxu0 0
    %1936 = vmatpush1.bf16.msra.mxu0 0
    %1937 = vmatprep.subr.bf16.mxu0 0
    %1938 = vmatpush1.bf16.msra.mxu0 0
    %1939 = vmatprep.subr.bf16.mxu0 0
    %1940 = vmatpush1.bf16.msra.mxu0 0
    %1941 = vmatprep.subr.bf16.mxu0 0
    %1942 = vmatpush1.bf16.msra.mxu0 0
    %1943 = vmatprep.subr.bf16.mxu0 0
    %1944 = vmatpush1.bf16.msra.mxu0 0
    %1945 = vmatprep.subr.bf16.mxu0 0
    %1946 = vmatpush1.bf16.msra.mxu0 0
    %1947 = vmatprep.subr.bf16.mxu0 0
    %1948 = vmatpush1.bf16.msra.mxu0 0
    %1949 = vmatprep.mubr.bf16.mxu0 0
    %1950 = vmatmul.mubr.bf16.gmra.mrb[0].mxu0 %v1894
    %v1951 = vpop.f32.mrb[0].mxu0
    %v1952 = vadd.f32 0.0, %v1951
    %v1953 = vpop.f32.mrb[0].mxu0
    %v1954 = vpop.f32.mrb[0].mxu0
    %v1955 = vadd.f32 0.0, %v1954
    %v1956 = vpop.f32.mrb[0].mxu0
    %1957 = vmatprep.mubr.bf16.mxu0 0
    %1958 = vmatmul.mubr.bf16.gmra.mrb[0].mxu0 %v1897
    %v1959 = vpop.f32.mrb[0].mxu0
    %v1960 = vadd.f32 0.0, %v1959
    %v1961 = vpop.f32.mrb[0].mxu0
    %v1962 = vpop.f32.mrb[0].mxu0
    %v1963 = vadd.f32 0.0, %v1962
    %v1964 = vpop.f32.mrb[0].mxu0
    %1965 = vmatprep.mubr.bf16.mxu0 0
    %1966 = vmatmul.mubr.bf16.gmra.mrb[0].mxu0 %v1900
    %v1967 = vpop.f32.mrb[0].mxu0
    %v1968 = vadd.f32 0.0, %v1967
    %v1969 = vpop.f32.mrb[0].mxu0
    %v1970 = vpop.f32.mrb[0].mxu0
    %v1971 = vadd.f32 0.0, %v1970
    %v1972 = vpop.f32.mrb[0].mxu0
    %1973 = vmatprep.mubr.bf16.mxu0 0
    %1974 = vmatmul.mubr.bf16.gmra.mrb[0].mxu0 %v1903
    %v1975 = vpop.f32.mrb[0].mxu0
    %v1976 = vadd.f32 0.0, %v1975
    %v1977 = vpop.f32.mrb[0].mxu0
    %v1978 = vpop.f32.mrb[0].mxu0
    %v1979 = vadd.f32 0.0, %v1978
    %v1980 = vpop.f32.mrb[0].mxu0
    %1981 = vmatprep.mubr.bf16.mxu0 0
    %1982 = vmatmul.mubr.bf16.gmra.mrb[0].mxu0 %v1906
    %v1983 = vpop.f32.mrb[0].mxu0
    %v1984 = vadd.f32 0.0, %v1983
    %v1985 = vpop.f32.mrb[0].mxu0
    %v1986 = vpop.f32.mrb[0].mxu0
    %v1987 = vadd.f32 0.0, %v1986
    %v1988 = vpop.f32.mrb[0].mxu0
    %1989 = vmatprep.mubr.bf16.mxu0 0
    %1990 = vmatmul.mubr.bf16.gmra.mrb[0].mxu0 %v1909
    %v1991 = vpop.f32.mrb[0].mxu0
    %v1992 = vadd.f32 0.0, %v1991
    %v1993 = vpop.f32.mrb[0].mxu0
    %v1994 = vpop.f32.mrb[0].mxu0
    %v1995 = vadd.f32 0.0, %v1994
    %v1996 = vpop.f32.mrb[0].mxu0
    %1997 = vmatprep.mubr.bf16.mxu0 0
    %1998 = vmatmul.mubr.bf16.gmra.mrb[0].mxu0 %v1912
    %v1999 = vpop.f32.mrb[0].mxu0
    %v2000 = vadd.f32 0.0, %v1999
    %v2001 = vpop.f32.mrb[0].mxu0
    %v2002 = vpop.f32.mrb[0].mxu0
    %v2003 = vpop.f32.mrb[0].mxu0
    %2004 = vdwg.mxu0
    %v2005 = vadd.f32 %v1794, %v1952
    %v2006 = vadd.f32 %v1795, %v1955
    %v2007 = vadd.f32 %v1796, %v1960
    %v2008 = vadd.f32 %v1797, %v1963
    %v2009 = vadd.f32 %v1798, %v1968
    %v2010 = vadd.f32 %v1799, %v1971
    %v2011 = vadd.f32 %v1800, %v1976
    %v2012 = vadd.f32 %v1801, %v1979
    %v2013 = vadd.f32 %v1802, %v1984
    %v2014 = vadd.f32 %v1803, %v1987
    %v2015 = vadd.f32 %v1804, %v1992
    %v2016 = vadd.f32 %v1805, %v1995
    %v2017 = vadd.f32 %v1806, %v2000
    %v2018 = vld [vmem:[#allocation2] sm:$0x80]
    %s2019 = scalar_lea.vmem %s3, 84
    %v2020 = vld [vmem:[%s2019] sm:$0xf]
    %v2021 = vld [vmem:[%s2019 + $0x4] sm:$0xf]
    %v2022 = vld [vmem:[%s2019 + $0x8] sm:$0x3]
    %vm2025 = vcmask 1040384
    %v2026 = vrot.slane %v2018, 7
    %v2027 = vrot.slane %v1638, 7
    %v2028 = vsel %vm2025, %v2026, %v2027
    %v2029 = vrot.slane %v1639, 7
    %v2030 = vsel %vm2025, %v2027, %v2029
    %v2031 = vrot.slane %v1640, 7
    %v2032 = vsel %vm2025, %v2029, %v2031
    %v2033 = vrot.slane %v1641, 7
    %v2034 = vsel %vm2025, %v2031, %v2033
    %v2035 = vrot.slane %v1642, 7
    %v2036 = vsel %vm2025, %v2033, %v2035
    %v2037 = vrot.slane %v1643, 7
    %v2038 = vsel %vm2025, %v2035, %v2037
    %v2039 = vrot.slane %v1807, 7
    %v2040 = vsel %vm2025, %v2037, %v2039
    %v2044 = vunpack.c.l.b16 %v2020
    %v2045 = vunpack.c.l.b16 %v2021
    %v2046 = vunpack.c.l.b16 %v2022
    %v2047 = vpack.c.b16 %v2045, %v2044
    %v2048 = vpack.c.b16 %v2046, %v2046
    %v2051 = vsel %vm826, %v2028, 0
    %v2054 = vsel %vm826, %v2030, 0
    %v2057 = vsel %vm826, %v2032, 0
    %v2060 = vsel %vm826, %v2034, 0
    %v2063 = vsel %vm826, %v2036, 0
    %v2066 = vsel %vm826, %v2038, 0
    %v2069 = vsel %vm826, %v2040, 0
    %v2072 = vsel %vm938, %v2048, 0
    %2074 = vmatprep.subr.bf16.mxu0 0
    %2075 = vmatpush1.bf16.msra.mxu0 %v2047
    %2076 = vmatprep.subr.bf16.mxu0 0
    %2077 = vmatpush1.bf16.msra.mxu0 %v2072
    %2078 = vmatprep.subr.bf16.mxu0 0
    %2079 = vmatpush1.bf16.msra.mxu0 0
    %2080 = vmatprep.subr.bf16.mxu0 0
    %2081 = vmatpush1.bf16.msra.mxu0 0
    %2082 = vmatprep.subr.bf16.mxu0 0
    %2083 = vmatpush1.bf16.msra.mxu0 0
    %2084 = vmatprep.subr.bf16.mxu0 0
    %2085 = vmatpush1.bf16.msra.mxu0 0
    %2086 = vmatprep.subr.bf16.mxu0 0
    %2087 = vmatpush1.bf16.msra.mxu0 0
    %2088 = vmatprep.subr.bf16.mxu0 0
    %2089 = vmatpush1.bf16.msra.mxu0 0
    %2090 = vmatprep.subr.bf16.mxu0 0
    %2091 = vmatpush1.bf16.msra.mxu0 0
    %2092 = vmatprep.subr.bf16.mxu0 0
    %2093 = vmatpush1.bf16.msra.mxu0 0
    %2094 = vmatprep.subr.bf16.mxu0 0
    %2095 = vmatpush1.bf16.msra.mxu0 0
    %2096 = vmatprep.subr.bf16.mxu0 0
    %2097 = vmatpush1.bf16.msra.mxu0 0
    %2098 = vmatprep.subr.bf16.mxu0 0
    %2099 = vmatpush1.bf16.msra.mxu0 0
    %2100 = vmatprep.subr.bf16.mxu0 0
    %2101 = vmatpush1.bf16.msra.mxu0 0
    %2102 = vmatprep.subr.bf16.mxu0 0
    %2103 = vmatpush1.bf16.msra.mxu0 0
    %2104 = vmatprep.subr.bf16.mxu0 0
    %2105 = vmatpush1.bf16.msra.mxu0 0
    %2106 = vmatprep.mubr.bf16.mxu0 0
    %2107 = vmatmul.mubr.bf16.gmra.mrb[0].mxu0 %v2051
    %v2108 = vpop.f32.mrb[0].mxu0
    %v2109 = vadd.f32 0.0, %v2108
    %v2110 = vpop.f32.mrb[0].mxu0
    %v2111 = vpop.f32.mrb[0].mxu0
    %v2112 = vadd.f32 0.0, %v2111
    %v2113 = vpop.f32.mrb[0].mxu0
    %2114 = vmatprep.mubr.bf16.mxu0 0
    %2115 = vmatmul.mubr.bf16.gmra.mrb[0].mxu0 %v2054
    %v2116 = vpop.f32.mrb[0].mxu0
    %v2117 = vadd.f32 0.0, %v2116
    %v2118 = vpop.f32.mrb[0].mxu0
    %v2119 = vpop.f32.mrb[0].mxu0
    %v2120 = vadd.f32 0.0, %v2119
    %v2121 = vpop.f32.mrb[0].mxu0
    %2122 = vmatprep.mubr.bf16.mxu0 0
    %2123 = vmatmul.mubr.bf16.gmra.mrb[0].mxu0 %v2057
    %v2124 = vpop.f32.mrb[0].mxu0
    %v2125 = vadd.f32 0.0, %v2124
    %v2126 = vpop.f32.mrb[0].mxu0
    %v2127 = vpop.f32.mrb[0].mxu0
    %v2128 = vadd.f32 0.0, %v2127
    %v2129 = vpop.f32.mrb[0].mxu0
    %2130 = vmatprep.mubr.bf16.mxu0 0
    %2131 = vmatmul.mubr.bf16.gmra.mrb[0].mxu0 %v2060
    %v2132 = vpop.f32.mrb[0].mxu0
    %v2133 = vadd.f32 0.0, %v2132
    %v2134 = vpop.f32.mrb[0].mxu0
    %v2135 = vpop.f32.mrb[0].mxu0
    %v2136 = vadd.f32 0.0, %v2135
    %v2137 = vpop.f32.mrb[0].mxu0
    %2138 = vmatprep.mubr.bf16.mxu0 0
    %2139 = vmatmul.mubr.bf16.gmra.mrb[0].mxu0 %v2063
    %v2140 = vpop.f32.mrb[0].mxu0
    %v2141 = vadd.f32 0.0, %v2140
    %v2142 = vpop.f32.mrb[0].mxu0
    %v2143 = vpop.f32.mrb[0].mxu0
    %v2144 = vadd.f32 0.0, %v2143
    %v2145 = vpop.f32.mrb[0].mxu0
    %2146 = vmatprep.mubr.bf16.mxu0 0
    %2147 = vmatmul.mubr.bf16.gmra.mrb[0].mxu0 %v2066
    %v2148 = vpop.f32.mrb[0].mxu0
    %v2149 = vadd.f32 0.0, %v2148
    %v2150 = vpop.f32.mrb[0].mxu0
    %v2151 = vpop.f32.mrb[0].mxu0
    %v2152 = vadd.f32 0.0, %v2151
    %v2153 = vpop.f32.mrb[0].mxu0
    %2154 = vmatprep.mubr.bf16.mxu0 0
    %2155 = vmatmul.mubr.bf16.gmra.mrb[0].mxu0 %v2069
    %v2156 = vpop.f32.mrb[0].mxu0
    %v2157 = vadd.f32 0.0, %v2156
    %v2158 = vpop.f32.mrb[0].mxu0
    %v2159 = vpop.f32.mrb[0].mxu0
    %v2160 = vpop.f32.mrb[0].mxu0
    %2161 = vdwg.mxu0
    %v2162 = vadd.f32 %v2005, %v2109
    %v2163 = vadd.f32 %v2006, %v2112
    %v2164 = vadd.f32 %v2007, %v2117
    %v2165 = vadd.f32 %v2008, %v2120
    %v2166 = vadd.f32 %v2009, %v2125
    %v2167 = vadd.f32 %v2010, %v2128
    %v2168 = vadd.f32 %v2011, %v2133
    %v2169 = vadd.f32 %v2012, %v2136
    %v2170 = vadd.f32 %v2013, %v2141
    %v2171 = vadd.f32 %v2014, %v2144
    %v2172 = vadd.f32 %v2015, %v2149
    %v2173 = vadd.f32 %v2016, %v2152
    %v2174 = vadd.f32 %v2017, %v2157
    %v2175 = vld [vmem:[#allocation2 + $0x38] sm:$0xf]
    %s2176 = scalar_lea.vmem %s3, 96
    %v2177 = vld [vmem:[%s2176] sm:$0xf]
    %v2178 = vld [vmem:[%s2176 + $0x4] sm:$0xf]
    %v2179 = vld [vmem:[%s2176 + $0x8] sm:$0x3]
    %vm2180 = vsmask.f32 256
    %v2182 = vshrl.u32 %v2018, 16
    %v2184 = vrot.slane %v2182, 7
    %v2185 = vrot.slane %v1822, 7
    %v2186 = vor.u32 %v2185, %v1825
    %v2187 = vsel %vm2180, %v2184, %v2186
    %v2188 = vrot.slane %v1831, 7
    %v2189 = vor.u32 %v2188, %v1834
    %v2190 = vsel %vm2180, %v2185, %v2189
    %v2191 = vrot.slane %v1840, 7
    %v2192 = vor.u32 %v2191, %v1843
    %v2193 = vsel %vm2180, %v2188, %v2192
    %v2194 = vrot.slane %v1849, 7
    %v2195 = vor.u32 %v2194, %v1852
    %v2196 = vsel %vm2180, %v2191, %v2195
    %v2197 = vrot.slane %v1858, 7
    %v2198 = vor.u32 %v2197, %v1861
    %v2199 = vsel %vm2180, %v2194, %v2198
    %v2200 = vrot.slane %v1867, 7
    %v2201 = vor.u32 %v2200, %v1870
    %v2202 = vsel %vm2180, %v2197, %v2201
    %v2204 = vshrl.u32 %v2175, 16
    %v2206 = vrot.slane %v2204, 7
    %v2207 = vshll.u32 %v2175, 16
    %v2209 = vor.u32 %v2206, %v2207
    %v2210 = vsel %vm2180, %v2200, %v2209
    %v2214 = vunpack.c.l.b16 %v2177
    %v2215 = vunpack.c.l.b16 %v2178
    %v2216 = vunpack.c.l.b16 %v2179
    %v2217 = vpack.c.b16 %v2215, %v2214
    %v2218 = vpack.c.b16 %v2216, %v2216
    %v2221 = vsel %vm826, %v2187, 0
    %v2224 = vsel %vm826, %v2190, 0
    %v2227 = vsel %vm826, %v2193, 0
    %v2230 = vsel %vm826, %v2196, 0
    %v2233 = vsel %vm826, %v2199, 0
    %v2236 = vsel %vm826, %v2202, 0
    %v2239 = vsel %vm826, %v2210, 0
    %v2242 = vsel %vm938, %v2218, 0
    %2244 = vmatprep.subr.bf16.mxu0 0
    %2245 = vmatpush1.bf16.msra.mxu0 %v2217
    %2246 = vmatprep.subr.bf16.mxu0 0
    %2247 = vmatpush1.bf16.msra.mxu0 %v2242
    %2248 = vmatprep.subr.bf16.mxu0 0
    %2249 = vmatpush1.bf16.msra.mxu0 0
    %2250 = vmatprep.subr.bf16.mxu0 0
    %2251 = vmatpush1.bf16.msra.mxu0 0
    %2252 = vmatprep.subr.bf16.mxu0 0
    %2253 = vmatpush1.bf16.msra.mxu0 0
    %2254 = vmatprep.subr.bf16.mxu0 0
    %2255 = vmatpush1.bf16.msra.mxu0 0
    %2256 = vmatprep.subr.bf16.mxu0 0
    %2257 = vmatpush1.bf16.msra.mxu0 0
    %2258 = vmatprep.subr.bf16.mxu0 0
    %2259 = vmatpush1.bf16.msra.mxu0 0
    %2260 = vmatprep.subr.bf16.mxu0 0
    %2261 = vmatpush1.bf16.msra.mxu0 0
    %2262 = vmatprep.subr.bf16.mxu0 0
    %2263 = vmatpush1.bf16.msra.mxu0 0
    %2264 = vmatprep.subr.bf16.mxu0 0
    %2265 = vmatpush1.bf16.msra.mxu0 0
    %2266 = vmatprep.subr.bf16.mxu0 0
    %2267 = vmatpush1.bf16.msra.mxu0 0
    %2268 = vmatprep.subr.bf16.mxu0 0
    %2269 = vmatpush1.bf16.msra.mxu0 0
    %2270 = vmatprep.subr.bf16.mxu0 0
    %2271 = vmatpush1.bf16.msra.mxu0 0
    %2272 = vmatprep.subr.bf16.mxu0 0
    %2273 = vmatpush1.bf16.msra.mxu0 0
    %2274 = vmatprep.subr.bf16.mxu0 0
    %2275 = vmatpush1.bf16.msra.mxu0 0
    %2276 = vmatprep.mubr.bf16.mxu0 0
    %2277 = vmatmul.mubr.bf16.gmra.mrb[0].mxu0 %v2221
    %v2278 = vpop.f32.mrb[0].mxu0
    %v2279 = vadd.f32 0.0, %v2278
    %v2280 = vpop.f32.mrb[0].mxu0
    %v2281 = vpop.f32.mrb[0].mxu0
    %v2282 = vadd.f32 0.0, %v2281
    %v2283 = vpop.f32.mrb[0].mxu0
    %2284 = vmatprep.mubr.bf16.mxu0 0
    %2285 = vmatmul.mubr.bf16.gmra.mrb[0].mxu0 %v2224
    %v2286 = vpop.f32.mrb[0].mxu0
    %v2287 = vadd.f32 0.0, %v2286
    %v2288 = vpop.f32.mrb[0].mxu0
    %v2289 = vpop.f32.mrb[0].mxu0
    %v2290 = vadd.f32 0.0, %v2289
    %v2291 = vpop.f32.mrb[0].mxu0
    %2292 = vmatprep.mubr.bf16.mxu0 0
    %2293 = vmatmul.mubr.bf16.gmra.mrb[0].mxu0 %v2227
    %v2294 = vpop.f32.mrb[0].mxu0
    %v2295 = vadd.f32 0.0, %v2294
    %v2296 = vpop.f32.mrb[0].mxu0
    %v2297 = vpop.f32.mrb[0].mxu0
    %v2298 = vadd.f32 0.0, %v2297
    %v2299 = vpop.f32.mrb[0].mxu0
    %2300 = vmatprep.mubr.bf16.mxu0 0
    %2301 = vmatmul.mubr.bf16.gmra.mrb[0].mxu0 %v2230
    %v2302 = vpop.f32.mrb[0].mxu0
    %v2303 = vadd.f32 0.0, %v2302
    %v2304 = vpop.f32.mrb[0].mxu0
    %v2305 = vpop.f32.mrb[0].mxu0
    %v2306 = vadd.f32 0.0, %v2305
    %v2307 = vpop.f32.mrb[0].mxu0
    %2308 = vmatprep.mubr.bf16.mxu0 0
    %2309 = vmatmul.mubr.bf16.gmra.mrb[0].mxu0 %v2233
    %v2310 = vpop.f32.mrb[0].mxu0
    %v2311 = vadd.f32 0.0, %v2310
    %v2312 = vpop.f32.mrb[0].mxu0
    %v2313 = vpop.f32.mrb[0].mxu0
    %v2314 = vadd.f32 0.0, %v2313
    %v2315 = vpop.f32.mrb[0].mxu0
    %2316 = vmatprep.mubr.bf16.mxu0 0
    %2317 = vmatmul.mubr.bf16.gmra.mrb[0].mxu0 %v2236
    %v2318 = vpop.f32.mrb[0].mxu0
    %v2319 = vadd.f32 0.0, %v2318
    %v2320 = vpop.f32.mrb[0].mxu0
    %v2321 = vpop.f32.mrb[0].mxu0
    %v2322 = vadd.f32 0.0, %v2321
    %v2323 = vpop.f32.mrb[0].mxu0
    %2324 = vmatprep.mubr.bf16.mxu0 0
    %2325 = vmatmul.mubr.bf16.gmra.mrb[0].mxu0 %v2239
    %v2326 = vpop.f32.mrb[0].mxu0
    %v2327 = vadd.f32 0.0, %v2326
    %v2328 = vpop.f32.mrb[0].mxu0
    %v2329 = vpop.f32.mrb[0].mxu0
    %v2330 = vpop.f32.mrb[0].mxu0
    %2331 = vdwg.mxu0
    %v2332 = vadd.f32 %v2162, %v2279
    %v2333 = vadd.f32 %v2163, %v2282
    %v2334 = vadd.f32 %v2164, %v2287
    %v2335 = vadd.f32 %v2165, %v2290
    %v2336 = vadd.f32 %v2166, %v2295
    %v2337 = vadd.f32 %v2167, %v2298
    %v2338 = vadd.f32 %v2168, %v2303
    %v2339 = vadd.f32 %v2169, %v2306
    %v2340 = vadd.f32 %v2170, %v2311
    %v2341 = vadd.f32 %v2171, %v2314
    %v2342 = vadd.f32 %v2172, %v2319
    %v2343 = vadd.f32 %v2173, %v2322
    %v2344 = vadd.f32 %v2174, %v2327
    %s2345 = scalar_lea.vmem %s3, 108
    %v2346 = vld [vmem:[%s2345] sm:$0xf]
    %v2347 = vld [vmem:[%s2345 + $0x4] sm:$0xf]
    %v2348 = vld [vmem:[%s2345 + $0x8] sm:$0x3]
    %v2352 = vunpack.c.l.b16 %v2346
    %v2353 = vunpack.c.l.b16 %v2347
    %v2354 = vunpack.c.l.b16 %v2348
    %v2355 = vpack.c.b16 %v2353, %v2352
    %v2356 = vpack.c.b16 %v2354, %v2354
    %v2358 = vsel %vm826, %v1638, 0
    %v2360 = vsel %vm826, %v1639, 0
    %v2362 = vsel %vm826, %v1640, 0
    %v2364 = vsel %vm826, %v1641, 0
    %v2366 = vsel %vm826, %v1642, 0
    %v2368 = vsel %vm826, %v1643, 0
    %v2370 = vsel %vm826, %v2175, 0
    %v2373 = vsel %vm938, %v2356, 0
    %2375 = vmatprep.subr.bf16.mxu0 0
    %2376 = vmatpush1.bf16.msra.mxu0 %v2355
    %2377 = vmatprep.subr.bf16.mxu0 0
    %2378 = vmatpush1.bf16.msra.mxu0 %v2373
    %2379 = vmatprep.subr.bf16.mxu0 0
    %2380 = vmatpush1.bf16.msra.mxu0 0
    %2381 = vmatprep.subr.bf16.mxu0 0
    %2382 = vmatpush1.bf16.msra.mxu0 0
    %2383 = vmatprep.subr.bf16.mxu0 0
    %2384 = vmatpush1.bf16.msra.mxu0 0
    %2385 = vmatprep.subr.bf16.mxu0 0
    %2386 = vmatpush1.bf16.msra.mxu0 0
    %2387 = vmatprep.subr.bf16.mxu0 0
    %2388 = vmatpush1.bf16.msra.mxu0 0
    %2389 = vmatprep.subr.bf16.mxu0 0
    %2390 = vmatpush1.bf16.msra.mxu0 0
    %2391 = vmatprep.subr.bf16.mxu0 0
    %2392 = vmatpush1.bf16.msra.mxu0 0
    %2393 = vmatprep.subr.bf16.mxu0 0
    %2394 = vmatpush1.bf16.msra.mxu0 0
    %2395 = vmatprep.subr.bf16.mxu0 0
    %2396 = vmatpush1.bf16.msra.mxu0 0
    %2397 = vmatprep.subr.bf16.mxu0 0
    %2398 = vmatpush1.bf16.msra.mxu0 0
    %2399 = vmatprep.subr.bf16.mxu0 0
    %2400 = vmatpush1.bf16.msra.mxu0 0
    %2401 = vmatprep.subr.bf16.mxu0 0
    %2402 = vmatpush1.bf16.msra.mxu0 0
    %2403 = vmatprep.subr.bf16.mxu0 0
    %2404 = vmatpush1.bf16.msra.mxu0 0
    %2405 = vmatprep.subr.bf16.mxu0 0
    %2406 = vmatpush1.bf16.msra.mxu0 0
    %2407 = vmatprep.mubr.bf16.mxu0 0
    %2408 = vmatmul.mubr.bf16.gmra.mrb[0].mxu0 %v2358
    %v2409 = vpop.f32.mrb[0].mxu0
    %v2410 = vadd.f32 0.0, %v2409
    %v2411 = vpop.f32.mrb[0].mxu0
    %v2412 = vpop.f32.mrb[0].mxu0
    %v2413 = vadd.f32 0.0, %v2412
    %v2414 = vpop.f32.mrb[0].mxu0
    %2415 = vmatprep.mubr.bf16.mxu0 0
    %2416 = vmatmul.mubr.bf16.gmra.mrb[0].mxu0 %v2360
    %v2417 = vpop.f32.mrb[0].mxu0
    %v2418 = vadd.f32 0.0, %v2417
    %v2419 = vpop.f32.mrb[0].mxu0
    %v2420 = vpop.f32.mrb[0].mxu0
    %v2421 = vadd.f32 0.0, %v2420
    %v2422 = vpop.f32.mrb[0].mxu0
    %2423 = vmatprep.mubr.bf16.mxu0 0
    %2424 = vmatmul.mubr.bf16.gmra.mrb[0].mxu0 %v2362
    %v2425 = vpop.f32.mrb[0].mxu0
    %v2426 = vadd.f32 0.0, %v2425
    %v2427 = vpop.f32.mrb[0].mxu0
    %v2428 = vpop.f32.mrb[0].mxu0
    %v2429 = vadd.f32 0.0, %v2428
    %v2430 = vpop.f32.mrb[0].mxu0
    %2431 = vmatprep.mubr.bf16.mxu0 0
    %2432 = vmatmul.mubr.bf16.gmra.mrb[0].mxu0 %v2364
    %v2433 = vpop.f32.mrb[0].mxu0
    %v2434 = vadd.f32 0.0, %v2433
    %v2435 = vpop.f32.mrb[0].mxu0
    %v2436 = vpop.f32.mrb[0].mxu0
    %v2437 = vadd.f32 0.0, %v2436
    %v2438 = vpop.f32.mrb[0].mxu0
    %2439 = vmatprep.mubr.bf16.mxu0 0
    %2440 = vmatmul.mubr.bf16.gmra.mrb[0].mxu0 %v2366
    %v2441 = vpop.f32.mrb[0].mxu0
    %v2442 = vadd.f32 0.0, %v2441
    %v2443 = vpop.f32.mrb[0].mxu0
    %v2444 = vpop.f32.mrb[0].mxu0
    %v2445 = vadd.f32 0.0, %v2444
    %v2446 = vpop.f32.mrb[0].mxu0
    %2447 = vmatprep.mubr.bf16.mxu0 0
    %2448 = vmatmul.mubr.bf16.gmra.mrb[0].mxu0 %v2368
    %v2449 = vpop.f32.mrb[0].mxu0
    %v2450 = vadd.f32 0.0, %v2449
    %v2451 = vpop.f32.mrb[0].mxu0
    %v2452 = vpop.f32.mrb[0].mxu0
    %v2453 = vadd.f32 0.0, %v2452
    %v2454 = vpop.f32.mrb[0].mxu0
    %2455 = vmatprep.mubr.bf16.mxu0 0
    %2456 = vmatmul.mubr.bf16.gmra.mrb[0].mxu0 %v2370
    %v2457 = vpop.f32.mrb[0].mxu0
    %v2458 = vadd.f32 0.0, %v2457
    %v2459 = vpop.f32.mrb[0].mxu0
    %v2460 = vpop.f32.mrb[0].mxu0
    %v2461 = vpop.f32.mrb[0].mxu0
    %2462 = vdwg.mxu0
    %v2463 = vadd.f32 %v2332, %v2410
    %v2464 = vadd.f32 %v2333, %v2413
    %v2465 = vadd.f32 %v2334, %v2418
    %v2466 = vadd.f32 %v2335, %v2421
    %v2467 = vadd.f32 %v2336, %v2426
    %v2468 = vadd.f32 %v2337, %v2429
    %v2469 = vadd.f32 %v2338, %v2434
    %v2470 = vadd.f32 %v2339, %v2437
    %v2471 = vadd.f32 %v2340, %v2442
    %v2472 = vadd.f32 %v2341, %v2445
    %v2473 = vadd.f32 %v2342, %v2450
    %v2474 = vadd.f32 %v2343, %v2453
    %v2475 = vadd.f32 %v2344, %v2458
    %v2476 = vld [vmem:[#allocation2 + $0x8] sm:$0xf0]
    %v2477 = vld [vmem:[#allocation2 + $0x38] sm:$0xff]
    %s2478 = scalar_lea.vmem %s3, 120
    %v2479 = vld [vmem:[%s2478] sm:$0xf]
    %v2480 = vld [vmem:[%s2478 + $0x4] sm:$0xf]
    %v2481 = vld [vmem:[%s2478 + $0x8] sm:$0x3]
    %vm2484 = vcmask 1043456
    %v2485 = vrot.slane %v2476, 4
    %v2486 = vrot.slane %v1639, 4
    %v2487 = vsel %vm2484, %v2485, %v2486
    %v2488 = vrot.slane %v1640, 4
    %v2489 = vsel %vm2484, %v2486, %v2488
    %v2490 = vrot.slane %v1641, 4
    %v2491 = vsel %vm2484, %v2488, %v2490
    %v2492 = vrot.slane %v1642, 4
    %v2493 = vsel %vm2484, %v2490, %v2492
    %v2494 = vrot.slane %v1643, 4
    %v2495 = vsel %vm2484, %v2492, %v2494
    %v2496 = vrot.slane %v2477, 4
    %v2497 = vsel %vm2484, %v2494, %v2496
    %v2501 = vunpack.c.l.b16 %v2479
    %v2502 = vunpack.c.l.b16 %v2480
    %v2503 = vunpack.c.l.b16 %v2481
    %v2504 = vpack.c.b16 %v2502, %v2501
    %v2505 = vpack.c.b16 %v2503, %v2503
    %v2508 = vsel %vm826, %v2487, 0
    %v2511 = vsel %vm826, %v2489, 0
    %v2514 = vsel %vm826, %v2491, 0
    %v2517 = vsel %vm826, %v2493, 0
    %v2520 = vsel %vm826, %v2495, 0
    %v2523 = vsel %vm826, %v2497, 0
    %v2526 = vsel %vm826, %v2496, 0
    %v2529 = vsel %vm938, %v2505, 0
    %2531 = vmatprep.subr.bf16.mxu0 0
    %2532 = vmatpush1.bf16.msra.mxu0 %v2504
    %2533 = vmatprep.subr.bf16.mxu0 0
    %2534 = vmatpush1.bf16.msra.mxu0 %v2529
    %2535 = vmatprep.subr.bf16.mxu0 0
    %2536 = vmatpush1.bf16.msra.mxu0 0
    %2537 = vmatprep.subr.bf16.mxu0 0
    %2538 = vmatpush1.bf16.msra.mxu0 0
    %2539 = vmatprep.subr.bf16.mxu0 0
    %2540 = vmatpush1.bf16.msra.mxu0 0
    %2541 = vmatprep.subr.bf16.mxu0 0
    %2542 = vmatpush1.bf16.msra.mxu0 0
    %2543 = vmatprep.subr.bf16.mxu0 0
    %2544 = vmatpush1.bf16.msra.mxu0 0
    %2545 = vmatprep.subr.bf16.mxu0 0
    %2546 = vmatpush1.bf16.msra.mxu0 0
    %2547 = vmatprep.subr.bf16.mxu0 0
    %2548 = vmatpush1.bf16.msra.mxu0 0
    %2549 = vmatprep.subr.bf16.mxu0 0
    %2550 = vmatpush1.bf16.msra.mxu0 0
    %2551 = vmatprep.subr.bf16.mxu0 0
    %2552 = vmatpush1.bf16.msra.mxu0 0
    %2553 = vmatprep.subr.bf16.mxu0 0
    %2554 = vmatpush1.bf16.msra.mxu0 0
    %2555 = vmatprep.subr.bf16.mxu0 0
    %2556 = vmatpush1.bf16.msra.mxu0 0
    %2557 = vmatprep.subr.bf16.mxu0 0
    %2558 = vmatpush1.bf16.msra.mxu0 0
    %2559 = vmatprep.subr.bf16.mxu0 0
    %2560 = vmatpush1.bf16.msra.mxu0 0
    %2561 = vmatprep.subr.bf16.mxu0 0
    %2562 = vmatpush1.bf16.msra.mxu0 0
    %2563 = vmatprep.mubr.bf16.mxu0 0
    %2564 = vmatmul.mubr.bf16.gmra.mrb[0].mxu0 %v2508
    %v2565 = vpop.f32.mrb[0].mxu0
    %v2566 = vadd.f32 0.0, %v2565
    %v2567 = vpop.f32.mrb[0].mxu0
    %v2568 = vpop.f32.mrb[0].mxu0
    %v2569 = vadd.f32 0.0, %v2568
    %v2570 = vpop.f32.mrb[0].mxu0
    %2571 = vmatprep.mubr.bf16.mxu0 0
    %2572 = vmatmul.mubr.bf16.gmra.mrb[0].mxu0 %v2511
    %v2573 = vpop.f32.mrb[0].mxu0
    %v2574 = vadd.f32 0.0, %v2573
    %v2575 = vpop.f32.mrb[0].mxu0
    %v2576 = vpop.f32.mrb[0].mxu0
    %v2577 = vadd.f32 0.0, %v2576
    %v2578 = vpop.f32.mrb[0].mxu0
    %2579 = vmatprep.mubr.bf16.mxu0 0
    %2580 = vmatmul.mubr.bf16.gmra.mrb[0].mxu0 %v2514
    %v2581 = vpop.f32.mrb[0].mxu0
    %v2582 = vadd.f32 0.0, %v2581
    %v2583 = vpop.f32.mrb[0].mxu0
    %v2584 = vpop.f32.mrb[0].mxu0
    %v2585 = vadd.f32 0.0, %v2584
    %v2586 = vpop.f32.mrb[0].mxu0
    %2587 = vmatprep.mubr.bf16.mxu0 0
    %2588 = vmatmul.mubr.bf16.gmra.mrb[0].mxu0 %v2517
    %v2589 = vpop.f32.mrb[0].mxu0
    %v2590 = vadd.f32 0.0, %v2589
    %v2591 = vpop.f32.mrb[0].mxu0
    %v2592 = vpop.f32.mrb[0].mxu0
    %v2593 = vadd.f32 0.0, %v2592
    %v2594 = vpop.f32.mrb[0].mxu0
    %2595 = vmatprep.mubr.bf16.mxu0 0
    %2596 = vmatmul.mubr.bf16.gmra.mrb[0].mxu0 %v2520
    %v2597 = vpop.f32.mrb[0].mxu0
    %v2598 = vadd.f32 0.0, %v2597
    %v2599 = vpop.f32.mrb[0].mxu0
    %v2600 = vpop.f32.mrb[0].mxu0
    %v2601 = vadd.f32 0.0, %v2600
    %v2602 = vpop.f32.mrb[0].mxu0
    %2603 = vmatprep.mubr.bf16.mxu0 0
    %2604 = vmatmul.mubr.bf16.gmra.mrb[0].mxu0 %v2523
    %v2605 = vpop.f32.mrb[0].mxu0
    %v2606 = vadd.f32 0.0, %v2605
    %v2607 = vpop.f32.mrb[0].mxu0
    %v2608 = vpop.f32.mrb[0].mxu0
    %v2609 = vadd.f32 0.0, %v2608
    %v2610 = vpop.f32.mrb[0].mxu0
    %2611 = vmatprep.mubr.bf16.mxu0 0
    %2612 = vmatmul.mubr.bf16.gmra.mrb[0].mxu0 %v2526
    %v2613 = vpop.f32.mrb[0].mxu0
    %v2614 = vadd.f32 0.0, %v2613
    %v2615 = vpop.f32.mrb[0].mxu0
    %v2616 = vpop.f32.mrb[0].mxu0
    %v2617 = vpop.f32.mrb[0].mxu0
    %2618 = vdwg.mxu0
    %v2619 = vadd.f32 %v2463, %v2566
    %v2620 = vadd.f32 %v2464, %v2569
    %v2621 = vadd.f32 %v2465, %v2574
    %v2622 = vadd.f32 %v2466, %v2577
    %v2623 = vadd.f32 %v2467, %v2582
    %v2624 = vadd.f32 %v2468, %v2585
    %v2625 = vadd.f32 %v2469, %v2590
    %v2626 = vadd.f32 %v2470, %v2593
    %v2627 = vadd.f32 %v2471, %v2598
    %v2628 = vadd.f32 %v2472, %v2601
    %v2629 = vadd.f32 %v2473, %v2606
    %v2630 = vadd.f32 %v2474, %v2609
    %v2631 = vadd.f32 %v2475, %v2614
    %v2632 = vld [vmem:[#allocation2 + $0x8] sm:$0xf0]
    %v2633 = vld [vmem:[#allocation2 + $0x10] sm:$0xff]
    %v2634 = vld [vmem:[#allocation2 + $0x18] sm:$0xff]
    %v2635 = vld [vmem:[#allocation2 + $0x20] sm:$0xff]
    %v2636 = vld [vmem:[#allocation2 + $0x28] sm:$0xff]
    %v2637 = vld [vmem:[#allocation2 + $0x30] sm:$0xff]
    %v2638 = vld [vmem:[#allocation2 + $0x38] sm:$0xff]
    %v2639 = vld [vmem:[#allocation2 + $0x40] sm:$0x1]
    %s2640 = scalar_lea.vmem %s3, 132
    %v2641 = vld [vmem:[%s2640] sm:$0xf]
    %v2642 = vld [vmem:[%s2640 + $0x4] sm:$0xf]
    %v2643 = vld [vmem:[%s2640 + $0x8] sm:$0x3]
    %vm2644 = vsmask.f32 3328
    %v2646 = vshrl.u32 %v2632, 16
    %v2648 = vrot.slane %v2646, 4
    %v2649 = vshll.u32 %v2632, 16
    %v2651 = vrot.slane %v2649, 5
    %v2652 = vor.u32 %v2648, %v2651
    %v2654 = vshrl.u32 %v2633, 16
    %v2656 = vrot.slane %v2654, 4
    %v2657 = vshll.u32 %v2633, 16
    %v2659 = vrot.slane %v2657, 5
    %v2660 = vor.u32 %v2656, %v2659
    %v2661 = vsel %vm2644, %v2652, %v2660
    %v2663 = vshrl.u32 %v2634, 16
    %v2665 = vrot.slane %v2663, 4
    %v2666 = vshll.u32 %v2634, 16
    %v2668 = vrot.slane %v2666, 5
    %v2669 = vor.u32 %v2665, %v2668
    %v2670 = vsel %vm2644, %v2660, %v2669
    %v2672 = vshrl.u32 %v2635, 16
    %v2674 = vrot.slane %v2672, 4
    %v2675 = vshll.u32 %v2635, 16
    %v2677 = vrot.slane %v2675, 5
    %v2678 = vor.u32 %v2674, %v2677
    %v2679 = vsel %vm2644, %v2669, %v2678
    %v2681 = vshrl.u32 %v2636, 16
    %v2683 = vrot.slane %v2681, 4
    %v2684 = vshll.u32 %v2636, 16
    %v2686 = vrot.slane %v2684, 5
    %v2687 = vor.u32 %v2683, %v2686
    %v2688 = vsel %vm2644, %v2678, %v2687
    %v2690 = vshrl.u32 %v2637, 16
    %v2692 = vrot.slane %v2690, 4
    %v2693 = vshll.u32 %v2637, 16
    %v2695 = vrot.slane %v2693, 5
    %v2696 = vor.u32 %v2692, %v2695
    %v2697 = vsel %vm2644, %v2687, %v2696
    %v2699 = vshrl.u32 %v2638, 16
    %v2701 = vrot.slane %v2699, 4
    %v2702 = vshll.u32 %v2638, 16
    %v2704 = vrot.slane %v2702, 5
    %v2705 = vor.u32 %v2701, %v2704
    %v2706 = vsel %vm2644, %v2696, %v2705
    %v2708 = vshll.u32 %v2639, 16
    %v2710 = vrot.slane %v2708, 5
    %v2711 = vsel %vm2644, %v2705, %v2710
    %v2715 = vunpack.c.l.b16 %v2641
    %v2716 = vunpack.c.l.b16 %v2642
    %v2717 = vunpack.c.l.b16 %v2643
    %v2718 = vpack.c.b16 %v2716, %v2715
    %v2719 = vpack.c.b16 %v2717, %v2717
    %v2722 = vsel %vm826, %v2661, 0
    %v2725 = vsel %vm826, %v2670, 0
    %v2728 = vsel %vm826, %v2679, 0
    %v2731 = vsel %vm826, %v2688, 0
    %v2734 = vsel %vm826, %v2697, 0
    %v2737 = vsel %vm826, %v2706, 0
    %v2740 = vsel %vm826, %v2711, 0
    %v2743 = vsel %vm938, %v2719, 0
    %2745 = vmatprep.subr.bf16.mxu0 0
    %2746 = vmatpush1.bf16.msra.mxu0 %v2718
    %2747 = vmatprep.subr.bf16.mxu0 0
    %2748 = vmatpush1.bf16.msra.mxu0 %v2743
    %2749 = vmatprep.subr.bf16.mxu0 0
    %2750 = vmatpush1.bf16.msra.mxu0 0
    %2751 = vmatprep.subr.bf16.mxu0 0
    %2752 = vmatpush1.bf16.msra.mxu0 0
    %2753 = vmatprep.subr.bf16.mxu0 0
    %2754 = vmatpush1.bf16.msra.mxu0 0
    %2755 = vmatprep.subr.bf16.mxu0 0
    %2756 = vmatpush1.bf16.msra.mxu0 0
    %2757 = vmatprep.subr.bf16.mxu0 0
    %2758 = vmatpush1.bf16.msra.mxu0 0
    %2759 = vmatprep.subr.bf16.mxu0 0
    %2760 = vmatpush1.bf16.msra.mxu0 0
    %2761 = vmatprep.subr.bf16.mxu0 0
    %2762 = vmatpush1.bf16.msra.mxu0 0
    %2763 = vmatprep.subr.bf16.mxu0 0
    %2764 = vmatpush1.bf16.msra.mxu0 0
    %2765 = vmatprep.subr.bf16.mxu0 0
    %2766 = vmatpush1.bf16.msra.mxu0 0
    %2767 = vmatprep.subr.bf16.mxu0 0
    %2768 = vmatpush1.bf16.msra.mxu0 0
    %2769 = vmatprep.subr.bf16.mxu0 0
    %2770 = vmatpush1.bf16.msra.mxu0 0
    %2771 = vmatprep.subr.bf16.mxu0 0
    %2772 = vmatpush1.bf16.msra.mxu0 0
    %2773 = vmatprep.subr.bf16.mxu0 0
    %2774 = vmatpush1.bf16.msra.mxu0 0
    %2775 = vmatprep.subr.bf16.mxu0 0
    %2776 = vmatpush1.bf16.msra.mxu0 0
    %2777 = vmatprep.mubr.bf16.mxu0 0
    %2778 = vmatmul.mubr.bf16.gmra.mrb[0].mxu0 %v2722
    %v2779 = vpop.f32.mrb[0].mxu0
    %v2780 = vadd.f32 0.0, %v2779
    %v2781 = vpop.f32.mrb[0].mxu0
    %v2782 = vpop.f32.mrb[0].mxu0
    %v2783 = vadd.f32 0.0, %v2782
    %v2784 = vpop.f32.mrb[0].mxu0
    %2785 = vmatprep.mubr.bf16.mxu0 0
    %2786 = vmatmul.mubr.bf16.gmra.mrb[0].mxu0 %v2725
    %v2787 = vpop.f32.mrb[0].mxu0
    %v2788 = vadd.f32 0.0, %v2787
    %v2789 = vpop.f32.mrb[0].mxu0
    %v2790 = vpop.f32.mrb[0].mxu0
    %v2791 = vadd.f32 0.0, %v2790
    %v2792 = vpop.f32.mrb[0].mxu0
    %2793 = vmatprep.mubr.bf16.mxu0 0
    %2794 = vmatmul.mubr.bf16.gmra.mrb[0].mxu0 %v2728
    %v2795 = vpop.f32.mrb[0].mxu0
    %v2796 = vadd.f32 0.0, %v2795
    %v2797 = vpop.f32.mrb[0].mxu0
    %v2798 = vpop.f32.mrb[0].mxu0
    %v2799 = vadd.f32 0.0, %v2798
    %v2800 = vpop.f32.mrb[0].mxu0
    %2801 = vmatprep.mubr.bf16.mxu0 0
    %2802 = vmatmul.mubr.bf16.gmra.mrb[0].mxu0 %v2731
    %v2803 = vpop.f32.mrb[0].mxu0
    %v2804 = vadd.f32 0.0, %v2803
    %v2805 = vpop.f32.mrb[0].mxu0
    %v2806 = vpop.f32.mrb[0].mxu0
    %v2807 = vadd.f32 0.0, %v2806
    %v2808 = vpop.f32.mrb[0].mxu0
    %2809 = vmatprep.mubr.bf16.mxu0 0
    %2810 = vmatmul.mubr.bf16.gmra.mrb[0].mxu0 %v2734
    %v2811 = vpop.f32.mrb[0].mxu0
    %v2812 = vadd.f32 0.0, %v2811
    %v2813 = vpop.f32.mrb[0].mxu0
    %v2814 = vpop.f32.mrb[0].mxu0
    %v2815 = vadd.f32 0.0, %v2814
    %v2816 = vpop.f32.mrb[0].mxu0
    %2817 = vmatprep.mubr.bf16.mxu0 0
    %2818 = vmatmul.mubr.bf16.gmra.mrb[0].mxu0 %v2737
    %v2819 = vpop.f32.mrb[0].mxu0
    %v2820 = vadd.f32 0.0, %v2819
    %v2821 = vpop.f32.mrb[0].mxu0
    %v2822 = vpop.f32.mrb[0].mxu0
    %v2823 = vadd.f32 0.0, %v2822
    %v2824 = vpop.f32.mrb[0].mxu0
    %2825 = vmatprep.mubr.bf16.mxu0 0
    %2826 = vmatmul.mubr.bf16.gmra.mrb[0].mxu0 %v2740
    %v2827 = vpop.f32.mrb[0].mxu0
    %v2828 = vadd.f32 0.0, %v2827
    %v2829 = vpop.f32.mrb[0].mxu0
    %v2830 = vpop.f32.mrb[0].mxu0
    %v2831 = vpop.f32.mrb[0].mxu0
    %2832 = vdwg.mxu0
    %v2833 = vadd.f32 %v2619, %v2780
    %v2834 = vadd.f32 %v2620, %v2783
    %v2835 = vadd.f32 %v2621, %v2788
    %v2836 = vadd.f32 %v2622, %v2791
    %v2837 = vadd.f32 %v2623, %v2796
    %v2838 = vadd.f32 %v2624, %v2799
    %v2839 = vadd.f32 %v2625, %v2804
    %v2840 = vadd.f32 %v2626, %v2807
    %v2841 = vadd.f32 %v2627, %v2812
    %v2842 = vadd.f32 %v2628, %v2815
    %v2843 = vadd.f32 %v2629, %v2820
    %v2844 = vadd.f32 %v2630, %v2823
    %v2845 = vadd.f32 %v2631, %v2828
    %v2846 = vld [vmem:[#allocation2 + $0x8] sm:$0xe0]
    %s2847 = scalar_lea.vmem %s3, 144
    %v2848 = vld [vmem:[%s2847] sm:$0xf]
    %v2849 = vld [vmem:[%s2847 + $0x4] sm:$0xf]
    %v2850 = vld [vmem:[%s2847 + $0x8] sm:$0x3]
    %vm2859 = vcmask 1042432
    %v2860 = vrot.slane %v2846, 5
    %v2861 = vrot.slane %v2633, 5
    %v2862 = vsel %vm2859, %v2860, %v2861
    %v2863 = vrot.slane %v2634, 5
    %v2864 = vsel %vm2859, %v2861, %v2863
    %v2865 = vrot.slane %v2635, 5
    %v2866 = vsel %vm2859, %v2863, %v2865
    %v2867 = vrot.slane %v2636, 5
    %v2868 = vsel %vm2859, %v2865, %v2867
    %v2869 = vrot.slane %v2637, 5
    %v2870 = vsel %vm2859, %v2867, %v2869
    %v2871 = vrot.slane %v2638, 5
    %v2872 = vsel %vm2859, %v2869, %v2871
    %v2873 = vrot.slane %v2639, 5
    %v2874 = vsel %vm2859, %v2871, %v2873
    %v2878 = vunpack.c.l.b16 %v2848
    %v2879 = vunpack.c.l.b16 %v2849
    %v2880 = vunpack.c.l.b16 %v2850
    %v2881 = vpack.c.b16 %v2879, %v2878
    %v2882 = vpack.c.b16 %v2880, %v2880
    %v2885 = vsel %vm826, %v2862, 0
    %v2888 = vsel %vm826, %v2864, 0
    %v2891 = vsel %vm826, %v2866, 0
    %v2894 = vsel %vm826, %v2868, 0
    %v2897 = vsel %vm826, %v2870, 0
    %v2900 = vsel %vm826, %v2872, 0
    %v2903 = vsel %vm826, %v2874, 0
    %v2906 = vsel %vm938, %v2882, 0
    %2908 = vmatprep.subr.bf16.mxu0 0
    %2909 = vmatpush1.bf16.msra.mxu0 %v2881
    %2910 = vmatprep.subr.bf16.mxu0 0
    %2911 = vmatpush1.bf16.msra.mxu0 %v2906
    %2912 = vmatprep.subr.bf16.mxu0 0
    %2913 = vmatpush1.bf16.msra.mxu0 0
    %2914 = vmatprep.subr.bf16.mxu0 0
    %2915 = vmatpush1.bf16.msra.mxu0 0
    %2916 = vmatprep.subr.bf16.mxu0 0
    %2917 = vmatpush1.bf16.msra.mxu0 0
    %2918 = vmatprep.subr.bf16.mxu0 0
    %2919 = vmatpush1.bf16.msra.mxu0 0
    %2920 = vmatprep.subr.bf16.mxu0 0
    %2921 = vmatpush1.bf16.msra.mxu0 0
    %2922 = vmatprep.subr.bf16.mxu0 0
    %2923 = vmatpush1.bf16.msra.mxu0 0
    %2924 = vmatprep.subr.bf16.mxu0 0
    %2925 = vmatpush1.bf16.msra.mxu0 0
    %2926 = vmatprep.subr.bf16.mxu0 0
    %2927 = vmatpush1.bf16.msra.mxu0 0
    %2928 = vmatprep.subr.bf16.mxu0 0
    %2929 = vmatpush1.bf16.msra.mxu0 0
    %2930 = vmatprep.subr.bf16.mxu0 0
    %2931 = vmatpush1.bf16.msra.mxu0 0
    %2932 = vmatprep.subr.bf16.mxu0 0
    %2933 = vmatpush1.bf16.msra.mxu0 0
    %2934 = vmatprep.subr.bf16.mxu0 0
    %2935 = vmatpush1.bf16.msra.mxu0 0
    %2936 = vmatprep.subr.bf16.mxu0 0
    %2937 = vmatpush1.bf16.msra.mxu0 0
    %2938 = vmatprep.subr.bf16.mxu0 0
    %2939 = vmatpush1.bf16.msra.mxu0 0
    %2940 = vmatprep.mubr.bf16.mxu0 0
    %2941 = vmatmul.mubr.bf16.gmra.mrb[0].mxu0 %v2885
    %v2942 = vpop.f32.mrb[0].mxu0
    %v2943 = vadd.f32 0.0, %v2942
    %v2944 = vpop.f32.mrb[0].mxu0
    %v2945 = vpop.f32.mrb[0].mxu0
    %v2946 = vadd.f32 0.0, %v2945
    %v2947 = vpop.f32.mrb[0].mxu0
    %2948 = vmatprep.mubr.bf16.mxu0 0
    %2949 = vmatmul.mubr.bf16.gmra.mrb[0].mxu0 %v2888
    %v2950 = vpop.f32.mrb[0].mxu0
    %v2951 = vadd.f32 0.0, %v2950
    %v2952 = vpop.f32.mrb[0].mxu0
    %v2953 = vpop.f32.mrb[0].mxu0
    %v2954 = vadd.f32 0.0, %v2953
    %v2955 = vpop.f32.mrb[0].mxu0
    %2956 = vmatprep.mubr.bf16.mxu0 0
    %2957 = vmatmul.mubr.bf16.gmra.mrb[0].mxu0 %v2891
    %v2958 = vpop.f32.mrb[0].mxu0
    %v2959 = vadd.f32 0.0, %v2958
    %v2960 = vpop.f32.mrb[0].mxu0
    %v2961 = vpop.f32.mrb[0].mxu0
    %v2962 = vadd.f32 0.0, %v2961
    %v2963 = vpop.f32.mrb[0].mxu0
    %2964 = vmatprep.mubr.bf16.mxu0 0
    %2965 = vmatmul.mubr.bf16.gmra.mrb[0].mxu0 %v2894
    %v2966 = vpop.f32.mrb[0].mxu0
    %v2967 = vadd.f32 0.0, %v2966
    %v2968 = vpop.f32.mrb[0].mxu0
    %v2969 = vpop.f32.mrb[0].mxu0
    %v2970 = vadd.f32 0.0, %v2969
    %v2971 = vpop.f32.mrb[0].mxu0
    %2972 = vmatprep.mubr.bf16.mxu0 0
    %2973 = vmatmul.mubr.bf16.gmra.mrb[0].mxu0 %v2897
    %v2974 = vpop.f32.mrb[0].mxu0
    %v2975 = vadd.f32 0.0, %v2974
    %v2976 = vpop.f32.mrb[0].mxu0
    %v2977 = vpop.f32.mrb[0].mxu0
    %v2978 = vadd.f32 0.0, %v2977
    %v2979 = vpop.f32.mrb[0].mxu0
    %2980 = vmatprep.mubr.bf16.mxu0 0
    %2981 = vmatmul.mubr.bf16.gmra.mrb[0].mxu0 %v2900
    %v2982 = vpop.f32.mrb[0].mxu0
    %v2983 = vadd.f32 0.0, %v2982
    %v2984 = vpop.f32.mrb[0].mxu0
    %v2985 = vpop.f32.mrb[0].mxu0
    %v2986 = vadd.f32 0.0, %v2985
    %v2987 = vpop.f32.mrb[0].mxu0
    %2988 = vmatprep.mubr.bf16.mxu0 0
    %2989 = vmatmul.mubr.bf16.gmra.mrb[0].mxu0 %v2903
    %v2990 = vpop.f32.mrb[0].mxu0
    %v2991 = vadd.f32 0.0, %v2990
    %v2992 = vpop.f32.mrb[0].mxu0
    %v2993 = vpop.f32.mrb[0].mxu0
    %v2994 = vpop.f32.mrb[0].mxu0
    %2995 = vdwg.mxu0
    %v2996 = vadd.f32 %v2833, %v2943
    %v2997 = vadd.f32 %v2834, %v2946
    %v2998 = vadd.f32 %v2835, %v2951
    %v2999 = vadd.f32 %v2836, %v2954
    %v3000 = vadd.f32 %v2837, %v2959
    %v3001 = vadd.f32 %v2838, %v2962
    %v3002 = vadd.f32 %v2839, %v2967
    %v3003 = vadd.f32 %v2840, %v2970
    %v3004 = vadd.f32 %v2841, %v2975
    %v3005 = vadd.f32 %v2842, %v2978
    %v3006 = vadd.f32 %v2843, %v2983
    %v3007 = vadd.f32 %v2844, %v2986
    %v3008 = vadd.f32 %v2845, %v2991
    %v3009 = vld [vmem:[#allocation2 + $0x40] sm:$0x3]
    %s3010 = scalar_lea.vmem %s3, 156
    %v3011 = vld [vmem:[%s3010] sm:$0xf]
    %v3012 = vld [vmem:[%s3010 + $0x4] sm:$0xf]
    %v3013 = vld [vmem:[%s3010 + $0x8] sm:$0x3]
    %vm3014 = vsmask.f32 2304
    %v3016 = vshrl.u32 %v2846, 16
    %v3018 = vrot.slane %v3016, 5
    %v3019 = vshll.u32 %v2846, 16
    %v3021 = vrot.slane %v3019, 6
    %v3022 = vor.u32 %v3018, %v3021
    %v3023 = vrot.slane %v2654, 5
    %v3024 = vrot.slane %v2657, 6
    %v3025 = vor.u32 %v3023, %v3024
    %v3026 = vsel %vm3014, %v3022, %v3025
    %v3027 = vrot.slane %v2663, 5
    %v3028 = vrot.slane %v2666, 6
    %v3029 = vor.u32 %v3027, %v3028
    %v3030 = vsel %vm3014, %v3025, %v3029
    %v3031 = vrot.slane %v2672, 5
    %v3032 = vrot.slane %v2675, 6
    %v3033 = vor.u32 %v3031, %v3032
    %v3034 = vsel %vm3014, %v3029, %v3033
    %v3035 = vrot.slane %v2681, 5
    %v3036 = vrot.slane %v2684, 6
    %v3037 = vor.u32 %v3035, %v3036
    %v3038 = vsel %vm3014, %v3033, %v3037
    %v3039 = vrot.slane %v2690, 5
    %v3040 = vrot.slane %v2693, 6
    %v3041 = vor.u32 %v3039, %v3040
    %v3042 = vsel %vm3014, %v3037, %v3041
    %v3043 = vrot.slane %v2699, 5
    %v3044 = vrot.slane %v2702, 6
    %v3045 = vor.u32 %v3043, %v3044
    %v3046 = vsel %vm3014, %v3041, %v3045
    %v3048 = vshrl.u32 %v3009, 16
    %v3050 = vrot.slane %v3048, 5
    %v3051 = vshll.u32 %v3009, 16
    %v3053 = vrot.slane %v3051, 6
    %v3054 = vor.u32 %v3050, %v3053
    %v3055 = vsel %vm3014, %v3045, %v3054
    %v3059 = vunpack.c.l.b16 %v3011
    %v3060 = vunpack.c.l.b16 %v3012
    %v3061 = vunpack.c.l.b16 %v3013
    %v3062 = vpack.c.b16 %v3060, %v3059
    %v3063 = vpack.c.b16 %v3061, %v3061
    %v3066 = vsel %vm826, %v3026, 0
    %v3069 = vsel %vm826, %v3030, 0
    %v3072 = vsel %vm826, %v3034, 0
    %v3075 = vsel %vm826, %v3038, 0
    %v3078 = vsel %vm826, %v3042, 0
    %v3081 = vsel %vm826, %v3046, 0
    %v3084 = vsel %vm826, %v3055, 0
    %v3087 = vsel %vm938, %v3063, 0
    %3089 = vmatprep.subr.bf16.mxu0 0
    %3090 = vmatpush1.bf16.msra.mxu0 %v3062
    %3091 = vmatprep.subr.bf16.mxu0 0
    %3092 = vmatpush1.bf16.msra.mxu0 %v3087
    %3093 = vmatprep.subr.bf16.mxu0 0
    %3094 = vmatpush1.bf16.msra.mxu0 0
    %3095 = vmatprep.subr.bf16.mxu0 0
    %3096 = vmatpush1.bf16.msra.mxu0 0
    %3097 = vmatprep.subr.bf16.mxu0 0
    %3098 = vmatpush1.bf16.msra.mxu0 0
    %3099 = vmatprep.subr.bf16.mxu0 0
    %3100 = vmatpush1.bf16.msra.mxu0 0
    %3101 = vmatprep.subr.bf16.mxu0 0
    %3102 = vmatpush1.bf16.msra.mxu0 0
    %3103 = vmatprep.subr.bf16.mxu0 0
    %3104 = vmatpush1.bf16.msra.mxu0 0
    %3105 = vmatprep.subr.bf16.mxu0 0
    %3106 = vmatpush1.bf16.msra.mxu0 0
    %3107 = vmatprep.subr.bf16.mxu0 0
    %3108 = vmatpush1.bf16.msra.mxu0 0
    %3109 = vmatprep.subr.bf16.mxu0 0
    %3110 = vmatpush1.bf16.msra.mxu0 0
    %3111 = vmatprep.subr.bf16.mxu0 0
    %3112 = vmatpush1.bf16.msra.mxu0 0
    %3113 = vmatprep.subr.bf16.mxu0 0
    %3114 = vmatpush1.bf16.msra.mxu0 0
    %3115 = vmatprep.subr.bf16.mxu0 0
    %3116 = vmatpush1.bf16.msra.mxu0 0
    %3117 = vmatprep.subr.bf16.mxu0 0
    %3118 = vmatpush1.bf16.msra.mxu0 0
    %3119 = vmatprep.subr.bf16.mxu0 0
    %3120 = vmatpush1.bf16.msra.mxu0 0
    %3121 = vmatprep.mubr.bf16.mxu0 0
    %3122 = vmatmul.mubr.bf16.gmra.mrb[0].mxu0 %v3066
    %v3123 = vpop.f32.mrb[0].mxu0
    %v3124 = vadd.f32 0.0, %v3123
    %v3125 = vpop.f32.mrb[0].mxu0
    %v3126 = vpop.f32.mrb[0].mxu0
    %v3127 = vadd.f32 0.0, %v3126
    %v3128 = vpop.f32.mrb[0].mxu0
    %3129 = vmatprep.mubr.bf16.mxu0 0
    %3130 = vmatmul.mubr.bf16.gmra.mrb[0].mxu0 %v3069
    %v3131 = vpop.f32.mrb[0].mxu0
    %v3132 = vadd.f32 0.0, %v3131
    %v3133 = vpop.f32.mrb[0].mxu0
    %v3134 = vpop.f32.mrb[0].mxu0
    %v3135 = vadd.f32 0.0, %v3134
    %v3136 = vpop.f32.mrb[0].mxu0
    %3137 = vmatprep.mubr.bf16.mxu0 0
    %3138 = vmatmul.mubr.bf16.gmra.mrb[0].mxu0 %v3072
    %v3139 = vpop.f32.mrb[0].mxu0
    %v3140 = vadd.f32 0.0, %v3139
    %v3141 = vpop.f32.mrb[0].mxu0
    %v3142 = vpop.f32.mrb[0].mxu0
    %v3143 = vadd.f32 0.0, %v3142
    %v3144 = vpop.f32.mrb[0].mxu0
    %3145 = vmatprep.mubr.bf16.mxu0 0
    %3146 = vmatmul.mubr.bf16.gmra.mrb[0].mxu0 %v3075
    %v3147 = vpop.f32.mrb[0].mxu0
    %v3148 = vadd.f32 0.0, %v3147
    %v3149 = vpop.f32.mrb[0].mxu0
    %v3150 = vpop.f32.mrb[0].mxu0
    %v3151 = vadd.f32 0.0, %v3150
    %v3152 = vpop.f32.mrb[0].mxu0
    %3153 = vmatprep.mubr.bf16.mxu0 0
    %3154 = vmatmul.mubr.bf16.gmra.mrb[0].mxu0 %v3078
    %v3155 = vpop.f32.mrb[0].mxu0
    %v3156 = vadd.f32 0.0, %v3155
    %v3157 = vpop.f32.mrb[0].mxu0
    %v3158 = vpop.f32.mrb[0].mxu0
    %v3159 = vadd.f32 0.0, %v3158
    %v3160 = vpop.f32.mrb[0].mxu0
    %3161 = vmatprep.mubr.bf16.mxu0 0
    %3162 = vmatmul.mubr.bf16.gmra.mrb[0].mxu0 %v3081
    %v3163 = vpop.f32.mrb[0].mxu0
    %v3164 = vadd.f32 0.0, %v3163
    %v3165 = vpop.f32.mrb[0].mxu0
    %v3166 = vpop.f32.mrb[0].mxu0
    %v3167 = vadd.f32 0.0, %v3166
    %v3168 = vpop.f32.mrb[0].mxu0
    %3169 = vmatprep.mubr.bf16.mxu0 0
    %3170 = vmatmul.mubr.bf16.gmra.mrb[0].mxu0 %v3084
    %v3171 = vpop.f32.mrb[0].mxu0
    %v3172 = vadd.f32 0.0, %v3171
    %v3173 = vpop.f32.mrb[0].mxu0
    %v3174 = vpop.f32.mrb[0].mxu0
    %v3175 = vpop.f32.mrb[0].mxu0
    %3176 = vdwg.mxu0
    %v3177 = vadd.f32 %v2996, %v3124
    %v3178 = vadd.f32 %v2997, %v3127
    %v3179 = vadd.f32 %v2998, %v3132
    %v3180 = vadd.f32 %v2999, %v3135
    %v3181 = vadd.f32 %v3000, %v3140
    %v3182 = vadd.f32 %v3001, %v3143
    %v3183 = vadd.f32 %v3002, %v3148
    %v3184 = vadd.f32 %v3003, %v3151
    %v3185 = vadd.f32 %v3004, %v3156
    %v3186 = vadd.f32 %v3005, %v3159
    %v3187 = vadd.f32 %v3006, %v3164
    %v3188 = vadd.f32 %v3007, %v3167
    %v3189 = vadd.f32 %v3008, %v3172
    %v3190 = vld [vmem:[#allocation2 + $0x8] sm:$0xc0]
    %s3191 = scalar_lea.vmem %s3, 168
    %v3192 = vld [vmem:[%s3191] sm:$0xf]
    %v3193 = vld [vmem:[%s3191 + $0x4] sm:$0xf]
    %v3194 = vld [vmem:[%s3191 + $0x8] sm:$0x3]
    %v3197 = vrot.slane %v3190, 6
    %v3198 = vrot.slane %v2633, 6
    %v3199 = vsel %vm1657, %v3197, %v3198
    %v3200 = vrot.slane %v2634, 6
    %v3201 = vsel %vm1657, %v3198, %v3200
    %v3202 = vrot.slane %v2635, 6
    %v3203 = vsel %vm1657, %v3200, %v3202
    %v3204 = vrot.slane %v2636, 6
    %v3205 = vsel %vm1657, %v3202, %v3204
    %v3206 = vrot.slane %v2637, 6
    %v3207 = vsel %vm1657, %v3204, %v3206
    %v3208 = vrot.slane %v2638, 6
    %v3209 = vsel %vm1657, %v3206, %v3208
    %v3210 = vrot.slane %v3009, 6
    %v3211 = vsel %vm1657, %v3208, %v3210
    %v3215 = vunpack.c.l.b16 %v3192
    %v3216 = vunpack.c.l.b16 %v3193
    %v3217 = vunpack.c.l.b16 %v3194
    %v3218 = vpack.c.b16 %v3216, %v3215
    %v3219 = vpack.c.b16 %v3217, %v3217
    %v3222 = vsel %vm826, %v3199, 0
    %v3225 = vsel %vm826, %v3201, 0
    %v3228 = vsel %vm826, %v3203, 0
    %v3231 = vsel %vm826, %v3205, 0
    %v3234 = vsel %vm826, %v3207, 0
    %v3237 = vsel %vm826, %v3209, 0
    %v3240 = vsel %vm826, %v3211, 0
    %v3243 = vsel %vm938, %v3219, 0
    %3245 = vmatprep.subr.bf16.mxu0 0
    %3246 = vmatpush1.bf16.msra.mxu0 %v3218
    %3247 = vmatprep.subr.bf16.mxu0 0
    %3248 = vmatpush1.bf16.msra.mxu0 %v3243
    %3249 = vmatprep.subr.bf16.mxu0 0
    %3250 = vmatpush1.bf16.msra.mxu0 0
    %3251 = vmatprep.subr.bf16.mxu0 0
    %3252 = vmatpush1.bf16.msra.mxu0 0
    %3253 = vmatprep.subr.bf16.mxu0 0
    %3254 = vmatpush1.bf16.msra.mxu0 0
    %3255 = vmatprep.subr.bf16.mxu0 0
    %3256 = vmatpush1.bf16.msra.mxu0 0
    %3257 = vmatprep.subr.bf16.mxu0 0
    %3258 = vmatpush1.bf16.msra.mxu0 0
    %3259 = vmatprep.subr.bf16.mxu0 0
    %3260 = vmatpush1.bf16.msra.mxu0 0
    %3261 = vmatprep.subr.bf16.mxu0 0
    %3262 = vmatpush1.bf16.msra.mxu0 0
    %3263 = vmatprep.subr.bf16.mxu0 0
    %3264 = vmatpush1.bf16.msra.mxu0 0
    %3265 = vmatprep.subr.bf16.mxu0 0
    %3266 = vmatpush1.bf16.msra.mxu0 0
    %3267 = vmatprep.subr.bf16.mxu0 0
    %3268 = vmatpush1.bf16.msra.mxu0 0
    %3269 = vmatprep.subr.bf16.mxu0 0
    %3270 = vmatpush1.bf16.msra.mxu0 0
    %3271 = vmatprep.subr.bf16.mxu0 0
    %3272 = vmatpush1.bf16.msra.mxu0 0
    %3273 = vmatprep.subr.bf16.mxu0 0
    %3274 = vmatpush1.bf16.msra.mxu0 0
    %3275 = vmatprep.subr.bf16.mxu0 0
    %3276 = vmatpush1.bf16.msra.mxu0 0
    %3277 = vmatprep.mubr.bf16.mxu0 0
    %3278 = vmatmul.mubr.bf16.gmra.mrb[0].mxu0 %v3222
    %v3279 = vpop.f32.mrb[0].mxu0
    %v3280 = vadd.f32 0.0, %v3279
    %v3281 = vpop.f32.mrb[0].mxu0
    %v3282 = vpop.f32.mrb[0].mxu0
    %v3283 = vadd.f32 0.0, %v3282
    %v3284 = vpop.f32.mrb[0].mxu0
    %3285 = vmatprep.mubr.bf16.mxu0 0
    %3286 = vmatmul.mubr.bf16.gmra.mrb[0].mxu0 %v3225
    %v3287 = vpop.f32.mrb[0].mxu0
    %v3288 = vadd.f32 0.0, %v3287
    %v3289 = vpop.f32.mrb[0].mxu0
    %v3290 = vpop.f32.mrb[0].mxu0
    %v3291 = vadd.f32 0.0, %v3290
    %v3292 = vpop.f32.mrb[0].mxu0
    %3293 = vmatprep.mubr.bf16.mxu0 0
    %3294 = vmatmul.mubr.bf16.gmra.mrb[0].mxu0 %v3228
    %v3295 = vpop.f32.mrb[0].mxu0
    %v3296 = vadd.f32 0.0, %v3295
    %v3297 = vpop.f32.mrb[0].mxu0
    %v3298 = vpop.f32.mrb[0].mxu0
    %v3299 = vadd.f32 0.0, %v3298
    %v3300 = vpop.f32.mrb[0].mxu0
    %3301 = vmatprep.mubr.bf16.mxu0 0
    %3302 = vmatmul.mubr.bf16.gmra.mrb[0].mxu0 %v3231
    %v3303 = vpop.f32.mrb[0].mxu0
    %v3304 = vadd.f32 0.0, %v3303
    %v3305 = vpop.f32.mrb[0].mxu0
    %v3306 = vpop.f32.mrb[0].mxu0
    %v3307 = vadd.f32 0.0, %v3306
    %v3308 = vpop.f32.mrb[0].mxu0
    %3309 = vmatprep.mubr.bf16.mxu0 0
    %3310 = vmatmul.mubr.bf16.gmra.mrb[0].mxu0 %v3234
    %v3311 = vpop.f32.mrb[0].mxu0
    %v3312 = vadd.f32 0.0, %v3311
    %v3313 = vpop.f32.mrb[0].mxu0
    %v3314 = vpop.f32.mrb[0].mxu0
    %v3315 = vadd.f32 0.0, %v3314
    %v3316 = vpop.f32.mrb[0].mxu0
    %3317 = vmatprep.mubr.bf16.mxu0 0
    %3318 = vmatmul.mubr.bf16.gmra.mrb[0].mxu0 %v3237
    %v3319 = vpop.f32.mrb[0].mxu0
    %v3320 = vadd.f32 0.0, %v3319
    %v3321 = vpop.f32.mrb[0].mxu0
    %v3322 = vpop.f32.mrb[0].mxu0
    %v3323 = vadd.f32 0.0, %v3322
    %v3324 = vpop.f32.mrb[0].mxu0
    %3325 = vmatprep.mubr.bf16.mxu0 0
    %3326 = vmatmul.mubr.bf16.gmra.mrb[0].mxu0 %v3240
    %v3327 = vpop.f32.mrb[0].mxu0
    %v3328 = vadd.f32 0.0, %v3327
    %v3329 = vpop.f32.mrb[0].mxu0
    %v3330 = vpop.f32.mrb[0].mxu0
    %v3331 = vpop.f32.mrb[0].mxu0
    %3332 = vdwg.mxu0
    %v3333 = vadd.f32 %v3177, %v3280
    %v3334 = vadd.f32 %v3178, %v3283
    %v3335 = vadd.f32 %v3179, %v3288
    %v3336 = vadd.f32 %v3180, %v3291
    %v3337 = vadd.f32 %v3181, %v3296
    %v3338 = vadd.f32 %v3182, %v3299
    %v3339 = vadd.f32 %v3183, %v3304
    %v3340 = vadd.f32 %v3184, %v3307
    %v3341 = vadd.f32 %v3185, %v3312
    %v3342 = vadd.f32 %v3186, %v3315
    %v3343 = vadd.f32 %v3187, %v3320
    %v3344 = vadd.f32 %v3188, %v3323
    %v3345 = vadd.f32 %v3189, %v3328
    %v3346 = vld [vmem:[#allocation2 + $0x10] sm:$0xfc]
    %v3347 = vld [vmem:[#allocation2 + $0x40] sm:$0x3f]
    %s3348 = scalar_lea.vmem %s3, 180
    %v3349 = vld [vmem:[%s3348] sm:$0xf]
    %v3350 = vld [vmem:[%s3348 + $0x4] sm:$0xf]
    %v3351 = vld [vmem:[%s3348 + $0x8] sm:$0x3]
    %v3354 = vrot.slane %v3346, 2
    %v3355 = vrot.slane %v2634, 2
    %v3356 = vsel %vm1489, %v3354, %v3355
    %v3357 = vrot.slane %v2635, 2
    %v3358 = vsel %vm1489, %v3355, %v3357
    %v3359 = vrot.slane %v2636, 2
    %v3360 = vsel %vm1489, %v3357, %v3359
    %v3361 = vrot.slane %v2637, 2
    %v3362 = vsel %vm1489, %v3359, %v3361
    %v3363 = vrot.slane %v2638, 2
    %v3364 = vsel %vm1489, %v3361, %v3363
    %v3365 = vrot.slane %v3347, 2
    %v3366 = vsel %vm1489, %v3363, %v3365
    %v3370 = vunpack.c.l.b16 %v3349
    %v3371 = vunpack.c.l.b16 %v3350
    %v3372 = vunpack.c.l.b16 %v3351
    %v3373 = vpack.c.b16 %v3371, %v3370
    %v3374 = vpack.c.b16 %v3372, %v3372
    %v3377 = vsel %vm826, %v3356, 0
    %v3380 = vsel %vm826, %v3358, 0
    %v3383 = vsel %vm826, %v3360, 0
    %v3386 = vsel %vm826, %v3362, 0
    %v3389 = vsel %vm826, %v3364, 0
    %v3392 = vsel %vm826, %v3366, 0
    %v3395 = vsel %vm826, %v3365, 0
    %v3398 = vsel %vm938, %v3374, 0
    %3400 = vmatprep.subr.bf16.mxu0 0
    %3401 = vmatpush1.bf16.msra.mxu0 %v3373
    %3402 = vmatprep.subr.bf16.mxu0 0
    %3403 = vmatpush1.bf16.msra.mxu0 %v3398
    %3404 = vmatprep.subr.bf16.mxu0 0
    %3405 = vmatpush1.bf16.msra.mxu0 0
    %3406 = vmatprep.subr.bf16.mxu0 0
    %3407 = vmatpush1.bf16.msra.mxu0 0
    %3408 = vmatprep.subr.bf16.mxu0 0
    %3409 = vmatpush1.bf16.msra.mxu0 0
    %3410 = vmatprep.subr.bf16.mxu0 0
    %3411 = vmatpush1.bf16.msra.mxu0 0
    %3412 = vmatprep.subr.bf16.mxu0 0
    %3413 = vmatpush1.bf16.msra.mxu0 0
    %3414 = vmatprep.subr.bf16.mxu0 0
    %3415 = vmatpush1.bf16.msra.mxu0 0
    %3416 = vmatprep.subr.bf16.mxu0 0
    %3417 = vmatpush1.bf16.msra.mxu0 0
    %3418 = vmatprep.subr.bf16.mxu0 0
    %3419 = vmatpush1.bf16.msra.mxu0 0
    %3420 = vmatprep.subr.bf16.mxu0 0
    %3421 = vmatpush1.bf16.msra.mxu0 0
    %3422 = vmatprep.subr.bf16.mxu0 0
    %3423 = vmatpush1.bf16.msra.mxu0 0
    %3424 = vmatprep.subr.bf16.mxu0 0
    %3425 = vmatpush1.bf16.msra.mxu0 0
    %3426 = vmatprep.subr.bf16.mxu0 0
    %3427 = vmatpush1.bf16.msra.mxu0 0
    %3428 = vmatprep.subr.bf16.mxu0 0
    %3429 = vmatpush1.bf16.msra.mxu0 0
    %3430 = vmatprep.subr.bf16.mxu0 0
    %3431 = vmatpush1.bf16.msra.mxu0 0
    %3432 = vmatprep.mubr.bf16.mxu0 0
    %3433 = vmatmul.mubr.bf16.gmra.mrb[0].mxu0 %v3377
    %v3434 = vpop.f32.mrb[0].mxu0
    %v3435 = vadd.f32 0.0, %v3434
    %v3436 = vpop.f32.mrb[0].mxu0
    %v3437 = vpop.f32.mrb[0].mxu0
    %v3438 = vadd.f32 0.0, %v3437
    %v3439 = vpop.f32.mrb[0].mxu0
    %3440 = vmatprep.mubr.bf16.mxu0 0
    %3441 = vmatmul.mubr.bf16.gmra.mrb[0].mxu0 %v3380
    %v3442 = vpop.f32.mrb[0].mxu0
    %v3443 = vadd.f32 0.0, %v3442
    %v3444 = vpop.f32.mrb[0].mxu0
    %v3445 = vpop.f32.mrb[0].mxu0
    %v3446 = vadd.f32 0.0, %v3445
    %v3447 = vpop.f32.mrb[0].mxu0
    %3448 = vmatprep.mubr.bf16.mxu0 0
    %3449 = vmatmul.mubr.bf16.gmra.mrb[0].mxu0 %v3383
    %v3450 = vpop.f32.mrb[0].mxu0
    %v3451 = vadd.f32 0.0, %v3450
    %v3452 = vpop.f32.mrb[0].mxu0
    %v3453 = vpop.f32.mrb[0].mxu0
    %v3454 = vadd.f32 0.0, %v3453
    %v3455 = vpop.f32.mrb[0].mxu0
    %3456 = vmatprep.mubr.bf16.mxu0 0
    %3457 = vmatmul.mubr.bf16.gmra.mrb[0].mxu0 %v3386
    %v3458 = vpop.f32.mrb[0].mxu0
    %v3459 = vadd.f32 0.0, %v3458
    %v3460 = vpop.f32.mrb[0].mxu0
    %v3461 = vpop.f32.mrb[0].mxu0
    %v3462 = vadd.f32 0.0, %v3461
    %v3463 = vpop.f32.mrb[0].mxu0
    %3464 = vmatprep.mubr.bf16.mxu0 0
    %3465 = vmatmul.mubr.bf16.gmra.mrb[0].mxu0 %v3389
    %v3466 = vpop.f32.mrb[0].mxu0
    %v3467 = vadd.f32 0.0, %v3466
    %v3468 = vpop.f32.mrb[0].mxu0
    %v3469 = vpop.f32.mrb[0].mxu0
    %v3470 = vadd.f32 0.0, %v3469
    %v3471 = vpop.f32.mrb[0].mxu0
    %3472 = vmatprep.mubr.bf16.mxu0 0
    %3473 = vmatmul.mubr.bf16.gmra.mrb[0].mxu0 %v3392
    %v3474 = vpop.f32.mrb[0].mxu0
    %v3475 = vadd.f32 0.0, %v3474
    %v3476 = vpop.f32.mrb[0].mxu0
    %v3477 = vpop.f32.mrb[0].mxu0
    %v3478 = vadd.f32 0.0, %v3477
    %v3479 = vpop.f32.mrb[0].mxu0
    %3480 = vmatprep.mubr.bf16.mxu0 0
    %3481 = vmatmul.mubr.bf16.gmra.mrb[0].mxu0 %v3395
    %v3482 = vpop.f32.mrb[0].mxu0
    %v3483 = vadd.f32 0.0, %v3482
    %v3484 = vpop.f32.mrb[0].mxu0
    %v3485 = vpop.f32.mrb[0].mxu0
    %v3486 = vpop.f32.mrb[0].mxu0
    %3487 = vdwg.mxu0
    %v3488 = vadd.f32 %v3333, %v3435
    %v3489 = vadd.f32 %v3334, %v3438
    %v3490 = vadd.f32 %v3335, %v3443
    %v3491 = vadd.f32 %v3336, %v3446
    %v3492 = vadd.f32 %v3337, %v3451
    %v3493 = vadd.f32 %v3338, %v3454
    %v3494 = vadd.f32 %v3339, %v3459
    %v3495 = vadd.f32 %v3340, %v3462
    %v3496 = vadd.f32 %v3341, %v3467
    %v3497 = vadd.f32 %v3342, %v3470
    %v3498 = vadd.f32 %v3343, %v3475
    %v3499 = vadd.f32 %v3344, %v3478
    %v3500 = vadd.f32 %v3345, %v3483
    %v3501 = vld [vmem:[#allocation2 + $0x40] sm:$0x7f]
    %s3502 = scalar_lea.vmem %s3, 192
    %v3503 = vld [vmem:[%s3502] sm:$0xf]
    %v3504 = vld [vmem:[%s3502 + $0x4] sm:$0xf]
    %v3505 = vld [vmem:[%s3502 + $0x8] sm:$0x3]
    %vm3506 = vsmask.f32 5376
    %v3508 = vshrl.u32 %v3346, 16
    %v3510 = vrot.slane %v3508, 2
    %v3511 = vshll.u32 %v3346, 16
    %v3513 = vrot.slane %v3511, 3
    %v3514 = vor.u32 %v3510, %v3513
    %v3515 = vrot.slane %v2663, 2
    %v3516 = vrot.slane %v2666, 3
    %v3517 = vor.u32 %v3515, %v3516
    %v3518 = vsel %vm3506, %v3514, %v3517
    %v3519 = vrot.slane %v2672, 2
    %v3520 = vrot.slane %v2675, 3
    %v3521 = vor.u32 %v3519, %v3520
    %v3522 = vsel %vm3506, %v3517, %v3521
    %v3523 = vrot.slane %v2681, 2
    %v3524 = vrot.slane %v2684, 3
    %v3525 = vor.u32 %v3523, %v3524
    %v3526 = vsel %vm3506, %v3521, %v3525
    %v3527 = vrot.slane %v2690, 2
    %v3528 = vrot.slane %v2693, 3
    %v3529 = vor.u32 %v3527, %v3528
    %v3530 = vsel %vm3506, %v3525, %v3529
    %v3531 = vrot.slane %v2699, 2
    %v3532 = vrot.slane %v2702, 3
    %v3533 = vor.u32 %v3531, %v3532
    %v3534 = vsel %vm3506, %v3529, %v3533
    %v3536 = vshrl.u32 %v3501, 16
    %v3538 = vrot.slane %v3536, 2
    %v3539 = vshll.u32 %v3501, 16
    %v3541 = vrot.slane %v3539, 3
    %v3542 = vor.u32 %v3538, %v3541
    %v3543 = vsel %vm3506, %v3533, %v3542
    %v3547 = vunpack.c.l.b16 %v3503
    %v3548 = vunpack.c.l.b16 %v3504
    %v3549 = vunpack.c.l.b16 %v3505
    %v3550 = vpack.c.b16 %v3548, %v3547
    %v3551 = vpack.c.b16 %v3549, %v3549
    %v3554 = vsel %vm826, %v3518, 0
    %v3557 = vsel %vm826, %v3522, 0
    %v3560 = vsel %vm826, %v3526, 0
    %v3563 = vsel %vm826, %v3530, 0
    %v3566 = vsel %vm826, %v3534, 0
    %v3569 = vsel %vm826, %v3543, 0
    %v3572 = vsel %vm826, %v3542, 0
    %v3575 = vsel %vm938, %v3551, 0
    %3577 = vmatprep.subr.bf16.mxu0 0
    %3578 = vmatpush1.bf16.msra.mxu0 %v3550
    %3579 = vmatprep.subr.bf16.mxu0 0
    %3580 = vmatpush1.bf16.msra.mxu0 %v3575
    %3581 = vmatprep.subr.bf16.mxu0 0
    %3582 = vmatpush1.bf16.msra.mxu0 0
    %3583 = vmatprep.subr.bf16.mxu0 0
    %3584 = vmatpush1.bf16.msra.mxu0 0
    %3585 = vmatprep.subr.bf16.mxu0 0
    %3586 = vmatpush1.bf16.msra.mxu0 0
    %3587 = vmatprep.subr.bf16.mxu0 0
    %3588 = vmatpush1.bf16.msra.mxu0 0
    %3589 = vmatprep.subr.bf16.mxu0 0
    %3590 = vmatpush1.bf16.msra.mxu0 0
    %3591 = vmatprep.subr.bf16.mxu0 0
    %3592 = vmatpush1.bf16.msra.mxu0 0
    %3593 = vmatprep.subr.bf16.mxu0 0
    %3594 = vmatpush1.bf16.msra.mxu0 0
    %3595 = vmatprep.subr.bf16.mxu0 0
    %3596 = vmatpush1.bf16.msra.mxu0 0
    %3597 = vmatprep.subr.bf16.mxu0 0
    %3598 = vmatpush1.bf16.msra.mxu0 0
    %3599 = vmatprep.subr.bf16.mxu0 0
    %3600 = vmatpush1.bf16.msra.mxu0 0
    %3601 = vmatprep.subr.bf16.mxu0 0
    %3602 = vmatpush1.bf16.msra.mxu0 0
    %3603 = vmatprep.subr.bf16.mxu0 0
    %3604 = vmatpush1.bf16.msra.mxu0 0
    %3605 = vmatprep.subr.bf16.mxu0 0
    %3606 = vmatpush1.bf16.msra.mxu0 0
    %3607 = vmatprep.subr.bf16.mxu0 0
    %3608 = vmatpush1.bf16.msra.mxu0 0
    %3609 = vmatprep.mubr.bf16.mxu0 0
    %3610 = vmatmul.mubr.bf16.gmra.mrb[0].mxu0 %v3554
    %v3611 = vpop.f32.mrb[0].mxu0
    %v3612 = vadd.f32 0.0, %v3611
    %v3613 = vpop.f32.mrb[0].mxu0
    %v3614 = vpop.f32.mrb[0].mxu0
    %v3615 = vadd.f32 0.0, %v3614
    %v3616 = vpop.f32.mrb[0].mxu0
    %3617 = vmatprep.mubr.bf16.mxu0 0
    %3618 = vmatmul.mubr.bf16.gmra.mrb[0].mxu0 %v3557
    %v3619 = vpop.f32.mrb[0].mxu0
    %v3620 = vadd.f32 0.0, %v3619
    %v3621 = vpop.f32.mrb[0].mxu0
    %v3622 = vpop.f32.mrb[0].mxu0
    %v3623 = vadd.f32 0.0, %v3622
    %v3624 = vpop.f32.mrb[0].mxu0
    %3625 = vmatprep.mubr.bf16.mxu0 0
    %3626 = vmatmul.mubr.bf16.gmra.mrb[0].mxu0 %v3560
    %v3627 = vpop.f32.mrb[0].mxu0
    %v3628 = vadd.f32 0.0, %v3627
    %v3629 = vpop.f32.mrb[0].mxu0
    %v3630 = vpop.f32.mrb[0].mxu0
    %v3631 = vadd.f32 0.0, %v3630
    %v3632 = vpop.f32.mrb[0].mxu0
    %3633 = vmatprep.mubr.bf16.mxu0 0
    %3634 = vmatmul.mubr.bf16.gmra.mrb[0].mxu0 %v3563
    %v3635 = vpop.f32.mrb[0].mxu0
    %v3636 = vadd.f32 0.0, %v3635
    %v3637 = vpop.f32.mrb[0].mxu0
    %v3638 = vpop.f32.mrb[0].mxu0
    %v3639 = vadd.f32 0.0, %v3638
    %v3640 = vpop.f32.mrb[0].mxu0
    %3641 = vmatprep.mubr.bf16.mxu0 0
    %3642 = vmatmul.mubr.bf16.gmra.mrb[0].mxu0 %v3566
    %v3643 = vpop.f32.mrb[0].mxu0
    %v3644 = vadd.f32 0.0, %v3643
    %v3645 = vpop.f32.mrb[0].mxu0
    %v3646 = vpop.f32.mrb[0].mxu0
    %v3647 = vadd.f32 0.0, %v3646
    %v3648 = vpop.f32.mrb[0].mxu0
    %3649 = vmatprep.mubr.bf16.mxu0 0
    %3650 = vmatmul.mubr.bf16.gmra.mrb[0].mxu0 %v3569
    %v3651 = vpop.f32.mrb[0].mxu0
    %v3652 = vadd.f32 0.0, %v3651
    %v3653 = vpop.f32.mrb[0].mxu0
    %v3654 = vpop.f32.mrb[0].mxu0
    %v3655 = vadd.f32 0.0, %v3654
    %v3656 = vpop.f32.mrb[0].mxu0
    %3657 = vmatprep.mubr.bf16.mxu0 0
    %3658 = vmatmul.mubr.bf16.gmra.mrb[0].mxu0 %v3572
    %v3659 = vpop.f32.mrb[0].mxu0
    %v3660 = vadd.f32 0.0, %v3659
    %v3661 = vpop.f32.mrb[0].mxu0
    %v3662 = vpop.f32.mrb[0].mxu0
    %v3663 = vpop.f32.mrb[0].mxu0
    %3664 = vdwg.mxu0
    %v3665 = vadd.f32 %v3488, %v3612
    %v3666 = vadd.f32 %v3489, %v3615
    %v3667 = vadd.f32 %v3490, %v3620
    %v3668 = vadd.f32 %v3491, %v3623
    %v3669 = vadd.f32 %v3492, %v3628
    %v3670 = vadd.f32 %v3493, %v3631
    %v3671 = vadd.f32 %v3494, %v3636
    %v3672 = vadd.f32 %v3495, %v3639
    %v3673 = vadd.f32 %v3496, %v3644
    %v3674 = vadd.f32 %v3497, %v3647
    %v3675 = vadd.f32 %v3498, %v3652
    %v3676 = vadd.f32 %v3499, %v3655
    %v3677 = vadd.f32 %v3500, %v3660
    %v3678 = vld [vmem:[#allocation2 + $0x10] sm:$0xf8]
    %s3679 = scalar_lea.vmem %s3, 204
    %v3680 = vld [vmem:[%s3679] sm:$0xf]
    %v3681 = vld [vmem:[%s3679 + $0x4] sm:$0xf]
    %v3682 = vld [vmem:[%s3679 + $0x8] sm:$0x3]
    %vm3685 = vcmask 1044480
    %v3686 = vrot.slane %v3678, 3
    %v3687 = vrot.slane %v2634, 3
    %v3688 = vsel %vm3685, %v3686, %v3687
    %v3689 = vrot.slane %v2635, 3
    %v3690 = vsel %vm3685, %v3687, %v3689
    %v3691 = vrot.slane %v2636, 3
    %v3692 = vsel %vm3685, %v3689, %v3691
    %v3693 = vrot.slane %v2637, 3
    %v3694 = vsel %vm3685, %v3691, %v3693
    %v3695 = vrot.slane %v2638, 3
    %v3696 = vsel %vm3685, %v3693, %v3695
    %v3697 = vrot.slane %v3501, 3
    %v3698 = vsel %vm3685, %v3695, %v3697
    %v3702 = vunpack.c.l.b16 %v3680
    %v3703 = vunpack.c.l.b16 %v3681
    %v3704 = vunpack.c.l.b16 %v3682
    %v3705 = vpack.c.b16 %v3703, %v3702
    %v3706 = vpack.c.b16 %v3704, %v3704
    %v3709 = vsel %vm826, %v3688, 0
    %v3712 = vsel %vm826, %v3690, 0
    %v3715 = vsel %vm826, %v3692, 0
    %v3718 = vsel %vm826, %v3694, 0
    %v3721 = vsel %vm826, %v3696, 0
    %v3724 = vsel %vm826, %v3698, 0
    %v3727 = vsel %vm826, %v3697, 0
    %v3730 = vsel %vm938, %v3706, 0
    %3732 = vmatprep.subr.bf16.mxu0 0
    %3733 = vmatpush1.bf16.msra.mxu0 %v3705
    %3734 = vmatprep.subr.bf16.mxu0 0
    %3735 = vmatpush1.bf16.msra.mxu0 %v3730
    %3736 = vmatprep.subr.bf16.mxu0 0
    %3737 = vmatpush1.bf16.msra.mxu0 0
    %3738 = vmatprep.subr.bf16.mxu0 0
    %3739 = vmatpush1.bf16.msra.mxu0 0
    %3740 = vmatprep.subr.bf16.mxu0 0
    %3741 = vmatpush1.bf16.msra.mxu0 0
    %3742 = vmatprep.subr.bf16.mxu0 0
    %3743 = vmatpush1.bf16.msra.mxu0 0
    %3744 = vmatprep.subr.bf16.mxu0 0
    %3745 = vmatpush1.bf16.msra.mxu0 0
    %3746 = vmatprep.subr.bf16.mxu0 0
    %3747 = vmatpush1.bf16.msra.mxu0 0
    %3748 = vmatprep.subr.bf16.mxu0 0
    %3749 = vmatpush1.bf16.msra.mxu0 0
    %3750 = vmatprep.subr.bf16.mxu0 0
    %3751 = vmatpush1.bf16.msra.mxu0 0
    %3752 = vmatprep.subr.bf16.mxu0 0
    %3753 = vmatpush1.bf16.msra.mxu0 0
    %3754 = vmatprep.subr.bf16.mxu0 0
    %3755 = vmatpush1.bf16.msra.mxu0 0
    %3756 = vmatprep.subr.bf16.mxu0 0
    %3757 = vmatpush1.bf16.msra.mxu0 0
    %3758 = vmatprep.subr.bf16.mxu0 0
    %3759 = vmatpush1.bf16.msra.mxu0 0
    %3760 = vmatprep.subr.bf16.mxu0 0
    %3761 = vmatpush1.bf16.msra.mxu0 0
    %3762 = vmatprep.subr.bf16.mxu0 0
    %3763 = vmatpush1.bf16.msra.mxu0 0
    %3764 = vmatprep.mubr.bf16.mxu0 0
    %3765 = vmatmul.mubr.bf16.gmra.mrb[0].mxu0 %v3709
    %v3766 = vpop.f32.mrb[0].mxu0
    %v3767 = vadd.f32 0.0, %v3766
    %v3768 = vpop.f32.mrb[0].mxu0
    %v3769 = vpop.f32.mrb[0].mxu0
    %v3770 = vadd.f32 0.0, %v3769
    %v3771 = vpop.f32.mrb[0].mxu0
    %3772 = vmatprep.mubr.bf16.mxu0 0
    %3773 = vmatmul.mubr.bf16.gmra.mrb[0].mxu0 %v3712
    %v3774 = vpop.f32.mrb[0].mxu0
    %v3775 = vadd.f32 0.0, %v3774
    %v3776 = vpop.f32.mrb[0].mxu0
    %v3777 = vpop.f32.mrb[0].mxu0
    %v3778 = vadd.f32 0.0, %v3777
    %v3779 = vpop.f32.mrb[0].mxu0
    %3780 = vmatprep.mubr.bf16.mxu0 0
    %3781 = vmatmul.mubr.bf16.gmra.mrb[0].mxu0 %v3715
    %v3782 = vpop.f32.mrb[0].mxu0
    %v3783 = vadd.f32 0.0, %v3782
    %v3784 = vpop.f32.mrb[0].mxu0
    %v3785 = vpop.f32.mrb[0].mxu0
    %v3786 = vadd.f32 0.0, %v3785
    %v3787 = vpop.f32.mrb[0].mxu0
    %3788 = vmatprep.mubr.bf16.mxu0 0
    %3789 = vmatmul.mubr.bf16.gmra.mrb[0].mxu0 %v3718
    %v3790 = vpop.f32.mrb[0].mxu0
    %v3791 = vadd.f32 0.0, %v3790
    %v3792 = vpop.f32.mrb[0].mxu0
    %v3793 = vpop.f32.mrb[0].mxu0
    %v3794 = vadd.f32 0.0, %v3793
    %v3795 = vpop.f32.mrb[0].mxu0
    %3796 = vmatprep.mubr.bf16.mxu0 0
    %3797 = vmatmul.mubr.bf16.gmra.mrb[0].mxu0 %v3721
    %v3798 = vpop.f32.mrb[0].mxu0
    %v3799 = vadd.f32 0.0, %v3798
    %v3800 = vpop.f32.mrb[0].mxu0
    %v3801 = vpop.f32.mrb[0].mxu0
    %v3802 = vadd.f32 0.0, %v3801
    %v3803 = vpop.f32.mrb[0].mxu0
    %3804 = vmatprep.mubr.bf16.mxu0 0
    %3805 = vmatmul.mubr.bf16.gmra.mrb[0].mxu0 %v3724
    %v3806 = vpop.f32.mrb[0].mxu0
    %v3807 = vadd.f32 0.0, %v3806
    %v3808 = vpop.f32.mrb[0].mxu0
    %v3809 = vpop.f32.mrb[0].mxu0
    %v3810 = vadd.f32 0.0, %v3809
    %v3811 = vpop.f32.mrb[0].mxu0
    %3812 = vmatprep.mubr.bf16.mxu0 0
    %3813 = vmatmul.mubr.bf16.gmra.mrb[0].mxu0 %v3727
    %v3814 = vpop.f32.mrb[0].mxu0
    %v3815 = vadd.f32 0.0, %v3814
    %v3816 = vpop.f32.mrb[0].mxu0
    %v3817 = vpop.f32.mrb[0].mxu0
    %v3818 = vpop.f32.mrb[0].mxu0
    %3819 = vdwg.mxu0
    %v3820 = vadd.f32 %v3665, %v3767
    %v3821 = vadd.f32 %v3666, %v3770
    %v3822 = vadd.f32 %v3667, %v3775
    %v3823 = vadd.f32 %v3668, %v3778
    %v3824 = vadd.f32 %v3669, %v3783
    %v3825 = vadd.f32 %v3670, %v3786
    %v3826 = vadd.f32 %v3671, %v3791
    %v3827 = vadd.f32 %v3672, %v3794
    %v3828 = vadd.f32 %v3673, %v3799
    %v3829 = vadd.f32 %v3674, %v3802
    %v3830 = vadd.f32 %v3675, %v3807
    %v3831 = vadd.f32 %v3676, %v3810
    %v3832 = vadd.f32 %v3677, %v3815
    %v3833 = vld [vmem:[#allocation2 + $0x40] sm:$0xff]
    %s3834 = scalar_lea.vmem %s3, 216
    %v3835 = vld [vmem:[%s3834] sm:$0xf]
    %v3836 = vld [vmem:[%s3834 + $0x4] sm:$0xf]
    %v3837 = vld [vmem:[%s3834 + $0x8] sm:$0x3]
    %vm3838 = vsmask.f32 4352
    %v3840 = vshrl.u32 %v3678, 16
    %v3842 = vrot.slane %v3840, 3
    %v3843 = vshll.u32 %v3678, 16
    %v3845 = vrot.slane %v3843, 4
    %v3846 = vor.u32 %v3842, %v3845
    %v3847 = vrot.slane %v2663, 3
    %v3848 = vrot.slane %v2666, 4
    %v3849 = vor.u32 %v3847, %v3848
    %v3850 = vsel %vm3838, %v3846, %v3849
    %v3851 = vrot.slane %v2672, 3
    %v3852 = vrot.slane %v2675, 4
    %v3853 = vor.u32 %v3851, %v3852
    %v3854 = vsel %vm3838, %v3849, %v3853
    %v3855 = vrot.slane %v2681, 3
    %v3856 = vrot.slane %v2684, 4
    %v3857 = vor.u32 %v3855, %v3856
    %v3858 = vsel %vm3838, %v3853, %v3857
    %v3859 = vrot.slane %v2690, 3
    %v3860 = vrot.slane %v2693, 4
    %v3861 = vor.u32 %v3859, %v3860
    %v3862 = vsel %vm3838, %v3857, %v3861
    %v3863 = vrot.slane %v2699, 3
    %v3864 = vrot.slane %v2702, 4
    %v3865 = vor.u32 %v3863, %v3864
    %v3866 = vsel %vm3838, %v3861, %v3865
    %v3868 = vshrl.u32 %v3833, 16
    %v3870 = vrot.slane %v3868, 3
    %v3871 = vshll.u32 %v3833, 16
    %v3873 = vrot.slane %v3871, 4
    %v3874 = vor.u32 %v3870, %v3873
    %v3875 = vsel %vm3838, %v3865, %v3874
    %v3879 = vunpack.c.l.b16 %v3835
    %v3880 = vunpack.c.l.b16 %v3836
    %v3881 = vunpack.c.l.b16 %v3837
    %v3882 = vpack.c.b16 %v3880, %v3879
    %v3883 = vpack.c.b16 %v3881, %v3881
    %v3886 = vsel %vm826, %v3850, 0
    %v3889 = vsel %vm826, %v3854, 0
    %v3892 = vsel %vm826, %v3858, 0
    %v3895 = vsel %vm826, %v3862, 0
    %v3898 = vsel %vm826, %v3866, 0
    %v3901 = vsel %vm826, %v3875, 0
    %v3904 = vsel %vm826, %v3874, 0
    %v3907 = vsel %vm938, %v3883, 0
    %3909 = vmatprep.subr.bf16.mxu0 0
    %3910 = vmatpush1.bf16.msra.mxu0 %v3882
    %3911 = vmatprep.subr.bf16.mxu0 0
    %3912 = vmatpush1.bf16.msra.mxu0 %v3907
    %3913 = vmatprep.subr.bf16.mxu0 0
    %3914 = vmatpush1.bf16.msra.mxu0 0
    %3915 = vmatprep.subr.bf16.mxu0 0
    %3916 = vmatpush1.bf16.msra.mxu0 0
    %3917 = vmatprep.subr.bf16.mxu0 0
    %3918 = vmatpush1.bf16.msra.mxu0 0
    %3919 = vmatprep.subr.bf16.mxu0 0
    %3920 = vmatpush1.bf16.msra.mxu0 0
    %3921 = vmatprep.subr.bf16.mxu0 0
    %3922 = vmatpush1.bf16.msra.mxu0 0
    %3923 = vmatprep.subr.bf16.mxu0 0
    %3924 = vmatpush1.bf16.msra.mxu0 0
    %3925 = vmatprep.subr.bf16.mxu0 0
    %3926 = vmatpush1.bf16.msra.mxu0 0
    %3927 = vmatprep.subr.bf16.mxu0 0
    %3928 = vmatpush1.bf16.msra.mxu0 0
    %3929 = vmatprep.subr.bf16.mxu0 0
    %3930 = vmatpush1.bf16.msra.mxu0 0
    %3931 = vmatprep.subr.bf16.mxu0 0
    %3932 = vmatpush1.bf16.msra.mxu0 0
    %3933 = vmatprep.subr.bf16.mxu0 0
    %3934 = vmatpush1.bf16.msra.mxu0 0
    %3935 = vmatprep.subr.bf16.mxu0 0
    %3936 = vmatpush1.bf16.msra.mxu0 0
    %3937 = vmatprep.subr.bf16.mxu0 0
    %3938 = vmatpush1.bf16.msra.mxu0 0
    %3939 = vmatprep.subr.bf16.mxu0 0
    %3940 = vmatpush1.bf16.msra.mxu0 0
    %3941 = vmatprep.mubr.bf16.mxu0 0
    %3942 = vmatmul.mubr.bf16.gmra.mrb[0].mxu0 %v3886
    %v3943 = vpop.f32.mrb[0].mxu0
    %v3944 = vadd.f32 0.0, %v3943
    %v3945 = vpop.f32.mrb[0].mxu0
    %v3946 = vpop.f32.mrb[0].mxu0
    %v3947 = vadd.f32 0.0, %v3946
    %v3948 = vpop.f32.mrb[0].mxu0
    %3949 = vmatprep.mubr.bf16.mxu0 0
    %3950 = vmatmul.mubr.bf16.gmra.mrb[0].mxu0 %v3889
    %v3951 = vpop.f32.mrb[0].mxu0
    %v3952 = vadd.f32 0.0, %v3951
    %v3953 = vpop.f32.mrb[0].mxu0
    %v3954 = vpop.f32.mrb[0].mxu0
    %v3955 = vadd.f32 0.0, %v3954
    %v3956 = vpop.f32.mrb[0].mxu0
    %3957 = vmatprep.mubr.bf16.mxu0 0
    %3958 = vmatmul.mubr.bf16.gmra.mrb[0].mxu0 %v3892
    %v3959 = vpop.f32.mrb[0].mxu0
    %v3960 = vadd.f32 0.0, %v3959
    %v3961 = vpop.f32.mrb[0].mxu0
    %v3962 = vpop.f32.mrb[0].mxu0
    %v3963 = vadd.f32 0.0, %v3962
    %v3964 = vpop.f32.mrb[0].mxu0
    %3965 = vmatprep.mubr.bf16.mxu0 0
    %3966 = vmatmul.mubr.bf16.gmra.mrb[0].mxu0 %v3895
    %v3967 = vpop.f32.mrb[0].mxu0
    %v3968 = vadd.f32 0.0, %v3967
    %v3969 = vpop.f32.mrb[0].mxu0
    %v3970 = vpop.f32.mrb[0].mxu0
    %v3971 = vadd.f32 0.0, %v3970
    %v3972 = vpop.f32.mrb[0].mxu0
    %3973 = vmatprep.mubr.bf16.mxu0 0
    %3974 = vmatmul.mubr.bf16.gmra.mrb[0].mxu0 %v3898
    %v3975 = vpop.f32.mrb[0].mxu0
    %v3976 = vadd.f32 0.0, %v3975
    %v3977 = vpop.f32.mrb[0].mxu0
    %v3978 = vpop.f32.mrb[0].mxu0
    %v3979 = vadd.f32 0.0, %v3978
    %v3980 = vpop.f32.mrb[0].mxu0
    %3981 = vmatprep.mubr.bf16.mxu0 0
    %3982 = vmatmul.mubr.bf16.gmra.mrb[0].mxu0 %v3901
    %v3983 = vpop.f32.mrb[0].mxu0
    %v3984 = vadd.f32 0.0, %v3983
    %v3985 = vpop.f32.mrb[0].mxu0
    %v3986 = vpop.f32.mrb[0].mxu0
    %v3987 = vadd.f32 0.0, %v3986
    %v3988 = vpop.f32.mrb[0].mxu0
    %3989 = vmatprep.mubr.bf16.mxu0 0
    %3990 = vmatmul.mubr.bf16.gmra.mrb[0].mxu0 %v3904
    %v3991 = vpop.f32.mrb[0].mxu0
    %v3992 = vadd.f32 0.0, %v3991
    %v3993 = vpop.f32.mrb[0].mxu0
    %v3994 = vpop.f32.mrb[0].mxu0
    %v3995 = vpop.f32.mrb[0].mxu0
    %3996 = vdwg.mxu0
    %v3997 = vadd.f32 %v3820, %v3944
    %v3998 = vadd.f32 %v3821, %v3947
    %v3999 = vadd.f32 %v3822, %v3952
    %v4000 = vadd.f32 %v3823, %v3955
    %v4001 = vadd.f32 %v3824, %v3960
    %v4002 = vadd.f32 %v3825, %v3963
    %v4003 = vadd.f32 %v3826, %v3968
    %v4004 = vadd.f32 %v3827, %v3971
    %v4005 = vadd.f32 %v3828, %v3976
    %v4006 = vadd.f32 %v3829, %v3979
    %v4007 = vadd.f32 %v3830, %v3984
    %v4008 = vadd.f32 %v3831, %v3987
    %v4009 = vadd.f32 %v3832, %v3992
    %v4010 = vld [vmem:[#allocation2 + $0x10] sm:$0xf0]
    %s4011 = scalar_lea.vmem %s3, 228
    %v4012 = vld [vmem:[%s4011] sm:$0xf]
    %v4013 = vld [vmem:[%s4011 + $0x4] sm:$0xf]
    %v4014 = vld [vmem:[%s4011 + $0x8] sm:$0x3]
    %v4017 = vrot.slane %v4010, 4
    %v4018 = vrot.slane %v2634, 4
    %v4019 = vsel %vm2484, %v4017, %v4018
    %v4020 = vrot.slane %v2635, 4
    %v4021 = vsel %vm2484, %v4018, %v4020
    %v4022 = vrot.slane %v2636, 4
    %v4023 = vsel %vm2484, %v4020, %v4022
    %v4024 = vrot.slane %v2637, 4
    %v4025 = vsel %vm2484, %v4022, %v4024
    %v4026 = vrot.slane %v2638, 4
    %v4027 = vsel %vm2484, %v4024, %v4026
    %v4028 = vrot.slane %v3833, 4
    %v4029 = vsel %vm2484, %v4026, %v4028
    %v4033 = vunpack.c.l.b16 %v4012
    %v4034 = vunpack.c.l.b16 %v4013
    %v4035 = vunpack.c.l.b16 %v4014
    %v4036 = vpack.c.b16 %v4034, %v4033
    %v4037 = vpack.c.b16 %v4035, %v4035
    %v4040 = vsel %vm826, %v4019, 0
    %v4043 = vsel %vm826, %v4021, 0
    %v4046 = vsel %vm826, %v4023, 0
    %v4049 = vsel %vm826, %v4025, 0
    %v4052 = vsel %vm826, %v4027, 0
    %v4055 = vsel %vm826, %v4029, 0
    %v4058 = vsel %vm826, %v4028, 0
    %v4061 = vsel %vm938, %v4037, 0
    %4063 = vmatprep.subr.bf16.mxu0 0
    %4064 = vmatpush1.bf16.msra.mxu0 %v4036
    %4065 = vmatprep.subr.bf16.mxu0 0
    %4066 = vmatpush1.bf16.msra.mxu0 %v4061
    %4067 = vmatprep.subr.bf16.mxu0 0
    %4068 = vmatpush1.bf16.msra.mxu0 0
    %4069 = vmatprep.subr.bf16.mxu0 0
    %4070 = vmatpush1.bf16.msra.mxu0 0
    %4071 = vmatprep.subr.bf16.mxu0 0
    %4072 = vmatpush1.bf16.msra.mxu0 0
    %4073 = vmatprep.subr.bf16.mxu0 0
    %4074 = vmatpush1.bf16.msra.mxu0 0
    %4075 = vmatprep.subr.bf16.mxu0 0
    %4076 = vmatpush1.bf16.msra.mxu0 0
    %4077 = vmatprep.subr.bf16.mxu0 0
    %4078 = vmatpush1.bf16.msra.mxu0 0
    %4079 = vmatprep.subr.bf16.mxu0 0
    %4080 = vmatpush1.bf16.msra.mxu0 0
    %4081 = vmatprep.subr.bf16.mxu0 0
    %4082 = vmatpush1.bf16.msra.mxu0 0
    %4083 = vmatprep.subr.bf16.mxu0 0
    %4084 = vmatpush1.bf16.msra.mxu0 0
    %4085 = vmatprep.subr.bf16.mxu0 0
    %4086 = vmatpush1.bf16.msra.mxu0 0
    %4087 = vmatprep.subr.bf16.mxu0 0
    %4088 = vmatpush1.bf16.msra.mxu0 0
    %4089 = vmatprep.subr.bf16.mxu0 0
    %4090 = vmatpush1.bf16.msra.mxu0 0
    %4091 = vmatprep.subr.bf16.mxu0 0
    %4092 = vmatpush1.bf16.msra.mxu0 0
    %4093 = vmatprep.subr.bf16.mxu0 0
    %4094 = vmatpush1.bf16.msra.mxu0 0
    %4095 = vmatprep.mubr.bf16.mxu0 0
    %4096 = vmatmul.mubr.bf16.gmra.mrb[0].mxu0 %v4040
    %v4097 = vpop.f32.mrb[0].mxu0
    %v4098 = vadd.f32 0.0, %v4097
    %v4099 = vpop.f32.mrb[0].mxu0
    %v4100 = vpop.f32.mrb[0].mxu0
    %v4101 = vadd.f32 0.0, %v4100
    %v4102 = vpop.f32.mrb[0].mxu0
    %4103 = vmatprep.mubr.bf16.mxu0 0
    %4104 = vmatmul.mubr.bf16.gmra.mrb[0].mxu0 %v4043
    %v4105 = vpop.f32.mrb[0].mxu0
    %v4106 = vadd.f32 0.0, %v4105
    %v4107 = vpop.f32.mrb[0].mxu0
    %v4108 = vpop.f32.mrb[0].mxu0
    %v4109 = vadd.f32 0.0, %v4108
    %v4110 = vpop.f32.mrb[0].mxu0
    %4111 = vmatprep.mubr.bf16.mxu0 0
    %4112 = vmatmul.mubr.bf16.gmra.mrb[0].mxu0 %v4046
    %v4113 = vpop.f32.mrb[0].mxu0
    %v4114 = vadd.f32 0.0, %v4113
    %v4115 = vpop.f32.mrb[0].mxu0
    %v4116 = vpop.f32.mrb[0].mxu0
    %v4117 = vadd.f32 0.0, %v4116
    %v4118 = vpop.f32.mrb[0].mxu0
    %4119 = vmatprep.mubr.bf16.mxu0 0
    %4120 = vmatmul.mubr.bf16.gmra.mrb[0].mxu0 %v4049
    %v4121 = vpop.f32.mrb[0].mxu0
    %v4122 = vadd.f32 0.0, %v4121
    %v4123 = vpop.f32.mrb[0].mxu0
    %v4124 = vpop.f32.mrb[0].mxu0
    %v4125 = vadd.f32 0.0, %v4124
    %v4126 = vpop.f32.mrb[0].mxu0
    %4127 = vmatprep.mubr.bf16.mxu0 0
    %4128 = vmatmul.mubr.bf16.gmra.mrb[0].mxu0 %v4052
    %v4129 = vpop.f32.mrb[0].mxu0
    %v4130 = vadd.f32 0.0, %v4129
    %v4131 = vpop.f32.mrb[0].mxu0
    %v4132 = vpop.f32.mrb[0].mxu0
    %v4133 = vadd.f32 0.0, %v4132
    %v4134 = vpop.f32.mrb[0].mxu0
    %4135 = vmatprep.mubr.bf16.mxu0 0
    %4136 = vmatmul.mubr.bf16.gmra.mrb[0].mxu0 %v4055
    %v4137 = vpop.f32.mrb[0].mxu0
    %v4138 = vadd.f32 0.0, %v4137
    %v4139 = vpop.f32.mrb[0].mxu0
    %v4140 = vpop.f32.mrb[0].mxu0
    %v4141 = vadd.f32 0.0, %v4140
    %v4142 = vpop.f32.mrb[0].mxu0
    %4143 = vmatprep.mubr.bf16.mxu0 0
    %4144 = vmatmul.mubr.bf16.gmra.mrb[0].mxu0 %v4058
    %v4145 = vpop.f32.mrb[0].mxu0
    %v4146 = vadd.f32 0.0, %v4145
    %v4147 = vpop.f32.mrb[0].mxu0
    %v4148 = vpop.f32.mrb[0].mxu0
    %v4149 = vpop.f32.mrb[0].mxu0
    %4150 = vdwg.mxu0
    %v4151 = vadd.f32 %v3997, %v4098
    %v4152 = vadd.f32 %v3998, %v4101
    %v4153 = vadd.f32 %v3999, %v4106
    %v4154 = vadd.f32 %v4000, %v4109
    %v4155 = vadd.f32 %v4001, %v4114
    %v4156 = vadd.f32 %v4002, %v4117
    %v4157 = vadd.f32 %v4003, %v4122
    %v4158 = vadd.f32 %v4004, %v4125
    %v4159 = vadd.f32 %v4005, %v4130
    %v4160 = vadd.f32 %v4006, %v4133
    %v4161 = vadd.f32 %v4007, %v4138
    %v4162 = vadd.f32 %v4008, %v4141
    %v4163 = vadd.f32 %v4009, %v4146
    %v4164 = vld [vmem:[#allocation2 + $0x18] sm:$0xff]
    %v4165 = vld [vmem:[#allocation2 + $0x20] sm:$0xff]
    %v4166 = vld [vmem:[#allocation2 + $0x28] sm:$0xff]
    %v4167 = vld [vmem:[#allocation2 + $0x30] sm:$0xff]
    %v4168 = vld [vmem:[#allocation2 + $0x38] sm:$0xff]
    %v4169 = vld [vmem:[#allocation2 + $0x40] sm:$0xff]
    %v4170 = vld [vmem:[#allocation2 + $0x48] sm:$0xf]
    %s4171 = scalar_lea.vmem %s3, 240
    %v4172 = vld [vmem:[%s4171] sm:$0xf]
    %v4173 = vld [vmem:[%s4171 + $0x4] sm:$0xf]
    %v4174 = vld [vmem:[%s4171 + $0x8] sm:$0x3]
    %v4178 = vunpack.c.l.b16 %v4172
    %v4179 = vunpack.c.l.b16 %v4173
    %v4180 = vunpack.c.l.b16 %v4174
    %v4181 = vpack.c.b16 %v4179, %v4178
    %v4182 = vpack.c.b16 %v4180, %v4180
    %v4185 = vsel %vm826, %v4164, 0
    %v4188 = vsel %vm826, %v4165, 0
    %v4191 = vsel %vm826, %v4166, 0
    %v4194 = vsel %vm826, %v4167, 0
    %v4197 = vsel %vm826, %v4168, 0
    %v4200 = vsel %vm826, %v4169, 0
    %v4203 = vsel %vm826, %v4170, 0
    %v4206 = vsel %vm938, %v4182, 0
    %4208 = vmatprep.subr.bf16.mxu0 0
    %4209 = vmatpush1.bf16.msra.mxu0 %v4181
    %4210 = vmatprep.subr.bf16.mxu0 0
    %4211 = vmatpush1.bf16.msra.mxu0 %v4206
    %4212 = vmatprep.subr.bf16.mxu0 0
    %4213 = vmatpush1.bf16.msra.mxu0 0
    %4214 = vmatprep.subr.bf16.mxu0 0
    %4215 = vmatpush1.bf16.msra.mxu0 0
    %4216 = vmatprep.subr.bf16.mxu0 0
    %4217 = vmatpush1.bf16.msra.mxu0 0
    %4218 = vmatprep.subr.bf16.mxu0 0
    %4219 = vmatpush1.bf16.msra.mxu0 0
    %4220 = vmatprep.subr.bf16.mxu0 0
    %4221 = vmatpush1.bf16.msra.mxu0 0
    %4222 = vmatprep.subr.bf16.mxu0 0
    %4223 = vmatpush1.bf16.msra.mxu0 0
    %4224 = vmatprep.subr.bf16.mxu0 0
    %4225 = vmatpush1.bf16.msra.mxu0 0
    %4226 = vmatprep.subr.bf16.mxu0 0
    %4227 = vmatpush1.bf16.msra.mxu0 0
    %4228 = vmatprep.subr.bf16.mxu0 0
    %4229 = vmatpush1.bf16.msra.mxu0 0
    %4230 = vmatprep.subr.bf16.mxu0 0
    %4231 = vmatpush1.bf16.msra.mxu0 0
    %4232 = vmatprep.subr.bf16.mxu0 0
    %4233 = vmatpush1.bf16.msra.mxu0 0
    %4234 = vmatprep.subr.bf16.mxu0 0
    %4235 = vmatpush1.bf16.msra.mxu0 0
    %4236 = vmatprep.subr.bf16.mxu0 0
    %4237 = vmatpush1.bf16.msra.mxu0 0
    %4238 = vmatprep.subr.bf16.mxu0 0
    %4239 = vmatpush1.bf16.msra.mxu0 0
    %4240 = vmatprep.mubr.bf16.mxu0 0
    %4241 = vmatmul.mubr.bf16.gmra.mrb[0].mxu0 %v4185
    %v4242 = vpop.f32.mrb[0].mxu0
    %v4243 = vadd.f32 0.0, %v4242
    %v4244 = vpop.f32.mrb[0].mxu0
    %v4245 = vpop.f32.mrb[0].mxu0
    %v4246 = vadd.f32 0.0, %v4245
    %v4247 = vpop.f32.mrb[0].mxu0
    %4248 = vmatprep.mubr.bf16.mxu0 0
    %4249 = vmatmul.mubr.bf16.gmra.mrb[0].mxu0 %v4188
    %v4250 = vpop.f32.mrb[0].mxu0
    %v4251 = vadd.f32 0.0, %v4250
    %v4252 = vpop.f32.mrb[0].mxu0
    %v4253 = vpop.f32.mrb[0].mxu0
    %v4254 = vadd.f32 0.0, %v4253
    %v4255 = vpop.f32.mrb[0].mxu0
    %4256 = vmatprep.mubr.bf16.mxu0 0
    %4257 = vmatmul.mubr.bf16.gmra.mrb[0].mxu0 %v4191
    %v4258 = vpop.f32.mrb[0].mxu0
    %v4259 = vadd.f32 0.0, %v4258
    %v4260 = vpop.f32.mrb[0].mxu0
    %v4261 = vpop.f32.mrb[0].mxu0
    %v4262 = vadd.f32 0.0, %v4261
    %v4263 = vpop.f32.mrb[0].mxu0
    %4264 = vmatprep.mubr.bf16.mxu0 0
    %4265 = vmatmul.mubr.bf16.gmra.mrb[0].mxu0 %v4194
    %v4266 = vpop.f32.mrb[0].mxu0
    %v4267 = vadd.f32 0.0, %v4266
    %v4268 = vpop.f32.mrb[0].mxu0
    %v4269 = vpop.f32.mrb[0].mxu0
    %v4270 = vadd.f32 0.0, %v4269
    %v4271 = vpop.f32.mrb[0].mxu0
    %4272 = vmatprep.mubr.bf16.mxu0 0
    %4273 = vmatmul.mubr.bf16.gmra.mrb[0].mxu0 %v4197
    %v4274 = vpop.f32.mrb[0].mxu0
    %v4275 = vadd.f32 0.0, %v4274
    %v4276 = vpop.f32.mrb[0].mxu0
    %v4277 = vpop.f32.mrb[0].mxu0
    %v4278 = vadd.f32 0.0, %v4277
    %v4279 = vpop.f32.mrb[0].mxu0
    %4280 = vmatprep.mubr.bf16.mxu0 0
    %4281 = vmatmul.mubr.bf16.gmra.mrb[0].mxu0 %v4200
    %v4282 = vpop.f32.mrb[0].mxu0
    %v4283 = vadd.f32 0.0, %v4282
    %v4284 = vpop.f32.mrb[0].mxu0
    %v4285 = vpop.f32.mrb[0].mxu0
    %v4286 = vadd.f32 0.0, %v4285
    %v4287 = vpop.f32.mrb[0].mxu0
    %4288 = vmatprep.mubr.bf16.mxu0 0
    %4289 = vmatmul.mubr.bf16.gmra.mrb[0].mxu0 %v4203
    %v4290 = vpop.f32.mrb[0].mxu0
    %v4291 = vadd.f32 0.0, %v4290
    %v4292 = vpop.f32.mrb[0].mxu0
    %v4293 = vpop.f32.mrb[0].mxu0
    %v4294 = vpop.f32.mrb[0].mxu0
    %4295 = vdwg.mxu0
    %v4296 = vadd.f32 %v4151, %v4243
    %v4297 = vadd.f32 %v4152, %v4246
    %v4298 = vadd.f32 %v4153, %v4251
    %v4299 = vadd.f32 %v4154, %v4254
    %v4300 = vadd.f32 %v4155, %v4259
    %v4301 = vadd.f32 %v4156, %v4262
    %v4302 = vadd.f32 %v4157, %v4267
    %v4303 = vadd.f32 %v4158, %v4270
    %v4304 = vadd.f32 %v4159, %v4275
    %v4305 = vadd.f32 %v4160, %v4278
    %v4306 = vadd.f32 %v4161, %v4283
    %v4307 = vadd.f32 %v4162, %v4286
    %v4308 = vadd.f32 %v4163, %v4291
    %v4309 = vld [vmem:[#allocation2 + $0x48] sm:$0x1f]
    %s4310 = scalar_lea.vmem %s3, 252
    %v4311 = vld [vmem:[%s4310] sm:$0xf]
    %v4312 = vld [vmem:[%s4310 + $0x4] sm:$0xf]
    %v4313 = vld [vmem:[%s4310 + $0x8] sm:$0x3]
    %v4314 = vshrl.u32 %v4164, 16
    %v4316 = vshll.u32 %v4164, 16
    %v4318 = vrot.slane %v4316, 1
    %v4319 = vor.u32 %v4314, %v4318
    %v4320 = vshll.u32 %v4165, 16
    %v4322 = vrot.slane %v4320, 1
    %v4323 = vsel %vm852, %v4319, %v4322
    %v4324 = vshrl.u32 %v4165, 16
    %v4326 = vor.u32 %v4324, %v4322
    %v4327 = vshll.u32 %v4166, 16
    %v4329 = vrot.slane %v4327, 1
    %v4330 = vsel %vm852, %v4326, %v4329
    %v4331 = vshrl.u32 %v4166, 16
    %v4333 = vor.u32 %v4331, %v4329
    %v4334 = vshll.u32 %v4167, 16
    %v4336 = vrot.slane %v4334, 1
    %v4337 = vsel %vm852, %v4333, %v4336
    %v4338 = vshrl.u32 %v4167, 16
    %v4340 = vor.u32 %v4338, %v4336
    %v4341 = vshll.u32 %v4168, 16
    %v4343 = vrot.slane %v4341, 1
    %v4344 = vsel %vm852, %v4340, %v4343
    %v4345 = vshrl.u32 %v4168, 16
    %v4347 = vor.u32 %v4345, %v4343
    %v4348 = vshll.u32 %v4169, 16
    %v4350 = vrot.slane %v4348, 1
    %v4351 = vsel %vm852, %v4347, %v4350
    %v4352 = vshrl.u32 %v4169, 16
    %v4354 = vor.u32 %v4352, %v4350
    %v4356 = vshll.u32 %v4309, 16
    %v4358 = vrot.slane %v4356, 1
    %v4359 = vsel %vm852, %v4354, %v4358
    %v4360 = vshrl.u32 %v4309, 16
    %v4362 = vor.u32 %v4360, %v4358
    %v4366 = vunpack.c.l.b16 %v4311
    %v4367 = vunpack.c.l.b16 %v4312
    %v4368 = vunpack.c.l.b16 %v4313
    %v4369 = vpack.c.b16 %v4367, %v4366
    %v4370 = vpack.c.b16 %v4368, %v4368
    %v4373 = vsel %vm826, %v4323, 0
    %v4376 = vsel %vm826, %v4330, 0
    %v4379 = vsel %vm826, %v4337, 0
    %v4382 = vsel %vm826, %v4344, 0
    %v4385 = vsel %vm826, %v4351, 0
    %v4388 = vsel %vm826, %v4359, 0
    %v4391 = vsel %vm826, %v4362, 0
    %v4394 = vsel %vm938, %v4370, 0
    %4396 = vmatprep.subr.bf16.mxu0 0
    %4397 = vmatpush1.bf16.msra.mxu0 %v4369
    %4398 = vmatprep.subr.bf16.mxu0 0
    %4399 = vmatpush1.bf16.msra.mxu0 %v4394
    %4400 = vmatprep.subr.bf16.mxu0 0
    %4401 = vmatpush1.bf16.msra.mxu0 0
    %4402 = vmatprep.subr.bf16.mxu0 0
    %4403 = vmatpush1.bf16.msra.mxu0 0
    %4404 = vmatprep.subr.bf16.mxu0 0
    %4405 = vmatpush1.bf16.msra.mxu0 0
    %4406 = vmatprep.subr.bf16.mxu0 0
    %4407 = vmatpush1.bf16.msra.mxu0 0
    %4408 = vmatprep.subr.bf16.mxu0 0
    %4409 = vmatpush1.bf16.msra.mxu0 0
    %4410 = vmatprep.subr.bf16.mxu0 0
    %4411 = vmatpush1.bf16.msra.mxu0 0
    %4412 = vmatprep.subr.bf16.mxu0 0
    %4413 = vmatpush1.bf16.msra.mxu0 0
    %4414 = vmatprep.subr.bf16.mxu0 0
    %4415 = vmatpush1.bf16.msra.mxu0 0
    %4416 = vmatprep.subr.bf16.mxu0 0
    %4417 = vmatpush1.bf16.msra.mxu0 0
    %4418 = vmatprep.subr.bf16.mxu0 0
    %4419 = vmatpush1.bf16.msra.mxu0 0
    %4420 = vmatprep.subr.bf16.mxu0 0
    %4421 = vmatpush1.bf16.msra.mxu0 0
    %4422 = vmatprep.subr.bf16.mxu0 0
    %4423 = vmatpush1.bf16.msra.mxu0 0
    %4424 = vmatprep.subr.bf16.mxu0 0
    %4425 = vmatpush1.bf16.msra.mxu0 0
    %4426 = vmatprep.subr.bf16.mxu0 0
    %4427 = vmatpush1.bf16.msra.mxu0 0
    %4428 = vmatprep.mubr.bf16.mxu0 0
    %4429 = vmatmul.mubr.bf16.gmra.mrb[0].mxu0 %v4373
    %v4430 = vpop.f32.mrb[0].mxu0
    %v4431 = vadd.f32 0.0, %v4430
    %v4432 = vpop.f32.mrb[0].mxu0
    %v4433 = vpop.f32.mrb[0].mxu0
    %v4434 = vadd.f32 0.0, %v4433
    %v4435 = vpop.f32.mrb[0].mxu0
    %4436 = vmatprep.mubr.bf16.mxu0 0
    %4437 = vmatmul.mubr.bf16.gmra.mrb[0].mxu0 %v4376
    %v4438 = vpop.f32.mrb[0].mxu0
    %v4439 = vadd.f32 0.0, %v4438
    %v4440 = vpop.f32.mrb[0].mxu0
    %v4441 = vpop.f32.mrb[0].mxu0
    %v4442 = vadd.f32 0.0, %v4441
    %v4443 = vpop.f32.mrb[0].mxu0
    %4444 = vmatprep.mubr.bf16.mxu0 0
    %4445 = vmatmul.mubr.bf16.gmra.mrb[0].mxu0 %v4379
    %v4446 = vpop.f32.mrb[0].mxu0
    %v4447 = vadd.f32 0.0, %v4446
    %v4448 = vpop.f32.mrb[0].mxu0
    %v4449 = vpop.f32.mrb[0].mxu0
    %v4450 = vadd.f32 0.0, %v4449
    %v4451 = vpop.f32.mrb[0].mxu0
    %4452 = vmatprep.mubr.bf16.mxu0 0
    %4453 = vmatmul.mubr.bf16.gmra.mrb[0].mxu0 %v4382
    %v4454 = vpop.f32.mrb[0].mxu0
    %v4455 = vadd.f32 0.0, %v4454
    %v4456 = vpop.f32.mrb[0].mxu0
    %v4457 = vpop.f32.mrb[0].mxu0
    %v4458 = vadd.f32 0.0, %v4457
    %v4459 = vpop.f32.mrb[0].mxu0
    %4460 = vmatprep.mubr.bf16.mxu0 0
    %4461 = vmatmul.mubr.bf16.gmra.mrb[0].mxu0 %v4385
    %v4462 = vpop.f32.mrb[0].mxu0
    %v4463 = vadd.f32 0.0, %v4462
    %v4464 = vpop.f32.mrb[0].mxu0
    %v4465 = vpop.f32.mrb[0].mxu0
    %v4466 = vadd.f32 0.0, %v4465
    %v4467 = vpop.f32.mrb[0].mxu0
    %4468 = vmatprep.mubr.bf16.mxu0 0
    %4469 = vmatmul.mubr.bf16.gmra.mrb[0].mxu0 %v4388
    %v4470 = vpop.f32.mrb[0].mxu0
    %v4471 = vadd.f32 0.0, %v4470
    %v4472 = vpop.f32.mrb[0].mxu0
    %v4473 = vpop.f32.mrb[0].mxu0
    %v4474 = vadd.f32 0.0, %v4473
    %v4475 = vpop.f32.mrb[0].mxu0
    %4476 = vmatprep.mubr.bf16.mxu0 0
    %4477 = vmatmul.mubr.bf16.gmra.mrb[0].mxu0 %v4391
    %v4478 = vpop.f32.mrb[0].mxu0
    %v4479 = vadd.f32 0.0, %v4478
    %v4480 = vpop.f32.mrb[0].mxu0
    %v4481 = vpop.f32.mrb[0].mxu0
    %v4482 = vpop.f32.mrb[0].mxu0
    %4483 = vdwg.mxu0
    %v4484 = vadd.f32 %v4296, %v4431
    %v4485 = vadd.f32 %v4297, %v4434
    %v4486 = vadd.f32 %v4298, %v4439
    %v4487 = vadd.f32 %v4299, %v4442
    %v4488 = vadd.f32 %v4300, %v4447
    %v4489 = vadd.f32 %v4301, %v4450
    %v4490 = vadd.f32 %v4302, %v4455
    %v4491 = vadd.f32 %v4303, %v4458
    %v4492 = vadd.f32 %v4304, %v4463
    %v4493 = vadd.f32 %v4305, %v4466
    %v4494 = vadd.f32 %v4306, %v4471
    %v4495 = vadd.f32 %v4307, %v4474
    %v4496 = vadd.f32 %v4308, %v4479
    %v4497 = vld [vmem:[#allocation2 + $0x18] sm:$0xfe]
    %s4498 = scalar_lea.vmem %s3, 264
    %v4499 = vld [vmem:[%s4498] sm:$0xf]
    %v4500 = vld [vmem:[%s4498 + $0x4] sm:$0xf]
    %v4501 = vld [vmem:[%s4498 + $0x8] sm:$0x3]
    %v4509 = vrot.slane %v4497, 1
    %v4510 = vrot.slane %v4165, 1
    %v4511 = vsel %vm1157, %v4509, %v4510
    %v4512 = vrot.slane %v4166, 1
    %v4513 = vsel %vm1157, %v4510, %v4512
    %v4514 = vrot.slane %v4167, 1
    %v4515 = vsel %vm1157, %v4512, %v4514
    %v4516 = vrot.slane %v4168, 1
    %v4517 = vsel %vm1157, %v4514, %v4516
    %v4518 = vrot.slane %v4169, 1
    %v4519 = vsel %vm1157, %v4516, %v4518
    %v4520 = vrot.slane %v4309, 1
    %v4521 = vsel %vm1157, %v4518, %v4520
    %v4525 = vunpack.c.l.b16 %v4499
    %v4526 = vunpack.c.l.b16 %v4500
    %v4527 = vunpack.c.l.b16 %v4501
    %v4528 = vpack.c.b16 %v4526, %v4525
    %v4529 = vpack.c.b16 %v4527, %v4527
    %v4532 = vsel %vm826, %v4511, 0
    %v4535 = vsel %vm826, %v4513, 0
    %v4538 = vsel %vm826, %v4515, 0
    %v4541 = vsel %vm826, %v4517, 0
    %v4544 = vsel %vm826, %v4519, 0
    %v4547 = vsel %vm826, %v4521, 0
    %v4550 = vsel %vm826, %v4520, 0
    %v4553 = vsel %vm938, %v4529, 0
    %4555 = vmatprep.subr.bf16.mxu0 0
    %4556 = vmatpush1.bf16.msra.mxu0 %v4528
    %4557 = vmatprep.subr.bf16.mxu0 0
    %4558 = vmatpush1.bf16.msra.mxu0 %v4553
    %4559 = vmatprep.subr.bf16.mxu0 0
    %4560 = vmatpush1.bf16.msra.mxu0 0
    %4561 = vmatprep.subr.bf16.mxu0 0
    %4562 = vmatpush1.bf16.msra.mxu0 0
    %4563 = vmatprep.subr.bf16.mxu0 0
    %4564 = vmatpush1.bf16.msra.mxu0 0
    %4565 = vmatprep.subr.bf16.mxu0 0
    %4566 = vmatpush1.bf16.msra.mxu0 0
    %4567 = vmatprep.subr.bf16.mxu0 0
    %4568 = vmatpush1.bf16.msra.mxu0 0
    %4569 = vmatprep.subr.bf16.mxu0 0
    %4570 = vmatpush1.bf16.msra.mxu0 0
    %4571 = vmatprep.subr.bf16.mxu0 0
    %4572 = vmatpush1.bf16.msra.mxu0 0
    %4573 = vmatprep.subr.bf16.mxu0 0
    %4574 = vmatpush1.bf16.msra.mxu0 0
    %4575 = vmatprep.subr.bf16.mxu0 0
    %4576 = vmatpush1.bf16.msra.mxu0 0
    %4577 = vmatprep.subr.bf16.mxu0 0
    %4578 = vmatpush1.bf16.msra.mxu0 0
    %4579 = vmatprep.subr.bf16.mxu0 0
    %4580 = vmatpush1.bf16.msra.mxu0 0
    %4581 = vmatprep.subr.bf16.mxu0 0
    %4582 = vmatpush1.bf16.msra.mxu0 0
    %4583 = vmatprep.subr.bf16.mxu0 0
    %4584 = vmatpush1.bf16.msra.mxu0 0
    %4585 = vmatprep.subr.bf16.mxu0 0
    %4586 = vmatpush1.bf16.msra.mxu0 0
    %4587 = vmatprep.mubr.bf16.mxu0 0
    %4588 = vmatmul.mubr.bf16.gmra.mrb[0].mxu0 %v4532
    %v4589 = vpop.f32.mrb[0].mxu0
    %v4590 = vadd.f32 0.0, %v4589
    %v4591 = vpop.f32.mrb[0].mxu0
    %v4592 = vpop.f32.mrb[0].mxu0
    %v4593 = vadd.f32 0.0, %v4592
    %v4594 = vpop.f32.mrb[0].mxu0
    %4595 = vmatprep.mubr.bf16.mxu0 0
    %4596 = vmatmul.mubr.bf16.gmra.mrb[0].mxu0 %v4535
    %v4597 = vpop.f32.mrb[0].mxu0
    %v4598 = vadd.f32 0.0, %v4597
    %v4599 = vpop.f32.mrb[0].mxu0
    %v4600 = vpop.f32.mrb[0].mxu0
    %v4601 = vadd.f32 0.0, %v4600
    %v4602 = vpop.f32.mrb[0].mxu0
    %4603 = vmatprep.mubr.bf16.mxu0 0
    %4604 = vmatmul.mubr.bf16.gmra.mrb[0].mxu0 %v4538
    %v4605 = vpop.f32.mrb[0].mxu0
    %v4606 = vadd.f32 0.0, %v4605
    %v4607 = vpop.f32.mrb[0].mxu0
    %v4608 = vpop.f32.mrb[0].mxu0
    %v4609 = vadd.f32 0.0, %v4608
    %v4610 = vpop.f32.mrb[0].mxu0
    %4611 = vmatprep.mubr.bf16.mxu0 0
    %4612 = vmatmul.mubr.bf16.gmra.mrb[0].mxu0 %v4541
    %v4613 = vpop.f32.mrb[0].mxu0
    %v4614 = vadd.f32 0.0, %v4613
    %v4615 = vpop.f32.mrb[0].mxu0
    %v4616 = vpop.f32.mrb[0].mxu0
    %v4617 = vadd.f32 0.0, %v4616
    %v4618 = vpop.f32.mrb[0].mxu0
    %4619 = vmatprep.mubr.bf16.mxu0 0
    %4620 = vmatmul.mubr.bf16.gmra.mrb[0].mxu0 %v4544
    %v4621 = vpop.f32.mrb[0].mxu0
    %v4622 = vadd.f32 0.0, %v4621
    %v4623 = vpop.f32.mrb[0].mxu0
    %v4624 = vpop.f32.mrb[0].mxu0
    %v4625 = vadd.f32 0.0, %v4624
    %v4626 = vpop.f32.mrb[0].mxu0
    %4627 = vmatprep.mubr.bf16.mxu0 0
    %4628 = vmatmul.mubr.bf16.gmra.mrb[0].mxu0 %v4547
    %v4629 = vpop.f32.mrb[0].mxu0
    %v4630 = vadd.f32 0.0, %v4629
    %v4631 = vpop.f32.mrb[0].mxu0
    %v4632 = vpop.f32.mrb[0].mxu0
    %v4633 = vadd.f32 0.0, %v4632
    %v4634 = vpop.f32.mrb[0].mxu0
    %4635 = vmatprep.mubr.bf16.mxu0 0
    %4636 = vmatmul.mubr.bf16.gmra.mrb[0].mxu0 %v4550
    %v4637 = vpop.f32.mrb[0].mxu0
    %v4638 = vadd.f32 0.0, %v4637
    %v4639 = vpop.f32.mrb[0].mxu0
    %v4640 = vpop.f32.mrb[0].mxu0
    %v4641 = vpop.f32.mrb[0].mxu0
    %4642 = vdwg.mxu0
    %v4643 = vadd.f32 %v4484, %v4590
    %v4644 = vadd.f32 %v4485, %v4593
    %v4645 = vadd.f32 %v4486, %v4598
    %v4646 = vadd.f32 %v4487, %v4601
    %v4647 = vadd.f32 %v4488, %v4606
    %v4648 = vadd.f32 %v4489, %v4609
    %v4649 = vadd.f32 %v4490, %v4614
    %v4650 = vadd.f32 %v4491, %v4617
    %v4651 = vadd.f32 %v4492, %v4622
    %v4652 = vadd.f32 %v4493, %v4625
    %v4653 = vadd.f32 %v4494, %v4630
    %v4654 = vadd.f32 %v4495, %v4633
    %v4655 = vadd.f32 %v4496, %v4638
    %v4656 = vld [vmem:[#allocation2 + $0x48] sm:$0x3f]
    %s4657 = scalar_lea.vmem %s3, 276
    %v4658 = vld [vmem:[%s4657] sm:$0xf]
    %v4659 = vld [vmem:[%s4657 + $0x4] sm:$0xf]
    %v4660 = vld [vmem:[%s4657 + $0x8] sm:$0x3]
    %v4662 = vshrl.u32 %v4497, 16
    %v4664 = vrot.slane %v4662, 1
    %v4665 = vshll.u32 %v4497, 16
    %v4667 = vrot.slane %v4665, 2
    %v4668 = vor.u32 %v4664, %v4667
    %v4669 = vrot.slane %v4324, 1
    %v4670 = vrot.slane %v4320, 2
    %v4671 = vor.u32 %v4669, %v4670
    %v4672 = vsel %vm1310, %v4668, %v4671
    %v4673 = vrot.slane %v4331, 1
    %v4674 = vrot.slane %v4327, 2
    %v4675 = vor.u32 %v4673, %v4674
    %v4676 = vsel %vm1310, %v4671, %v4675
    %v4677 = vrot.slane %v4338, 1
    %v4678 = vrot.slane %v4334, 2
    %v4679 = vor.u32 %v4677, %v4678
    %v4680 = vsel %vm1310, %v4675, %v4679
    %v4681 = vrot.slane %v4345, 1
    %v4682 = vrot.slane %v4341, 2
    %v4683 = vor.u32 %v4681, %v4682
    %v4684 = vsel %vm1310, %v4679, %v4683
    %v4685 = vrot.slane %v4352, 1
    %v4686 = vrot.slane %v4348, 2
    %v4687 = vor.u32 %v4685, %v4686
    %v4688 = vsel %vm1310, %v4683, %v4687
    %v4690 = vshrl.u32 %v4656, 16
    %v4692 = vrot.slane %v4690, 1
    %v4693 = vshll.u32 %v4656, 16
    %v4695 = vrot.slane %v4693, 2
    %v4696 = vor.u32 %v4692, %v4695
    %v4697 = vsel %vm1310, %v4687, %v4696
    %v4701 = vunpack.c.l.b16 %v4658
    %v4702 = vunpack.c.l.b16 %v4659
    %v4703 = vunpack.c.l.b16 %v4660
    %v4704 = vpack.c.b16 %v4702, %v4701
    %v4705 = vpack.c.b16 %v4703, %v4703
    %v4708 = vsel %vm826, %v4672, 0
    %v4711 = vsel %vm826, %v4676, 0
    %v4714 = vsel %vm826, %v4680, 0
    %v4717 = vsel %vm826, %v4684, 0
    %v4720 = vsel %vm826, %v4688, 0
    %v4723 = vsel %vm826, %v4697, 0
    %v4726 = vsel %vm826, %v4696, 0
    %v4729 = vsel %vm938, %v4705, 0
    %4731 = vmatprep.subr.bf16.mxu0 0
    %4732 = vmatpush1.bf16.msra.mxu0 %v4704
    %4733 = vmatprep.subr.bf16.mxu0 0
    %4734 = vmatpush1.bf16.msra.mxu0 %v4729
    %4735 = vmatprep.subr.bf16.mxu0 0
    %4736 = vmatpush1.bf16.msra.mxu0 0
    %4737 = vmatprep.subr.bf16.mxu0 0
    %4738 = vmatpush1.bf16.msra.mxu0 0
    %4739 = vmatprep.subr.bf16.mxu0 0
    %4740 = vmatpush1.bf16.msra.mxu0 0
    %4741 = vmatprep.subr.bf16.mxu0 0
    %4742 = vmatpush1.bf16.msra.mxu0 0
    %4743 = vmatprep.subr.bf16.mxu0 0
    %4744 = vmatpush1.bf16.msra.mxu0 0
    %4745 = vmatprep.subr.bf16.mxu0 0
    %4746 = vmatpush1.bf16.msra.mxu0 0
    %4747 = vmatprep.subr.bf16.mxu0 0
    %4748 = vmatpush1.bf16.msra.mxu0 0
    %4749 = vmatprep.subr.bf16.mxu0 0
    %4750 = vmatpush1.bf16.msra.mxu0 0
    %4751 = vmatprep.subr.bf16.mxu0 0
    %4752 = vmatpush1.bf16.msra.mxu0 0
    %4753 = vmatprep.subr.bf16.mxu0 0
    %4754 = vmatpush1.bf16.msra.mxu0 0
    %4755 = vmatprep.subr.bf16.mxu0 0
    %4756 = vmatpush1.bf16.msra.mxu0 0
    %4757 = vmatprep.subr.bf16.mxu0 0
    %4758 = vmatpush1.bf16.msra.mxu0 0
    %4759 = vmatprep.subr.bf16.mxu0 0
    %4760 = vmatpush1.bf16.msra.mxu0 0
    %4761 = vmatprep.subr.bf16.mxu0 0
    %4762 = vmatpush1.bf16.msra.mxu0 0
    %4763 = vmatprep.mubr.bf16.mxu0 0
    %4764 = vmatmul.mubr.bf16.gmra.mrb[0].mxu0 %v4708
    %v4765 = vpop.f32.mrb[0].mxu0
    %v4766 = vadd.f32 0.0, %v4765
    %v4767 = vpop.f32.mrb[0].mxu0
    %v4768 = vpop.f32.mrb[0].mxu0
    %v4769 = vadd.f32 0.0, %v4768
    %v4770 = vpop.f32.mrb[0].mxu0
    %4771 = vmatprep.mubr.bf16.mxu0 0
    %4772 = vmatmul.mubr.bf16.gmra.mrb[0].mxu0 %v4711
    %v4773 = vpop.f32.mrb[0].mxu0
    %v4774 = vadd.f32 0.0, %v4773
    %v4775 = vpop.f32.mrb[0].mxu0
    %v4776 = vpop.f32.mrb[0].mxu0
    %v4777 = vadd.f32 0.0, %v4776
    %v4778 = vpop.f32.mrb[0].mxu0
    %4779 = vmatprep.mubr.bf16.mxu0 0
    %4780 = vmatmul.mubr.bf16.gmra.mrb[0].mxu0 %v4714
    %v4781 = vpop.f32.mrb[0].mxu0
    %v4782 = vadd.f32 0.0, %v4781
    %v4783 = vpop.f32.mrb[0].mxu0
    %v4784 = vpop.f32.mrb[0].mxu0
    %v4785 = vadd.f32 0.0, %v4784
    %v4786 = vpop.f32.mrb[0].mxu0
    %4787 = vmatprep.mubr.bf16.mxu0 0
    %4788 = vmatmul.mubr.bf16.gmra.mrb[0].mxu0 %v4717
    %v4789 = vpop.f32.mrb[0].mxu0
    %v4790 = vadd.f32 0.0, %v4789
    %v4791 = vpop.f32.mrb[0].mxu0
    %v4792 = vpop.f32.mrb[0].mxu0
    %v4793 = vadd.f32 0.0, %v4792
    %v4794 = vpop.f32.mrb[0].mxu0
    %4795 = vmatprep.mubr.bf16.mxu0 0
    %4796 = vmatmul.mubr.bf16.gmra.mrb[0].mxu0 %v4720
    %v4797 = vpop.f32.mrb[0].mxu0
    %v4798 = vadd.f32 0.0, %v4797
    %v4799 = vpop.f32.mrb[0].mxu0
    %v4800 = vpop.f32.mrb[0].mxu0
    %v4801 = vadd.f32 0.0, %v4800
    %v4802 = vpop.f32.mrb[0].mxu0
    %4803 = vmatprep.mubr.bf16.mxu0 0
    %4804 = vmatmul.mubr.bf16.gmra.mrb[0].mxu0 %v4723
    %v4805 = vpop.f32.mrb[0].mxu0
    %v4806 = vadd.f32 0.0, %v4805
    %v4807 = vpop.f32.mrb[0].mxu0
    %v4808 = vpop.f32.mrb[0].mxu0
    %v4809 = vadd.f32 0.0, %v4808
    %v4810 = vpop.f32.mrb[0].mxu0
    %4811 = vmatprep.mubr.bf16.mxu0 0
    %4812 = vmatmul.mubr.bf16.gmra.mrb[0].mxu0 %v4726
    %v4813 = vpop.f32.mrb[0].mxu0
    %v4814 = vadd.f32 0.0, %v4813
    %v4815 = vpop.f32.mrb[0].mxu0
    %v4816 = vpop.f32.mrb[0].mxu0
    %v4817 = vpop.f32.mrb[0].mxu0
    %4818 = vdwg.mxu0
    %v4819 = vadd.f32 %v4643, %v4766
    %v4820 = vadd.f32 %v4644, %v4769
    %v4821 = vadd.f32 %v4645, %v4774
    %v4822 = vadd.f32 %v4646, %v4777
    %v4823 = vadd.f32 %v4647, %v4782
    %v4824 = vadd.f32 %v4648, %v4785
    %v4825 = vadd.f32 %v4649, %v4790
    %v4826 = vadd.f32 %v4650, %v4793
    %v4827 = vadd.f32 %v4651, %v4798
    %v4828 = vadd.f32 %v4652, %v4801
    %v4829 = vadd.f32 %v4653, %v4806
    %v4830 = vadd.f32 %v4654, %v4809
    %v4831 = vadd.f32 %v4655, %v4814
    %v4832 = vld [vmem:[#allocation2 + $0x18] sm:$0xfc]
    %s4833 = scalar_lea.vmem %s3, 288
    %v4834 = vld [vmem:[%s4833] sm:$0xf]
    %v4835 = vld [vmem:[%s4833 + $0x4] sm:$0xf]
    %v4836 = vld [vmem:[%s4833 + $0x8] sm:$0x3]
    %v4839 = vrot.slane %v4832, 2
    %v4840 = vrot.slane %v4165, 2
    %v4841 = vsel %vm1489, %v4839, %v4840
    %v4842 = vrot.slane %v4166, 2
    %v4843 = vsel %vm1489, %v4840, %v4842
    %v4844 = vrot.slane %v4167, 2
    %v4845 = vsel %vm1489, %v4842, %v4844
    %v4846 = vrot.slane %v4168, 2
    %v4847 = vsel %vm1489, %v4844, %v4846
    %v4848 = vrot.slane %v4169, 2
    %v4849 = vsel %vm1489, %v4846, %v4848
    %v4850 = vrot.slane %v4656, 2
    %v4851 = vsel %vm1489, %v4848, %v4850
    %v4855 = vunpack.c.l.b16 %v4834
    %v4856 = vunpack.c.l.b16 %v4835
    %v4857 = vunpack.c.l.b16 %v4836
    %v4858 = vpack.c.b16 %v4856, %v4855
    %v4859 = vpack.c.b16 %v4857, %v4857
    %v4862 = vsel %vm826, %v4841, 0
    %v4865 = vsel %vm826, %v4843, 0
    %v4868 = vsel %vm826, %v4845, 0
    %v4871 = vsel %vm826, %v4847, 0
    %v4874 = vsel %vm826, %v4849, 0
    %v4877 = vsel %vm826, %v4851, 0
    %v4880 = vsel %vm826, %v4850, 0
    %v4883 = vsel %vm938, %v4859, 0
    %4885 = vmatprep.subr.bf16.mxu0 0
    %4886 = vmatpush1.bf16.msra.mxu0 %v4858
    %4887 = vmatprep.subr.bf16.mxu0 0
    %4888 = vmatpush1.bf16.msra.mxu0 %v4883
    %4889 = vmatprep.subr.bf16.mxu0 0
    %4890 = vmatpush1.bf16.msra.mxu0 0
    %4891 = vmatprep.subr.bf16.mxu0 0
    %4892 = vmatpush1.bf16.msra.mxu0 0
    %4893 = vmatprep.subr.bf16.mxu0 0
    %4894 = vmatpush1.bf16.msra.mxu0 0
    %4895 = vmatprep.subr.bf16.mxu0 0
    %4896 = vmatpush1.bf16.msra.mxu0 0
    %4897 = vmatprep.subr.bf16.mxu0 0
    %4898 = vmatpush1.bf16.msra.mxu0 0
    %4899 = vmatprep.subr.bf16.mxu0 0
    %4900 = vmatpush1.bf16.msra.mxu0 0
    %4901 = vmatprep.subr.bf16.mxu0 0
    %4902 = vmatpush1.bf16.msra.mxu0 0
    %4903 = vmatprep.subr.bf16.mxu0 0
    %4904 = vmatpush1.bf16.msra.mxu0 0
    %4905 = vmatprep.subr.bf16.mxu0 0
    %4906 = vmatpush1.bf16.msra.mxu0 0
    %4907 = vmatprep.subr.bf16.mxu0 0
    %4908 = vmatpush1.bf16.msra.mxu0 0
    %4909 = vmatprep.subr.bf16.mxu0 0
    %4910 = vmatpush1.bf16.msra.mxu0 0
    %4911 = vmatprep.subr.bf16.mxu0 0
    %4912 = vmatpush1.bf16.msra.mxu0 0
    %4913 = vmatprep.subr.bf16.mxu0 0
    %4914 = vmatpush1.bf16.msra.mxu0 0
    %4915 = vmatprep.subr.bf16.mxu0 0
    %4916 = vmatpush1.bf16.msra.mxu0 0
    %4917 = vmatprep.mubr.bf16.mxu0 0
    %4918 = vmatmul.mubr.bf16.gmra.mrb[0].mxu0 %v4862
    %v4919 = vpop.f32.mrb[0].mxu0
    %v4920 = vadd.f32 0.0, %v4919
    %v4921 = vpop.f32.mrb[0].mxu0
    %v4922 = vpop.f32.mrb[0].mxu0
    %v4923 = vadd.f32 0.0, %v4922
    %v4924 = vpop.f32.mrb[0].mxu0
    %4925 = vmatprep.mubr.bf16.mxu0 0
    %4926 = vmatmul.mubr.bf16.gmra.mrb[0].mxu0 %v4865
    %v4927 = vpop.f32.mrb[0].mxu0
    %v4928 = vadd.f32 0.0, %v4927
    %v4929 = vpop.f32.mrb[0].mxu0
    %v4930 = vpop.f32.mrb[0].mxu0
    %v4931 = vadd.f32 0.0, %v4930
    %v4932 = vpop.f32.mrb[0].mxu0
    %4933 = vmatprep.mubr.bf16.mxu0 0
    %4934 = vmatmul.mubr.bf16.gmra.mrb[0].mxu0 %v4868
    %v4935 = vpop.f32.mrb[0].mxu0
    %v4936 = vadd.f32 0.0, %v4935
    %v4937 = vpop.f32.mrb[0].mxu0
    %v4938 = vpop.f32.mrb[0].mxu0
    %v4939 = vadd.f32 0.0, %v4938
    %v4940 = vpop.f32.mrb[0].mxu0
    %4941 = vmatprep.mubr.bf16.mxu0 0
    %4942 = vmatmul.mubr.bf16.gmra.mrb[0].mxu0 %v4871
    %v4943 = vpop.f32.mrb[0].mxu0
    %v4944 = vadd.f32 0.0, %v4943
    %v4945 = vpop.f32.mrb[0].mxu0
    %v4946 = vpop.f32.mrb[0].mxu0
    %v4947 = vadd.f32 0.0, %v4946
    %v4948 = vpop.f32.mrb[0].mxu0
    %4949 = vmatprep.mubr.bf16.mxu0 0
    %4950 = vmatmul.mubr.bf16.gmra.mrb[0].mxu0 %v4874
    %v4951 = vpop.f32.mrb[0].mxu0
    %v4952 = vadd.f32 0.0, %v4951
    %v4953 = vpop.f32.mrb[0].mxu0
    %v4954 = vpop.f32.mrb[0].mxu0
    %v4955 = vadd.f32 0.0, %v4954
    %v4956 = vpop.f32.mrb[0].mxu0
    %4957 = vmatprep.mubr.bf16.mxu0 0
    %4958 = vmatmul.mubr.bf16.gmra.mrb[0].mxu0 %v4877
    %v4959 = vpop.f32.mrb[0].mxu0
    %v4960 = vadd.f32 0.0, %v4959
    %v4961 = vpop.f32.mrb[0].mxu0
    %v4962 = vpop.f32.mrb[0].mxu0
    %v4963 = vadd.f32 0.0, %v4962
    %v4964 = vpop.f32.mrb[0].mxu0
    %4965 = vmatprep.mubr.bf16.mxu0 0
    %4966 = vmatmul.mubr.bf16.gmra.mrb[0].mxu0 %v4880
    %v4967 = vpop.f32.mrb[0].mxu0
    %v4968 = vadd.f32 0.0, %v4967
    %v4969 = vpop.f32.mrb[0].mxu0
    %v4970 = vpop.f32.mrb[0].mxu0
    %v4971 = vpop.f32.mrb[0].mxu0
    %4972 = vdwg.mxu0
    %v4973 = vadd.f32 %v4819, %v4920
    %v4974 = vadd.f32 %v4820, %v4923
    %v4975 = vadd.f32 %v4821, %v4928
    %v4976 = vadd.f32 %v4822, %v4931
    %v4977 = vadd.f32 %v4823, %v4936
    %v4978 = vadd.f32 %v4824, %v4939
    %v4979 = vadd.f32 %v4825, %v4944
    %v4980 = vadd.f32 %v4826, %v4947
    %v4981 = vadd.f32 %v4827, %v4952
    %v4982 = vadd.f32 %v4828, %v4955
    %v4983 = vadd.f32 %v4829, %v4960
    %v4984 = vadd.f32 %v4830, %v4963
    %v4985 = vadd.f32 %v4831, %v4968
    %v4986 = vld [vmem:[%s4] sm:$0x1]
    %v4988 = vlaneseq
    %v4989 = vshrl.u32 %v4988, 7
    %v4990 = vsub.s32 0, %v4989
    %v4991 = vrot.slane %v4986, %v4990
    %v4993 = vadd.f32 %v4973, %v4991
    %v4994 = vadd.f32 %v4974, %v4991
    %v4995 = vadd.f32 %v4975, %v4991
    %v4996 = vadd.f32 %v4976, %v4991
    %v4997 = vadd.f32 %v4977, %v4991
    %v4998 = vadd.f32 %v4978, %v4991
    %v4999 = vadd.f32 %v4979, %v4991
    %v5000 = vadd.f32 %v4980, %v4991
    %v5001 = vadd.f32 %v4981, %v4991
    %v5002 = vadd.f32 %v4982, %v4991
    %v5003 = vadd.f32 %v4983, %v4991
    %v5004 = vadd.f32 %v4984, %v4991
    %v5005 = vadd.f32 %v4985, %v4991
    %vm5019 = vcmask 1046528
    %v5020 = vrot.slane %v4993, 1
    %v5021 = vrot.slane %v4994, 1
    %v5022 = vsel %vm5019, %v5020, %v5021
    %v5023 = vrot.slane %v4995, 1
    %v5024 = vsel %vm5019, %v5021, %v5023
    %v5025 = vrot.slane %v4996, 1
    %v5026 = vsel %vm5019, %v5023, %v5025
    %v5027 = vrot.slane %v4997, 1
    %v5028 = vsel %vm5019, %v5025, %v5027
    %v5029 = vrot.slane %v4998, 1
    %v5030 = vsel %vm5019, %v5027, %v5029
    %v5031 = vrot.slane %v4999, 1
    %v5032 = vsel %vm5019, %v5029, %v5031
    %v5033 = vrot.slane %v5000, 1
    %v5034 = vsel %vm5019, %v5031, %v5033
    %v5035 = vrot.slane %v5001, 1
    %v5036 = vsel %vm5019, %v5033, %v5035
    %v5037 = vrot.slane %v5002, 1
    %v5038 = vsel %vm5019, %v5035, %v5037
    %v5039 = vrot.slane %v5003, 1
    %v5040 = vsel %vm5019, %v5037, %v5039
    %v5041 = vrot.slane %v5004, 1
    %v5042 = vsel %vm5019, %v5039, %v5041
    %v5043 = vrot.slane %v5005, 1
    %v5044 = vsel %vm5019, %v5041, %v5043
    %v5057 = vmax.f32 %v4993, %v5022
    %v5058 = vmax.f32 %v4994, %v5024
    %v5059 = vmax.f32 %v4995, %v5026
    %v5060 = vmax.f32 %v4996, %v5028
    %v5061 = vmax.f32 %v4997, %v5030
    %v5062 = vmax.f32 %v4998, %v5032
    %v5063 = vmax.f32 %v4999, %v5034
    %v5064 = vmax.f32 %v5000, %v5036
    %v5065 = vmax.f32 %v5001, %v5038
    %v5066 = vmax.f32 %v5002, %v5040
    %v5067 = vmax.f32 %v5003, %v5042
    %v5068 = vmax.f32 %v5004, %v5044
    %v5077 = vrot.slane %v5058, 4
    %v5078 = vrot.slane %v5059, 4
    %v5079 = vsel %vm410, %v5077, %v5078
    %v5080 = vrot.slane %v5061, 4
    %v5081 = vrot.slane %v5062, 4
    %v5082 = vsel %vm410, %v5080, %v5081
    %v5083 = vrot.slane %v5064, 4
    %v5084 = vrot.slane %v5065, 4
    %v5085 = vsel %vm410, %v5083, %v5084
    %v5086 = vrot.slane %v5067, 4
    %v5087 = vrot.slane %v5068, 4
    %v5088 = vsel %vm410, %v5086, %v5087
    %v5093 = vmax.f32 %v5057, %v5079
    %v5094 = vmax.f32 %v5060, %v5082
    %v5095 = vmax.f32 %v5063, %v5085
    %v5096 = vmax.f32 %v5066, %v5088
    %v5097 = vpack.c.bf16 %v5093, %v5093
    %v5098 = vld [vmem:[%s5] sm:$0xff]
    %v5099 = vld [vmem:[%s5 + $0x8] sm:$0xff]
    %v5100 = vld [vmem:[%s5 + $0x10] sm:$0xff]
    %v5101 = vld [vmem:[%s5 + $0x18] sm:$0xff]
    %v5102 = vld [vmem:[%s5 + $0x20] sm:$0xff]
    %v5103 = vld [vmem:[%s5 + $0x28] sm:$0xff]
    %v5104 = vld [vmem:[%s5 + $0x30] sm:$0xff]
    %v5105 = vld [vmem:[%s5 + $0x38] sm:$0xff]
    %v5106 = vld [vmem:[%s5 + $0x40] sm:$0xff]
    %v5107 = vld [vmem:[%s5 + $0x48] sm:$0xff]
    %v5108 = vld [vmem:[%s5 + $0x50] sm:$0xff]
    %v5109 = vld [vmem:[%s5 + $0x58] sm:$0xff]
    %v5110 = vld [vmem:[%s5 + $0x60] sm:$0x11]
    %v5111 = vld [vmem:[%s5 + $0x68] sm:$0x11]
    %s5112 = scalar_lea.vmem %s5, 112
    %v5113 = vld [vmem:[%s5112] sm:$0xff]
    %v5114 = vld [vmem:[%s5112 + $0x8] sm:$0xff]
    %v5115 = vld [vmem:[%s5112 + $0x10] sm:$0xff]
    %v5116 = vld [vmem:[%s5112 + $0x18] sm:$0xff]
    %v5117 = vld [vmem:[%s5112 + $0x20] sm:$0xff]
    %v5118 = vld [vmem:[%s5112 + $0x28] sm:$0xff]
    %v5119 = vld [vmem:[%s5112 + $0x30] sm:$0xff]
    %v5120 = vld [vmem:[%s5112 + $0x38] sm:$0xff]
    %v5121 = vld [vmem:[%s5112 + $0x40] sm:$0xff]
    %v5122 = vld [vmem:[%s5112 + $0x48] sm:$0xff]
    %v5123 = vld [vmem:[%s5112 + $0x50] sm:$0xff]
    %v5124 = vld [vmem:[%s5112 + $0x58] sm:$0xff]
    %v5125 = vld [vmem:[%s5112 + $0x60] sm:$0x11]
    %v5126 = vld [vmem:[%s5112 + $0x68] sm:$0x11]
    %v5128 = vrot.slane %v5097, 1
    %v5143 = vunpack.c.l.b16 %v5113
    %v5144 = vunpack.c.h.b16 %v5113
    %v5145 = vunpack.c.l.b16 %v5114
    %v5146 = vunpack.c.h.b16 %v5114
    %v5147 = vunpack.c.l.b16 %v5115
    %v5148 = vunpack.c.h.b16 %v5115
    %v5149 = vunpack.c.l.b16 %v5116
    %v5150 = vunpack.c.h.b16 %v5116
    %v5151 = vunpack.c.l.b16 %v5117
    %v5152 = vunpack.c.h.b16 %v5117
    %v5153 = vunpack.c.l.b16 %v5118
    %v5154 = vunpack.c.h.b16 %v5118
    %v5155 = vunpack.c.l.b16 %v5119
    %v5156 = vunpack.c.h.b16 %v5119
    %v5157 = vunpack.c.l.b16 %v5120
    %v5158 = vunpack.c.h.b16 %v5120
    %v5159 = vunpack.c.l.b16 %v5121
    %v5160 = vunpack.c.h.b16 %v5121
    %v5161 = vunpack.c.l.b16 %v5122
    %v5162 = vunpack.c.h.b16 %v5122
    %v5163 = vunpack.c.l.b16 %v5123
    %v5164 = vunpack.c.h.b16 %v5123
    %v5165 = vunpack.c.l.b16 %v5124
    %v5166 = vunpack.c.h.b16 %v5124
    %v5167 = vunpack.c.l.b16 %v5125
    %v5168 = vunpack.c.h.b16 %v5125
    %v5169 = vunpack.c.l.b16 %v5126
    %v5170 = vunpack.c.h.b16 %v5126
    %v5171 = vpack.c.b16 %v5147, %v5143
    %v5172 = vpack.c.b16 %v5148, %v5144
    %v5173 = vpack.c.b16 %v5149, %v5145
    %v5174 = vpack.c.b16 %v5150, %v5146
    %v5175 = vpack.c.b16 %v5155, %v5151
    %v5176 = vpack.c.b16 %v5156, %v5152
    %v5177 = vpack.c.b16 %v5157, %v5153
    %v5178 = vpack.c.b16 %v5158, %v5154
    %v5179 = vpack.c.b16 %v5163, %v5159
    %v5180 = vpack.c.b16 %v5164, %v5160
    %v5181 = vpack.c.b16 %v5165, %v5161
    %v5182 = vpack.c.b16 %v5166, %v5162
    %v5183 = vpack.c.b16 %v5167, %v5167
    %v5184 = vpack.c.b16 %v5168, %v5168
    %v5185 = vpack.c.b16 %v5169, %v5169
    %v5186 = vpack.c.b16 %v5170, %v5170
    %vm5199 = vcmask 408576
    %v5201 = vsel %vm5199, %v5128, 0
    %vm5203 = vcmask 1040384
    %v5205 = vsel %vm5203, %v5183, 0
    %v5208 = vsel %vm5203, %v5184, 0
    %v5211 = vsel %vm5203, %v5185, 0
    %v5214 = vsel %vm5203, %v5186, 0
    %5216 = vmatprep.subr.bf16.mxu0 %v5172
    %5217 = vmatpush1.bf16.msra.mxu0 %v5171
    %5218 = vmatprep.subr.bf16.mxu0 %v5176
    %5219 = vmatpush1.bf16.msra.mxu0 %v5175
    %5220 = vmatprep.subr.bf16.mxu0 %v5180
    %5221 = vmatpush1.bf16.msra.mxu0 %v5179
    %5222 = vmatprep.subr.bf16.mxu0 %v5208
    %5223 = vmatpush1.bf16.msra.mxu0 %v5205
    %5224 = vmatprep.subr.bf16.mxu0 0
    %5225 = vmatpush1.bf16.msra.mxu0 0
    %5226 = vmatprep.subr.bf16.mxu0 0
    %5227 = vmatpush1.bf16.msra.mxu0 0
    %5228 = vmatprep.subr.bf16.mxu0 0
    %5229 = vmatpush1.bf16.msra.mxu0 0
    %5230 = vmatprep.subr.bf16.mxu0 0
    %5231 = vmatpush1.bf16.msra.mxu0 0
    %5232 = vmatprep.subr.bf16.mxu0 0
    %5233 = vmatpush1.bf16.msra.mxu0 0
    %5234 = vmatprep.subr.bf16.mxu0 0
    %5235 = vmatpush1.bf16.msra.mxu0 0
    %5236 = vmatprep.subr.bf16.mxu0 0
    %5237 = vmatpush1.bf16.msra.mxu0 0
    %5238 = vmatprep.subr.bf16.mxu0 0
    %5239 = vmatpush1.bf16.msra.mxu0 0
    %5240 = vmatprep.subr.bf16.mxu0 0
    %5241 = vmatpush1.bf16.msra.mxu0 0
    %5242 = vmatprep.subr.bf16.mxu0 0
    %5243 = vmatpush1.bf16.msra.mxu0 0
    %5244 = vmatprep.subr.bf16.mxu0 0
    %5245 = vmatpush1.bf16.msra.mxu0 0
    %5246 = vmatprep.subr.bf16.mxu0 0
    %5247 = vmatpush1.bf16.msra.mxu0 0
    %5248 = vmatprep.mubr.bf16.mxu0 0
    %5249 = vmatmul.mubr.bf16.gmra.mrb[0].mxu0 %v5201
    %v5250 = vpop.f32.mrb[0].mxu0
    %v5251 = vadd.f32 0.0, %v5250
    %v5252 = vpop.f32.mrb[0].mxu0
    %v5253 = vadd.f32 0.0, %v5252
    %v5254 = vpop.f32.mrb[0].mxu0
    %v5255 = vpop.f32.mrb[0].mxu0
    %5256 = vdwg.mxu0
    %5257 = vmatprep.subr.bf16.mxu0 %v5174
    %5258 = vmatpush1.bf16.msra.mxu0 %v5173
    %5259 = vmatprep.subr.bf16.mxu0 %v5178
    %5260 = vmatpush1.bf16.msra.mxu0 %v5177
    %5261 = vmatprep.subr.bf16.mxu0 %v5182
    %5262 = vmatpush1.bf16.msra.mxu0 %v5181
    %5263 = vmatprep.subr.bf16.mxu0 %v5214
    %5264 = vmatpush1.bf16.msra.mxu0 %v5211
    %5265 = vmatprep.subr.bf16.mxu0 0
    %5266 = vmatpush1.bf16.msra.mxu0 0
    %5267 = vmatprep.subr.bf16.mxu0 0
    %5268 = vmatpush1.bf16.msra.mxu0 0
    %5269 = vmatprep.subr.bf16.mxu0 0
    %5270 = vmatpush1.bf16.msra.mxu0 0
    %5271 = vmatprep.subr.bf16.mxu0 0
    %5272 = vmatpush1.bf16.msra.mxu0 0
    %5273 = vmatprep.subr.bf16.mxu0 0
    %5274 = vmatpush1.bf16.msra.mxu0 0
    %5275 = vmatprep.subr.bf16.mxu0 0
    %5276 = vmatpush1.bf16.msra.mxu0 0
    %5277 = vmatprep.subr.bf16.mxu0 0
    %5278 = vmatpush1.bf16.msra.mxu0 0
    %5279 = vmatprep.subr.bf16.mxu0 0
    %5280 = vmatpush1.bf16.msra.mxu0 0
    %5281 = vmatprep.subr.bf16.mxu0 0
    %5282 = vmatpush1.bf16.msra.mxu0 0
    %5283 = vmatprep.subr.bf16.mxu0 0
    %5284 = vmatpush1.bf16.msra.mxu0 0
    %5285 = vmatprep.subr.bf16.mxu0 0
    %5286 = vmatpush1.bf16.msra.mxu0 0
    %5287 = vmatprep.subr.bf16.mxu0 0
    %5288 = vmatpush1.bf16.msra.mxu0 0
    %5289 = vmatprep.mubr.bf16.mxu0 0
    %5290 = vmatmul.mubr.bf16.gmra.mrb[0].mxu0 %v5201
    %v5291 = vpop.f32.mrb[0].mxu0
    %v5292 = vadd.f32 0.0, %v5291
    %v5293 = vpop.f32.mrb[0].mxu0
    %v5294 = vadd.f32 0.0, %v5293
    %v5295 = vpop.f32.mrb[0].mxu0
    %v5296 = vpop.f32.mrb[0].mxu0
    %5297 = vdwg.mxu0
    %v5312 = vunpack.c.l.b16 %v5098
    %v5313 = vunpack.c.h.b16 %v5098
    %v5314 = vunpack.c.l.b16 %v5099
    %v5315 = vunpack.c.h.b16 %v5099
    %v5316 = vunpack.c.l.b16 %v5100
    %v5317 = vunpack.c.h.b16 %v5100
    %v5318 = vunpack.c.l.b16 %v5101
    %v5319 = vunpack.c.h.b16 %v5101
    %v5320 = vunpack.c.l.b16 %v5102
    %v5321 = vunpack.c.h.b16 %v5102
    %v5322 = vunpack.c.l.b16 %v5103
    %v5323 = vunpack.c.h.b16 %v5103
    %v5324 = vunpack.c.l.b16 %v5104
    %v5325 = vunpack.c.h.b16 %v5104
    %v5326 = vunpack.c.l.b16 %v5105
    %v5327 = vunpack.c.h.b16 %v5105
    %v5328 = vunpack.c.l.b16 %v5106
    %v5329 = vunpack.c.h.b16 %v5106
    %v5330 = vunpack.c.l.b16 %v5107
    %v5331 = vunpack.c.h.b16 %v5107
    %v5332 = vunpack.c.l.b16 %v5108
    %v5333 = vunpack.c.h.b16 %v5108
    %v5334 = vunpack.c.l.b16 %v5109
    %v5335 = vunpack.c.h.b16 %v5109
    %v5336 = vunpack.c.l.b16 %v5110
    %v5337 = vunpack.c.h.b16 %v5110
    %v5338 = vunpack.c.l.b16 %v5111
    %v5339 = vunpack.c.h.b16 %v5111
    %v5340 = vpack.c.b16 %v5316, %v5312
    %v5341 = vpack.c.b16 %v5317, %v5313
    %v5342 = vpack.c.b16 %v5318, %v5314
    %v5343 = vpack.c.b16 %v5319, %v5315
    %v5344 = vpack.c.b16 %v5324, %v5320
    %v5345 = vpack.c.b16 %v5325, %v5321
    %v5346 = vpack.c.b16 %v5326, %v5322
    %v5347 = vpack.c.b16 %v5327, %v5323
    %v5348 = vpack.c.b16 %v5332, %v5328
    %v5349 = vpack.c.b16 %v5333, %v5329
    %v5350 = vpack.c.b16 %v5334, %v5330
    %v5351 = vpack.c.b16 %v5335, %v5331
    %v5352 = vpack.c.b16 %v5336, %v5336
    %v5353 = vpack.c.b16 %v5337, %v5337
    %v5354 = vpack.c.b16 %v5338, %v5338
    %v5355 = vpack.c.b16 %v5339, %v5339
    %v5369 = vsel %vm5199, %v5097, 0
    %v5372 = vsel %vm5203, %v5352, 0
    %v5375 = vsel %vm5203, %v5353, 0
    %v5378 = vsel %vm5203, %v5354, 0
    %v5381 = vsel %vm5203, %v5355, 0
    %5383 = vmatprep.subr.bf16.mxu0 %v5341
    %5384 = vmatpush1.bf16.msra.mxu0 %v5340
    %5385 = vmatprep.subr.bf16.mxu0 %v5345
    %5386 = vmatpush1.bf16.msra.mxu0 %v5344
    %5387 = vmatprep.subr.bf16.mxu0 %v5349
    %5388 = vmatpush1.bf16.msra.mxu0 %v5348
    %5389 = vmatprep.subr.bf16.mxu0 %v5375
    %5390 = vmatpush1.bf16.msra.mxu0 %v5372
    %5391 = vmatprep.subr.bf16.mxu0 0
    %5392 = vmatpush1.bf16.msra.mxu0 0
    %5393 = vmatprep.subr.bf16.mxu0 0
    %5394 = vmatpush1.bf16.msra.mxu0 0
    %5395 = vmatprep.subr.bf16.mxu0 0
    %5396 = vmatpush1.bf16.msra.mxu0 0
    %5397 = vmatprep.subr.bf16.mxu0 0
    %5398 = vmatpush1.bf16.msra.mxu0 0
    %5399 = vmatprep.subr.bf16.mxu0 0
    %5400 = vmatpush1.bf16.msra.mxu0 0
    %5401 = vmatprep.subr.bf16.mxu0 0
    %5402 = vmatpush1.bf16.msra.mxu0 0
    %5403 = vmatprep.subr.bf16.mxu0 0
    %5404 = vmatpush1.bf16.msra.mxu0 0
    %5405 = vmatprep.subr.bf16.mxu0 0
    %5406 = vmatpush1.bf16.msra.mxu0 0
    %5407 = vmatprep.subr.bf16.mxu0 0
    %5408 = vmatpush1.bf16.msra.mxu0 0
    %5409 = vmatprep.subr.bf16.mxu0 0
    %5410 = vmatpush1.bf16.msra.mxu0 0
    %5411 = vmatprep.subr.bf16.mxu0 0
    %5412 = vmatpush1.bf16.msra.mxu0 0
    %5413 = vmatprep.subr.bf16.mxu0 0
    %5414 = vmatpush1.bf16.msra.mxu0 0
    %5415 = vmatprep.mubr.bf16.mxu0 0
    %5416 = vmatmul.mubr.bf16.gmra.mrb[0].mxu0 %v5369
    %v5417 = vpop.f32.mrb[0].mxu0
    %v5418 = vadd.f32 %v5251, %v5417
    %v5419 = vpop.f32.mrb[0].mxu0
    %v5420 = vadd.f32 %v5253, %v5419
    %v5421 = vpop.f32.mrb[0].mxu0
    %v5422 = vpop.f32.mrb[0].mxu0
    %5423 = vdwg.mxu0
    %5424 = vmatprep.subr.bf16.mxu0 %v5343
    %5425 = vmatpush1.bf16.msra.mxu0 %v5342
    %5426 = vmatprep.subr.bf16.mxu0 %v5347
    %5427 = vmatpush1.bf16.msra.mxu0 %v5346
    %5428 = vmatprep.subr.bf16.mxu0 %v5351
    %5429 = vmatpush1.bf16.msra.mxu0 %v5350
    %5430 = vmatprep.subr.bf16.mxu0 %v5381
    %5431 = vmatpush1.bf16.msra.mxu0 %v5378
    %5432 = vmatprep.subr.bf16.mxu0 0
    %5433 = vmatpush1.bf16.msra.mxu0 0
    %5434 = vmatprep.subr.bf16.mxu0 0
    %5435 = vmatpush1.bf16.msra.mxu0 0
    %5436 = vmatprep.subr.bf16.mxu0 0
    %5437 = vmatpush1.bf16.msra.mxu0 0
    %5438 = vmatprep.subr.bf16.mxu0 0
    %5439 = vmatpush1.bf16.msra.mxu0 0
    %5440 = vmatprep.subr.bf16.mxu0 0
    %5441 = vmatpush1.bf16.msra.mxu0 0
    %5442 = vmatprep.subr.bf16.mxu0 0
    %5443 = vmatpush1.bf16.msra.mxu0 0
    %5444 = vmatprep.subr.bf16.mxu0 0
    %5445 = vmatpush1.bf16.msra.mxu0 0
    %5446 = vmatprep.subr.bf16.mxu0 0
    %5447 = vmatpush1.bf16.msra.mxu0 0
    %5448 = vmatprep.subr.bf16.mxu0 0
    %5449 = vmatpush1.bf16.msra.mxu0 0
    %5450 = vmatprep.subr.bf16.mxu0 0
    %5451 = vmatpush1.bf16.msra.mxu0 0
    %5452 = vmatprep.subr.bf16.mxu0 0
    %5453 = vmatpush1.bf16.msra.mxu0 0
    %5454 = vmatprep.subr.bf16.mxu0 0
    %5455 = vmatpush1.bf16.msra.mxu0 0
    %5456 = vmatprep.mubr.bf16.mxu0 0
    %5457 = vmatmul.mubr.bf16.gmra.mrb[0].mxu0 %v5369
    %v5458 = vpop.f32.mrb[0].mxu0
    %v5459 = vadd.f32 %v5292, %v5458
    %v5460 = vpop.f32.mrb[0].mxu0
    %v5461 = vadd.f32 %v5294, %v5460
    %v5462 = vpop.f32.mrb[0].mxu0
    %v5463 = vpop.f32.mrb[0].mxu0
    %5464 = vdwg.mxu0
    %s5465 = scalar_lea.vmem %s5, 224
    %v5466 = vld [vmem:[%s5465] sm:$0xff]
    %v5467 = vld [vmem:[%s5465 + $0x8] sm:$0xff]
    %v5468 = vld [vmem:[%s5465 + $0x10] sm:$0xff]
    %v5469 = vld [vmem:[%s5465 + $0x18] sm:$0xff]
    %v5470 = vld [vmem:[%s5465 + $0x20] sm:$0xff]
    %v5471 = vld [vmem:[%s5465 + $0x28] sm:$0xff]
    %v5472 = vld [vmem:[%s5465 + $0x30] sm:$0xff]
    %v5473 = vld [vmem:[%s5465 + $0x38] sm:$0xff]
    %v5474 = vld [vmem:[%s5465 + $0x40] sm:$0xff]
    %v5475 = vld [vmem:[%s5465 + $0x48] sm:$0xff]
    %v5476 = vld [vmem:[%s5465 + $0x50] sm:$0xff]
    %v5477 = vld [vmem:[%s5465 + $0x58] sm:$0xff]
    %v5478 = vld [vmem:[%s5465 + $0x60] sm:$0x11]
    %v5479 = vld [vmem:[%s5465 + $0x68] sm:$0x11]
    %v5480 = vrot.slane %v5097, 2
    %v5495 = vunpack.c.l.b16 %v5466
    %v5496 = vunpack.c.h.b16 %v5466
    %v5497 = vunpack.c.l.b16 %v5467
    %v5498 = vunpack.c.h.b16 %v5467
    %v5499 = vunpack.c.l.b16 %v5468
    %v5500 = vunpack.c.h.b16 %v5468
    %v5501 = vunpack.c.l.b16 %v5469
    %v5502 = vunpack.c.h.b16 %v5469
    %v5503 = vunpack.c.l.b16 %v5470
    %v5504 = vunpack.c.h.b16 %v5470
    %v5505 = vunpack.c.l.b16 %v5471
    %v5506 = vunpack.c.h.b16 %v5471
    %v5507 = vunpack.c.l.b16 %v5472
    %v5508 = vunpack.c.h.b16 %v5472
    %v5509 = vunpack.c.l.b16 %v5473
    %v5510 = vunpack.c.h.b16 %v5473
    %v5511 = vunpack.c.l.b16 %v5474
    %v5512 = vunpack.c.h.b16 %v5474
    %v5513 = vunpack.c.l.b16 %v5475
    %v5514 = vunpack.c.h.b16 %v5475
    %v5515 = vunpack.c.l.b16 %v5476
    %v5516 = vunpack.c.h.b16 %v5476
    %v5517 = vunpack.c.l.b16 %v5477
    %v5518 = vunpack.c.h.b16 %v5477
    %v5519 = vunpack.c.l.b16 %v5478
    %v5520 = vunpack.c.h.b16 %v5478
    %v5521 = vunpack.c.l.b16 %v5479
    %v5522 = vunpack.c.h.b16 %v5479
    %v5523 = vpack.c.b16 %v5499, %v5495
    %v5524 = vpack.c.b16 %v5500, %v5496
    %v5525 = vpack.c.b16 %v5501, %v5497
    %v5526 = vpack.c.b16 %v5502, %v5498
    %v5527 = vpack.c.b16 %v5507, %v5503
    %v5528 = vpack.c.b16 %v5508, %v5504
    %v5529 = vpack.c.b16 %v5509, %v5505
    %v5530 = vpack.c.b16 %v5510, %v5506
    %v5531 = vpack.c.b16 %v5515, %v5511
    %v5532 = vpack.c.b16 %v5516, %v5512
    %v5533 = vpack.c.b16 %v5517, %v5513
    %v5534 = vpack.c.b16 %v5518, %v5514
    %v5535 = vpack.c.b16 %v5519, %v5519
    %v5536 = vpack.c.b16 %v5520, %v5520
    %v5537 = vpack.c.b16 %v5521, %v5521
    %v5538 = vpack.c.b16 %v5522, %v5522
    %v5552 = vsel %vm5199, %v5480, 0
    %v5555 = vsel %vm5203, %v5535, 0
    %v5558 = vsel %vm5203, %v5536, 0
    %v5561 = vsel %vm5203, %v5537, 0
    %v5564 = vsel %vm5203, %v5538, 0
    %5566 = vmatprep.subr.bf16.mxu0 %v5524
    %5567 = vmatpush1.bf16.msra.mxu0 %v5523
    %5568 = vmatprep.subr.bf16.mxu0 %v5528
    %5569 = vmatpush1.bf16.msra.mxu0 %v5527
    %5570 = vmatprep.subr.bf16.mxu0 %v5532
    %5571 = vmatpush1.bf16.msra.mxu0 %v5531
    %5572 = vmatprep.subr.bf16.mxu0 %v5558
    %5573 = vmatpush1.bf16.msra.mxu0 %v5555
    %5574 = vmatprep.subr.bf16.mxu0 0
    %5575 = vmatpush1.bf16.msra.mxu0 0
    %5576 = vmatprep.subr.bf16.mxu0 0
    %5577 = vmatpush1.bf16.msra.mxu0 0
    %5578 = vmatprep.subr.bf16.mxu0 0
    %5579 = vmatpush1.bf16.msra.mxu0 0
    %5580 = vmatprep.subr.bf16.mxu0 0
    %5581 = vmatpush1.bf16.msra.mxu0 0
    %5582 = vmatprep.subr.bf16.mxu0 0
    %5583 = vmatpush1.bf16.msra.mxu0 0
    %5584 = vmatprep.subr.bf16.mxu0 0
    %5585 = vmatpush1.bf16.msra.mxu0 0
    %5586 = vmatprep.subr.bf16.mxu0 0
    %5587 = vmatpush1.bf16.msra.mxu0 0
    %5588 = vmatprep.subr.bf16.mxu0 0
    %5589 = vmatpush1.bf16.msra.mxu0 0
    %5590 = vmatprep.subr.bf16.mxu0 0
    %5591 = vmatpush1.bf16.msra.mxu0 0
    %5592 = vmatprep.subr.bf16.mxu0 0
    %5593 = vmatpush1.bf16.msra.mxu0 0
    %5594 = vmatprep.subr.bf16.mxu0 0
    %5595 = vmatpush1.bf16.msra.mxu0 0
    %5596 = vmatprep.subr.bf16.mxu0 0
    %5597 = vmatpush1.bf16.msra.mxu0 0
    %5598 = vmatprep.mubr.bf16.mxu0 0
    %5599 = vmatmul.mubr.bf16.gmra.mrb[0].mxu0 %v5552
    %v5600 = vpop.f32.mrb[0].mxu0
    %v5601 = vadd.f32 0.0, %v5600
    %v5602 = vpop.f32.mrb[0].mxu0
    %v5603 = vadd.f32 0.0, %v5602
    %v5604 = vpop.f32.mrb[0].mxu0
    %v5605 = vpop.f32.mrb[0].mxu0
    %5606 = vdwg.mxu0
    %5607 = vmatprep.subr.bf16.mxu0 %v5526
    %5608 = vmatpush1.bf16.msra.mxu0 %v5525
    %5609 = vmatprep.subr.bf16.mxu0 %v5530
    %5610 = vmatpush1.bf16.msra.mxu0 %v5529
    %5611 = vmatprep.subr.bf16.mxu0 %v5534
    %5612 = vmatpush1.bf16.msra.mxu0 %v5533
    %5613 = vmatprep.subr.bf16.mxu0 %v5564
    %5614 = vmatpush1.bf16.msra.mxu0 %v5561
    %5615 = vmatprep.subr.bf16.mxu0 0
    %5616 = vmatpush1.bf16.msra.mxu0 0
    %5617 = vmatprep.subr.bf16.mxu0 0
    %5618 = vmatpush1.bf16.msra.mxu0 0
    %5619 = vmatprep.subr.bf16.mxu0 0
    %5620 = vmatpush1.bf16.msra.mxu0 0
    %5621 = vmatprep.subr.bf16.mxu0 0
    %5622 = vmatpush1.bf16.msra.mxu0 0
    %5623 = vmatprep.subr.bf16.mxu0 0
    %5624 = vmatpush1.bf16.msra.mxu0 0
    %5625 = vmatprep.subr.bf16.mxu0 0
    %5626 = vmatpush1.bf16.msra.mxu0 0
    %5627 = vmatprep.subr.bf16.mxu0 0
    %5628 = vmatpush1.bf16.msra.mxu0 0
    %5629 = vmatprep.subr.bf16.mxu0 0
    %5630 = vmatpush1.bf16.msra.mxu0 0
    %5631 = vmatprep.subr.bf16.mxu0 0
    %5632 = vmatpush1.bf16.msra.mxu0 0
    %5633 = vmatprep.subr.bf16.mxu0 0
    %5634 = vmatpush1.bf16.msra.mxu0 0
    %5635 = vmatprep.subr.bf16.mxu0 0
    %5636 = vmatpush1.bf16.msra.mxu0 0
    %5637 = vmatprep.subr.bf16.mxu0 0
    %5638 = vmatpush1.bf16.msra.mxu0 0
    %5639 = vmatprep.mubr.bf16.mxu0 0
    %5640 = vmatmul.mubr.bf16.gmra.mrb[0].mxu0 %v5552
    %v5641 = vpop.f32.mrb[0].mxu0
    %v5642 = vadd.f32 0.0, %v5641
    %v5643 = vpop.f32.mrb[0].mxu0
    %v5644 = vadd.f32 0.0, %v5643
    %v5645 = vpop.f32.mrb[0].mxu0
    %v5646 = vpop.f32.mrb[0].mxu0
    %5647 = vdwg.mxu0
    %v5648 = vadd.f32 %v5418, %v5601
    %v5649 = vadd.f32 %v5420, %v5603
    %v5650 = vadd.f32 %v5459, %v5642
    %v5651 = vadd.f32 %v5461, %v5644
    %s5652 = scalar_lea.vmem %s5, 336
    %v5653 = vld [vmem:[%s5652] sm:$0xff]
    %v5654 = vld [vmem:[%s5652 + $0x8] sm:$0xff]
    %v5655 = vld [vmem:[%s5652 + $0x10] sm:$0xff]
    %v5656 = vld [vmem:[%s5652 + $0x18] sm:$0xff]
    %v5657 = vld [vmem:[%s5652 + $0x20] sm:$0xff]
    %v5658 = vld [vmem:[%s5652 + $0x28] sm:$0xff]
    %v5659 = vld [vmem:[%s5652 + $0x30] sm:$0xff]
    %v5660 = vld [vmem:[%s5652 + $0x38] sm:$0xff]
    %v5661 = vld [vmem:[%s5652 + $0x40] sm:$0xff]
    %v5662 = vld [vmem:[%s5652 + $0x48] sm:$0xff]
    %v5663 = vld [vmem:[%s5652 + $0x50] sm:$0xff]
    %v5664 = vld [vmem:[%s5652 + $0x58] sm:$0xff]
    %v5665 = vld [vmem:[%s5652 + $0x60] sm:$0x11]
    %v5666 = vld [vmem:[%s5652 + $0x68] sm:$0x11]
    %v5667 = vrot.slane %v5097, 3
    %v5682 = vunpack.c.l.b16 %v5653
    %v5683 = vunpack.c.h.b16 %v5653
    %v5684 = vunpack.c.l.b16 %v5654
    %v5685 = vunpack.c.h.b16 %v5654
    %v5686 = vunpack.c.l.b16 %v5655
    %v5687 = vunpack.c.h.b16 %v5655
    %v5688 = vunpack.c.l.b16 %v5656
    %v5689 = vunpack.c.h.b16 %v5656
    %v5690 = vunpack.c.l.b16 %v5657
    %v5691 = vunpack.c.h.b16 %v5657
    %v5692 = vunpack.c.l.b16 %v5658
    %v5693 = vunpack.c.h.b16 %v5658
    %v5694 = vunpack.c.l.b16 %v5659
    %v5695 = vunpack.c.h.b16 %v5659
    %v5696 = vunpack.c.l.b16 %v5660
    %v5697 = vunpack.c.h.b16 %v5660
    %v5698 = vunpack.c.l.b16 %v5661
    %v5699 = vunpack.c.h.b16 %v5661
    %v5700 = vunpack.c.l.b16 %v5662
    %v5701 = vunpack.c.h.b16 %v5662
    %v5702 = vunpack.c.l.b16 %v5663
    %v5703 = vunpack.c.h.b16 %v5663
    %v5704 = vunpack.c.l.b16 %v5664
    %v5705 = vunpack.c.h.b16 %v5664
    %v5706 = vunpack.c.l.b16 %v5665
    %v5707 = vunpack.c.h.b16 %v5665
    %v5708 = vunpack.c.l.b16 %v5666
    %v5709 = vunpack.c.h.b16 %v5666
    %v5710 = vpack.c.b16 %v5686, %v5682
    %v5711 = vpack.c.b16 %v5687, %v5683
    %v5712 = vpack.c.b16 %v5688, %v5684
    %v5713 = vpack.c.b16 %v5689, %v5685
    %v5714 = vpack.c.b16 %v5694, %v5690
    %v5715 = vpack.c.b16 %v5695, %v5691
    %v5716 = vpack.c.b16 %v5696, %v5692
    %v5717 = vpack.c.b16 %v5697, %v5693
    %v5718 = vpack.c.b16 %v5702, %v5698
    %v5719 = vpack.c.b16 %v5703, %v5699
    %v5720 = vpack.c.b16 %v5704, %v5700
    %v5721 = vpack.c.b16 %v5705, %v5701
    %v5722 = vpack.c.b16 %v5706, %v5706
    %v5723 = vpack.c.b16 %v5707, %v5707
    %v5724 = vpack.c.b16 %v5708, %v5708
    %v5725 = vpack.c.b16 %v5709, %v5709
    %v5739 = vsel %vm5199, %v5667, 0
    %v5742 = vsel %vm5203, %v5722, 0
    %v5745 = vsel %vm5203, %v5723, 0
    %v5748 = vsel %vm5203, %v5724, 0
    %v5751 = vsel %vm5203, %v5725, 0
    %5753 = vmatprep.subr.bf16.mxu0 %v5711
    %5754 = vmatpush1.bf16.msra.mxu0 %v5710
    %5755 = vmatprep.subr.bf16.mxu0 %v5715
    %5756 = vmatpush1.bf16.msra.mxu0 %v5714
    %5757 = vmatprep.subr.bf16.mxu0 %v5719
    %5758 = vmatpush1.bf16.msra.mxu0 %v5718
    %5759 = vmatprep.subr.bf16.mxu0 %v5745
    %5760 = vmatpush1.bf16.msra.mxu0 %v5742
    %5761 = vmatprep.subr.bf16.mxu0 0
    %5762 = vmatpush1.bf16.msra.mxu0 0
    %5763 = vmatprep.subr.bf16.mxu0 0
    %5764 = vmatpush1.bf16.msra.mxu0 0
    %5765 = vmatprep.subr.bf16.mxu0 0
    %5766 = vmatpush1.bf16.msra.mxu0 0
    %5767 = vmatprep.subr.bf16.mxu0 0
    %5768 = vmatpush1.bf16.msra.mxu0 0
    %5769 = vmatprep.subr.bf16.mxu0 0
    %5770 = vmatpush1.bf16.msra.mxu0 0
    %5771 = vmatprep.subr.bf16.mxu0 0
    %5772 = vmatpush1.bf16.msra.mxu0 0
    %5773 = vmatprep.subr.bf16.mxu0 0
    %5774 = vmatpush1.bf16.msra.mxu0 0
    %5775 = vmatprep.subr.bf16.mxu0 0
    %5776 = vmatpush1.bf16.msra.mxu0 0
    %5777 = vmatprep.subr.bf16.mxu0 0
    %5778 = vmatpush1.bf16.msra.mxu0 0
    %5779 = vmatprep.subr.bf16.mxu0 0
    %5780 = vmatpush1.bf16.msra.mxu0 0
    %5781 = vmatprep.subr.bf16.mxu0 0
    %5782 = vmatpush1.bf16.msra.mxu0 0
    %5783 = vmatprep.subr.bf16.mxu0 0
    %5784 = vmatpush1.bf16.msra.mxu0 0
    %5785 = vmatprep.mubr.bf16.mxu0 0
    %5786 = vmatmul.mubr.bf16.gmra.mrb[0].mxu0 %v5739
    %v5787 = vpop.f32.mrb[0].mxu0
    %v5788 = vadd.f32 0.0, %v5787
    %v5789 = vpop.f32.mrb[0].mxu0
    %v5790 = vadd.f32 0.0, %v5789
    %v5791 = vpop.f32.mrb[0].mxu0
    %v5792 = vpop.f32.mrb[0].mxu0
    %5793 = vdwg.mxu0
    %5794 = vmatprep.subr.bf16.mxu0 %v5713
    %5795 = vmatpush1.bf16.msra.mxu0 %v5712
    %5796 = vmatprep.subr.bf16.mxu0 %v5717
    %5797 = vmatpush1.bf16.msra.mxu0 %v5716
    %5798 = vmatprep.subr.bf16.mxu0 %v5721
    %5799 = vmatpush1.bf16.msra.mxu0 %v5720
    %5800 = vmatprep.subr.bf16.mxu0 %v5751
    %5801 = vmatpush1.bf16.msra.mxu0 %v5748
    %5802 = vmatprep.subr.bf16.mxu0 0
    %5803 = vmatpush1.bf16.msra.mxu0 0
    %5804 = vmatprep.subr.bf16.mxu0 0
    %5805 = vmatpush1.bf16.msra.mxu0 0
    %5806 = vmatprep.subr.bf16.mxu0 0
    %5807 = vmatpush1.bf16.msra.mxu0 0
    %5808 = vmatprep.subr.bf16.mxu0 0
    %5809 = vmatpush1.bf16.msra.mxu0 0
    %5810 = vmatprep.subr.bf16.mxu0 0
    %5811 = vmatpush1.bf16.msra.mxu0 0
    %5812 = vmatprep.subr.bf16.mxu0 0
    %5813 = vmatpush1.bf16.msra.mxu0 0
    %5814 = vmatprep.subr.bf16.mxu0 0
    %5815 = vmatpush1.bf16.msra.mxu0 0
    %5816 = vmatprep.subr.bf16.mxu0 0
    %5817 = vmatpush1.bf16.msra.mxu0 0
    %5818 = vmatprep.subr.bf16.mxu0 0
    %5819 = vmatpush1.bf16.msra.mxu0 0
    %5820 = vmatprep.subr.bf16.mxu0 0
    %5821 = vmatpush1.bf16.msra.mxu0 0
    %5822 = vmatprep.subr.bf16.mxu0 0
    %5823 = vmatpush1.bf16.msra.mxu0 0
    %5824 = vmatprep.subr.bf16.mxu0 0
    %5825 = vmatpush1.bf16.msra.mxu0 0
    %5826 = vmatprep.mubr.bf16.mxu0 0
    %5827 = vmatmul.mubr.bf16.gmra.mrb[0].mxu0 %v5739
    %v5828 = vpop.f32.mrb[0].mxu0
    %v5829 = vadd.f32 0.0, %v5828
    %v5830 = vpop.f32.mrb[0].mxu0
    %v5831 = vadd.f32 0.0, %v5830
    %v5832 = vpop.f32.mrb[0].mxu0
    %v5833 = vpop.f32.mrb[0].mxu0
    %5834 = vdwg.mxu0
    %v5835 = vadd.f32 %v5648, %v5788
    %v5836 = vadd.f32 %v5649, %v5790
    %v5837 = vadd.f32 %v5650, %v5829
    %v5838 = vadd.f32 %v5651, %v5831
    %v5839 = vpack.c.bf16 %v5094, %v5094
    %s5840 = scalar_lea.vmem %s5, 448
    %v5841 = vld [vmem:[%s5840] sm:$0xff]
    %v5842 = vld [vmem:[%s5840 + $0x8] sm:$0xff]
    %v5843 = vld [vmem:[%s5840 + $0x10] sm:$0xff]
    %v5844 = vld [vmem:[%s5840 + $0x18] sm:$0xff]
    %v5845 = vld [vmem:[%s5840 + $0x20] sm:$0xff]
    %v5846 = vld [vmem:[%s5840 + $0x28] sm:$0xff]
    %v5847 = vld [vmem:[%s5840 + $0x30] sm:$0xff]
    %v5848 = vld [vmem:[%s5840 + $0x38] sm:$0xff]
    %v5849 = vld [vmem:[%s5840 + $0x40] sm:$0xff]
    %v5850 = vld [vmem:[%s5840 + $0x48] sm:$0xff]
    %v5851 = vld [vmem:[%s5840 + $0x50] sm:$0xff]
    %v5852 = vld [vmem:[%s5840 + $0x58] sm:$0xff]
    %v5853 = vld [vmem:[%s5840 + $0x60] sm:$0x11]
    %v5854 = vld [vmem:[%s5840 + $0x68] sm:$0x11]
    %v5869 = vunpack.c.l.b16 %v5841
    %v5870 = vunpack.c.h.b16 %v5841
    %v5871 = vunpack.c.l.b16 %v5842
    %v5872 = vunpack.c.h.b16 %v5842
    %v5873 = vunpack.c.l.b16 %v5843
    %v5874 = vunpack.c.h.b16 %v5843
    %v5875 = vunpack.c.l.b16 %v5844
    %v5876 = vunpack.c.h.b16 %v5844
    %v5877 = vunpack.c.l.b16 %v5845
    %v5878 = vunpack.c.h.b16 %v5845
    %v5879 = vunpack.c.l.b16 %v5846
    %v5880 = vunpack.c.h.b16 %v5846
    %v5881 = vunpack.c.l.b16 %v5847
    %v5882 = vunpack.c.h.b16 %v5847
    %v5883 = vunpack.c.l.b16 %v5848
    %v5884 = vunpack.c.h.b16 %v5848
    %v5885 = vunpack.c.l.b16 %v5849
    %v5886 = vunpack.c.h.b16 %v5849
    %v5887 = vunpack.c.l.b16 %v5850
    %v5888 = vunpack.c.h.b16 %v5850
    %v5889 = vunpack.c.l.b16 %v5851
    %v5890 = vunpack.c.h.b16 %v5851
    %v5891 = vunpack.c.l.b16 %v5852
    %v5892 = vunpack.c.h.b16 %v5852
    %v5893 = vunpack.c.l.b16 %v5853
    %v5894 = vunpack.c.h.b16 %v5853
    %v5895 = vunpack.c.l.b16 %v5854
    %v5896 = vunpack.c.h.b16 %v5854
    %v5897 = vpack.c.b16 %v5873, %v5869
    %v5898 = vpack.c.b16 %v5874, %v5870
    %v5899 = vpack.c.b16 %v5875, %v5871
    %v5900 = vpack.c.b16 %v5876, %v5872
    %v5901 = vpack.c.b16 %v5881, %v5877
    %v5902 = vpack.c.b16 %v5882, %v5878
    %v5903 = vpack.c.b16 %v5883, %v5879
    %v5904 = vpack.c.b16 %v5884, %v5880
    %v5905 = vpack.c.b16 %v5889, %v5885
    %v5906 = vpack.c.b16 %v5890, %v5886
    %v5907 = vpack.c.b16 %v5891, %v5887
    %v5908 = vpack.c.b16 %v5892, %v5888
    %v5909 = vpack.c.b16 %v5893, %v5893
    %v5910 = vpack.c.b16 %v5894, %v5894
    %v5911 = vpack.c.b16 %v5895, %v5895
    %v5912 = vpack.c.b16 %v5896, %v5896
    %v5926 = vsel %vm5199, %v5839, 0
    %v5929 = vsel %vm5203, %v5909, 0
    %v5932 = vsel %vm5203, %v5910, 0
    %v5935 = vsel %vm5203, %v5911, 0
    %v5938 = vsel %vm5203, %v5912, 0
    %5940 = vmatprep.subr.bf16.mxu0 %v5898
    %5941 = vmatpush1.bf16.msra.mxu0 %v5897
    %5942 = vmatprep.subr.bf16.mxu0 %v5902
    %5943 = vmatpush1.bf16.msra.mxu0 %v5901
    %5944 = vmatprep.subr.bf16.mxu0 %v5906
    %5945 = vmatpush1.bf16.msra.mxu0 %v5905
    %5946 = vmatprep.subr.bf16.mxu0 %v5932
    %5947 = vmatpush1.bf16.msra.mxu0 %v5929
    %5948 = vmatprep.subr.bf16.mxu0 0
    %5949 = vmatpush1.bf16.msra.mxu0 0
    %5950 = vmatprep.subr.bf16.mxu0 0
    %5951 = vmatpush1.bf16.msra.mxu0 0
    %5952 = vmatprep.subr.bf16.mxu0 0
    %5953 = vmatpush1.bf16.msra.mxu0 0
    %5954 = vmatprep.subr.bf16.mxu0 0
    %5955 = vmatpush1.bf16.msra.mxu0 0
    %5956 = vmatprep.subr.bf16.mxu0 0
    %5957 = vmatpush1.bf16.msra.mxu0 0
    %5958 = vmatprep.subr.bf16.mxu0 0
    %5959 = vmatpush1.bf16.msra.mxu0 0
    %5960 = vmatprep.subr.bf16.mxu0 0
    %5961 = vmatpush1.bf16.msra.mxu0 0
    %5962 = vmatprep.subr.bf16.mxu0 0
    %5963 = vmatpush1.bf16.msra.mxu0 0
    %5964 = vmatprep.subr.bf16.mxu0 0
    %5965 = vmatpush1.bf16.msra.mxu0 0
    %5966 = vmatprep.subr.bf16.mxu0 0
    %5967 = vmatpush1.bf16.msra.mxu0 0
    %5968 = vmatprep.subr.bf16.mxu0 0
    %5969 = vmatpush1.bf16.msra.mxu0 0
    %5970 = vmatprep.subr.bf16.mxu0 0
    %5971 = vmatpush1.bf16.msra.mxu0 0
    %5972 = vmatprep.mubr.bf16.mxu0 0
    %5973 = vmatmul.mubr.bf16.gmra.mrb[0].mxu0 %v5926
    %v5974 = vpop.f32.mrb[0].mxu0
    %v5975 = vadd.f32 0.0, %v5974
    %v5976 = vpop.f32.mrb[0].mxu0
    %v5977 = vadd.f32 0.0, %v5976
    %v5978 = vpop.f32.mrb[0].mxu0
    %v5979 = vpop.f32.mrb[0].mxu0
    %5980 = vdwg.mxu0
    %5981 = vmatprep.subr.bf16.mxu0 %v5900
    %5982 = vmatpush1.bf16.msra.mxu0 %v5899
    %5983 = vmatprep.subr.bf16.mxu0 %v5904
    %5984 = vmatpush1.bf16.msra.mxu0 %v5903
    %5985 = vmatprep.subr.bf16.mxu0 %v5908
    %5986 = vmatpush1.bf16.msra.mxu0 %v5907
    %5987 = vmatprep.subr.bf16.mxu0 %v5938
    %5988 = vmatpush1.bf16.msra.mxu0 %v5935
    %5989 = vmatprep.subr.bf16.mxu0 0
    %5990 = vmatpush1.bf16.msra.mxu0 0
    %5991 = vmatprep.subr.bf16.mxu0 0
    %5992 = vmatpush1.bf16.msra.mxu0 0
    %5993 = vmatprep.subr.bf16.mxu0 0
    %5994 = vmatpush1.bf16.msra.mxu0 0
    %5995 = vmatprep.subr.bf16.mxu0 0
    %5996 = vmatpush1.bf16.msra.mxu0 0
    %5997 = vmatprep.subr.bf16.mxu0 0
    %5998 = vmatpush1.bf16.msra.mxu0 0
    %5999 = vmatprep.subr.bf16.mxu0 0
    %6000 = vmatpush1.bf16.msra.mxu0 0
    %6001 = vmatprep.subr.bf16.mxu0 0
    %6002 = vmatpush1.bf16.msra.mxu0 0
    %6003 = vmatprep.subr.bf16.mxu0 0
    %6004 = vmatpush1.bf16.msra.mxu0 0
    %6005 = vmatprep.subr.bf16.mxu0 0
    %6006 = vmatpush1.bf16.msra.mxu0 0
    %6007 = vmatprep.subr.bf16.mxu0 0
    %6008 = vmatpush1.bf16.msra.mxu0 0
    %6009 = vmatprep.subr.bf16.mxu0 0
    %6010 = vmatpush1.bf16.msra.mxu0 0
    %6011 = vmatprep.subr.bf16.mxu0 0
    %6012 = vmatpush1.bf16.msra.mxu0 0
    %6013 = vmatprep.mubr.bf16.mxu0 0
    %6014 = vmatmul.mubr.bf16.gmra.mrb[0].mxu0 %v5926
    %v6015 = vpop.f32.mrb[0].mxu0
    %v6016 = vadd.f32 0.0, %v6015
    %v6017 = vpop.f32.mrb[0].mxu0
    %v6018 = vadd.f32 0.0, %v6017
    %v6019 = vpop.f32.mrb[0].mxu0
    %v6020 = vpop.f32.mrb[0].mxu0
    %6021 = vdwg.mxu0
    %v6022 = vadd.f32 %v5835, %v5975
    %v6023 = vadd.f32 %v5836, %v5977
    %v6024 = vadd.f32 %v5837, %v6016
    %v6025 = vadd.f32 %v5838, %v6018
    %s6026 = scalar_lea.vmem %s5, 560
    %v6027 = vld [vmem:[%s6026] sm:$0xff]
    %v6028 = vld [vmem:[%s6026 + $0x8] sm:$0xff]
    %v6029 = vld [vmem:[%s6026 + $0x10] sm:$0xff]
    %v6030 = vld [vmem:[%s6026 + $0x18] sm:$0xff]
    %v6031 = vld [vmem:[%s6026 + $0x20] sm:$0xff]
    %v6032 = vld [vmem:[%s6026 + $0x28] sm:$0xff]
    %v6033 = vld [vmem:[%s6026 + $0x30] sm:$0xff]
    %v6034 = vld [vmem:[%s6026 + $0x38] sm:$0xff]
    %v6035 = vld [vmem:[%s6026 + $0x40] sm:$0xff]
    %v6036 = vld [vmem:[%s6026 + $0x48] sm:$0xff]
    %v6037 = vld [vmem:[%s6026 + $0x50] sm:$0xff]
    %v6038 = vld [vmem:[%s6026 + $0x58] sm:$0xff]
    %v6039 = vld [vmem:[%s6026 + $0x60] sm:$0x11]
    %v6040 = vld [vmem:[%s6026 + $0x68] sm:$0x11]
    %v6042 = vrot.slane %v5839, 1
    %v6057 = vunpack.c.l.b16 %v6027
    %v6058 = vunpack.c.h.b16 %v6027
    %v6059 = vunpack.c.l.b16 %v6028
    %v6060 = vunpack.c.h.b16 %v6028
    %v6061 = vunpack.c.l.b16 %v6029
    %v6062 = vunpack.c.h.b16 %v6029
    %v6063 = vunpack.c.l.b16 %v6030
    %v6064 = vunpack.c.h.b16 %v6030
    %v6065 = vunpack.c.l.b16 %v6031
    %v6066 = vunpack.c.h.b16 %v6031
    %v6067 = vunpack.c.l.b16 %v6032
    %v6068 = vunpack.c.h.b16 %v6032
    %v6069 = vunpack.c.l.b16 %v6033
    %v6070 = vunpack.c.h.b16 %v6033
    %v6071 = vunpack.c.l.b16 %v6034
    %v6072 = vunpack.c.h.b16 %v6034
    %v6073 = vunpack.c.l.b16 %v6035
    %v6074 = vunpack.c.h.b16 %v6035
    %v6075 = vunpack.c.l.b16 %v6036
    %v6076 = vunpack.c.h.b16 %v6036
    %v6077 = vunpack.c.l.b16 %v6037
    %v6078 = vunpack.c.h.b16 %v6037
    %v6079 = vunpack.c.l.b16 %v6038
    %v6080 = vunpack.c.h.b16 %v6038
    %v6081 = vunpack.c.l.b16 %v6039
    %v6082 = vunpack.c.h.b16 %v6039
    %v6083 = vunpack.c.l.b16 %v6040
    %v6084 = vunpack.c.h.b16 %v6040
    %v6085 = vpack.c.b16 %v6061, %v6057
    %v6086 = vpack.c.b16 %v6062, %v6058
    %v6087 = vpack.c.b16 %v6063, %v6059
    %v6088 = vpack.c.b16 %v6064, %v6060
    %v6089 = vpack.c.b16 %v6069, %v6065
    %v6090 = vpack.c.b16 %v6070, %v6066
    %v6091 = vpack.c.b16 %v6071, %v6067
    %v6092 = vpack.c.b16 %v6072, %v6068
    %v6093 = vpack.c.b16 %v6077, %v6073
    %v6094 = vpack.c.b16 %v6078, %v6074
    %v6095 = vpack.c.b16 %v6079, %v6075
    %v6096 = vpack.c.b16 %v6080, %v6076
    %v6097 = vpack.c.b16 %v6081, %v6081
    %v6098 = vpack.c.b16 %v6082, %v6082
    %v6099 = vpack.c.b16 %v6083, %v6083
    %v6100 = vpack.c.b16 %v6084, %v6084
    %v6114 = vsel %vm5199, %v6042, 0
    %v6117 = vsel %vm5203, %v6097, 0
    %v6120 = vsel %vm5203, %v6098, 0
    %v6123 = vsel %vm5203, %v6099, 0
    %v6126 = vsel %vm5203, %v6100, 0
    %6128 = vmatprep.subr.bf16.mxu0 %v6086
    %6129 = vmatpush1.bf16.msra.mxu0 %v6085
    %6130 = vmatprep.subr.bf16.mxu0 %v6090
    %6131 = vmatpush1.bf16.msra.mxu0 %v6089
    %6132 = vmatprep.subr.bf16.mxu0 %v6094
    %6133 = vmatpush1.bf16.msra.mxu0 %v6093
    %6134 = vmatprep.subr.bf16.mxu0 %v6120
    %6135 = vmatpush1.bf16.msra.mxu0 %v6117
    %6136 = vmatprep.subr.bf16.mxu0 0
    %6137 = vmatpush1.bf16.msra.mxu0 0
    %6138 = vmatprep.subr.bf16.mxu0 0
    %6139 = vmatpush1.bf16.msra.mxu0 0
    %6140 = vmatprep.subr.bf16.mxu0 0
    %6141 = vmatpush1.bf16.msra.mxu0 0
    %6142 = vmatprep.subr.bf16.mxu0 0
    %6143 = vmatpush1.bf16.msra.mxu0 0
    %6144 = vmatprep.subr.bf16.mxu0 0
    %6145 = vmatpush1.bf16.msra.mxu0 0
    %6146 = vmatprep.subr.bf16.mxu0 0
    %6147 = vmatpush1.bf16.msra.mxu0 0
    %6148 = vmatprep.subr.bf16.mxu0 0
    %6149 = vmatpush1.bf16.msra.mxu0 0
    %6150 = vmatprep.subr.bf16.mxu0 0
    %6151 = vmatpush1.bf16.msra.mxu0 0
    %6152 = vmatprep.subr.bf16.mxu0 0
    %6153 = vmatpush1.bf16.msra.mxu0 0
    %6154 = vmatprep.subr.bf16.mxu0 0
    %6155 = vmatpush1.bf16.msra.mxu0 0
    %6156 = vmatprep.subr.bf16.mxu0 0
    %6157 = vmatpush1.bf16.msra.mxu0 0
    %6158 = vmatprep.subr.bf16.mxu0 0
    %6159 = vmatpush1.bf16.msra.mxu0 0
    %6160 = vmatprep.mubr.bf16.mxu0 0
    %6161 = vmatmul.mubr.bf16.gmra.mrb[0].mxu0 %v6114
    %v6162 = vpop.f32.mrb[0].mxu0
    %v6163 = vadd.f32 0.0, %v6162
    %v6164 = vpop.f32.mrb[0].mxu0
    %v6165 = vadd.f32 0.0, %v6164
    %v6166 = vpop.f32.mrb[0].mxu0
    %v6167 = vpop.f32.mrb[0].mxu0
    %6168 = vdwg.mxu0
    %6169 = vmatprep.subr.bf16.mxu0 %v6088
    %6170 = vmatpush1.bf16.msra.mxu0 %v6087
    %6171 = vmatprep.subr.bf16.mxu0 %v6092
    %6172 = vmatpush1.bf16.msra.mxu0 %v6091
    %6173 = vmatprep.subr.bf16.mxu0 %v6096
    %6174 = vmatpush1.bf16.msra.mxu0 %v6095
    %6175 = vmatprep.subr.bf16.mxu0 %v6126
    %6176 = vmatpush1.bf16.msra.mxu0 %v6123
    %6177 = vmatprep.subr.bf16.mxu0 0
    %6178 = vmatpush1.bf16.msra.mxu0 0
    %6179 = vmatprep.subr.bf16.mxu0 0
    %6180 = vmatpush1.bf16.msra.mxu0 0
    %6181 = vmatprep.subr.bf16.mxu0 0
    %6182 = vmatpush1.bf16.msra.mxu0 0
    %6183 = vmatprep.subr.bf16.mxu0 0
    %6184 = vmatpush1.bf16.msra.mxu0 0
    %6185 = vmatprep.subr.bf16.mxu0 0
    %6186 = vmatpush1.bf16.msra.mxu0 0
    %6187 = vmatprep.subr.bf16.mxu0 0
    %6188 = vmatpush1.bf16.msra.mxu0 0
    %6189 = vmatprep.subr.bf16.mxu0 0
    %6190 = vmatpush1.bf16.msra.mxu0 0
    %6191 = vmatprep.subr.bf16.mxu0 0
    %6192 = vmatpush1.bf16.msra.mxu0 0
    %6193 = vmatprep.subr.bf16.mxu0 0
    %6194 = vmatpush1.bf16.msra.mxu0 0
    %6195 = vmatprep.subr.bf16.mxu0 0
    %6196 = vmatpush1.bf16.msra.mxu0 0
    %6197 = vmatprep.subr.bf16.mxu0 0
    %6198 = vmatpush1.bf16.msra.mxu0 0
    %6199 = vmatprep.subr.bf16.mxu0 0
    %6200 = vmatpush1.bf16.msra.mxu0 0
    %6201 = vmatprep.mubr.bf16.mxu0 0
    %6202 = vmatmul.mubr.bf16.gmra.mrb[0].mxu0 %v6114
    %v6203 = vpop.f32.mrb[0].mxu0
    %v6204 = vadd.f32 0.0, %v6203
    %v6205 = vpop.f32.mrb[0].mxu0
    %v6206 = vadd.f32 0.0, %v6205
    %v6207 = vpop.f32.mrb[0].mxu0
    %v6208 = vpop.f32.mrb[0].mxu0
    %6209 = vdwg.mxu0
    %v6210 = vadd.f32 %v6022, %v6163
    %v6211 = vadd.f32 %v6023, %v6165
    %v6212 = vadd.f32 %v6024, %v6204
    %v6213 = vadd.f32 %v6025, %v6206
    %s6214 = scalar_lea.vmem %s5, 672
    %v6215 = vld [vmem:[%s6214] sm:$0xff]
    %v6216 = vld [vmem:[%s6214 + $0x8] sm:$0xff]
    %v6217 = vld [vmem:[%s6214 + $0x10] sm:$0xff]
    %v6218 = vld [vmem:[%s6214 + $0x18] sm:$0xff]
    %v6219 = vld [vmem:[%s6214 + $0x20] sm:$0xff]
    %v6220 = vld [vmem:[%s6214 + $0x28] sm:$0xff]
    %v6221 = vld [vmem:[%s6214 + $0x30] sm:$0xff]
    %v6222 = vld [vmem:[%s6214 + $0x38] sm:$0xff]
    %v6223 = vld [vmem:[%s6214 + $0x40] sm:$0xff]
    %v6224 = vld [vmem:[%s6214 + $0x48] sm:$0xff]
    %v6225 = vld [vmem:[%s6214 + $0x50] sm:$0xff]
    %v6226 = vld [vmem:[%s6214 + $0x58] sm:$0xff]
    %v6227 = vld [vmem:[%s6214 + $0x60] sm:$0x11]
    %v6228 = vld [vmem:[%s6214 + $0x68] sm:$0x11]
    %v6229 = vrot.slane %v5839, 2
    %v6244 = vunpack.c.l.b16 %v6215
    %v6245 = vunpack.c.h.b16 %v6215
    %v6246 = vunpack.c.l.b16 %v6216
    %v6247 = vunpack.c.h.b16 %v6216
    %v6248 = vunpack.c.l.b16 %v6217
    %v6249 = vunpack.c.h.b16 %v6217
    %v6250 = vunpack.c.l.b16 %v6218
    %v6251 = vunpack.c.h.b16 %v6218
    %v6252 = vunpack.c.l.b16 %v6219
    %v6253 = vunpack.c.h.b16 %v6219
    %v6254 = vunpack.c.l.b16 %v6220
    %v6255 = vunpack.c.h.b16 %v6220
    %v6256 = vunpack.c.l.b16 %v6221
    %v6257 = vunpack.c.h.b16 %v6221
    %v6258 = vunpack.c.l.b16 %v6222
    %v6259 = vunpack.c.h.b16 %v6222
    %v6260 = vunpack.c.l.b16 %v6223
    %v6261 = vunpack.c.h.b16 %v6223
    %v6262 = vunpack.c.l.b16 %v6224
    %v6263 = vunpack.c.h.b16 %v6224
    %v6264 = vunpack.c.l.b16 %v6225
    %v6265 = vunpack.c.h.b16 %v6225
    %v6266 = vunpack.c.l.b16 %v6226
    %v6267 = vunpack.c.h.b16 %v6226
    %v6268 = vunpack.c.l.b16 %v6227
    %v6269 = vunpack.c.h.b16 %v6227
    %v6270 = vunpack.c.l.b16 %v6228
    %v6271 = vunpack.c.h.b16 %v6228
    %v6272 = vpack.c.b16 %v6248, %v6244
    %v6273 = vpack.c.b16 %v6249, %v6245
    %v6274 = vpack.c.b16 %v6250, %v6246
    %v6275 = vpack.c.b16 %v6251, %v6247
    %v6276 = vpack.c.b16 %v6256, %v6252
    %v6277 = vpack.c.b16 %v6257, %v6253
    %v6278 = vpack.c.b16 %v6258, %v6254
    %v6279 = vpack.c.b16 %v6259, %v6255
    %v6280 = vpack.c.b16 %v6264, %v6260
    %v6281 = vpack.c.b16 %v6265, %v6261
    %v6282 = vpack.c.b16 %v6266, %v6262
    %v6283 = vpack.c.b16 %v6267, %v6263
    %v6284 = vpack.c.b16 %v6268, %v6268
    %v6285 = vpack.c.b16 %v6269, %v6269
    %v6286 = vpack.c.b16 %v6270, %v6270
    %v6287 = vpack.c.b16 %v6271, %v6271
    %v6301 = vsel %vm5199, %v6229, 0
    %v6304 = vsel %vm5203, %v6284, 0
    %v6307 = vsel %vm5203, %v6285, 0
    %v6310 = vsel %vm5203, %v6286, 0
    %v6313 = vsel %vm5203, %v6287, 0
    %6315 = vmatprep.subr.bf16.mxu0 %v6273
    %6316 = vmatpush1.bf16.msra.mxu0 %v6272
    %6317 = vmatprep.subr.bf16.mxu0 %v6277
    %6318 = vmatpush1.bf16.msra.mxu0 %v6276
    %6319 = vmatprep.subr.bf16.mxu0 %v6281
    %6320 = vmatpush1.bf16.msra.mxu0 %v6280
    %6321 = vmatprep.subr.bf16.mxu0 %v6307
    %6322 = vmatpush1.bf16.msra.mxu0 %v6304
    %6323 = vmatprep.subr.bf16.mxu0 0
    %6324 = vmatpush1.bf16.msra.mxu0 0
    %6325 = vmatprep.subr.bf16.mxu0 0
    %6326 = vmatpush1.bf16.msra.mxu0 0
    %6327 = vmatprep.subr.bf16.mxu0 0
    %6328 = vmatpush1.bf16.msra.mxu0 0
    %6329 = vmatprep.subr.bf16.mxu0 0
    %6330 = vmatpush1.bf16.msra.mxu0 0
    %6331 = vmatprep.subr.bf16.mxu0 0
    %6332 = vmatpush1.bf16.msra.mxu0 0
    %6333 = vmatprep.subr.bf16.mxu0 0
    %6334 = vmatpush1.bf16.msra.mxu0 0
    %6335 = vmatprep.subr.bf16.mxu0 0
    %6336 = vmatpush1.bf16.msra.mxu0 0
    %6337 = vmatprep.subr.bf16.mxu0 0
    %6338 = vmatpush1.bf16.msra.mxu0 0
    %6339 = vmatprep.subr.bf16.mxu0 0
    %6340 = vmatpush1.bf16.msra.mxu0 0
    %6341 = vmatprep.subr.bf16.mxu0 0
    %6342 = vmatpush1.bf16.msra.mxu0 0
    %6343 = vmatprep.subr.bf16.mxu0 0
    %6344 = vmatpush1.bf16.msra.mxu0 0
    %6345 = vmatprep.subr.bf16.mxu0 0
    %6346 = vmatpush1.bf16.msra.mxu0 0
    %6347 = vmatprep.mubr.bf16.mxu0 0
    %6348 = vmatmul.mubr.bf16.gmra.mrb[0].mxu0 %v6301
    %v6349 = vpop.f32.mrb[0].mxu0
    %v6350 = vadd.f32 0.0, %v6349
    %v6351 = vpop.f32.mrb[0].mxu0
    %v6352 = vadd.f32 0.0, %v6351
    %v6353 = vpop.f32.mrb[0].mxu0
    %v6354 = vpop.f32.mrb[0].mxu0
    %6355 = vdwg.mxu0
    %6356 = vmatprep.subr.bf16.mxu0 %v6275
    %6357 = vmatpush1.bf16.msra.mxu0 %v6274
    %6358 = vmatprep.subr.bf16.mxu0 %v6279
    %6359 = vmatpush1.bf16.msra.mxu0 %v6278
    %6360 = vmatprep.subr.bf16.mxu0 %v6283
    %6361 = vmatpush1.bf16.msra.mxu0 %v6282
    %6362 = vmatprep.subr.bf16.mxu0 %v6313
    %6363 = vmatpush1.bf16.msra.mxu0 %v6310
    %6364 = vmatprep.subr.bf16.mxu0 0
    %6365 = vmatpush1.bf16.msra.mxu0 0
    %6366 = vmatprep.subr.bf16.mxu0 0
    %6367 = vmatpush1.bf16.msra.mxu0 0
    %6368 = vmatprep.subr.bf16.mxu0 0
    %6369 = vmatpush1.bf16.msra.mxu0 0
    %6370 = vmatprep.subr.bf16.mxu0 0
    %6371 = vmatpush1.bf16.msra.mxu0 0
    %6372 = vmatprep.subr.bf16.mxu0 0
    %6373 = vmatpush1.bf16.msra.mxu0 0
    %6374 = vmatprep.subr.bf16.mxu0 0
    %6375 = vmatpush1.bf16.msra.mxu0 0
    %6376 = vmatprep.subr.bf16.mxu0 0
    %6377 = vmatpush1.bf16.msra.mxu0 0
    %6378 = vmatprep.subr.bf16.mxu0 0
    %6379 = vmatpush1.bf16.msra.mxu0 0
    %6380 = vmatprep.subr.bf16.mxu0 0
    %6381 = vmatpush1.bf16.msra.mxu0 0
    %6382 = vmatprep.subr.bf16.mxu0 0
    %6383 = vmatpush1.bf16.msra.mxu0 0
    %6384 = vmatprep.subr.bf16.mxu0 0
    %6385 = vmatpush1.bf16.msra.mxu0 0
    %6386 = vmatprep.subr.bf16.mxu0 0
    %6387 = vmatpush1.bf16.msra.mxu0 0
    %6388 = vmatprep.mubr.bf16.mxu0 0
    %6389 = vmatmul.mubr.bf16.gmra.mrb[0].mxu0 %v6301
    %v6390 = vpop.f32.mrb[0].mxu0
    %v6391 = vadd.f32 0.0, %v6390
    %v6392 = vpop.f32.mrb[0].mxu0
    %v6393 = vadd.f32 0.0, %v6392
    %v6394 = vpop.f32.mrb[0].mxu0
    %v6395 = vpop.f32.mrb[0].mxu0
    %6396 = vdwg.mxu0
    %v6397 = vadd.f32 %v6210, %v6350
    %v6398 = vadd.f32 %v6211, %v6352
    %v6399 = vadd.f32 %v6212, %v6391
    %v6400 = vadd.f32 %v6213, %v6393
    %s6401 = scalar_lea.vmem %s5, 784
    %v6402 = vld [vmem:[%s6401] sm:$0xff]
    %v6403 = vld [vmem:[%s6401 + $0x8] sm:$0xff]
    %v6404 = vld [vmem:[%s6401 + $0x10] sm:$0xff]
    %v6405 = vld [vmem:[%s6401 + $0x18] sm:$0xff]
    %v6406 = vld [vmem:[%s6401 + $0x20] sm:$0xff]
    %v6407 = vld [vmem:[%s6401 + $0x28] sm:$0xff]
    %v6408 = vld [vmem:[%s6401 + $0x30] sm:$0xff]
    %v6409 = vld [vmem:[%s6401 + $0x38] sm:$0xff]
    %v6410 = vld [vmem:[%s6401 + $0x40] sm:$0xff]
    %v6411 = vld [vmem:[%s6401 + $0x48] sm:$0xff]
    %v6412 = vld [vmem:[%s6401 + $0x50] sm:$0xff]
    %v6413 = vld [vmem:[%s6401 + $0x58] sm:$0xff]
    %v6414 = vld [vmem:[%s6401 + $0x60] sm:$0x11]
    %v6415 = vld [vmem:[%s6401 + $0x68] sm:$0x11]
    %v6416 = vrot.slane %v5839, 3
    %v6431 = vunpack.c.l.b16 %v6402
    %v6432 = vunpack.c.h.b16 %v6402
    %v6433 = vunpack.c.l.b16 %v6403
    %v6434 = vunpack.c.h.b16 %v6403
    %v6435 = vunpack.c.l.b16 %v6404
    %v6436 = vunpack.c.h.b16 %v6404
    %v6437 = vunpack.c.l.b16 %v6405
    %v6438 = vunpack.c.h.b16 %v6405
    %v6439 = vunpack.c.l.b16 %v6406
    %v6440 = vunpack.c.h.b16 %v6406
    %v6441 = vunpack.c.l.b16 %v6407
    %v6442 = vunpack.c.h.b16 %v6407
    %v6443 = vunpack.c.l.b16 %v6408
    %v6444 = vunpack.c.h.b16 %v6408
    %v6445 = vunpack.c.l.b16 %v6409
    %v6446 = vunpack.c.h.b16 %v6409
    %v6447 = vunpack.c.l.b16 %v6410
    %v6448 = vunpack.c.h.b16 %v6410
    %v6449 = vunpack.c.l.b16 %v6411
    %v6450 = vunpack.c.h.b16 %v6411
    %v6451 = vunpack.c.l.b16 %v6412
    %v6452 = vunpack.c.h.b16 %v6412
    %v6453 = vunpack.c.l.b16 %v6413
    %v6454 = vunpack.c.h.b16 %v6413
    %v6455 = vunpack.c.l.b16 %v6414
    %v6456 = vunpack.c.h.b16 %v6414
    %v6457 = vunpack.c.l.b16 %v6415
    %v6458 = vunpack.c.h.b16 %v6415
    %v6459 = vpack.c.b16 %v6435, %v6431
    %v6460 = vpack.c.b16 %v6436, %v6432
    %v6461 = vpack.c.b16 %v6437, %v6433
    %v6462 = vpack.c.b16 %v6438, %v6434
    %v6463 = vpack.c.b16 %v6443, %v6439
    %v6464 = vpack.c.b16 %v6444, %v6440
    %v6465 = vpack.c.b16 %v6445, %v6441
    %v6466 = vpack.c.b16 %v6446, %v6442
    %v6467 = vpack.c.b16 %v6451, %v6447
    %v6468 = vpack.c.b16 %v6452, %v6448
    %v6469 = vpack.c.b16 %v6453, %v6449
    %v6470 = vpack.c.b16 %v6454, %v6450
    %v6471 = vpack.c.b16 %v6455, %v6455
    %v6472 = vpack.c.b16 %v6456, %v6456
    %v6473 = vpack.c.b16 %v6457, %v6457
    %v6474 = vpack.c.b16 %v6458, %v6458
    %v6488 = vsel %vm5199, %v6416, 0
    %v6491 = vsel %vm5203, %v6471, 0
    %v6494 = vsel %vm5203, %v6472, 0
    %v6497 = vsel %vm5203, %v6473, 0
    %v6500 = vsel %vm5203, %v6474, 0
    %6502 = vmatprep.subr.bf16.mxu0 %v6460
    %6503 = vmatpush1.bf16.msra.mxu0 %v6459
    %6504 = vmatprep.subr.bf16.mxu0 %v6464
    %6505 = vmatpush1.bf16.msra.mxu0 %v6463
    %6506 = vmatprep.subr.bf16.mxu0 %v6468
    %6507 = vmatpush1.bf16.msra.mxu0 %v6467
    %6508 = vmatprep.subr.bf16.mxu0 %v6494
    %6509 = vmatpush1.bf16.msra.mxu0 %v6491
    %6510 = vmatprep.subr.bf16.mxu0 0
    %6511 = vmatpush1.bf16.msra.mxu0 0
    %6512 = vmatprep.subr.bf16.mxu0 0
    %6513 = vmatpush1.bf16.msra.mxu0 0
    %6514 = vmatprep.subr.bf16.mxu0 0
    %6515 = vmatpush1.bf16.msra.mxu0 0
    %6516 = vmatprep.subr.bf16.mxu0 0
    %6517 = vmatpush1.bf16.msra.mxu0 0
    %6518 = vmatprep.subr.bf16.mxu0 0
    %6519 = vmatpush1.bf16.msra.mxu0 0
    %6520 = vmatprep.subr.bf16.mxu0 0
    %6521 = vmatpush1.bf16.msra.mxu0 0
    %6522 = vmatprep.subr.bf16.mxu0 0
    %6523 = vmatpush1.bf16.msra.mxu0 0
    %6524 = vmatprep.subr.bf16.mxu0 0
    %6525 = vmatpush1.bf16.msra.mxu0 0
    %6526 = vmatprep.subr.bf16.mxu0 0
    %6527 = vmatpush1.bf16.msra.mxu0 0
    %6528 = vmatprep.subr.bf16.mxu0 0
    %6529 = vmatpush1.bf16.msra.mxu0 0
    %6530 = vmatprep.subr.bf16.mxu0 0
    %6531 = vmatpush1.bf16.msra.mxu0 0
    %6532 = vmatprep.subr.bf16.mxu0 0
    %6533 = vmatpush1.bf16.msra.mxu0 0
    %6534 = vmatprep.mubr.bf16.mxu0 0
    %6535 = vmatmul.mubr.bf16.gmra.mrb[0].mxu0 %v6488
    %v6536 = vpop.f32.mrb[0].mxu0
    %v6537 = vadd.f32 0.0, %v6536
    %v6538 = vpop.f32.mrb[0].mxu0
    %v6539 = vadd.f32 0.0, %v6538
    %v6540 = vpop.f32.mrb[0].mxu0
    %v6541 = vpop.f32.mrb[0].mxu0
    %6542 = vdwg.mxu0
    %6543 = vmatprep.subr.bf16.mxu0 %v6462
    %6544 = vmatpush1.bf16.msra.mxu0 %v6461
    %6545 = vmatprep.subr.bf16.mxu0 %v6466
    %6546 = vmatpush1.bf16.msra.mxu0 %v6465
    %6547 = vmatprep.subr.bf16.mxu0 %v6470
    %6548 = vmatpush1.bf16.msra.mxu0 %v6469
    %6549 = vmatprep.subr.bf16.mxu0 %v6500
    %6550 = vmatpush1.bf16.msra.mxu0 %v6497
    %6551 = vmatprep.subr.bf16.mxu0 0
    %6552 = vmatpush1.bf16.msra.mxu0 0
    %6553 = vmatprep.subr.bf16.mxu0 0
    %6554 = vmatpush1.bf16.msra.mxu0 0
    %6555 = vmatprep.subr.bf16.mxu0 0
    %6556 = vmatpush1.bf16.msra.mxu0 0
    %6557 = vmatprep.subr.bf16.mxu0 0
    %6558 = vmatpush1.bf16.msra.mxu0 0
    %6559 = vmatprep.subr.bf16.mxu0 0
    %6560 = vmatpush1.bf16.msra.mxu0 0
    %6561 = vmatprep.subr.bf16.mxu0 0
    %6562 = vmatpush1.bf16.msra.mxu0 0
    %6563 = vmatprep.subr.bf16.mxu0 0
    %6564 = vmatpush1.bf16.msra.mxu0 0
    %6565 = vmatprep.subr.bf16.mxu0 0
    %6566 = vmatpush1.bf16.msra.mxu0 0
    %6567 = vmatprep.subr.bf16.mxu0 0
    %6568 = vmatpush1.bf16.msra.mxu0 0
    %6569 = vmatprep.subr.bf16.mxu0 0
    %6570 = vmatpush1.bf16.msra.mxu0 0
    %6571 = vmatprep.subr.bf16.mxu0 0
    %6572 = vmatpush1.bf16.msra.mxu0 0
    %6573 = vmatprep.subr.bf16.mxu0 0
    %6574 = vmatpush1.bf16.msra.mxu0 0
    %6575 = vmatprep.mubr.bf16.mxu0 0
    %6576 = vmatmul.mubr.bf16.gmra.mrb[0].mxu0 %v6488
    %v6577 = vpop.f32.mrb[0].mxu0
    %v6578 = vadd.f32 0.0, %v6577
    %v6579 = vpop.f32.mrb[0].mxu0
    %v6580 = vadd.f32 0.0, %v6579
    %v6581 = vpop.f32.mrb[0].mxu0
    %v6582 = vpop.f32.mrb[0].mxu0
    %6583 = vdwg.mxu0
    %v6584 = vadd.f32 %v6397, %v6537
    %v6585 = vadd.f32 %v6398, %v6539
    %v6586 = vadd.f32 %v6399, %v6578
    %v6587 = vadd.f32 %v6400, %v6580
    %v6588 = vpack.c.bf16 %v5095, %v5095
    %s6589 = scalar_lea.vmem %s5, 896
    %v6590 = vld [vmem:[%s6589] sm:$0xff]
    %v6591 = vld [vmem:[%s6589 + $0x8] sm:$0xff]
    %v6592 = vld [vmem:[%s6589 + $0x10] sm:$0xff]
    %v6593 = vld [vmem:[%s6589 + $0x18] sm:$0xff]
    %v6594 = vld [vmem:[%s6589 + $0x20] sm:$0xff]
    %v6595 = vld [vmem:[%s6589 + $0x28] sm:$0xff]
    %v6596 = vld [vmem:[%s6589 + $0x30] sm:$0xff]
    %v6597 = vld [vmem:[%s6589 + $0x38] sm:$0xff]
    %v6598 = vld [vmem:[%s6589 + $0x40] sm:$0xff]
    %v6599 = vld [vmem:[%s6589 + $0x48] sm:$0xff]
    %v6600 = vld [vmem:[%s6589 + $0x50] sm:$0xff]
    %v6601 = vld [vmem:[%s6589 + $0x58] sm:$0xff]
    %v6602 = vld [vmem:[%s6589 + $0x60] sm:$0x11]
    %v6603 = vld [vmem:[%s6589 + $0x68] sm:$0x11]
    %v6618 = vunpack.c.l.b16 %v6590
    %v6619 = vunpack.c.h.b16 %v6590
    %v6620 = vunpack.c.l.b16 %v6591
    %v6621 = vunpack.c.h.b16 %v6591
    %v6622 = vunpack.c.l.b16 %v6592
    %v6623 = vunpack.c.h.b16 %v6592
    %v6624 = vunpack.c.l.b16 %v6593
    %v6625 = vunpack.c.h.b16 %v6593
    %v6626 = vunpack.c.l.b16 %v6594
    %v6627 = vunpack.c.h.b16 %v6594
    %v6628 = vunpack.c.l.b16 %v6595
    %v6629 = vunpack.c.h.b16 %v6595
    %v6630 = vunpack.c.l.b16 %v6596
    %v6631 = vunpack.c.h.b16 %v6596
    %v6632 = vunpack.c.l.b16 %v6597
    %v6633 = vunpack.c.h.b16 %v6597
    %v6634 = vunpack.c.l.b16 %v6598
    %v6635 = vunpack.c.h.b16 %v6598
    %v6636 = vunpack.c.l.b16 %v6599
    %v6637 = vunpack.c.h.b16 %v6599
    %v6638 = vunpack.c.l.b16 %v6600
    %v6639 = vunpack.c.h.b16 %v6600
    %v6640 = vunpack.c.l.b16 %v6601
    %v6641 = vunpack.c.h.b16 %v6601
    %v6642 = vunpack.c.l.b16 %v6602
    %v6643 = vunpack.c.h.b16 %v6602
    %v6644 = vunpack.c.l.b16 %v6603
    %v6645 = vunpack.c.h.b16 %v6603
    %v6646 = vpack.c.b16 %v6622, %v6618
    %v6647 = vpack.c.b16 %v6623, %v6619
    %v6648 = vpack.c.b16 %v6624, %v6620
    %v6649 = vpack.c.b16 %v6625, %v6621
    %v6650 = vpack.c.b16 %v6630, %v6626
    %v6651 = vpack.c.b16 %v6631, %v6627
    %v6652 = vpack.c.b16 %v6632, %v6628
    %v6653 = vpack.c.b16 %v6633, %v6629
    %v6654 = vpack.c.b16 %v6638, %v6634
    %v6655 = vpack.c.b16 %v6639, %v6635
    %v6656 = vpack.c.b16 %v6640, %v6636
    %v6657 = vpack.c.b16 %v6641, %v6637
    %v6658 = vpack.c.b16 %v6642, %v6642
    %v6659 = vpack.c.b16 %v6643, %v6643
    %v6660 = vpack.c.b16 %v6644, %v6644
    %v6661 = vpack.c.b16 %v6645, %v6645
    %v6675 = vsel %vm5199, %v6588, 0
    %v6678 = vsel %vm5203, %v6658, 0
    %v6681 = vsel %vm5203, %v6659, 0
    %v6684 = vsel %vm5203, %v6660, 0
    %v6687 = vsel %vm5203, %v6661, 0
    %6689 = vmatprep.subr.bf16.mxu0 %v6647
    %6690 = vmatpush1.bf16.msra.mxu0 %v6646
    %6691 = vmatprep.subr.bf16.mxu0 %v6651
    %6692 = vmatpush1.bf16.msra.mxu0 %v6650
    %6693 = vmatprep.subr.bf16.mxu0 %v6655
    %6694 = vmatpush1.bf16.msra.mxu0 %v6654
    %6695 = vmatprep.subr.bf16.mxu0 %v6681
    %6696 = vmatpush1.bf16.msra.mxu0 %v6678
    %6697 = vmatprep.subr.bf16.mxu0 0
    %6698 = vmatpush1.bf16.msra.mxu0 0
    %6699 = vmatprep.subr.bf16.mxu0 0
    %6700 = vmatpush1.bf16.msra.mxu0 0
    %6701 = vmatprep.subr.bf16.mxu0 0
    %6702 = vmatpush1.bf16.msra.mxu0 0
    %6703 = vmatprep.subr.bf16.mxu0 0
    %6704 = vmatpush1.bf16.msra.mxu0 0
    %6705 = vmatprep.subr.bf16.mxu0 0
    %6706 = vmatpush1.bf16.msra.mxu0 0
    %6707 = vmatprep.subr.bf16.mxu0 0
    %6708 = vmatpush1.bf16.msra.mxu0 0
    %6709 = vmatprep.subr.bf16.mxu0 0
    %6710 = vmatpush1.bf16.msra.mxu0 0
    %6711 = vmatprep.subr.bf16.mxu0 0
    %6712 = vmatpush1.bf16.msra.mxu0 0
    %6713 = vmatprep.subr.bf16.mxu0 0
    %6714 = vmatpush1.bf16.msra.mxu0 0
    %6715 = vmatprep.subr.bf16.mxu0 0
    %6716 = vmatpush1.bf16.msra.mxu0 0
    %6717 = vmatprep.subr.bf16.mxu0 0
    %6718 = vmatpush1.bf16.msra.mxu0 0
    %6719 = vmatprep.subr.bf16.mxu0 0
    %6720 = vmatpush1.bf16.msra.mxu0 0
    %6721 = vmatprep.mubr.bf16.mxu0 0
    %6722 = vmatmul.mubr.bf16.gmra.mrb[0].mxu0 %v6675
    %v6723 = vpop.f32.mrb[0].mxu0
    %v6724 = vadd.f32 0.0, %v6723
    %v6725 = vpop.f32.mrb[0].mxu0
    %v6726 = vadd.f32 0.0, %v6725
    %v6727 = vpop.f32.mrb[0].mxu0
    %v6728 = vpop.f32.mrb[0].mxu0
    %6729 = vdwg.mxu0
    %6730 = vmatprep.subr.bf16.mxu0 %v6649
    %6731 = vmatpush1.bf16.msra.mxu0 %v6648
    %6732 = vmatprep.subr.bf16.mxu0 %v6653
    %6733 = vmatpush1.bf16.msra.mxu0 %v6652
    %6734 = vmatprep.subr.bf16.mxu0 %v6657
    %6735 = vmatpush1.bf16.msra.mxu0 %v6656
    %6736 = vmatprep.subr.bf16.mxu0 %v6687
    %6737 = vmatpush1.bf16.msra.mxu0 %v6684
    %6738 = vmatprep.subr.bf16.mxu0 0
    %6739 = vmatpush1.bf16.msra.mxu0 0
    %6740 = vmatprep.subr.bf16.mxu0 0
    %6741 = vmatpush1.bf16.msra.mxu0 0
    %6742 = vmatprep.subr.bf16.mxu0 0
    %6743 = vmatpush1.bf16.msra.mxu0 0
    %6744 = vmatprep.subr.bf16.mxu0 0
    %6745 = vmatpush1.bf16.msra.mxu0 0
    %6746 = vmatprep.subr.bf16.mxu0 0
    %6747 = vmatpush1.bf16.msra.mxu0 0
    %6748 = vmatprep.subr.bf16.mxu0 0
    %6749 = vmatpush1.bf16.msra.mxu0 0
    %6750 = vmatprep.subr.bf16.mxu0 0
    %6751 = vmatpush1.bf16.msra.mxu0 0
    %6752 = vmatprep.subr.bf16.mxu0 0
    %6753 = vmatpush1.bf16.msra.mxu0 0
    %6754 = vmatprep.subr.bf16.mxu0 0
    %6755 = vmatpush1.bf16.msra.mxu0 0
    %6756 = vmatprep.subr.bf16.mxu0 0
    %6757 = vmatpush1.bf16.msra.mxu0 0
    %6758 = vmatprep.subr.bf16.mxu0 0
    %6759 = vmatpush1.bf16.msra.mxu0 0
    %6760 = vmatprep.subr.bf16.mxu0 0
    %6761 = vmatpush1.bf16.msra.mxu0 0
    %6762 = vmatprep.mubr.bf16.mxu0 0
    %6763 = vmatmul.mubr.bf16.gmra.mrb[0].mxu0 %v6675
    %v6764 = vpop.f32.mrb[0].mxu0
    %v6765 = vadd.f32 0.0, %v6764
    %v6766 = vpop.f32.mrb[0].mxu0
    %v6767 = vadd.f32 0.0, %v6766
    %v6768 = vpop.f32.mrb[0].mxu0
    %v6769 = vpop.f32.mrb[0].mxu0
    %6770 = vdwg.mxu0
    %v6771 = vadd.f32 %v6584, %v6724
    %v6772 = vadd.f32 %v6585, %v6726
    %v6773 = vadd.f32 %v6586, %v6765
    %v6774 = vadd.f32 %v6587, %v6767
    %s6775 = scalar_lea.vmem %s5, 1008
    %v6776 = vld [vmem:[%s6775] sm:$0xff]
    %v6777 = vld [vmem:[%s6775 + $0x8] sm:$0xff]
    %v6778 = vld [vmem:[%s6775 + $0x10] sm:$0xff]
    %v6779 = vld [vmem:[%s6775 + $0x18] sm:$0xff]
    %v6780 = vld [vmem:[%s6775 + $0x20] sm:$0xff]
    %v6781 = vld [vmem:[%s6775 + $0x28] sm:$0xff]
    %v6782 = vld [vmem:[%s6775 + $0x30] sm:$0xff]
    %v6783 = vld [vmem:[%s6775 + $0x38] sm:$0xff]
    %v6784 = vld [vmem:[%s6775 + $0x40] sm:$0xff]
    %v6785 = vld [vmem:[%s6775 + $0x48] sm:$0xff]
    %v6786 = vld [vmem:[%s6775 + $0x50] sm:$0xff]
    %v6787 = vld [vmem:[%s6775 + $0x58] sm:$0xff]
    %v6788 = vld [vmem:[%s6775 + $0x60] sm:$0x11]
    %v6789 = vld [vmem:[%s6775 + $0x68] sm:$0x11]
    %v6791 = vrot.slane %v6588, 1
    %v6806 = vunpack.c.l.b16 %v6776
    %v6807 = vunpack.c.h.b16 %v6776
    %v6808 = vunpack.c.l.b16 %v6777
    %v6809 = vunpack.c.h.b16 %v6777
    %v6810 = vunpack.c.l.b16 %v6778
    %v6811 = vunpack.c.h.b16 %v6778
    %v6812 = vunpack.c.l.b16 %v6779
    %v6813 = vunpack.c.h.b16 %v6779
    %v6814 = vunpack.c.l.b16 %v6780
    %v6815 = vunpack.c.h.b16 %v6780
    %v6816 = vunpack.c.l.b16 %v6781
    %v6817 = vunpack.c.h.b16 %v6781
    %v6818 = vunpack.c.l.b16 %v6782
    %v6819 = vunpack.c.h.b16 %v6782
    %v6820 = vunpack.c.l.b16 %v6783
    %v6821 = vunpack.c.h.b16 %v6783
    %v6822 = vunpack.c.l.b16 %v6784
    %v6823 = vunpack.c.h.b16 %v6784
    %v6824 = vunpack.c.l.b16 %v6785
    %v6825 = vunpack.c.h.b16 %v6785
    %v6826 = vunpack.c.l.b16 %v6786
    %v6827 = vunpack.c.h.b16 %v6786
    %v6828 = vunpack.c.l.b16 %v6787
    %v6829 = vunpack.c.h.b16 %v6787
    %v6830 = vunpack.c.l.b16 %v6788
    %v6831 = vunpack.c.h.b16 %v6788
    %v6832 = vunpack.c.l.b16 %v6789
    %v6833 = vunpack.c.h.b16 %v6789
    %v6834 = vpack.c.b16 %v6810, %v6806
    %v6835 = vpack.c.b16 %v6811, %v6807
    %v6836 = vpack.c.b16 %v6812, %v6808
    %v6837 = vpack.c.b16 %v6813, %v6809
    %v6838 = vpack.c.b16 %v6818, %v6814
    %v6839 = vpack.c.b16 %v6819, %v6815
    %v6840 = vpack.c.b16 %v6820, %v6816
    %v6841 = vpack.c.b16 %v6821, %v6817
    %v6842 = vpack.c.b16 %v6826, %v6822
    %v6843 = vpack.c.b16 %v6827, %v6823
    %v6844 = vpack.c.b16 %v6828, %v6824
    %v6845 = vpack.c.b16 %v6829, %v6825
    %v6846 = vpack.c.b16 %v6830, %v6830
    %v6847 = vpack.c.b16 %v6831, %v6831
    %v6848 = vpack.c.b16 %v6832, %v6832
    %v6849 = vpack.c.b16 %v6833, %v6833
    %v6863 = vsel %vm5199, %v6791, 0
    %v6866 = vsel %vm5203, %v6846, 0
    %v6869 = vsel %vm5203, %v6847, 0
    %v6872 = vsel %vm5203, %v6848, 0
    %v6875 = vsel %vm5203, %v6849, 0
    %6877 = vmatprep.subr.bf16.mxu0 %v6835
    %6878 = vmatpush1.bf16.msra.mxu0 %v6834
    %6879 = vmatprep.subr.bf16.mxu0 %v6839
    %6880 = vmatpush1.bf16.msra.mxu0 %v6838
    %6881 = vmatprep.subr.bf16.mxu0 %v6843
    %6882 = vmatpush1.bf16.msra.mxu0 %v6842
    %6883 = vmatprep.subr.bf16.mxu0 %v6869
    %6884 = vmatpush1.bf16.msra.mxu0 %v6866
    %6885 = vmatprep.subr.bf16.mxu0 0
    %6886 = vmatpush1.bf16.msra.mxu0 0
    %6887 = vmatprep.subr.bf16.mxu0 0
    %6888 = vmatpush1.bf16.msra.mxu0 0
    %6889 = vmatprep.subr.bf16.mxu0 0
    %6890 = vmatpush1.bf16.msra.mxu0 0
    %6891 = vmatprep.subr.bf16.mxu0 0
    %6892 = vmatpush1.bf16.msra.mxu0 0
    %6893 = vmatprep.subr.bf16.mxu0 0
    %6894 = vmatpush1.bf16.msra.mxu0 0
    %6895 = vmatprep.subr.bf16.mxu0 0
    %6896 = vmatpush1.bf16.msra.mxu0 0
    %6897 = vmatprep.subr.bf16.mxu0 0
    %6898 = vmatpush1.bf16.msra.mxu0 0
    %6899 = vmatprep.subr.bf16.mxu0 0
    %6900 = vmatpush1.bf16.msra.mxu0 0
    %6901 = vmatprep.subr.bf16.mxu0 0
    %6902 = vmatpush1.bf16.msra.mxu0 0
    %6903 = vmatprep.subr.bf16.mxu0 0
    %6904 = vmatpush1.bf16.msra.mxu0 0
    %6905 = vmatprep.subr.bf16.mxu0 0
    %6906 = vmatpush1.bf16.msra.mxu0 0
    %6907 = vmatprep.subr.bf16.mxu0 0
    %6908 = vmatpush1.bf16.msra.mxu0 0
    %6909 = vmatprep.mubr.bf16.mxu0 0
    %6910 = vmatmul.mubr.bf16.gmra.mrb[0].mxu0 %v6863
    %v6911 = vpop.f32.mrb[0].mxu0
    %v6912 = vadd.f32 0.0, %v6911
    %v6913 = vpop.f32.mrb[0].mxu0
    %v6914 = vadd.f32 0.0, %v6913
    %v6915 = vpop.f32.mrb[0].mxu0
    %v6916 = vpop.f32.mrb[0].mxu0
    %6917 = vdwg.mxu0
    %6918 = vmatprep.subr.bf16.mxu0 %v6837
    %6919 = vmatpush1.bf16.msra.mxu0 %v6836
    %6920 = vmatprep.subr.bf16.mxu0 %v6841
    %6921 = vmatpush1.bf16.msra.mxu0 %v6840
    %6922 = vmatprep.subr.bf16.mxu0 %v6845
    %6923 = vmatpush1.bf16.msra.mxu0 %v6844
    %6924 = vmatprep.subr.bf16.mxu0 %v6875
    %6925 = vmatpush1.bf16.msra.mxu0 %v6872
    %6926 = vmatprep.subr.bf16.mxu0 0
    %6927 = vmatpush1.bf16.msra.mxu0 0
    %6928 = vmatprep.subr.bf16.mxu0 0
    %6929 = vmatpush1.bf16.msra.mxu0 0
    %6930 = vmatprep.subr.bf16.mxu0 0
    %6931 = vmatpush1.bf16.msra.mxu0 0
    %6932 = vmatprep.subr.bf16.mxu0 0
    %6933 = vmatpush1.bf16.msra.mxu0 0
    %6934 = vmatprep.subr.bf16.mxu0 0
    %6935 = vmatpush1.bf16.msra.mxu0 0
    %6936 = vmatprep.subr.bf16.mxu0 0
    %6937 = vmatpush1.bf16.msra.mxu0 0
    %6938 = vmatprep.subr.bf16.mxu0 0
    %6939 = vmatpush1.bf16.msra.mxu0 0
    %6940 = vmatprep.subr.bf16.mxu0 0
    %6941 = vmatpush1.bf16.msra.mxu0 0
    %6942 = vmatprep.subr.bf16.mxu0 0
    %6943 = vmatpush1.bf16.msra.mxu0 0
    %6944 = vmatprep.subr.bf16.mxu0 0
    %6945 = vmatpush1.bf16.msra.mxu0 0
    %6946 = vmatprep.subr.bf16.mxu0 0
    %6947 = vmatpush1.bf16.msra.mxu0 0
    %6948 = vmatprep.subr.bf16.mxu0 0
    %6949 = vmatpush1.bf16.msra.mxu0 0
    %6950 = vmatprep.mubr.bf16.mxu0 0
    %6951 = vmatmul.mubr.bf16.gmra.mrb[0].mxu0 %v6863
    %v6952 = vpop.f32.mrb[0].mxu0
    %v6953 = vadd.f32 0.0, %v6952
    %v6954 = vpop.f32.mrb[0].mxu0
    %v6955 = vadd.f32 0.0, %v6954
    %v6956 = vpop.f32.mrb[0].mxu0
    %v6957 = vpop.f32.mrb[0].mxu0
    %6958 = vdwg.mxu0
    %v6959 = vadd.f32 %v6771, %v6912
    %v6960 = vadd.f32 %v6772, %v6914
    %v6961 = vadd.f32 %v6773, %v6953
    %v6962 = vadd.f32 %v6774, %v6955
    %s6963 = scalar_lea.vmem %s5, 1120
    %v6964 = vld [vmem:[%s6963] sm:$0xff]
    %v6965 = vld [vmem:[%s6963 + $0x8] sm:$0xff]
    %v6966 = vld [vmem:[%s6963 + $0x10] sm:$0xff]
    %v6967 = vld [vmem:[%s6963 + $0x18] sm:$0xff]
    %v6968 = vld [vmem:[%s6963 + $0x20] sm:$0xff]
    %v6969 = vld [vmem:[%s6963 + $0x28] sm:$0xff]
    %v6970 = vld [vmem:[%s6963 + $0x30] sm:$0xff]
    %v6971 = vld [vmem:[%s6963 + $0x38] sm:$0xff]
    %v6972 = vld [vmem:[%s6963 + $0x40] sm:$0xff]
    %v6973 = vld [vmem:[%s6963 + $0x48] sm:$0xff]
    %v6974 = vld [vmem:[%s6963 + $0x50] sm:$0xff]
    %v6975 = vld [vmem:[%s6963 + $0x58] sm:$0xff]
    %v6976 = vld [vmem:[%s6963 + $0x60] sm:$0x11]
    %v6977 = vld [vmem:[%s6963 + $0x68] sm:$0x11]
    %v6978 = vrot.slane %v6588, 2
    %v6993 = vunpack.c.l.b16 %v6964
    %v6994 = vunpack.c.h.b16 %v6964
    %v6995 = vunpack.c.l.b16 %v6965
    %v6996 = vunpack.c.h.b16 %v6965
    %v6997 = vunpack.c.l.b16 %v6966
    %v6998 = vunpack.c.h.b16 %v6966
    %v6999 = vunpack.c.l.b16 %v6967
    %v7000 = vunpack.c.h.b16 %v6967
    %v7001 = vunpack.c.l.b16 %v6968
    %v7002 = vunpack.c.h.b16 %v6968
    %v7003 = vunpack.c.l.b16 %v6969
    %v7004 = vunpack.c.h.b16 %v6969
    %v7005 = vunpack.c.l.b16 %v6970
    %v7006 = vunpack.c.h.b16 %v6970
    %v7007 = vunpack.c.l.b16 %v6971
    %v7008 = vunpack.c.h.b16 %v6971
    %v7009 = vunpack.c.l.b16 %v6972
    %v7010 = vunpack.c.h.b16 %v6972
    %v7011 = vunpack.c.l.b16 %v6973
    %v7012 = vunpack.c.h.b16 %v6973
    %v7013 = vunpack.c.l.b16 %v6974
    %v7014 = vunpack.c.h.b16 %v6974
    %v7015 = vunpack.c.l.b16 %v6975
    %v7016 = vunpack.c.h.b16 %v6975
    %v7017 = vunpack.c.l.b16 %v6976
    %v7018 = vunpack.c.h.b16 %v6976
    %v7019 = vunpack.c.l.b16 %v6977
    %v7020 = vunpack.c.h.b16 %v6977
    %v7021 = vpack.c.b16 %v6997, %v6993
    %v7022 = vpack.c.b16 %v6998, %v6994
    %v7023 = vpack.c.b16 %v6999, %v6995
    %v7024 = vpack.c.b16 %v7000, %v6996
    %v7025 = vpack.c.b16 %v7005, %v7001
    %v7026 = vpack.c.b16 %v7006, %v7002
    %v7027 = vpack.c.b16 %v7007, %v7003
    %v7028 = vpack.c.b16 %v7008, %v7004
    %v7029 = vpack.c.b16 %v7013, %v7009
    %v7030 = vpack.c.b16 %v7014, %v7010
    %v7031 = vpack.c.b16 %v7015, %v7011
    %v7032 = vpack.c.b16 %v7016, %v7012
    %v7033 = vpack.c.b16 %v7017, %v7017
    %v7034 = vpack.c.b16 %v7018, %v7018
    %v7035 = vpack.c.b16 %v7019, %v7019
    %v7036 = vpack.c.b16 %v7020, %v7020
    %v7050 = vsel %vm5199, %v6978, 0
    %v7053 = vsel %vm5203, %v7033, 0
    %v7056 = vsel %vm5203, %v7034, 0
    %v7059 = vsel %vm5203, %v7035, 0
    %v7062 = vsel %vm5203, %v7036, 0
    %7064 = vmatprep.subr.bf16.mxu0 %v7022
    %7065 = vmatpush1.bf16.msra.mxu0 %v7021
    %7066 = vmatprep.subr.bf16.mxu0 %v7026
    %7067 = vmatpush1.bf16.msra.mxu0 %v7025
    %7068 = vmatprep.subr.bf16.mxu0 %v7030
    %7069 = vmatpush1.bf16.msra.mxu0 %v7029
    %7070 = vmatprep.subr.bf16.mxu0 %v7056
    %7071 = vmatpush1.bf16.msra.mxu0 %v7053
    %7072 = vmatprep.subr.bf16.mxu0 0
    %7073 = vmatpush1.bf16.msra.mxu0 0
    %7074 = vmatprep.subr.bf16.mxu0 0
    %7075 = vmatpush1.bf16.msra.mxu0 0
    %7076 = vmatprep.subr.bf16.mxu0 0
    %7077 = vmatpush1.bf16.msra.mxu0 0
    %7078 = vmatprep.subr.bf16.mxu0 0
    %7079 = vmatpush1.bf16.msra.mxu0 0
    %7080 = vmatprep.subr.bf16.mxu0 0
    %7081 = vmatpush1.bf16.msra.mxu0 0
    %7082 = vmatprep.subr.bf16.mxu0 0
    %7083 = vmatpush1.bf16.msra.mxu0 0
    %7084 = vmatprep.subr.bf16.mxu0 0
    %7085 = vmatpush1.bf16.msra.mxu0 0
    %7086 = vmatprep.subr.bf16.mxu0 0
    %7087 = vmatpush1.bf16.msra.mxu0 0
    %7088 = vmatprep.subr.bf16.mxu0 0
    %7089 = vmatpush1.bf16.msra.mxu0 0
    %7090 = vmatprep.subr.bf16.mxu0 0
    %7091 = vmatpush1.bf16.msra.mxu0 0
    %7092 = vmatprep.subr.bf16.mxu0 0
    %7093 = vmatpush1.bf16.msra.mxu0 0
    %7094 = vmatprep.subr.bf16.mxu0 0
    %7095 = vmatpush1.bf16.msra.mxu0 0
    %7096 = vmatprep.mubr.bf16.mxu0 0
    %7097 = vmatmul.mubr.bf16.gmra.mrb[0].mxu0 %v7050
    %v7098 = vpop.f32.mrb[0].mxu0
    %v7099 = vadd.f32 0.0, %v7098
    %v7100 = vpop.f32.mrb[0].mxu0
    %v7101 = vadd.f32 0.0, %v7100
    %v7102 = vpop.f32.mrb[0].mxu0
    %v7103 = vpop.f32.mrb[0].mxu0
    %7104 = vdwg.mxu0
    %7105 = vmatprep.subr.bf16.mxu0 %v7024
    %7106 = vmatpush1.bf16.msra.mxu0 %v7023
    %7107 = vmatprep.subr.bf16.mxu0 %v7028
    %7108 = vmatpush1.bf16.msra.mxu0 %v7027
    %7109 = vmatprep.subr.bf16.mxu0 %v7032
    %7110 = vmatpush1.bf16.msra.mxu0 %v7031
    %7111 = vmatprep.subr.bf16.mxu0 %v7062
    %7112 = vmatpush1.bf16.msra.mxu0 %v7059
    %7113 = vmatprep.subr.bf16.mxu0 0
    %7114 = vmatpush1.bf16.msra.mxu0 0
    %7115 = vmatprep.subr.bf16.mxu0 0
    %7116 = vmatpush1.bf16.msra.mxu0 0
    %7117 = vmatprep.subr.bf16.mxu0 0
    %7118 = vmatpush1.bf16.msra.mxu0 0
    %7119 = vmatprep.subr.bf16.mxu0 0
    %7120 = vmatpush1.bf16.msra.mxu0 0
    %7121 = vmatprep.subr.bf16.mxu0 0
    %7122 = vmatpush1.bf16.msra.mxu0 0
    %7123 = vmatprep.subr.bf16.mxu0 0
    %7124 = vmatpush1.bf16.msra.mxu0 0
    %7125 = vmatprep.subr.bf16.mxu0 0
    %7126 = vmatpush1.bf16.msra.mxu0 0
    %7127 = vmatprep.subr.bf16.mxu0 0
    %7128 = vmatpush1.bf16.msra.mxu0 0
    %7129 = vmatprep.subr.bf16.mxu0 0
    %7130 = vmatpush1.bf16.msra.mxu0 0
    %7131 = vmatprep.subr.bf16.mxu0 0
    %7132 = vmatpush1.bf16.msra.mxu0 0
    %7133 = vmatprep.subr.bf16.mxu0 0
    %7134 = vmatpush1.bf16.msra.mxu0 0
    %7135 = vmatprep.subr.bf16.mxu0 0
    %7136 = vmatpush1.bf16.msra.mxu0 0
    %7137 = vmatprep.mubr.bf16.mxu0 0
    %7138 = vmatmul.mubr.bf16.gmra.mrb[0].mxu0 %v7050
    %v7139 = vpop.f32.mrb[0].mxu0
    %v7140 = vadd.f32 0.0, %v7139
    %v7141 = vpop.f32.mrb[0].mxu0
    %v7142 = vadd.f32 0.0, %v7141
    %v7143 = vpop.f32.mrb[0].mxu0
    %v7144 = vpop.f32.mrb[0].mxu0
    %7145 = vdwg.mxu0
    %v7146 = vadd.f32 %v6959, %v7099
    %v7147 = vadd.f32 %v6960, %v7101
    %v7148 = vadd.f32 %v6961, %v7140
    %v7149 = vadd.f32 %v6962, %v7142
    %s7150 = scalar_lea.vmem %s5, 1232
    %v7151 = vld [vmem:[%s7150] sm:$0xff]
    %v7152 = vld [vmem:[%s7150 + $0x8] sm:$0xff]
    %v7153 = vld [vmem:[%s7150 + $0x10] sm:$0xff]
    %v7154 = vld [vmem:[%s7150 + $0x18] sm:$0xff]
    %v7155 = vld [vmem:[%s7150 + $0x20] sm:$0xff]
    %v7156 = vld [vmem:[%s7150 + $0x28] sm:$0xff]
    %v7157 = vld [vmem:[%s7150 + $0x30] sm:$0xff]
    %v7158 = vld [vmem:[%s7150 + $0x38] sm:$0xff]
    %v7159 = vld [vmem:[%s7150 + $0x40] sm:$0xff]
    %v7160 = vld [vmem:[%s7150 + $0x48] sm:$0xff]
    %v7161 = vld [vmem:[%s7150 + $0x50] sm:$0xff]
    %v7162 = vld [vmem:[%s7150 + $0x58] sm:$0xff]
    %v7163 = vld [vmem:[%s7150 + $0x60] sm:$0x11]
    %v7164 = vld [vmem:[%s7150 + $0x68] sm:$0x11]
    %v7165 = vrot.slane %v6588, 3
    %v7180 = vunpack.c.l.b16 %v7151
    %v7181 = vunpack.c.h.b16 %v7151
    %v7182 = vunpack.c.l.b16 %v7152
    %v7183 = vunpack.c.h.b16 %v7152
    %v7184 = vunpack.c.l.b16 %v7153
    %v7185 = vunpack.c.h.b16 %v7153
    %v7186 = vunpack.c.l.b16 %v7154
    %v7187 = vunpack.c.h.b16 %v7154
    %v7188 = vunpack.c.l.b16 %v7155
    %v7189 = vunpack.c.h.b16 %v7155
    %v7190 = vunpack.c.l.b16 %v7156
    %v7191 = vunpack.c.h.b16 %v7156
    %v7192 = vunpack.c.l.b16 %v7157
    %v7193 = vunpack.c.h.b16 %v7157
    %v7194 = vunpack.c.l.b16 %v7158
    %v7195 = vunpack.c.h.b16 %v7158
    %v7196 = vunpack.c.l.b16 %v7159
    %v7197 = vunpack.c.h.b16 %v7159
    %v7198 = vunpack.c.l.b16 %v7160
    %v7199 = vunpack.c.h.b16 %v7160
    %v7200 = vunpack.c.l.b16 %v7161
    %v7201 = vunpack.c.h.b16 %v7161
    %v7202 = vunpack.c.l.b16 %v7162
    %v7203 = vunpack.c.h.b16 %v7162
    %v7204 = vunpack.c.l.b16 %v7163
    %v7205 = vunpack.c.h.b16 %v7163
    %v7206 = vunpack.c.l.b16 %v7164
    %v7207 = vunpack.c.h.b16 %v7164
    %v7208 = vpack.c.b16 %v7184, %v7180
    %v7209 = vpack.c.b16 %v7185, %v7181
    %v7210 = vpack.c.b16 %v7186, %v7182
    %v7211 = vpack.c.b16 %v7187, %v7183
    %v7212 = vpack.c.b16 %v7192, %v7188
    %v7213 = vpack.c.b16 %v7193, %v7189
    %v7214 = vpack.c.b16 %v7194, %v7190
    %v7215 = vpack.c.b16 %v7195, %v7191
    %v7216 = vpack.c.b16 %v7200, %v7196
    %v7217 = vpack.c.b16 %v7201, %v7197
    %v7218 = vpack.c.b16 %v7202, %v7198
    %v7219 = vpack.c.b16 %v7203, %v7199
    %v7220 = vpack.c.b16 %v7204, %v7204
    %v7221 = vpack.c.b16 %v7205, %v7205
    %v7222 = vpack.c.b16 %v7206, %v7206
    %v7223 = vpack.c.b16 %v7207, %v7207
    %v7237 = vsel %vm5199, %v7165, 0
    %v7240 = vsel %vm5203, %v7220, 0
    %v7243 = vsel %vm5203, %v7221, 0
    %v7246 = vsel %vm5203, %v7222, 0
    %v7249 = vsel %vm5203, %v7223, 0
    %7251 = vmatprep.subr.bf16.mxu0 %v7209
    %7252 = vmatpush1.bf16.msra.mxu0 %v7208
    %7253 = vmatprep.subr.bf16.mxu0 %v7213
    %7254 = vmatpush1.bf16.msra.mxu0 %v7212
    %7255 = vmatprep.subr.bf16.mxu0 %v7217
    %7256 = vmatpush1.bf16.msra.mxu0 %v7216
    %7257 = vmatprep.subr.bf16.mxu0 %v7243
    %7258 = vmatpush1.bf16.msra.mxu0 %v7240
    %7259 = vmatprep.subr.bf16.mxu0 0
    %7260 = vmatpush1.bf16.msra.mxu0 0
    %7261 = vmatprep.subr.bf16.mxu0 0
    %7262 = vmatpush1.bf16.msra.mxu0 0
    %7263 = vmatprep.subr.bf16.mxu0 0
    %7264 = vmatpush1.bf16.msra.mxu0 0
    %7265 = vmatprep.subr.bf16.mxu0 0
    %7266 = vmatpush1.bf16.msra.mxu0 0
    %7267 = vmatprep.subr.bf16.mxu0 0
    %7268 = vmatpush1.bf16.msra.mxu0 0
    %7269 = vmatprep.subr.bf16.mxu0 0
    %7270 = vmatpush1.bf16.msra.mxu0 0
    %7271 = vmatprep.subr.bf16.mxu0 0
    %7272 = vmatpush1.bf16.msra.mxu0 0
    %7273 = vmatprep.subr.bf16.mxu0 0
    %7274 = vmatpush1.bf16.msra.mxu0 0
    %7275 = vmatprep.subr.bf16.mxu0 0
    %7276 = vmatpush1.bf16.msra.mxu0 0
    %7277 = vmatprep.subr.bf16.mxu0 0
    %7278 = vmatpush1.bf16.msra.mxu0 0
    %7279 = vmatprep.subr.bf16.mxu0 0
    %7280 = vmatpush1.bf16.msra.mxu0 0
    %7281 = vmatprep.subr.bf16.mxu0 0
    %7282 = vmatpush1.bf16.msra.mxu0 0
    %7283 = vmatprep.mubr.bf16.mxu0 0
    %7284 = vmatmul.mubr.bf16.gmra.mrb[0].mxu0 %v7237
    %v7285 = vpop.f32.mrb[0].mxu0
    %v7286 = vadd.f32 0.0, %v7285
    %v7287 = vpop.f32.mrb[0].mxu0
    %v7288 = vadd.f32 0.0, %v7287
    %v7289 = vpop.f32.mrb[0].mxu0
    %v7290 = vpop.f32.mrb[0].mxu0
    %7291 = vdwg.mxu0
    %7292 = vmatprep.subr.bf16.mxu0 %v7211
    %7293 = vmatpush1.bf16.msra.mxu0 %v7210
    %7294 = vmatprep.subr.bf16.mxu0 %v7215
    %7295 = vmatpush1.bf16.msra.mxu0 %v7214
    %7296 = vmatprep.subr.bf16.mxu0 %v7219
    %7297 = vmatpush1.bf16.msra.mxu0 %v7218
    %7298 = vmatprep.subr.bf16.mxu0 %v7249
    %7299 = vmatpush1.bf16.msra.mxu0 %v7246
    %7300 = vmatprep.subr.bf16.mxu0 0
    %7301 = vmatpush1.bf16.msra.mxu0 0
    %7302 = vmatprep.subr.bf16.mxu0 0
    %7303 = vmatpush1.bf16.msra.mxu0 0
    %7304 = vmatprep.subr.bf16.mxu0 0
    %7305 = vmatpush1.bf16.msra.mxu0 0
    %7306 = vmatprep.subr.bf16.mxu0 0
    %7307 = vmatpush1.bf16.msra.mxu0 0
    %7308 = vmatprep.subr.bf16.mxu0 0
    %7309 = vmatpush1.bf16.msra.mxu0 0
    %7310 = vmatprep.subr.bf16.mxu0 0
    %7311 = vmatpush1.bf16.msra.mxu0 0
    %7312 = vmatprep.subr.bf16.mxu0 0
    %7313 = vmatpush1.bf16.msra.mxu0 0
    %7314 = vmatprep.subr.bf16.mxu0 0
    %7315 = vmatpush1.bf16.msra.mxu0 0
    %7316 = vmatprep.subr.bf16.mxu0 0
    %7317 = vmatpush1.bf16.msra.mxu0 0
    %7318 = vmatprep.subr.bf16.mxu0 0
    %7319 = vmatpush1.bf16.msra.mxu0 0
    %7320 = vmatprep.subr.bf16.mxu0 0
    %7321 = vmatpush1.bf16.msra.mxu0 0
    %7322 = vmatprep.subr.bf16.mxu0 0
    %7323 = vmatpush1.bf16.msra.mxu0 0
    %7324 = vmatprep.mubr.bf16.mxu0 0
    %7325 = vmatmul.mubr.bf16.gmra.mrb[0].mxu0 %v7237
    %v7326 = vpop.f32.mrb[0].mxu0
    %v7327 = vadd.f32 0.0, %v7326
    %v7328 = vpop.f32.mrb[0].mxu0
    %v7329 = vadd.f32 0.0, %v7328
    %v7330 = vpop.f32.mrb[0].mxu0
    %v7331 = vpop.f32.mrb[0].mxu0
    %7332 = vdwg.mxu0
    %v7333 = vadd.f32 %v7146, %v7286
    %v7334 = vadd.f32 %v7147, %v7288
    %v7335 = vadd.f32 %v7148, %v7327
    %v7336 = vadd.f32 %v7149, %v7329
    %v7337 = vpack.c.bf16 %v5096, %v5096
    %s7338 = scalar_lea.vmem %s5, 1344
    %v7339 = vld [vmem:[%s7338] sm:$0xff]
    %v7340 = vld [vmem:[%s7338 + $0x8] sm:$0xff]
    %v7341 = vld [vmem:[%s7338 + $0x10] sm:$0xff]
    %v7342 = vld [vmem:[%s7338 + $0x18] sm:$0xff]
    %v7343 = vld [vmem:[%s7338 + $0x20] sm:$0xff]
    %v7344 = vld [vmem:[%s7338 + $0x28] sm:$0xff]
    %v7345 = vld [vmem:[%s7338 + $0x30] sm:$0xff]
    %v7346 = vld [vmem:[%s7338 + $0x38] sm:$0xff]
    %v7347 = vld [vmem:[%s7338 + $0x40] sm:$0xff]
    %v7348 = vld [vmem:[%s7338 + $0x48] sm:$0xff]
    %v7349 = vld [vmem:[%s7338 + $0x50] sm:$0xff]
    %v7350 = vld [vmem:[%s7338 + $0x58] sm:$0xff]
    %v7351 = vld [vmem:[%s7338 + $0x60] sm:$0x11]
    %v7352 = vld [vmem:[%s7338 + $0x68] sm:$0x11]
    %v7367 = vunpack.c.l.b16 %v7339
    %v7368 = vunpack.c.h.b16 %v7339
    %v7369 = vunpack.c.l.b16 %v7340
    %v7370 = vunpack.c.h.b16 %v7340
    %v7371 = vunpack.c.l.b16 %v7341
    %v7372 = vunpack.c.h.b16 %v7341
    %v7373 = vunpack.c.l.b16 %v7342
    %v7374 = vunpack.c.h.b16 %v7342
    %v7375 = vunpack.c.l.b16 %v7343
    %v7376 = vunpack.c.h.b16 %v7343
    %v7377 = vunpack.c.l.b16 %v7344
    %v7378 = vunpack.c.h.b16 %v7344
    %v7379 = vunpack.c.l.b16 %v7345
    %v7380 = vunpack.c.h.b16 %v7345
    %v7381 = vunpack.c.l.b16 %v7346
    %v7382 = vunpack.c.h.b16 %v7346
    %v7383 = vunpack.c.l.b16 %v7347
    %v7384 = vunpack.c.h.b16 %v7347
    %v7385 = vunpack.c.l.b16 %v7348
    %v7386 = vunpack.c.h.b16 %v7348
    %v7387 = vunpack.c.l.b16 %v7349
    %v7388 = vunpack.c.h.b16 %v7349
    %v7389 = vunpack.c.l.b16 %v7350
    %v7390 = vunpack.c.h.b16 %v7350
    %v7391 = vunpack.c.l.b16 %v7351
    %v7392 = vunpack.c.h.b16 %v7351
    %v7393 = vunpack.c.l.b16 %v7352
    %v7394 = vunpack.c.h.b16 %v7352
    %v7395 = vpack.c.b16 %v7371, %v7367
    %v7396 = vpack.c.b16 %v7372, %v7368
    %v7397 = vpack.c.b16 %v7373, %v7369
    %v7398 = vpack.c.b16 %v7374, %v7370
    %v7399 = vpack.c.b16 %v7379, %v7375
    %v7400 = vpack.c.b16 %v7380, %v7376
    %v7401 = vpack.c.b16 %v7381, %v7377
    %v7402 = vpack.c.b16 %v7382, %v7378
    %v7403 = vpack.c.b16 %v7387, %v7383
    %v7404 = vpack.c.b16 %v7388, %v7384
    %v7405 = vpack.c.b16 %v7389, %v7385
    %v7406 = vpack.c.b16 %v7390, %v7386
    %v7407 = vpack.c.b16 %v7391, %v7391
    %v7408 = vpack.c.b16 %v7392, %v7392
    %v7409 = vpack.c.b16 %v7393, %v7393
    %v7410 = vpack.c.b16 %v7394, %v7394
    %v7424 = vsel %vm5199, %v7337, 0
    %v7427 = vsel %vm5203, %v7407, 0
    %v7430 = vsel %vm5203, %v7408, 0
    %v7433 = vsel %vm5203, %v7409, 0
    %v7436 = vsel %vm5203, %v7410, 0
    %7438 = vmatprep.subr.bf16.mxu0 %v7396
    %7439 = vmatpush1.bf16.msra.mxu0 %v7395
    %7440 = vmatprep.subr.bf16.mxu0 %v7400
    %7441 = vmatpush1.bf16.msra.mxu0 %v7399
    %7442 = vmatprep.subr.bf16.mxu0 %v7404
    %7443 = vmatpush1.bf16.msra.mxu0 %v7403
    %7444 = vmatprep.subr.bf16.mxu0 %v7430
    %7445 = vmatpush1.bf16.msra.mxu0 %v7427
    %7446 = vmatprep.subr.bf16.mxu0 0
    %7447 = vmatpush1.bf16.msra.mxu0 0
    %7448 = vmatprep.subr.bf16.mxu0 0
    %7449 = vmatpush1.bf16.msra.mxu0 0
    %7450 = vmatprep.subr.bf16.mxu0 0
    %7451 = vmatpush1.bf16.msra.mxu0 0
    %7452 = vmatprep.subr.bf16.mxu0 0
    %7453 = vmatpush1.bf16.msra.mxu0 0
    %7454 = vmatprep.subr.bf16.mxu0 0
    %7455 = vmatpush1.bf16.msra.mxu0 0
    %7456 = vmatprep.subr.bf16.mxu0 0
    %7457 = vmatpush1.bf16.msra.mxu0 0
    %7458 = vmatprep.subr.bf16.mxu0 0
    %7459 = vmatpush1.bf16.msra.mxu0 0
    %7460 = vmatprep.subr.bf16.mxu0 0
    %7461 = vmatpush1.bf16.msra.mxu0 0
    %7462 = vmatprep.subr.bf16.mxu0 0
    %7463 = vmatpush1.bf16.msra.mxu0 0
    %7464 = vmatprep.subr.bf16.mxu0 0
    %7465 = vmatpush1.bf16.msra.mxu0 0
    %7466 = vmatprep.subr.bf16.mxu0 0
    %7467 = vmatpush1.bf16.msra.mxu0 0
    %7468 = vmatprep.subr.bf16.mxu0 0
    %7469 = vmatpush1.bf16.msra.mxu0 0
    %7470 = vmatprep.mubr.bf16.mxu0 0
    %7471 = vmatmul.mubr.bf16.gmra.mrb[0].mxu0 %v7424
    %v7472 = vpop.f32.mrb[0].mxu0
    %v7473 = vadd.f32 0.0, %v7472
    %v7474 = vpop.f32.mrb[0].mxu0
    %v7475 = vadd.f32 0.0, %v7474
    %v7476 = vpop.f32.mrb[0].mxu0
    %v7477 = vpop.f32.mrb[0].mxu0
    %7478 = vdwg.mxu0
    %7479 = vmatprep.subr.bf16.mxu0 %v7398
    %7480 = vmatpush1.bf16.msra.mxu0 %v7397
    %7481 = vmatprep.subr.bf16.mxu0 %v7402
    %7482 = vmatpush1.bf16.msra.mxu0 %v7401
    %7483 = vmatprep.subr.bf16.mxu0 %v7406
    %7484 = vmatpush1.bf16.msra.mxu0 %v7405
    %7485 = vmatprep.subr.bf16.mxu0 %v7436
    %7486 = vmatpush1.bf16.msra.mxu0 %v7433
    %7487 = vmatprep.subr.bf16.mxu0 0
    %7488 = vmatpush1.bf16.msra.mxu0 0
    %7489 = vmatprep.subr.bf16.mxu0 0
    %7490 = vmatpush1.bf16.msra.mxu0 0
    %7491 = vmatprep.subr.bf16.mxu0 0
    %7492 = vmatpush1.bf16.msra.mxu0 0
    %7493 = vmatprep.subr.bf16.mxu0 0
    %7494 = vmatpush1.bf16.msra.mxu0 0
    %7495 = vmatprep.subr.bf16.mxu0 0
    %7496 = vmatpush1.bf16.msra.mxu0 0
    %7497 = vmatprep.subr.bf16.mxu0 0
    %7498 = vmatpush1.bf16.msra.mxu0 0
    %7499 = vmatprep.subr.bf16.mxu0 0
    %7500 = vmatpush1.bf16.msra.mxu0 0
    %7501 = vmatprep.subr.bf16.mxu0 0
    %7502 = vmatpush1.bf16.msra.mxu0 0
    %7503 = vmatprep.subr.bf16.mxu0 0
    %7504 = vmatpush1.bf16.msra.mxu0 0
    %7505 = vmatprep.subr.bf16.mxu0 0
    %7506 = vmatpush1.bf16.msra.mxu0 0
    %7507 = vmatprep.subr.bf16.mxu0 0
    %7508 = vmatpush1.bf16.msra.mxu0 0
    %7509 = vmatprep.subr.bf16.mxu0 0
    %7510 = vmatpush1.bf16.msra.mxu0 0
    %7511 = vmatprep.mubr.bf16.mxu0 0
    %7512 = vmatmul.mubr.bf16.gmra.mrb[0].mxu0 %v7424
    %v7513 = vpop.f32.mrb[0].mxu0
    %v7514 = vadd.f32 0.0, %v7513
    %v7515 = vpop.f32.mrb[0].mxu0
    %v7516 = vadd.f32 0.0, %v7515
    %v7517 = vpop.f32.mrb[0].mxu0
    %v7518 = vpop.f32.mrb[0].mxu0
    %7519 = vdwg.mxu0
    %v7520 = vadd.f32 %v7333, %v7473
    %v7521 = vadd.f32 %v7334, %v7475
    %v7522 = vadd.f32 %v7335, %v7514
    %v7523 = vadd.f32 %v7336, %v7516
    %s7524 = scalar_lea.vmem %s5, 1456
    %v7525 = vld [vmem:[%s7524] sm:$0xff]
    %v7526 = vld [vmem:[%s7524 + $0x8] sm:$0xff]
    %v7527 = vld [vmem:[%s7524 + $0x10] sm:$0xff]
    %v7528 = vld [vmem:[%s7524 + $0x18] sm:$0xff]
    %v7529 = vld [vmem:[%s7524 + $0x20] sm:$0xff]
    %v7530 = vld [vmem:[%s7524 + $0x28] sm:$0xff]
    %v7531 = vld [vmem:[%s7524 + $0x30] sm:$0xff]
    %v7532 = vld [vmem:[%s7524 + $0x38] sm:$0xff]
    %v7533 = vld [vmem:[%s7524 + $0x40] sm:$0xff]
    %v7534 = vld [vmem:[%s7524 + $0x48] sm:$0xff]
    %v7535 = vld [vmem:[%s7524 + $0x50] sm:$0xff]
    %v7536 = vld [vmem:[%s7524 + $0x58] sm:$0xff]
    %v7537 = vld [vmem:[%s7524 + $0x60] sm:$0x11]
    %v7538 = vld [vmem:[%s7524 + $0x68] sm:$0x11]
    %v7540 = vrot.slane %v7337, 1
    %v7555 = vunpack.c.l.b16 %v7525
    %v7556 = vunpack.c.h.b16 %v7525
    %v7557 = vunpack.c.l.b16 %v7526
    %v7558 = vunpack.c.h.b16 %v7526
    %v7559 = vunpack.c.l.b16 %v7527
    %v7560 = vunpack.c.h.b16 %v7527
    %v7561 = vunpack.c.l.b16 %v7528
    %v7562 = vunpack.c.h.b16 %v7528
    %v7563 = vunpack.c.l.b16 %v7529
    %v7564 = vunpack.c.h.b16 %v7529
    %v7565 = vunpack.c.l.b16 %v7530
    %v7566 = vunpack.c.h.b16 %v7530
    %v7567 = vunpack.c.l.b16 %v7531
    %v7568 = vunpack.c.h.b16 %v7531
    %v7569 = vunpack.c.l.b16 %v7532
    %v7570 = vunpack.c.h.b16 %v7532
    %v7571 = vunpack.c.l.b16 %v7533
    %v7572 = vunpack.c.h.b16 %v7533
    %v7573 = vunpack.c.l.b16 %v7534
    %v7574 = vunpack.c.h.b16 %v7534
    %v7575 = vunpack.c.l.b16 %v7535
    %v7576 = vunpack.c.h.b16 %v7535
    %v7577 = vunpack.c.l.b16 %v7536
    %v7578 = vunpack.c.h.b16 %v7536
    %v7579 = vunpack.c.l.b16 %v7537
    %v7580 = vunpack.c.h.b16 %v7537
    %v7581 = vunpack.c.l.b16 %v7538
    %v7582 = vunpack.c.h.b16 %v7538
    %v7583 = vpack.c.b16 %v7559, %v7555
    %v7584 = vpack.c.b16 %v7560, %v7556
    %v7585 = vpack.c.b16 %v7561, %v7557
    %v7586 = vpack.c.b16 %v7562, %v7558
    %v7587 = vpack.c.b16 %v7567, %v7563
    %v7588 = vpack.c.b16 %v7568, %v7564
    %v7589 = vpack.c.b16 %v7569, %v7565
    %v7590 = vpack.c.b16 %v7570, %v7566
    %v7591 = vpack.c.b16 %v7575, %v7571
    %v7592 = vpack.c.b16 %v7576, %v7572
    %v7593 = vpack.c.b16 %v7577, %v7573
    %v7594 = vpack.c.b16 %v7578, %v7574
    %v7595 = vpack.c.b16 %v7579, %v7579
    %v7596 = vpack.c.b16 %v7580, %v7580
    %v7597 = vpack.c.b16 %v7581, %v7581
    %v7598 = vpack.c.b16 %v7582, %v7582
    %v7612 = vsel %vm5199, %v7540, 0
    %v7615 = vsel %vm5203, %v7595, 0
    %v7618 = vsel %vm5203, %v7596, 0
    %v7621 = vsel %vm5203, %v7597, 0
    %v7624 = vsel %vm5203, %v7598, 0
    %7626 = vmatprep.subr.bf16.mxu0 %v7584
    %7627 = vmatpush1.bf16.msra.mxu0 %v7583
    %7628 = vmatprep.subr.bf16.mxu0 %v7588
    %7629 = vmatpush1.bf16.msra.mxu0 %v7587
    %7630 = vmatprep.subr.bf16.mxu0 %v7592
    %7631 = vmatpush1.bf16.msra.mxu0 %v7591
    %7632 = vmatprep.subr.bf16.mxu0 %v7618
    %7633 = vmatpush1.bf16.msra.mxu0 %v7615
    %7634 = vmatprep.subr.bf16.mxu0 0
    %7635 = vmatpush1.bf16.msra.mxu0 0
    %7636 = vmatprep.subr.bf16.mxu0 0
    %7637 = vmatpush1.bf16.msra.mxu0 0
    %7638 = vmatprep.subr.bf16.mxu0 0
    %7639 = vmatpush1.bf16.msra.mxu0 0
    %7640 = vmatprep.subr.bf16.mxu0 0
    %7641 = vmatpush1.bf16.msra.mxu0 0
    %7642 = vmatprep.subr.bf16.mxu0 0
    %7643 = vmatpush1.bf16.msra.mxu0 0
    %7644 = vmatprep.subr.bf16.mxu0 0
    %7645 = vmatpush1.bf16.msra.mxu0 0
    %7646 = vmatprep.subr.bf16.mxu0 0
    %7647 = vmatpush1.bf16.msra.mxu0 0
    %7648 = vmatprep.subr.bf16.mxu0 0
    %7649 = vmatpush1.bf16.msra.mxu0 0
    %7650 = vmatprep.subr.bf16.mxu0 0
    %7651 = vmatpush1.bf16.msra.mxu0 0
    %7652 = vmatprep.subr.bf16.mxu0 0
    %7653 = vmatpush1.bf16.msra.mxu0 0
    %7654 = vmatprep.subr.bf16.mxu0 0
    %7655 = vmatpush1.bf16.msra.mxu0 0
    %7656 = vmatprep.subr.bf16.mxu0 0
    %7657 = vmatpush1.bf16.msra.mxu0 0
    %7658 = vmatprep.mubr.bf16.mxu0 0
    %7659 = vmatmul.mubr.bf16.gmra.mrb[0].mxu0 %v7612
    %v7660 = vpop.f32.mrb[0].mxu0
    %v7661 = vadd.f32 0.0, %v7660
    %v7662 = vpop.f32.mrb[0].mxu0
    %v7663 = vadd.f32 0.0, %v7662
    %v7664 = vpop.f32.mrb[0].mxu0
    %v7665 = vpop.f32.mrb[0].mxu0
    %7666 = vdwg.mxu0
    %7667 = vmatprep.subr.bf16.mxu0 %v7586
    %7668 = vmatpush1.bf16.msra.mxu0 %v7585
    %7669 = vmatprep.subr.bf16.mxu0 %v7590
    %7670 = vmatpush1.bf16.msra.mxu0 %v7589
    %7671 = vmatprep.subr.bf16.mxu0 %v7594
    %7672 = vmatpush1.bf16.msra.mxu0 %v7593
    %7673 = vmatprep.subr.bf16.mxu0 %v7624
    %7674 = vmatpush1.bf16.msra.mxu0 %v7621
    %7675 = vmatprep.subr.bf16.mxu0 0
    %7676 = vmatpush1.bf16.msra.mxu0 0
    %7677 = vmatprep.subr.bf16.mxu0 0
    %7678 = vmatpush1.bf16.msra.mxu0 0
    %7679 = vmatprep.subr.bf16.mxu0 0
    %7680 = vmatpush1.bf16.msra.mxu0 0
    %7681 = vmatprep.subr.bf16.mxu0 0
    %7682 = vmatpush1.bf16.msra.mxu0 0
    %7683 = vmatprep.subr.bf16.mxu0 0
    %7684 = vmatpush1.bf16.msra.mxu0 0
    %7685 = vmatprep.subr.bf16.mxu0 0
    %7686 = vmatpush1.bf16.msra.mxu0 0
    %7687 = vmatprep.subr.bf16.mxu0 0
    %7688 = vmatpush1.bf16.msra.mxu0 0
    %7689 = vmatprep.subr.bf16.mxu0 0
    %7690 = vmatpush1.bf16.msra.mxu0 0
    %7691 = vmatprep.subr.bf16.mxu0 0
    %7692 = vmatpush1.bf16.msra.mxu0 0
    %7693 = vmatprep.subr.bf16.mxu0 0
    %7694 = vmatpush1.bf16.msra.mxu0 0
    %7695 = vmatprep.subr.bf16.mxu0 0
    %7696 = vmatpush1.bf16.msra.mxu0 0
    %7697 = vmatprep.subr.bf16.mxu0 0
    %7698 = vmatpush1.bf16.msra.mxu0 0
    %7699 = vmatprep.mubr.bf16.mxu0 0
    %7700 = vmatmul.mubr.bf16.gmra.mrb[0].mxu0 %v7612
    %v7701 = vpop.f32.mrb[0].mxu0
    %v7702 = vadd.f32 0.0, %v7701
    %v7703 = vpop.f32.mrb[0].mxu0
    %v7704 = vadd.f32 0.0, %v7703
    %v7705 = vpop.f32.mrb[0].mxu0
    %v7706 = vpop.f32.mrb[0].mxu0
    %7707 = vdwg.mxu0
    %v7708 = vadd.f32 %v7520, %v7661
    %v7709 = vadd.f32 %v7521, %v7663
    %v7710 = vadd.f32 %v7522, %v7702
    %v7711 = vadd.f32 %v7523, %v7704
    %s7712 = scalar_lea.vmem %s5, 1568
    %v7713 = vld [vmem:[%s7712] sm:$0xff]
    %v7714 = vld [vmem:[%s7712 + $0x8] sm:$0xff]
    %v7715 = vld [vmem:[%s7712 + $0x10] sm:$0xff]
    %v7716 = vld [vmem:[%s7712 + $0x18] sm:$0xff]
    %v7717 = vld [vmem:[%s7712 + $0x20] sm:$0xff]
    %v7718 = vld [vmem:[%s7712 + $0x28] sm:$0xff]
    %v7719 = vld [vmem:[%s7712 + $0x30] sm:$0xff]
    %v7720 = vld [vmem:[%s7712 + $0x38] sm:$0xff]
    %v7721 = vld [vmem:[%s7712 + $0x40] sm:$0xff]
    %v7722 = vld [vmem:[%s7712 + $0x48] sm:$0xff]
    %v7723 = vld [vmem:[%s7712 + $0x50] sm:$0xff]
    %v7724 = vld [vmem:[%s7712 + $0x58] sm:$0xff]
    %v7725 = vld [vmem:[%s7712 + $0x60] sm:$0x11]
    %v7726 = vld [vmem:[%s7712 + $0x68] sm:$0x11]
    %v7727 = vrot.slane %v7337, 2
    %v7742 = vunpack.c.l.b16 %v7713
    %v7743 = vunpack.c.h.b16 %v7713
    %v7744 = vunpack.c.l.b16 %v7714
    %v7745 = vunpack.c.h.b16 %v7714
    %v7746 = vunpack.c.l.b16 %v7715
    %v7747 = vunpack.c.h.b16 %v7715
    %v7748 = vunpack.c.l.b16 %v7716
    %v7749 = vunpack.c.h.b16 %v7716
    %v7750 = vunpack.c.l.b16 %v7717
    %v7751 = vunpack.c.h.b16 %v7717
    %v7752 = vunpack.c.l.b16 %v7718
    %v7753 = vunpack.c.h.b16 %v7718
    %v7754 = vunpack.c.l.b16 %v7719
    %v7755 = vunpack.c.h.b16 %v7719
    %v7756 = vunpack.c.l.b16 %v7720
    %v7757 = vunpack.c.h.b16 %v7720
    %v7758 = vunpack.c.l.b16 %v7721
    %v7759 = vunpack.c.h.b16 %v7721
    %v7760 = vunpack.c.l.b16 %v7722
    %v7761 = vunpack.c.h.b16 %v7722
    %v7762 = vunpack.c.l.b16 %v7723
    %v7763 = vunpack.c.h.b16 %v7723
    %v7764 = vunpack.c.l.b16 %v7724
    %v7765 = vunpack.c.h.b16 %v7724
    %v7766 = vunpack.c.l.b16 %v7725
    %v7767 = vunpack.c.h.b16 %v7725
    %v7768 = vunpack.c.l.b16 %v7726
    %v7769 = vunpack.c.h.b16 %v7726
    %v7770 = vpack.c.b16 %v7746, %v7742
    %v7771 = vpack.c.b16 %v7747, %v7743
    %v7772 = vpack.c.b16 %v7748, %v7744
    %v7773 = vpack.c.b16 %v7749, %v7745
    %v7774 = vpack.c.b16 %v7754, %v7750
    %v7775 = vpack.c.b16 %v7755, %v7751
    %v7776 = vpack.c.b16 %v7756, %v7752
    %v7777 = vpack.c.b16 %v7757, %v7753
    %v7778 = vpack.c.b16 %v7762, %v7758
    %v7779 = vpack.c.b16 %v7763, %v7759
    %v7780 = vpack.c.b16 %v7764, %v7760
    %v7781 = vpack.c.b16 %v7765, %v7761
    %v7782 = vpack.c.b16 %v7766, %v7766
    %v7783 = vpack.c.b16 %v7767, %v7767
    %v7784 = vpack.c.b16 %v7768, %v7768
    %v7785 = vpack.c.b16 %v7769, %v7769
    %v7799 = vsel %vm5199, %v7727, 0
    %v7802 = vsel %vm5203, %v7782, 0
    %v7805 = vsel %vm5203, %v7783, 0
    %v7808 = vsel %vm5203, %v7784, 0
    %v7811 = vsel %vm5203, %v7785, 0
    %7813 = vmatprep.subr.bf16.mxu0 %v7771
    %7814 = vmatpush1.bf16.msra.mxu0 %v7770
    %7815 = vmatprep.subr.bf16.mxu0 %v7775
    %7816 = vmatpush1.bf16.msra.mxu0 %v7774
    %7817 = vmatprep.subr.bf16.mxu0 %v7779
    %7818 = vmatpush1.bf16.msra.mxu0 %v7778
    %7819 = vmatprep.subr.bf16.mxu0 %v7805
    %7820 = vmatpush1.bf16.msra.mxu0 %v7802
    %7821 = vmatprep.subr.bf16.mxu0 0
    %7822 = vmatpush1.bf16.msra.mxu0 0
    %7823 = vmatprep.subr.bf16.mxu0 0
    %7824 = vmatpush1.bf16.msra.mxu0 0
    %7825 = vmatprep.subr.bf16.mxu0 0
    %7826 = vmatpush1.bf16.msra.mxu0 0
    %7827 = vmatprep.subr.bf16.mxu0 0
    %7828 = vmatpush1.bf16.msra.mxu0 0
    %7829 = vmatprep.subr.bf16.mxu0 0
    %7830 = vmatpush1.bf16.msra.mxu0 0
    %7831 = vmatprep.subr.bf16.mxu0 0
    %7832 = vmatpush1.bf16.msra.mxu0 0
    %7833 = vmatprep.subr.bf16.mxu0 0
    %7834 = vmatpush1.bf16.msra.mxu0 0
    %7835 = vmatprep.subr.bf16.mxu0 0
    %7836 = vmatpush1.bf16.msra.mxu0 0
    %7837 = vmatprep.subr.bf16.mxu0 0
    %7838 = vmatpush1.bf16.msra.mxu0 0
    %7839 = vmatprep.subr.bf16.mxu0 0
    %7840 = vmatpush1.bf16.msra.mxu0 0
    %7841 = vmatprep.subr.bf16.mxu0 0
    %7842 = vmatpush1.bf16.msra.mxu0 0
    %7843 = vmatprep.subr.bf16.mxu0 0
    %7844 = vmatpush1.bf16.msra.mxu0 0
    %7845 = vmatprep.mubr.bf16.mxu0 0
    %7846 = vmatmul.mubr.bf16.gmra.mrb[0].mxu0 %v7799
    %v7847 = vpop.f32.mrb[0].mxu0
    %v7848 = vadd.f32 0.0, %v7847
    %v7849 = vpop.f32.mrb[0].mxu0
    %v7850 = vadd.f32 0.0, %v7849
    %v7851 = vpop.f32.mrb[0].mxu0
    %v7852 = vpop.f32.mrb[0].mxu0
    %7853 = vdwg.mxu0
    %7854 = vmatprep.subr.bf16.mxu0 %v7773
    %7855 = vmatpush1.bf16.msra.mxu0 %v7772
    %7856 = vmatprep.subr.bf16.mxu0 %v7777
    %7857 = vmatpush1.bf16.msra.mxu0 %v7776
    %7858 = vmatprep.subr.bf16.mxu0 %v7781
    %7859 = vmatpush1.bf16.msra.mxu0 %v7780
    %7860 = vmatprep.subr.bf16.mxu0 %v7811
    %7861 = vmatpush1.bf16.msra.mxu0 %v7808
    %7862 = vmatprep.subr.bf16.mxu0 0
    %7863 = vmatpush1.bf16.msra.mxu0 0
    %7864 = vmatprep.subr.bf16.mxu0 0
    %7865 = vmatpush1.bf16.msra.mxu0 0
    %7866 = vmatprep.subr.bf16.mxu0 0
    %7867 = vmatpush1.bf16.msra.mxu0 0
    %7868 = vmatprep.subr.bf16.mxu0 0
    %7869 = vmatpush1.bf16.msra.mxu0 0
    %7870 = vmatprep.subr.bf16.mxu0 0
    %7871 = vmatpush1.bf16.msra.mxu0 0
    %7872 = vmatprep.subr.bf16.mxu0 0
    %7873 = vmatpush1.bf16.msra.mxu0 0
    %7874 = vmatprep.subr.bf16.mxu0 0
    %7875 = vmatpush1.bf16.msra.mxu0 0
    %7876 = vmatprep.subr.bf16.mxu0 0
    %7877 = vmatpush1.bf16.msra.mxu0 0
    %7878 = vmatprep.subr.bf16.mxu0 0
    %7879 = vmatpush1.bf16.msra.mxu0 0
    %7880 = vmatprep.subr.bf16.mxu0 0
    %7881 = vmatpush1.bf16.msra.mxu0 0
    %7882 = vmatprep.subr.bf16.mxu0 0
    %7883 = vmatpush1.bf16.msra.mxu0 0
    %7884 = vmatprep.subr.bf16.mxu0 0
    %7885 = vmatpush1.bf16.msra.mxu0 0
    %7886 = vmatprep.mubr.bf16.mxu0 0
    %7887 = vmatmul.mubr.bf16.gmra.mrb[0].mxu0 %v7799
    %v7888 = vpop.f32.mrb[0].mxu0
    %v7889 = vadd.f32 0.0, %v7888
    %v7890 = vpop.f32.mrb[0].mxu0
    %v7891 = vadd.f32 0.0, %v7890
    %v7892 = vpop.f32.mrb[0].mxu0
    %v7893 = vpop.f32.mrb[0].mxu0
    %7894 = vdwg.mxu0
    %v7895 = vadd.f32 %v7708, %v7848
    %v7896 = vadd.f32 %v7709, %v7850
    %v7897 = vadd.f32 %v7710, %v7889
    %v7898 = vadd.f32 %v7711, %v7891
    %s7899 = scalar_lea.vmem %s5, 1680
    %v7900 = vld [vmem:[%s7899] sm:$0xff]
    %v7901 = vld [vmem:[%s7899 + $0x8] sm:$0xff]
    %v7902 = vld [vmem:[%s7899 + $0x10] sm:$0xff]
    %v7903 = vld [vmem:[%s7899 + $0x18] sm:$0xff]
    %v7904 = vld [vmem:[%s7899 + $0x20] sm:$0xff]
    %v7905 = vld [vmem:[%s7899 + $0x28] sm:$0xff]
    %v7906 = vld [vmem:[%s7899 + $0x30] sm:$0xff]
    %v7907 = vld [vmem:[%s7899 + $0x38] sm:$0xff]
    %v7908 = vld [vmem:[%s7899 + $0x40] sm:$0xff]
    %v7909 = vld [vmem:[%s7899 + $0x48] sm:$0xff]
    %v7910 = vld [vmem:[%s7899 + $0x50] sm:$0xff]
    %v7911 = vld [vmem:[%s7899 + $0x58] sm:$0xff]
    %v7912 = vld [vmem:[%s7899 + $0x60] sm:$0x11]
    %v7913 = vld [vmem:[%s7899 + $0x68] sm:$0x11]
    %v7914 = vrot.slane %v7337, 3
    %v7929 = vunpack.c.l.b16 %v7900
    %v7930 = vunpack.c.h.b16 %v7900
    %v7931 = vunpack.c.l.b16 %v7901
    %v7932 = vunpack.c.h.b16 %v7901
    %v7933 = vunpack.c.l.b16 %v7902
    %v7934 = vunpack.c.h.b16 %v7902
    %v7935 = vunpack.c.l.b16 %v7903
    %v7936 = vunpack.c.h.b16 %v7903
    %v7937 = vunpack.c.l.b16 %v7904
    %v7938 = vunpack.c.h.b16 %v7904
    %v7939 = vunpack.c.l.b16 %v7905
    %v7940 = vunpack.c.h.b16 %v7905
    %v7941 = vunpack.c.l.b16 %v7906
    %v7942 = vunpack.c.h.b16 %v7906
    %v7943 = vunpack.c.l.b16 %v7907
    %v7944 = vunpack.c.h.b16 %v7907
    %v7945 = vunpack.c.l.b16 %v7908
    %v7946 = vunpack.c.h.b16 %v7908
    %v7947 = vunpack.c.l.b16 %v7909
    %v7948 = vunpack.c.h.b16 %v7909
    %v7949 = vunpack.c.l.b16 %v7910
    %v7950 = vunpack.c.h.b16 %v7910
    %v7951 = vunpack.c.l.b16 %v7911
    %v7952 = vunpack.c.h.b16 %v7911
    %v7953 = vunpack.c.l.b16 %v7912
    %v7954 = vunpack.c.h.b16 %v7912
    %v7955 = vunpack.c.l.b16 %v7913
    %v7956 = vunpack.c.h.b16 %v7913
    %v7957 = vpack.c.b16 %v7933, %v7929
    %v7958 = vpack.c.b16 %v7934, %v7930
    %v7959 = vpack.c.b16 %v7935, %v7931
    %v7960 = vpack.c.b16 %v7936, %v7932
    %v7961 = vpack.c.b16 %v7941, %v7937
    %v7962 = vpack.c.b16 %v7942, %v7938
    %v7963 = vpack.c.b16 %v7943, %v7939
    %v7964 = vpack.c.b16 %v7944, %v7940
    %v7965 = vpack.c.b16 %v7949, %v7945
    %v7966 = vpack.c.b16 %v7950, %v7946
    %v7967 = vpack.c.b16 %v7951, %v7947
    %v7968 = vpack.c.b16 %v7952, %v7948
    %v7969 = vpack.c.b16 %v7953, %v7953
    %v7970 = vpack.c.b16 %v7954, %v7954
    %v7971 = vpack.c.b16 %v7955, %v7955
    %v7972 = vpack.c.b16 %v7956, %v7956
    %v7986 = vsel %vm5199, %v7914, 0
    %v7989 = vsel %vm5203, %v7969, 0
    %v7992 = vsel %vm5203, %v7970, 0
    %v7995 = vsel %vm5203, %v7971, 0
    %v7998 = vsel %vm5203, %v7972, 0
    %8000 = vmatprep.subr.bf16.mxu0 %v7958
    %8001 = vmatpush1.bf16.msra.mxu0 %v7957
    %8002 = vmatprep.subr.bf16.mxu0 %v7962
    %8003 = vmatpush1.bf16.msra.mxu0 %v7961
    %8004 = vmatprep.subr.bf16.mxu0 %v7966
    %8005 = vmatpush1.bf16.msra.mxu0 %v7965
    %8006 = vmatprep.subr.bf16.mxu0 %v7992
    %8007 = vmatpush1.bf16.msra.mxu0 %v7989
    %8008 = vmatprep.subr.bf16.mxu0 0
    %8009 = vmatpush1.bf16.msra.mxu0 0
    %8010 = vmatprep.subr.bf16.mxu0 0
    %8011 = vmatpush1.bf16.msra.mxu0 0
    %8012 = vmatprep.subr.bf16.mxu0 0
    %8013 = vmatpush1.bf16.msra.mxu0 0
    %8014 = vmatprep.subr.bf16.mxu0 0
    %8015 = vmatpush1.bf16.msra.mxu0 0
    %8016 = vmatprep.subr.bf16.mxu0 0
    %8017 = vmatpush1.bf16.msra.mxu0 0
    %8018 = vmatprep.subr.bf16.mxu0 0
    %8019 = vmatpush1.bf16.msra.mxu0 0
    %8020 = vmatprep.subr.bf16.mxu0 0
    %8021 = vmatpush1.bf16.msra.mxu0 0
    %8022 = vmatprep.subr.bf16.mxu0 0
    %8023 = vmatpush1.bf16.msra.mxu0 0
    %8024 = vmatprep.subr.bf16.mxu0 0
    %8025 = vmatpush1.bf16.msra.mxu0 0
    %8026 = vmatprep.subr.bf16.mxu0 0
    %8027 = vmatpush1.bf16.msra.mxu0 0
    %8028 = vmatprep.subr.bf16.mxu0 0
    %8029 = vmatpush1.bf16.msra.mxu0 0
    %8030 = vmatprep.subr.bf16.mxu0 0
    %8031 = vmatpush1.bf16.msra.mxu0 0
    %8032 = vmatprep.mubr.bf16.mxu0 0
    %8033 = vmatmul.mubr.bf16.gmra.mrb[0].mxu0 %v7986
    %v8034 = vpop.f32.mrb[0].mxu0
    %v8035 = vadd.f32 0.0, %v8034
    %v8036 = vpop.f32.mrb[0].mxu0
    %v8037 = vadd.f32 0.0, %v8036
    %v8038 = vpop.f32.mrb[0].mxu0
    %v8039 = vpop.f32.mrb[0].mxu0
    %8040 = vdwg.mxu0
    %8041 = vmatprep.subr.bf16.mxu0 %v7960
    %8042 = vmatpush1.bf16.msra.mxu0 %v7959
    %8043 = vmatprep.subr.bf16.mxu0 %v7964
    %8044 = vmatpush1.bf16.msra.mxu0 %v7963
    %8045 = vmatprep.subr.bf16.mxu0 %v7968
    %8046 = vmatpush1.bf16.msra.mxu0 %v7967
    %8047 = vmatprep.subr.bf16.mxu0 %v7998
    %8048 = vmatpush1.bf16.msra.mxu0 %v7995
    %8049 = vmatprep.subr.bf16.mxu0 0
    %8050 = vmatpush1.bf16.msra.mxu0 0
    %8051 = vmatprep.subr.bf16.mxu0 0
    %8052 = vmatpush1.bf16.msra.mxu0 0
    %8053 = vmatprep.subr.bf16.mxu0 0
    %8054 = vmatpush1.bf16.msra.mxu0 0
    %8055 = vmatprep.subr.bf16.mxu0 0
    %8056 = vmatpush1.bf16.msra.mxu0 0
    %8057 = vmatprep.subr.bf16.mxu0 0
    %8058 = vmatpush1.bf16.msra.mxu0 0
    %8059 = vmatprep.subr.bf16.mxu0 0
    %8060 = vmatpush1.bf16.msra.mxu0 0
    %8061 = vmatprep.subr.bf16.mxu0 0
    %8062 = vmatpush1.bf16.msra.mxu0 0
    %8063 = vmatprep.subr.bf16.mxu0 0
    %8064 = vmatpush1.bf16.msra.mxu0 0
    %8065 = vmatprep.subr.bf16.mxu0 0
    %8066 = vmatpush1.bf16.msra.mxu0 0
    %8067 = vmatprep.subr.bf16.mxu0 0
    %8068 = vmatpush1.bf16.msra.mxu0 0
    %8069 = vmatprep.subr.bf16.mxu0 0
    %8070 = vmatpush1.bf16.msra.mxu0 0
    %8071 = vmatprep.subr.bf16.mxu0 0
    %8072 = vmatpush1.bf16.msra.mxu0 0
    %8073 = vmatprep.mubr.bf16.mxu0 0
    %8074 = vmatmul.mubr.bf16.gmra.mrb[0].mxu0 %v7986
    %v8075 = vpop.f32.mrb[0].mxu0
    %v8076 = vadd.f32 0.0, %v8075
    %v8077 = vpop.f32.mrb[0].mxu0
    %v8078 = vadd.f32 0.0, %v8077
    %v8079 = vpop.f32.mrb[0].mxu0
    %v8080 = vpop.f32.mrb[0].mxu0
    %8081 = vdwg.mxu0
    %v8082 = vadd.f32 %v7895, %v8035
    %v8083 = vadd.f32 %v7896, %v8037
    %v8084 = vadd.f32 %v7897, %v8076
    %v8085 = vadd.f32 %v7898, %v8078
    %v8086 = vld [vmem:[%s6] sm:$0xf]
    %v8088 = vlaneseq
    %v8089 = vshrl.u32 %v8088, 7
    %v8090 = vsub.s32 0, %v8089
    %v8091 = vrot.slane %v8086, %v8090
    %v8092 = vlaneseq
    %v8093 = vshrl.u32 %v8092, 7
    %v8094 = vsub.s32 1, %v8093
    %v8095 = vrot.slane %v8086, %v8094
    %v8096 = vlaneseq
    %v8097 = vshrl.u32 %v8096, 7
    %v8098 = vsub.s32 2, %v8097
    %v8099 = vrot.slane %v8086, %v8098
    %v8100 = vlaneseq
    %v8101 = vshrl.u32 %v8100, 7
    %v8102 = vsub.s32 3, %v8101
    %v8103 = vrot.slane %v8086, %v8102
    %v8108 = vadd.f32 %v8082, %v8091
    %v8109 = vadd.f32 %v8083, %v8095
    %v8110 = vadd.f32 %v8084, %v8099
    %v8111 = vadd.f32 %v8085, %v8103
    %v8112 = vmax.f32 %v8108, 0.0
    %v8113 = vmax.f32 %v8109, 0.0
    %v8114 = vmax.f32 %v8110, 0.0
    %v8115 = vmax.f32 %v8111, 0.0
    %v8116 = vpack.c.bf16 %v8112, %v8112
    %v8117 = vpack.c.bf16 %v8113, %v8113
    %v8118 = vpack.c.bf16 %v8114, %v8114
    %v8119 = vpack.c.bf16 %v8115, %v8115
    %v8120 = vld [vmem:[%s7] sm:$0xf]
    %v8121 = vld [vmem:[%s7 + $0x4] sm:$0xf]
    %v8122 = vld [vmem:[%s7 + $0x8] sm:$0xf]
    %v8123 = vld [vmem:[%s7 + $0xc] sm:$0xf]
    %v8124 = vld [vmem:[%s7 + $0x10] sm:$0xf]
    %v8125 = vld [vmem:[%s7 + $0x14] sm:$0xf]
    %v8126 = vld [vmem:[%s7 + $0x18] sm:$0xf]
    %v8127 = vld [vmem:[%s7 + $0x1c] sm:$0xf]
    %v8128 = vld [vmem:[%s7 + $0x20] sm:$0xf]
    %v8129 = vld [vmem:[%s7 + $0x24] sm:$0xf]
    %v8130 = vld [vmem:[%s7 + $0x28] sm:$0xf]
    %v8131 = vld [vmem:[%s7 + $0x2c] sm:$0xf]
    %v8132 = vld [vmem:[%s7 + $0x30] sm:$0xf]
    %v8133 = vld [vmem:[%s7 + $0x34] sm:$0xf]
    %v8134 = vld [vmem:[%s7 + $0x38] sm:$0xf]
    %v8135 = vld [vmem:[%s7 + $0x3c] sm:$0xf]
    %v8136 = vld [vmem:[%s7 + $0x40] sm:$0xf]
    %v8137 = vld [vmem:[%s7 + $0x44] sm:$0xf]
    %v8138 = vld [vmem:[%s7 + $0x48] sm:$0xf]
    %v8139 = vld [vmem:[%s7 + $0x4c] sm:$0xf]
    %v8140 = vld [vmem:[%s7 + $0x50] sm:$0xf]
    %v8141 = vld [vmem:[%s7 + $0x54] sm:$0xf]
    %v8142 = vld [vmem:[%s7 + $0x58] sm:$0xf]
    %v8143 = vld [vmem:[%s7 + $0x5c] sm:$0xf]
    %v8144 = vld [vmem:[%s7 + $0x60] sm:$0xf]
    %v8145 = vld [vmem:[%s7 + $0x64] sm:$0xf]
    %v8146 = vld [vmem:[%s7 + $0x68] sm:$0xf]
    %v8147 = vld [vmem:[%s7 + $0x6c] sm:$0xf]
    %v8148 = vld [vmem:[%s7 + $0x70] sm:$0xf]
    %v8149 = vld [vmem:[%s7 + $0x74] sm:$0xf]
    %v8150 = vld [vmem:[%s7 + $0x78] sm:$0xf]
    %v8151 = vld [vmem:[%s7 + $0x7c] sm:$0xf]
    %v8152 = vld [vmem:[%s7 + $0x80] sm:$0xf]
    %v8153 = vld [vmem:[%s7 + $0x84] sm:$0xf]
    %v8154 = vld [vmem:[%s7 + $0x88] sm:$0xf]
    %v8155 = vld [vmem:[%s7 + $0x8c] sm:$0xf]
    %v8156 = vld [vmem:[%s7 + $0x90] sm:$0xf]
    %v8157 = vld [vmem:[%s7 + $0x94] sm:$0xf]
    %v8158 = vld [vmem:[%s7 + $0x98] sm:$0xf]
    %v8159 = vld [vmem:[%s7 + $0x9c] sm:$0xf]
    %v8160 = vld [vmem:[%s7 + $0xa0] sm:$0xf]
    %v8161 = vld [vmem:[%s7 + $0xa4] sm:$0xf]
    %v8162 = vld [vmem:[%s7 + $0xa8] sm:$0xf]
    %v8163 = vld [vmem:[%s7 + $0xac] sm:$0xf]
    %v8164 = vld [vmem:[%s7 + $0xb0] sm:$0xf]
    %v8165 = vld [vmem:[%s7 + $0xb4] sm:$0xf]
    %v8166 = vld [vmem:[%s7 + $0xb8] sm:$0xf]
    %v8167 = vld [vmem:[%s7 + $0xbc] sm:$0xf]
    %v8168 = vld [vmem:[%s7 + $0xc0] sm:$0xf]
    %v8169 = vld [vmem:[%s7 + $0xc4] sm:$0xf]
    %v8170 = vld [vmem:[%s7 + $0xc8] sm:$0xf]
    %v8171 = vld [vmem:[%s7 + $0xcc] sm:$0xf]
    %v8172 = vld [vmem:[%s7 + $0xd0] sm:$0xf]
    %v8173 = vld [vmem:[%s7 + $0xd4] sm:$0xf]
    %v8174 = vld [vmem:[%s7 + $0xd8] sm:$0xf]
    %v8175 = vld [vmem:[%s7 + $0xdc] sm:$0xf]
    %v8176 = vld [vmem:[%s7 + $0xe0] sm:$0xf]
    %v8177 = vld [vmem:[%s7 + $0xe4] sm:$0xf]
    %v8178 = vld [vmem:[%s7 + $0xe8] sm:$0xf]
    %v8179 = vld [vmem:[%s7 + $0xec] sm:$0xf]
    %v8180 = vld [vmem:[%s7 + $0xf0] sm:$0xf]
    %v8181 = vld [vmem:[%s7 + $0xf4] sm:$0xf]
    %v8182 = vld [vmem:[%s7 + $0xf8] sm:$0x3]
    %v8183 = vld [vmem:[%s8] sm:$0x1]
    %v8247 = vunpack.c.l.b16 %v8120
    %v8248 = vunpack.c.l.b16 %v8121
    %v8249 = vunpack.c.l.b16 %v8122
    %v8250 = vunpack.c.l.b16 %v8123
    %v8251 = vunpack.c.l.b16 %v8124
    %v8252 = vunpack.c.l.b16 %v8125
    %v8253 = vunpack.c.l.b16 %v8126
    %v8254 = vunpack.c.l.b16 %v8127
    %v8255 = vunpack.c.l.b16 %v8128
    %v8256 = vunpack.c.l.b16 %v8129
    %v8257 = vunpack.c.l.b16 %v8130
    %v8258 = vunpack.c.l.b16 %v8131
    %v8259 = vunpack.c.l.b16 %v8132
    %v8260 = vunpack.c.l.b16 %v8133
    %v8261 = vunpack.c.l.b16 %v8134
    %v8262 = vunpack.c.l.b16 %v8135
    %v8263 = vunpack.c.l.b16 %v8136
    %v8264 = vunpack.c.l.b16 %v8137
    %v8265 = vunpack.c.l.b16 %v8138
    %v8266 = vunpack.c.l.b16 %v8139
    %v8267 = vunpack.c.l.b16 %v8140
    %v8268 = vunpack.c.l.b16 %v8141
    %v8269 = vunpack.c.l.b16 %v8142
    %v8270 = vunpack.c.l.b16 %v8143
    %v8271 = vunpack.c.l.b16 %v8144
    %v8272 = vunpack.c.l.b16 %v8145
    %v8273 = vunpack.c.l.b16 %v8146
    %v8274 = vunpack.c.l.b16 %v8147
    %v8275 = vunpack.c.l.b16 %v8148
    %v8276 = vunpack.c.l.b16 %v8149
    %v8277 = vunpack.c.l.b16 %v8150
    %v8278 = vunpack.c.l.b16 %v8151
    %v8279 = vunpack.c.l.b16 %v8152
    %v8280 = vunpack.c.l.b16 %v8153
    %v8281 = vunpack.c.l.b16 %v8154
    %v8282 = vunpack.c.l.b16 %v8155
    %v8283 = vunpack.c.l.b16 %v8156
    %v8284 = vunpack.c.l.b16 %v8157
    %v8285 = vunpack.c.l.b16 %v8158
    %v8286 = vunpack.c.l.b16 %v8159
    %v8287 = vunpack.c.l.b16 %v8160
    %v8288 = vunpack.c.l.b16 %v8161
    %v8289 = vunpack.c.l.b16 %v8162
    %v8290 = vunpack.c.l.b16 %v8163
    %v8291 = vunpack.c.l.b16 %v8164
    %v8292 = vunpack.c.l.b16 %v8165
    %v8293 = vunpack.c.l.b16 %v8166
    %v8294 = vunpack.c.l.b16 %v8167
    %v8295 = vunpack.c.l.b16 %v8168
    %v8296 = vunpack.c.l.b16 %v8169
    %v8297 = vunpack.c.l.b16 %v8170
    %v8298 = vunpack.c.l.b16 %v8171
    %v8299 = vunpack.c.l.b16 %v8172
    %v8300 = vunpack.c.l.b16 %v8173
    %v8301 = vunpack.c.l.b16 %v8174
    %v8302 = vunpack.c.l.b16 %v8175
    %v8303 = vunpack.c.l.b16 %v8176
    %v8304 = vunpack.c.l.b16 %v8177
    %v8305 = vunpack.c.l.b16 %v8178
    %v8306 = vunpack.c.l.b16 %v8179
    %v8307 = vunpack.c.l.b16 %v8180
    %v8308 = vunpack.c.l.b16 %v8181
    %v8309 = vunpack.c.l.b16 %v8182
    %v8310 = vpack.c.b16 %v8248, %v8247
    %v8311 = vpack.c.b16 %v8250, %v8249
    %v8312 = vpack.c.b16 %v8252, %v8251
    %v8313 = vpack.c.b16 %v8254, %v8253
    %v8314 = vpack.c.b16 %v8256, %v8255
    %v8315 = vpack.c.b16 %v8258, %v8257
    %v8316 = vpack.c.b16 %v8260, %v8259
    %v8317 = vpack.c.b16 %v8262, %v8261
    %v8318 = vpack.c.b16 %v8264, %v8263
    %v8319 = vpack.c.b16 %v8266, %v8265
    %v8320 = vpack.c.b16 %v8268, %v8267
    %v8321 = vpack.c.b16 %v8270, %v8269
    %v8322 = vpack.c.b16 %v8272, %v8271
    %v8323 = vpack.c.b16 %v8274, %v8273
    %v8324 = vpack.c.b16 %v8276, %v8275
    %v8325 = vpack.c.b16 %v8278, %v8277
    %v8326 = vpack.c.b16 %v8280, %v8279
    %v8327 = vpack.c.b16 %v8282, %v8281
    %v8328 = vpack.c.b16 %v8284, %v8283
    %v8329 = vpack.c.b16 %v8286, %v8285
    %v8330 = vpack.c.b16 %v8288, %v8287
    %v8331 = vpack.c.b16 %v8290, %v8289
    %v8332 = vpack.c.b16 %v8292, %v8291
    %v8333 = vpack.c.b16 %v8294, %v8293
    %v8334 = vpack.c.b16 %v8296, %v8295
    %v8335 = vpack.c.b16 %v8298, %v8297
    %v8336 = vpack.c.b16 %v8300, %v8299
    %v8337 = vpack.c.b16 %v8302, %v8301
    %v8338 = vpack.c.b16 %v8304, %v8303
    %v8339 = vpack.c.b16 %v8306, %v8305
    %v8340 = vpack.c.b16 %v8308, %v8307
    %v8341 = vpack.c.b16 %v8309, %v8309
    %vm8373 = vcmask 949248
    %v8375 = vsel %vm8373, %v8119, 0
    %v8378 = vsel %vm938, %v8341, 0
    %8380 = vmatprep.subr.bf16.mxu0 0
    %8381 = vmatpush1.bf16.msra.mxu0 %v8310
    %8382 = vmatprep.subr.bf16.mxu0 0
    %8383 = vmatpush1.bf16.msra.mxu0 %v8311
    %8384 = vmatprep.subr.bf16.mxu0 0
    %8385 = vmatpush1.bf16.msra.mxu0 %v8312
    %8386 = vmatprep.subr.bf16.mxu0 0
    %8387 = vmatpush1.bf16.msra.mxu0 %v8313
    %8388 = vmatprep.subr.bf16.mxu0 0
    %8389 = vmatpush1.bf16.msra.mxu0 %v8314
    %8390 = vmatprep.subr.bf16.mxu0 0
    %8391 = vmatpush1.bf16.msra.mxu0 %v8315
    %8392 = vmatprep.subr.bf16.mxu0 0
    %8393 = vmatpush1.bf16.msra.mxu0 %v8316
    %8394 = vmatprep.subr.bf16.mxu0 0
    %8395 = vmatpush1.bf16.msra.mxu0 %v8317
    %8396 = vmatprep.subr.bf16.mxu0 0
    %8397 = vmatpush1.bf16.msra.mxu0 %v8318
    %8398 = vmatprep.subr.bf16.mxu0 0
    %8399 = vmatpush1.bf16.msra.mxu0 %v8319
    %8400 = vmatprep.subr.bf16.mxu0 0
    %8401 = vmatpush1.bf16.msra.mxu0 %v8320
    %8402 = vmatprep.subr.bf16.mxu0 0
    %8403 = vmatpush1.bf16.msra.mxu0 %v8321
    %8404 = vmatprep.subr.bf16.mxu0 0
    %8405 = vmatpush1.bf16.msra.mxu0 %v8322
    %8406 = vmatprep.subr.bf16.mxu0 0
    %8407 = vmatpush1.bf16.msra.mxu0 %v8323
    %8408 = vmatprep.subr.bf16.mxu0 0
    %8409 = vmatpush1.bf16.msra.mxu0 %v8324
    %8410 = vmatprep.subr.bf16.mxu0 0
    %8411 = vmatpush1.bf16.msra.mxu0 %v8325
    %8412 = vmatprep.mubr.bf16.mxu0 %v8117
    %8413 = vmatmul.mubr.bf16.gmra.mrb[0].mxu0 %v8116
    %v8414 = vpop.f32.mrb[0].mxu0
    %v8415 = vadd.f32 %v8183, %v8414
    %v8416 = vpop.f32.mrb[0].mxu0
    %v8417 = vpop.f32.mrb[0].mxu0
    %v8418 = vpop.f32.mrb[0].mxu0
    %8419 = vdwg.mxu0
    %8420 = vmatprep.subr.bf16.mxu0 0
    %8421 = vmatpush1.bf16.msra.mxu0 %v8326
    %8422 = vmatprep.subr.bf16.mxu0 0
    %8423 = vmatpush1.bf16.msra.mxu0 %v8327
    %8424 = vmatprep.subr.bf16.mxu0 0
    %8425 = vmatpush1.bf16.msra.mxu0 %v8328
    %8426 = vmatprep.subr.bf16.mxu0 0
    %8427 = vmatpush1.bf16.msra.mxu0 %v8329
    %8428 = vmatprep.subr.bf16.mxu0 0
    %8429 = vmatpush1.bf16.msra.mxu0 %v8330
    %8430 = vmatprep.subr.bf16.mxu0 0
    %8431 = vmatpush1.bf16.msra.mxu0 %v8331
    %8432 = vmatprep.subr.bf16.mxu0 0
    %8433 = vmatpush1.bf16.msra.mxu0 %v8332
    %8434 = vmatprep.subr.bf16.mxu0 0
    %8435 = vmatpush1.bf16.msra.mxu0 %v8333
    %8436 = vmatprep.subr.bf16.mxu0 0
    %8437 = vmatpush1.bf16.msra.mxu0 %v8334
    %8438 = vmatprep.subr.bf16.mxu0 0
    %8439 = vmatpush1.bf16.msra.mxu0 %v8335
    %8440 = vmatprep.subr.bf16.mxu0 0
    %8441 = vmatpush1.bf16.msra.mxu0 %v8336
    %8442 = vmatprep.subr.bf16.mxu0 0
    %8443 = vmatpush1.bf16.msra.mxu0 %v8337
    %8444 = vmatprep.subr.bf16.mxu0 0
    %8445 = vmatpush1.bf16.msra.mxu0 %v8338
    %8446 = vmatprep.subr.bf16.mxu0 0
    %8447 = vmatpush1.bf16.msra.mxu0 %v8339
    %8448 = vmatprep.subr.bf16.mxu0 0
    %8449 = vmatpush1.bf16.msra.mxu0 %v8340
    %8450 = vmatprep.subr.bf16.mxu0 0
    %8451 = vmatpush1.bf16.msra.mxu0 %v8378
    %8452 = vmatprep.mubr.bf16.mxu0 %v8375
    %8453 = vmatmul.mubr.bf16.gmra.mrb[0].mxu0 %v8118
    %v8454 = vpop.f32.mrb[0].mxu0
    %v8455 = vadd.f32 %v8415, %v8454
    %v8456 = vpop.f32.mrb[0].mxu0
    %v8457 = vpop.f32.mrb[0].mxu0
    %v8458 = vpop.f32.mrb[0].mxu0
    %8459 = vdwg.mxu0
    %v8460 = vtanh.pop %v8455
    %8461 = vst [vmem:[#allocation3] sm:$0x1] %v8460
    // Predicated region
    $region38: #{lenet_forward.1} parent=1 // pred_check
      _
    $region39: #{lenet_forward.1} parent=1 // pred_check_branch
      %8463 = sbr.rel (0) target = $region41
    $region40: #{lenet_forward.1} parent=1 // pred_region
      %s8465 = ssub.s32 16, 16
      %8466 = vsyncadd [#allocation4], %s8465
      %s8468 = sshll.u32 [#allocation3], 4
      %s8469 = int_to_ptr.vmem [resolvable:$true] %s8468
      %8471 = dma.vmem_to_hbm [thread:$0]  %s8469, 16, %s9, [#allocation4]
    $region41: #{lenet_forward.1} parent=1 // pred_fallthru
      _
    // Predicated region
    $region42: #{lenet_forward.1} parent=1 // pred_check
      _
    $region43: #{lenet_forward.1} parent=1 // pred_check_branch
      %8473 = sbr.rel (0) target = $region45
    $region44: #{lenet_forward.1} parent=1 // pred_region
      %8474 = dma.done [#allocation4], 16
    $region45: #{lenet_forward.1} parent=1 // pred_fallthru
      _
    %8475 = vsyncpa [#allocation4], 1

</llo_original>
